<compile_context>
chip_gen: v7x
topology: tpu7x:2x2x1
jax: 0.10.0
libtpu: 0.0.40
codegen_flags: <defaults>
</compile_context>

<pallas_src>
import jax
import jax.numpy as jnp
from jax.experimental import pallas as pl
from jax.experimental.pallas import tpu as pltpu


def _full_spec(a):
    nd = a.ndim
    return pl.BlockSpec(a.shape, lambda i, nd=nd: (0,) * nd)


# ----------------------------------------------------------------------------
# Kernel 1: per-point feature extractor (conv1..conv4, kernel-size-1 Conv1d ==
# per-point matmul) with the global-max "concat" folded into a per-sample bias,
# producing the per-sample global feature (max over points of conv4 output).
# Processes TB samples per grid step.
# ----------------------------------------------------------------------------
def _point_encoder_kernel(pts_ref, w1_ref, b1_ref, w2_ref, b2_ref,
                          w3a_ref, w3b_ref, b3_ref, w4_ref, b4_ref, gf_ref):
    TB, N, _ = pts_ref.shape
    M = TB * N
    x = pts_ref[...].astype(jnp.float32)                                   # (TB, N, 3)

    # conv1 (C_in = 3) on the VPU: three rank-1 FMAs, no lane-sparse MXU pass.
    x1 = jnp.maximum(
        x[:, :, 0:1] * w1_ref[0:1, :]
        + x[:, :, 1:2] * w1_ref[1:2, :]
        + x[:, :, 2:3] * w1_ref[2:3, :]
        + b1_ref[...], 0.0)                                                # (TB, N, 128) f32

    # conv2 (no ReLU before the first global max, per the torch module).
    x2 = jnp.dot(x1.reshape(M, x1.shape[2]).astype(jnp.bfloat16), w2_ref[...],
                 preferred_element_type=jnp.float32) + b2_ref[...]         # (M, 256) f32
    C2 = x2.shape[1]

    # per-sample global max over points of the conv2 output
    g1 = jnp.max(x2.reshape(TB, N, C2), axis=1)                            # (TB, 256)

    # conv3 with the concat removed:  [x2 | g1] @ w3  ==  x2 @ w3a + g1 @ w3b
    gbias = jnp.dot(g1.astype(jnp.bfloat16), w3b_ref[...],
                    preferred_element_type=jnp.float32) + b3_ref[...]      # (TB, 512)
    h3 = jnp.dot(x2.astype(jnp.bfloat16), w3a_ref[...],
                 preferred_element_type=jnp.float32)                       # (M, 512)
    C3 = h3.shape[1]
    x3 = jnp.maximum(h3.reshape(TB, N, C3) + gbias[:, None, :], 0.0)       # (TB, N, 512)

    # conv4 (no ReLU) + per-sample global max; channel bias added after the max.
    h4 = jnp.dot(x3.reshape(M, C3).astype(jnp.bfloat16), w4_ref[...],
                 preferred_element_type=jnp.float32)                       # (M, D)
    D = h4.shape[1]
    gf_ref[...] = jnp.max(h4.reshape(TB, N, D), axis=1) + b4_ref[...]      # (TB, D)


def point_encoder(points_bnc, pp):
    """points_bnc: (B, N, 3) channels-last, B % 8 == 0.  Returns (B, D) f32."""
    B, N, C = points_bnc.shape
    D = pp["w4"].shape[1]
    TB = 8                                  # samples per grid step (B % 8 == 0 by module contract)
    assert B % TB == 0

    # TODO(synk): for very large point counts on v7x (64 MiB VMEM), restructure
    # as a two-phase grid over N tiles (phase 1: running max of conv2 output,
    # phase 2: conv3/conv4 with a running max of conv4) instead of holding the
    # whole (TB*N, 512) activation in VMEM.
    weights = (pp["w1"], pp["b1"], pp["w2"], pp["b2"],
               pp["w3a"], pp["w3b"], pp["b3"], pp["w4"], pp["b4"])
    return pl.pallas_call(
        _point_encoder_kernel,
        out_shape=jax.ShapeDtypeStruct((B, D), jnp.float32),
        grid=(B // TB,),
        in_specs=[pl.BlockSpec((TB, N, C), lambda i: (i, 0, 0))]
                 + [_full_spec(w) for w in weights],
        out_specs=pl.BlockSpec((TB, D), lambda i: (i, 0)),
        compiler_params=pltpu.CompilerParams(dimension_semantics=("parallel",)),
    )(points_bnc, *weights)


# ----------------------------------------------------------------------------
# Kernel 2: (folded fc_qkv + MHA in-proj) -> single-head attention over the 8
# chunks -> residual + LayerNorm -> folded selection head + softmax over the
# chunk axis -> weighted sum of global features -> coarse decoder fc1/fc2/fc3.
# Batch-first layout: gf is (S, L=8, D), grid over S.
# ----------------------------------------------------------------------------
def _attn_select_kernel(gf_ref, wq_ref, bq_ref, wk_ref, bk_ref, wv_ref, bv_ref,
                        wo_ref, bo_ref, lnw_ref, lnb_ref, wsel_ref, bsel_ref,
                        wf1_ref, bf1_ref, wf2_ref, bf2_ref, wf3_ref, bf3_ref,
                        gfout_ref, coarse_ref, sel_ref):
    gf = gf_ref[...].astype(jnp.float32)                                   # (TS, 8, D)
    D = gf.shape[2]
    gfb = gf.astype(jnp.bfloat16)

    # fc_qkv folded into the MHA in-projection (n_head == 1 => head_dim == D).
    Q = jnp.einsum('sld,de->sle', gfb, wq_ref[...],
                   preferred_element_type=jnp.float32) + bq_ref[...]
    K = jnp.einsum('sld,de->sle', gfb, wk_ref[...],
                   preferred_element_type=jnp.float32) + bk_ref[...]
    V = jnp.einsum('sld,de->sle', gfb, wv_ref[...],
                   preferred_element_type=jnp.float32) + bv_ref[...]

    scale = 1.0 / (D ** 0.5)
    logits = jnp.einsum('sld,smd->slm',
                        Q.astype(jnp.bfloat16), K.astype(jnp.bfloat16),
                        preferred_element_type=jnp.float32) * scale        # (TS, 8, 8)
    logits = logits - jnp.max(logits, axis=-1, keepdims=True)
    p = jnp.exp(logits)
    p = p * pl.reciprocal(jnp.sum(p, axis=-1, keepdims=True), approx=True)
    attn = jnp.einsum('slm,smd->sld',
                      p.astype(jnp.bfloat16), V.astype(jnp.bfloat16),
                      preferred_element_type=jnp.float32)
    attn = jnp.einsum('sld,de->sle', attn.astype(jnp.bfloat16), wo_ref[...],
                      preferred_element_type=jnp.float32) + bo_ref[...]

    # residual + LayerNorm (eps=1e-5, biased variance -> matches nn.LayerNorm)
    y = attn + gf
    mu = jnp.mean(y, axis=-1, keepdims=True)
    var = jnp.mean((y - mu) * (y - mu), axis=-1, keepdims=True)
    yn = (y - mu) * jax.lax.rsqrt(var + 1e-5) * lnw_ref[...] + lnb_ref[...]

    # selection head fcs2(fcs1(.)) folded to one (1, D) vector; softmax over the
    # 8-chunk axis (F.softmax default dim=0 on the torch (8, S, 1) tensor).
    sl = jnp.sum(yn * wsel_ref[...], axis=-1) + bsel_ref[...]              # (TS, 8)
    sl = sl - jnp.max(sl, axis=1, keepdims=True)
    e = jnp.exp(sl)
    sel = e * pl.reciprocal(jnp.sum(e, axis=1, keepdims=True), approx=True)
    sel_ref[...] = sel

    # weighted sum of the 8 chunk features
    gfo = jnp.sum(sel[:, :, None] * gf, axis=1)                            # (TS, D)
    gfout_ref[...] = gfo

    # coarse decoder fc1/fc2/fc3 (fc3 columns zero-padded to a lane-dense width)
    c = jnp.maximum(jnp.dot(gfo.astype(jnp.bfloat16), wf1_ref[...],
                            preferred_element_type=jnp.float32) + bf1_ref[...], 0.0)
    c = jnp.maximum(jnp.dot(c.astype(jnp.bfloat16), wf2_ref[...],
                            preferred_element_type=jnp.float32) + bf2_ref[...], 0.0)
    coarse_ref[...] = jnp.dot(c.astype(jnp.bfloat16), wf3_ref[...],
                              preferred_element_type=jnp.float32) + bf3_ref[...]


# ----------------------------------------------------------------------------
# Parameters (deterministic synthetic init; Linear/Conv weights stored
# pre-transposed as (in, out) for x @ W style) and offline parameter prep.
# ----------------------------------------------------------------------------
def init_params(key, d_model=128, num_coarse=64, input_size=3):
    keys = iter(jax.random.split(key, 32))

    def w(shape, scale=0.05):
        return scale * jax.random.normal(next(keys), shape, dtype=jnp.float32)

    D = d_model
    return dict(
        w1=w((input_size, 128)), b1=w((1, 128)),
        w2=w((128, 256)),        b2=w((1, 256)),
        w3=w((512, 512)),        b3=w((1, 512)),
        w4=w((512, D)),          b4=w((1, D)),
        wqkv=w((D, 3 * D)),      bqkv=w((1, 3 * D)),
        wq=w((D, D)), wk=w((D, D)), wv=w((D, D)),
        bq=w((1, D)), bk=w((1, D)), bv=w((1, D)),
        wo=w((D, D)), bo=w((1, D)),
        lnw=jnp.ones((1, D), jnp.float32), lnb=jnp.zeros((1, D), jnp.float32),
        ws1=w((D, D)), bs1=w((1, D)),
        ws2=w((1, D)), bs2=w((1, 1)),
        wf1=w((D, D)), bf1=w((1, D)),
        wf2=w((D, D)), bf2=w((1, D)),
        wf3=w((D, 3 * num_coarse)), bf3=w((1, 3 * num_coarse)),
    )


def prepare_params(params):
    """Offline prep: fold fc_qkv into the MHA in-projection, fold fcs1/fcs2
    into one vector, split w3 (concat removal), pad fc3 to a lane-dense width,
    and cast MXU weight operands to bf16 (biases / VPU weights stay f32)."""
    f32, bf16 = jnp.float32, jnp.bfloat16
    D = params["w4"].shape[1]

    def fold_qkv(sl, w_in, b_in):
        w_eff = params["wqkv"][:, sl] @ w_in                     # (D, D)
        b_eff = params["bqkv"][:, sl] @ w_in + b_in              # (1, D)
        return w_eff.astype(bf16), b_eff.astype(f32)

    wq_e, bq_e = fold_qkv(slice(0, D),         params["wq"], params["bq"])
    wk_e, bk_e = fold_qkv(slice(D, 2 * D),     params["wk"], params["bk"])
    wv_e, bv_e = fold_qkv(slice(2 * D, 3 * D), params["wv"], params["bv"])

    # fcs2(fcs1(x)) with no activation in between == x @ (ws1 @ ws2.T) + const
    wsel = (params["ws2"] @ params["ws1"].T).astype(f32)                   # (1, D)
    bsel = (params["bs1"] @ params["ws2"].T + params["bs2"]).astype(f32)   # (1, 1)

    # fc3 output padded up to a multiple of 128 lanes (unmasked stores).
    C3 = params["wf3"].shape[1]
    CP = -(-C3 // 128) * 128
    wf3p = jnp.pad(params["wf3"], ((0, 0), (0, CP - C3)))
    bf3p = jnp.pad(params["bf3"], ((0, 0), (0, CP - C3)))

    return dict(
        # point encoder
        w1=params["w1"].astype(f32), b1=params["b1"].astype(f32),
        w2=params["w2"].astype(bf16), b2=params["b2"].astype(f32),
        w3a=params["w3"][:256].astype(bf16),   # rows acting on conv2(x)
        w3b=params["w3"][256:].astype(bf16),   # rows acting on the broadcast global max
        b3=params["b3"].astype(f32),
        w4=params["w4"].astype(bf16), b4=params["b4"].astype(f32),
        # attention / selection / decoder
        wq_e=wq_e, bq_e=bq_e, wk_e=wk_e, bk_e=bk_e, wv_e=wv_e, bv_e=bv_e,
        wo=params["wo"].astype(bf16), bo=params["bo"].astype(f32),
        lnw=params["lnw"].astype(f32), lnb=params["lnb"].astype(f32),
        wsel=wsel, bsel=bsel,
        wf1=params["wf1"].astype(bf16), bf1=params["bf1"].astype(f32),
        wf2=params["wf2"].astype(bf16), bf2=params["bf2"].astype(f32),
        wf3p=wf3p.astype(bf16), bf3p=bf3p.astype(f32),
    )


def _pick_tile(n, candidates=(128, 64, 32, 16, 8)):
    for c in candidates:
        if n % c == 0:
            return c
    return n


def ri_encoder(points, pp, num_coarse):
    """points: (B, 3, N) in PyTorch NCW layout. B must be divisible by 8."""
    B, _, N = points.shape
    D = pp["w4"].shape[1]
    S = B // 8
    C3 = 3 * num_coarse
    CP = pp["wf3p"].shape[1]

    # Conv1d(k=1) over NCW == per-point matmul over channels: go channels-last.
    pts = jnp.transpose(points, (0, 2, 1))                       # (B, N, 3)  tiny XLA transpose
    gf = point_encoder(pts, pp)                                  # (B, D) f32

    # torch.chunk(8, dim=0) + stack == reshape(8, S, D); kernel 2 is batch-first
    # (S, 8, D) -- the (8,S,D)->(S,8,D) transpose is an O(B*D) XLA copy.
    gf_b = jnp.transpose(gf.reshape(8, S, D), (1, 0, 2))         # (S, 8, D)

    TS = _pick_tile(S)
    weights = (pp["wq_e"], pp["bq_e"], pp["wk_e"], pp["bk_e"], pp["wv_e"], pp["bv_e"],
               pp["wo"], pp["bo"], pp["lnw"], pp["lnb"], pp["wsel"], pp["bsel"],
               pp["wf1"], pp["bf1"], pp["wf2"], pp["bf2"], pp["wf3p"], pp["bf3p"])
    gfout, coarse_p, sel = pl.pallas_call(
        _attn_select_kernel,
        out_shape=(jax.ShapeDtypeStruct((S, D), jnp.float32),
                   jax.ShapeDtypeStruct((S, CP), jnp.float32),
                   jax.ShapeDtypeStruct((S, 8), jnp.float32)),
        grid=(S // TS,),
        in_specs=[pl.BlockSpec((TS, 8, D), lambda s: (s, 0, 0))]
                 + [_full_spec(w) for w in weights],
        out_specs=(pl.BlockSpec((TS, D), lambda s: (s, 0)),
                   pl.BlockSpec((TS, CP), lambda s: (s, 0)),
                   pl.BlockSpec((TS, 8), lambda s: (s, 0))),
        compiler_params=pltpu.CompilerParams(dimension_semantics=("parallel",)),
    )(gf_b, *weights)

    coarse = coarse_p[:, :C3].reshape(S, 3, num_coarse)          # drop lane padding
    # inx = sel.squeeze().max(dim=0).indices  (argmax over the 8-chunk axis)
    inx = jnp.argmax(sel, axis=1)                                # (S,)
    return gfout, coarse, inx


if __name__ == "__main__":
    key = jax.random.PRNGKey(0)
    pkey, xkey = jax.random.split(key)

    d_model, num_coarse = 128, 64
    B, N = 16, 64                                                # B must be a multiple of 8
    params = init_params(pkey, d_model=d_model, num_coarse=num_coarse)
    pp = prepare_params(params)
    points = jax.random.normal(xkey, (B, 3, N), dtype=jnp.float32)

    fwd = jax.jit(lambda p, x: ri_encoder(x, p, num_coarse))
    gf, coarse, inx = fwd(pp, points)
    jax.block_until_ready((gf, coarse, inx))

    assert gf.shape == (B // 8, d_model)
    assert coarse.shape == (B // 8, 3, num_coarse)
    assert inx.shape == (B // 8,)
    print("KERNEL_OK")
</pallas_src>

<mosaic_0001>
module attributes {stable_mosaic.version = 11 : i64} {
  func.func @_attn_select_kernel(%arg0: i32, %arg1: memref<2x8x128xf32, #tpu.memory_space<vmem>>, %arg2: memref<128x128xbf16, #tpu.memory_space<vmem>>, %arg3: memref<1x128xf32, #tpu.memory_space<vmem>>, %arg4: memref<128x128xbf16, #tpu.memory_space<vmem>>, %arg5: memref<1x128xf32, #tpu.memory_space<vmem>>, %arg6: memref<128x128xbf16, #tpu.memory_space<vmem>>, %arg7: memref<1x128xf32, #tpu.memory_space<vmem>>, %arg8: memref<128x128xbf16, #tpu.memory_space<vmem>>, %arg9: memref<1x128xf32, #tpu.memory_space<vmem>>, %arg10: memref<1x128xf32, #tpu.memory_space<vmem>>, %arg11: memref<1x128xf32, #tpu.memory_space<vmem>>, %arg12: memref<1x128xf32, #tpu.memory_space<vmem>>, %arg13: memref<1x1xf32, #tpu.memory_space<vmem>>, %arg14: memref<128x128xbf16, #tpu.memory_space<vmem>>, %arg15: memref<1x128xf32, #tpu.memory_space<vmem>>, %arg16: memref<128x128xbf16, #tpu.memory_space<vmem>>, %arg17: memref<1x128xf32, #tpu.memory_space<vmem>>, %arg18: memref<128x256xbf16, #tpu.memory_space<vmem>>, %arg19: memref<1x256xf32, #tpu.memory_space<vmem>>, %arg20: memref<2x128xf32, #tpu.memory_space<vmem>>, %arg21: memref<2x256xf32, #tpu.memory_space<vmem>>, %arg22: memref<2x8xf32, #tpu.memory_space<vmem>>) attributes {dimension_semantics = [#tpu.dimension_semantics<parallel>], iteration_bounds = array<i64: 1>, scalar_prefetch = 0 : i64, scratch_operands = 0 : i64, tpu.core_type = #tpu.core_type<tc>, window_params = [{transform_indices = @transform_0, window_bounds = array<i64: 2, 8, 128>}, {pipeline_mode = #tpu.pipeline_mode<synchronous>, transform_indices = @transform_1, window_bounds = array<i64: 128, 128>}, {pipeline_mode = #tpu.pipeline_mode<synchronous>, transform_indices = @transform_2, window_bounds = array<i64: 1, 128>}, {pipeline_mode = #tpu.pipeline_mode<synchronous>, transform_indices = @transform_3, window_bounds = array<i64: 128, 128>}, {pipeline_mode = #tpu.pipeline_mode<synchronous>, transform_indices = @transform_4, window_bounds = array<i64: 1, 128>}, {pipeline_mode = #tpu.pipeline_mode<synchronous>, transform_indices = @transform_5, window_bounds = array<i64: 128, 128>}, {pipeline_mode = #tpu.pipeline_mode<synchronous>, transform_indices = @transform_6, window_bounds = array<i64: 1, 128>}, {pipeline_mode = #tpu.pipeline_mode<synchronous>, transform_indices = @transform_7, window_bounds = array<i64: 128, 128>}, {pipeline_mode = #tpu.pipeline_mode<synchronous>, transform_indices = @transform_8, window_bounds = array<i64: 1, 128>}, {pipeline_mode = #tpu.pipeline_mode<synchronous>, transform_indices = @transform_9, window_bounds = array<i64: 1, 128>}, {pipeline_mode = #tpu.pipeline_mode<synchronous>, transform_indices = @transform_10, window_bounds = array<i64: 1, 128>}, {pipeline_mode = #tpu.pipeline_mode<synchronous>, transform_indices = @transform_11, window_bounds = array<i64: 1, 128>}, {pipeline_mode = #tpu.pipeline_mode<synchronous>, transform_indices = @transform_12, window_bounds = array<i64: 1, 1>}, {pipeline_mode = #tpu.pipeline_mode<synchronous>, transform_indices = @transform_13, window_bounds = array<i64: 128, 128>}, {pipeline_mode = #tpu.pipeline_mode<synchronous>, transform_indices = @transform_14, window_bounds = array<i64: 1, 128>}, {pipeline_mode = #tpu.pipeline_mode<synchronous>, transform_indices = @transform_15, window_bounds = array<i64: 128, 128>}, {pipeline_mode = #tpu.pipeline_mode<synchronous>, transform_indices = @transform_16, window_bounds = array<i64: 1, 128>}, {pipeline_mode = #tpu.pipeline_mode<synchronous>, transform_indices = @transform_17, window_bounds = array<i64: 128, 256>}, {pipeline_mode = #tpu.pipeline_mode<synchronous>, transform_indices = @transform_18, window_bounds = array<i64: 1, 256>}, {transform_indices = @transform_19, window_bounds = array<i64: 2, 128>}, {transform_indices = @transform_20, window_bounds = array<i64: 2, 256>}, {transform_indices = @transform_21, window_bounds = array<i64: 2, 8>}]} {
    %c0 = arith.constant 0 : index
    %c0_0 = arith.constant 0 : index
    %c0_1 = arith.constant 0 : index
    %0 = vector.load %arg1[%c0, %c0_0, %c0_1] : memref<2x8x128xf32, #tpu.memory_space<vmem>>, vector<2x8x128xf32>
    %1 = arith.truncf %0 : vector<2x8x128xf32> to vector<2x8x128xbf16>
    %c0_2 = arith.constant 0 : index
    %c0_3 = arith.constant 0 : index
    %2 = vector.load %arg2[%c0_2, %c0_3] : memref<128x128xbf16, #tpu.memory_space<vmem>>, vector<128x128xbf16>
    "tpu.trace_start"() <{level = 10 : i32, message = "sld,de->sle"}> : () -> ()
    %cst = arith.constant dense<0.000000e+00> : vector<2x8x128xf32>
    %3 = tpu.matmul %1, %2, %cst {dimension_numbers = #tpu.dot_dimension_numbers<[2], [0], [0, 1], [1], [0, 0, 0, 1, 1, 1], [], []>} : vector<2x8x128xbf16>, vector<128x128xbf16>, vector<2x8x128xf32> -> vector<2x8x128xf32>
    "tpu.trace_stop"() : () -> ()
    %c0_4 = arith.constant 0 : index
    %c0_5 = arith.constant 0 : index
    %4 = vector.load %arg3[%c0_4, %c0_5] : memref<1x128xf32, #tpu.memory_space<vmem>>, vector<1x128xf32>
    %5 = vector.shape_cast %4 : vector<1x128xf32> to vector<1x1x128xf32>
    %6 = vector.broadcast %5 : vector<1x1x128xf32> to vector<2x8x128xf32>
    %7 = arith.addf %3, %6 : vector<2x8x128xf32>
    %c0_6 = arith.constant 0 : index
    %c0_7 = arith.constant 0 : index
    %8 = vector.load %arg4[%c0_6, %c0_7] : memref<128x128xbf16, #tpu.memory_space<vmem>>, vector<128x128xbf16>
    "tpu.trace_start"() <{level = 10 : i32, message = "sld,de->sle"}> : () -> ()
    %cst_8 = arith.constant dense<0.000000e+00> : vector<2x8x128xf32>
    %9 = tpu.matmul %1, %8, %cst_8 {dimension_numbers = #tpu.dot_dimension_numbers<[2], [0], [0, 1], [1], [0, 0, 0, 1, 1, 1], [], []>} : vector<2x8x128xbf16>, vector<128x128xbf16>, vector<2x8x128xf32> -> vector<2x8x128xf32>
    "tpu.trace_stop"() : () -> ()
    %c0_9 = arith.constant 0 : index
    %c0_10 = arith.constant 0 : index
    %10 = vector.load %arg5[%c0_9, %c0_10] : memref<1x128xf32, #tpu.memory_space<vmem>>, vector<1x128xf32>
    %11 = vector.shape_cast %10 : vector<1x128xf32> to vector<1x1x128xf32>
    %12 = vector.broadcast %11 : vector<1x1x128xf32> to vector<2x8x128xf32>
    %13 = arith.addf %9, %12 : vector<2x8x128xf32>
    %c0_11 = arith.constant 0 : index
    %c0_12 = arith.constant 0 : index
    %14 = vector.load %arg6[%c0_11, %c0_12] : memref<128x128xbf16, #tpu.memory_space<vmem>>, vector<128x128xbf16>
    "tpu.trace_start"() <{level = 10 : i32, message = "sld,de->sle"}> : () -> ()
    %cst_13 = arith.constant dense<0.000000e+00> : vector<2x8x128xf32>
    %15 = tpu.matmul %1, %14, %cst_13 {dimension_numbers = #tpu.dot_dimension_numbers<[2], [0], [0, 1], [1], [0, 0, 0, 1, 1, 1], [], []>} : vector<2x8x128xbf16>, vector<128x128xbf16>, vector<2x8x128xf32> -> vector<2x8x128xf32>
    "tpu.trace_stop"() : () -> ()
    %c0_14 = arith.constant 0 : index
    %c0_15 = arith.constant 0 : index
    %16 = vector.load %arg7[%c0_14, %c0_15] : memref<1x128xf32, #tpu.memory_space<vmem>>, vector<1x128xf32>
    %17 = vector.shape_cast %16 : vector<1x128xf32> to vector<1x1x128xf32>
    %18 = vector.broadcast %17 : vector<1x1x128xf32> to vector<2x8x128xf32>
    %19 = arith.addf %15, %18 : vector<2x8x128xf32>
    %20 = arith.truncf %7 : vector<2x8x128xf32> to vector<2x8x128xbf16>
    %21 = arith.truncf %13 : vector<2x8x128xf32> to vector<2x8x128xbf16>
    "tpu.trace_start"() <{level = 10 : i32, message = "sld,smd->slm"}> : () -> ()
    %cst_16 = arith.constant dense<0.000000e+00> : vector<2x8x8xf32>
    %22 = tpu.matmul %20, %21, %cst_16 {dimension_numbers = #tpu.dot_dimension_numbers<[2], [2], [1], [1], [0, 0, 0, 1, 1, 1], [0], [0]>} : vector<2x8x128xbf16>, vector<2x8x128xbf16>, vector<2x8x8xf32> -> vector<2x8x8xf32>
    "tpu.trace_stop"() : () -> ()
    %cst_17 = arith.constant 0.0883883461 : f32
    %23 = vector.broadcast %cst_17 : f32 to vector<2x8x8xf32>
    %24 = arith.mulf %22, %23 : vector<2x8x8xf32>
    %cst_18 = arith.constant dense<0xFF800000> : vector<2x8xf32>
    %25 = vector.multi_reduction <maximumf>, %24, %cst_18 [2] : vector<2x8x8xf32> to vector<2x8xf32>
    %26 = vector.shape_cast %25 : vector<2x8xf32> to vector<2x8x1xf32>
    %27 = vector.broadcast %26 : vector<2x8x1xf32> to vector<2x8x8xf32>
    %28 = arith.subf %24, %27 : vector<2x8x8xf32>
    %29 = math.exp %28 : vector<2x8x8xf32>
    %cst_19 = arith.constant dense<0.000000e+00> : vector<2x8xf32>
    %30 = vector.multi_reduction <add>, %29, %cst_19 [2] : vector<2x8x8xf32> to vector<2x8xf32>
    %31 = vector.shape_cast %30 : vector<2x8xf32> to vector<2x8x1xf32>
    %32 = tpu.reciprocal %31 {approx = true} : vector<2x8x1xf32> -> vector<2x8x1xf32>
    %33 = vector.broadcast %32 : vector<2x8x1xf32> to vector<2x8x8xf32>
    %34 = arith.mulf %29, %33 : vector<2x8x8xf32>
    %35 = arith.truncf %34 : vector<2x8x8xf32> to vector<2x8x8xbf16>
    %36 = arith.truncf %19 : vector<2x8x128xf32> to vector<2x8x128xbf16>
    "tpu.trace_start"() <{level = 10 : i32, message = "slm,smd->sld"}> : () -> ()
    %cst_20 = arith.constant dense<0.000000e+00> : vector<2x8x128xf32>
    %37 = tpu.matmul %35, %36, %cst_20 {dimension_numbers = #tpu.dot_dimension_numbers<[2], [1], [1], [2], [0, 0, 0, 1, 1, 2], [0], [0]>} : vector<2x8x8xbf16>, vector<2x8x128xbf16>, vector<2x8x128xf32> -> vector<2x8x128xf32>
    "tpu.trace_stop"() : () -> ()
    %38 = arith.truncf %37 : vector<2x8x128xf32> to vector<2x8x128xbf16>
    %c0_21 = arith.constant 0 : index
    %c0_22 = arith.constant 0 : index
    %39 = vector.load %arg8[%c0_21, %c0_22] : memref<128x128xbf16, #tpu.memory_space<vmem>>, vector<128x128xbf16>
    "tpu.trace_start"() <{level = 10 : i32, message = "sld,de->sle"}> : () -> ()
    %cst_23 = arith.constant dense<0.000000e+00> : vector<2x8x128xf32>
    %40 = tpu.matmul %38, %39, %cst_23 {dimension_numbers = #tpu.dot_dimension_numbers<[2], [0], [0, 1], [1], [0, 0, 0, 1, 1, 1], [], []>} : vector<2x8x128xbf16>, vector<128x128xbf16>, vector<2x8x128xf32> -> vector<2x8x128xf32>
    "tpu.trace_stop"() : () -> ()
    %c0_24 = arith.constant 0 : index
    %c0_25 = arith.constant 0 : index
    %41 = vector.load %arg9[%c0_24, %c0_25] : memref<1x128xf32, #tpu.memory_space<vmem>>, vector<1x128xf32>
    %42 = vector.shape_cast %41 : vector<1x128xf32> to vector<1x1x128xf32>
    %43 = vector.broadcast %42 : vector<1x1x128xf32> to vector<2x8x128xf32>
    %44 = arith.addf %40, %43 : vector<2x8x128xf32>
    %45 = arith.addf %44, %0 : vector<2x8x128xf32>
    %cst_26 = arith.constant dense<0.000000e+00> : vector<2x8xf32>
    %46 = vector.multi_reduction <add>, %45, %cst_26 [2] : vector<2x8x128xf32> to vector<2x8xf32>
    %47 = vector.shape_cast %46 : vector<2x8xf32> to vector<2x8x1xf32>
    %cst_27 = arith.constant 1.280000e+02 : f32
    %48 = vector.broadcast %cst_27 : f32 to vector<2x8x1xf32>
    %49 = arith.divf %47, %48 : vector<2x8x1xf32>
    %50 = vector.broadcast %49 : vector<2x8x1xf32> to vector<2x8x128xf32>
    %51 = arith.subf %45, %50 : vector<2x8x128xf32>
    %52 = vector.broadcast %49 : vector<2x8x1xf32> to vector<2x8x128xf32>
    %53 = arith.subf %45, %52 : vector<2x8x128xf32>
    %54 = arith.mulf %51, %53 : vector<2x8x128xf32>
    %cst_28 = arith.constant dense<0.000000e+00> : vector<2x8xf32>
    %55 = vector.multi_reduction <add>, %54, %cst_28 [2] : vector<2x8x128xf32> to vector<2x8xf32>
    %56 = vector.shape_cast %55 : vector<2x8xf32> to vector<2x8x1xf32>
    %cst_29 = arith.constant 1.280000e+02 : f32
    %57 = vector.broadcast %cst_29 : f32 to vector<2x8x1xf32>
    %58 = arith.divf %56, %57 : vector<2x8x1xf32>
    %59 = vector.broadcast %49 : vector<2x8x1xf32> to vector<2x8x128xf32>
    %60 = arith.subf %45, %59 : vector<2x8x128xf32>
    %cst_30 = arith.constant 9.99999974E-6 : f32
    %61 = vector.broadcast %cst_30 : f32 to vector<2x8x1xf32>
    %62 = arith.addf %58, %61 : vector<2x8x1xf32>
    %63 = math.rsqrt %62 : vector<2x8x1xf32>
    %64 = vector.broadcast %63 : vector<2x8x1xf32> to vector<2x8x128xf32>
    %65 = arith.mulf %60, %64 : vector<2x8x128xf32>
    %c0_31 = arith.constant 0 : index
    %c0_32 = arith.constant 0 : index
    %66 = vector.load %arg10[%c0_31, %c0_32] : memref<1x128xf32, #tpu.memory_space<vmem>>, vector<1x128xf32>
    %67 = vector.shape_cast %66 : vector<1x128xf32> to vector<1x1x128xf32>
    %68 = vector.broadcast %67 : vector<1x1x128xf32> to vector<2x8x128xf32>
    %69 = arith.mulf %65, %68 : vector<2x8x128xf32>
    %c0_33 = arith.constant 0 : index
    %c0_34 = arith.constant 0 : index
    %70 = vector.load %arg11[%c0_33, %c0_34] : memref<1x128xf32, #tpu.memory_space<vmem>>, vector<1x128xf32>
    %71 = vector.shape_cast %70 : vector<1x128xf32> to vector<1x1x128xf32>
    %72 = vector.broadcast %71 : vector<1x1x128xf32> to vector<2x8x128xf32>
    %73 = arith.addf %69, %72 : vector<2x8x128xf32>
    %c0_35 = arith.constant 0 : index
    %c0_36 = arith.constant 0 : index
    %74 = vector.load %arg12[%c0_35, %c0_36] : memref<1x128xf32, #tpu.memory_space<vmem>>, vector<1x128xf32>
    %75 = vector.shape_cast %74 : vector<1x128xf32> to vector<1x1x128xf32>
    %76 = vector.broadcast %75 : vector<1x1x128xf32> to vector<2x8x128xf32>
    %77 = arith.mulf %73, %76 : vector<2x8x128xf32>
    %cst_37 = arith.constant dense<0.000000e+00> : vector<2x8xf32>
    %78 = vector.multi_reduction <add>, %77, %cst_37 [2] : vector<2x8x128xf32> to vector<2x8xf32>
    %c0_38 = arith.constant 0 : index
    %c0_39 = arith.constant 0 : index
    %79 = vector.load %arg13[%c0_38, %c0_39] : memref<1x1xf32, #tpu.memory_space<vmem>>, vector<1x1xf32>
    %80 = vector.broadcast %79 : vector<1x1xf32> to vector<2x8xf32>
    %81 = arith.addf %78, %80 : vector<2x8xf32>
    %cst_40 = arith.constant dense<0xFF800000> : vector<2xf32>
    %82 = vector.multi_reduction <maximumf>, %81, %cst_40 [1] : vector<2x8xf32> to vector<2xf32>
    %83 = vector.shape_cast %82 : vector<2xf32> to vector<2x1xf32>
    %84 = vector.broadcast %83 : vector<2x1xf32> to vector<2x8xf32>
    %85 = arith.subf %81, %84 : vector<2x8xf32>
    %86 = math.exp %85 : vector<2x8xf32>
    %cst_41 = arith.constant dense<0.000000e+00> : vector<2xf32>
    %87 = vector.multi_reduction <add>, %86, %cst_41 [1] : vector<2x8xf32> to vector<2xf32>
    %88 = vector.shape_cast %87 : vector<2xf32> to vector<2x1xf32>
    %89 = tpu.reciprocal %88 {approx = true} : vector<2x1xf32> -> vector<2x1xf32>
    %90 = vector.broadcast %89 : vector<2x1xf32> to vector<2x8xf32>
    %91 = arith.mulf %86, %90 : vector<2x8xf32>
    %c0_42 = arith.constant 0 : index
    %c0_43 = arith.constant 0 : index
    %92 = vector.load %arg22[%c0_42, %c0_43] : memref<2x8xf32, #tpu.memory_space<vmem>>, vector<2x8xf32>
    tpu.vector_store %arg22[%c0_42, %c0_43], %91 {strides = array<i32>} : memref<2x8xf32, #tpu.memory_space<vmem>>, vector<2x8xf32>,
    %93 = vector.shape_cast %91 : vector<2x8xf32> to vector<2x8x1xf32>
    %94 = vector.broadcast %93 : vector<2x8x1xf32> to vector<2x8x128xf32>
    %95 = arith.mulf %94, %0 : vector<2x8x128xf32>
    %cst_44 = arith.constant dense<0.000000e+00> : vector<2x128xf32>
    %96 = vector.multi_reduction <add>, %95, %cst_44 [1] : vector<2x8x128xf32> to vector<2x128xf32>
    %c0_45 = arith.constant 0 : index
    %c0_46 = arith.constant 0 : index
    %97 = vector.load %arg20[%c0_45, %c0_46] : memref<2x128xf32, #tpu.memory_space<vmem>>, vector<2x128xf32>
    tpu.vector_store %arg20[%c0_45, %c0_46], %96 {strides = array<i32>} : memref<2x128xf32, #tpu.memory_space<vmem>>, vector<2x128xf32>,
    %98 = arith.truncf %96 : vector<2x128xf32> to vector<2x128xbf16>
    %c0_47 = arith.constant 0 : index
    %c0_48 = arith.constant 0 : index
    %99 = vector.load %arg14[%c0_47, %c0_48] : memref<128x128xbf16, #tpu.memory_space<vmem>>, vector<128x128xbf16>
    %cst_49 = arith.constant dense<0.000000e+00> : vector<2x128xf32>
    %100 = tpu.matmul %98, %99, %cst_49 {dimension_numbers = #tpu.dot_dimension_numbers<[1], [0], [0], [1], [0, 0, 1, 1], [], []>} : vector<2x128xbf16>, vector<128x128xbf16>, vector<2x128xf32> -> vector<2x128xf32>
    %c0_50 = arith.constant 0 : index
    %c0_51 = arith.constant 0 : index
    %101 = vector.load %arg15[%c0_50, %c0_51] : memref<1x128xf32, #tpu.memory_space<vmem>>, vector<1x128xf32>
    %102 = vector.broadcast %101 : vector<1x128xf32> to vector<2x128xf32>
    %103 = arith.addf %100, %102 : vector<2x128xf32>
    %cst_52 = arith.constant 0.000000e+00 : f32
    %104 = vector.broadcast %cst_52 : f32 to vector<2x128xf32>
    %105 = arith.maximumf %103, %104 : vector<2x128xf32>
    %106 = arith.truncf %105 : vector<2x128xf32> to vector<2x128xbf16>
    %c0_53 = arith.constant 0 : index
    %c0_54 = arith.constant 0 : index
    %107 = vector.load %arg16[%c0_53, %c0_54] : memref<128x128xbf16, #tpu.memory_space<vmem>>, vector<128x128xbf16>
    %cst_55 = arith.constant dense<0.000000e+00> : vector<2x128xf32>
    %108 = tpu.matmul %106, %107, %cst_55 {dimension_numbers = #tpu.dot_dimension_numbers<[1], [0], [0], [1], [0, 0, 1, 1], [], []>} : vector<2x128xbf16>, vector<128x128xbf16>, vector<2x128xf32> -> vector<2x128xf32>
    %c0_56 = arith.constant 0 : index
    %c0_57 = arith.constant 0 : index
    %109 = vector.load %arg17[%c0_56, %c0_57] : memref<1x128xf32, #tpu.memory_space<vmem>>, vector<1x128xf32>
    %110 = vector.broadcast %109 : vector<1x128xf32> to vector<2x128xf32>
    %111 = arith.addf %108, %110 : vector<2x128xf32>
    %cst_58 = arith.constant 0.000000e+00 : f32
    %112 = vector.broadcast %cst_58 : f32 to vector<2x128xf32>
    %113 = arith.maximumf %111, %112 : vector<2x128xf32>
    %114 = arith.truncf %113 : vector<2x128xf32> to vector<2x128xbf16>
    %c0_59 = arith.constant 0 : index
    %c0_60 = arith.constant 0 : index
    %115 = vector.load %arg18[%c0_59, %c0_60] : memref<128x256xbf16, #tpu.memory_space<vmem>>, vector<128x256xbf16>
    %cst_61 = arith.constant dense<0.000000e+00> : vector<2x256xf32>
    %116 = tpu.matmul %114, %115, %cst_61 {dimension_numbers = #tpu.dot_dimension_numbers<[1], [0], [0], [1], [0, 0, 1, 1], [], []>} : vector<2x128xbf16>, vector<128x256xbf16>, vector<2x256xf32> -> vector<2x256xf32>
    %c0_62 = arith.constant 0 : index
    %c0_63 = arith.constant 0 : index
    %117 = vector.load %arg19[%c0_62, %c0_63] : memref<1x256xf32, #tpu.memory_space<vmem>>, vector<1x256xf32>
    %118 = vector.broadcast %117 : vector<1x256xf32> to vector<2x256xf32>
    %119 = arith.addf %116, %118 : vector<2x256xf32>
    %c0_64 = arith.constant 0 : index
    %c0_65 = arith.constant 0 : index
    %120 = vector.load %arg21[%c0_64, %c0_65] : memref<2x256xf32, #tpu.memory_space<vmem>>, vector<2x256xf32>
    tpu.vector_store %arg21[%c0_64, %c0_65], %119 {strides = array<i32>} : memref<2x256xf32, #tpu.memory_space<vmem>>, vector<2x256xf32>,
    return
  }
  func.func @transform_0(%arg0: i32) -> (i32, i32, i32) {
    %c0_i32 = arith.constant 0 : i32
    %c0_i32_0 = arith.constant 0 : i32
    %c0_i32_1 = arith.constant 0 : i32
    return %arg0, %c0_i32, %c0_i32_0 : i32, i32, i32
  }
  func.func @transform_1(%arg0: i32) -> (i32, i32) {
    %c0_i32 = arith.constant 0 : i32
    %c0_i32_0 = arith.constant 0 : i32
    %c0_i32_1 = arith.constant 0 : i32
    return %c0_i32, %c0_i32_0 : i32, i32
  }
  func.func @transform_2(%arg0: i32) -> (i32, i32) {
    %c0_i32 = arith.constant 0 : i32
    %c0_i32_0 = arith.constant 0 : i32
    %c0_i32_1 = arith.constant 0 : i32
    return %c0_i32, %c0_i32_0 : i32, i32
  }
  func.func @transform_3(%arg0: i32) -> (i32, i32) {
    %c0_i32 = arith.constant 0 : i32
    %c0_i32_0 = arith.constant 0 : i32
    %c0_i32_1 = arith.constant 0 : i32
    return %c0_i32, %c0_i32_0 : i32, i32
  }
  func.func @transform_4(%arg0: i32) -> (i32, i32) {
    %c0_i32 = arith.constant 0 : i32
    %c0_i32_0 = arith.constant 0 : i32
    %c0_i32_1 = arith.constant 0 : i32
    return %c0_i32, %c0_i32_0 : i32, i32
  }
  func.func @transform_5(%arg0: i32) -> (i32, i32) {
    %c0_i32 = arith.constant 0 : i32
    %c0_i32_0 = arith.constant 0 : i32
    %c0_i32_1 = arith.constant 0 : i32
    return %c0_i32, %c0_i32_0 : i32, i32
  }
  func.func @transform_6(%arg0: i32) -> (i32, i32) {
    %c0_i32 = arith.constant 0 : i32
    %c0_i32_0 = arith.constant 0 : i32
    %c0_i32_1 = arith.constant 0 : i32
    return %c0_i32, %c0_i32_0 : i32, i32
  }
  func.func @transform_7(%arg0: i32) -> (i32, i32) {
    %c0_i32 = arith.constant 0 : i32
    %c0_i32_0 = arith.constant 0 : i32
    %c0_i32_1 = arith.constant 0 : i32
    return %c0_i32, %c0_i32_0 : i32, i32
  }
  func.func @transform_8(%arg0: i32) -> (i32, i32) {
    %c0_i32 = arith.constant 0 : i32
    %c0_i32_0 = arith.constant 0 : i32
    %c0_i32_1 = arith.constant 0 : i32
    return %c0_i32, %c0_i32_0 : i32, i32
  }
  func.func @transform_9(%arg0: i32) -> (i32, i32) {
    %c0_i32 = arith.constant 0 : i32
    %c0_i32_0 = arith.constant 0 : i32
    %c0_i32_1 = arith.constant 0 : i32
    return %c0_i32, %c0_i32_0 : i32, i32
  }
  func.func @transform_10(%arg0: i32) -> (i32, i32) {
    %c0_i32 = arith.constant 0 : i32
    %c0_i32_0 = arith.constant 0 : i32
    %c0_i32_1 = arith.constant 0 : i32
    return %c0_i32, %c0_i32_0 : i32, i32
  }
  func.func @transform_11(%arg0: i32) -> (i32, i32) {
    %c0_i32 = arith.constant 0 : i32
    %c0_i32_0 = arith.constant 0 : i32
    %c0_i32_1 = arith.constant 0 : i32
    return %c0_i32, %c0_i32_0 : i32, i32
  }
  func.func @transform_12(%arg0: i32) -> (i32, i32) {
    %c0_i32 = arith.constant 0 : i32
    %c0_i32_0 = arith.constant 0 : i32
    %c0_i32_1 = arith.constant 0 : i32
    return %c0_i32, %c0_i32_0 : i32, i32
  }
  func.func @transform_13(%arg0: i32) -> (i32, i32) {
    %c0_i32 = arith.constant 0 : i32
    %c0_i32_0 = arith.constant 0 : i32
    %c0_i32_1 = arith.constant 0 : i32
    return %c0_i32, %c0_i32_0 : i32, i32
  }
  func.func @transform_14(%arg0: i32) -> (i32, i32) {
    %c0_i32 = arith.constant 0 : i32
    %c0_i32_0 = arith.constant 0 : i32
    %c0_i32_1 = arith.constant 0 : i32
    return %c0_i32, %c0_i32_0 : i32, i32
  }
  func.func @transform_15(%arg0: i32) -> (i32, i32) {
    %c0_i32 = arith.constant 0 : i32
    %c0_i32_0 = arith.constant 0 : i32
    %c0_i32_1 = arith.constant 0 : i32
    return %c0_i32, %c0_i32_0 : i32, i32
  }
  func.func @transform_16(%arg0: i32) -> (i32, i32) {
    %c0_i32 = arith.constant 0 : i32
    %c0_i32_0 = arith.constant 0 : i32
    %c0_i32_1 = arith.constant 0 : i32
    return %c0_i32, %c0_i32_0 : i32, i32
  }
  func.func @transform_17(%arg0: i32) -> (i32, i32) {
    %c0_i32 = arith.constant 0 : i32
    %c0_i32_0 = arith.constant 0 : i32
    %c0_i32_1 = arith.constant 0 : i32
    return %c0_i32, %c0_i32_0 : i32, i32
  }
  func.func @transform_18(%arg0: i32) -> (i32, i32) {
    %c0_i32 = arith.constant 0 : i32
    %c0_i32_0 = arith.constant 0 : i32
    %c0_i32_1 = arith.constant 0 : i32
    return %c0_i32, %c0_i32_0 : i32, i32
  }
  func.func @transform_19(%arg0: i32) -> (i32, i32) {
    %c0_i32 = arith.constant 0 : i32
    %c0_i32_0 = arith.constant 0 : i32
    return %arg0, %c0_i32 : i32, i32
  }
  func.func @transform_20(%arg0: i32) -> (i32, i32) {
    %c0_i32 = arith.constant 0 : i32
    %c0_i32_0 = arith.constant 0 : i32
    return %arg0, %c0_i32 : i32, i32
  }
  func.func @transform_21(%arg0: i32) -> (i32, i32) {
    %c0_i32 = arith.constant 0 : i32
    %c0_i32_0 = arith.constant 0 : i32
    return %arg0, %c0_i32 : i32, i32
  }
}

module attributes {stable_mosaic.version = 11 : i64} {
  func.func @_point_encoder_kernel(%arg0: i32, %arg1: memref<8x64x3xf32, #tpu.memory_space<vmem>>, %arg2: memref<3x128xf32, #tpu.memory_space<vmem>>, %arg3: memref<1x128xf32, #tpu.memory_space<vmem>>, %arg4: memref<128x256xbf16, #tpu.memory_space<vmem>>, %arg5: memref<1x256xf32, #tpu.memory_space<vmem>>, %arg6: memref<256x512xbf16, #tpu.memory_space<vmem>>, %arg7: memref<256x512xbf16, #tpu.memory_space<vmem>>, %arg8: memref<1x512xf32, #tpu.memory_space<vmem>>, %arg9: memref<512x128xbf16, #tpu.memory_space<vmem>>, %arg10: memref<1x128xf32, #tpu.memory_space<vmem>>, %arg11: memref<8x128xf32, #tpu.memory_space<vmem>>) attributes {dimension_semantics = [#tpu.dimension_semantics<parallel>], iteration_bounds = array<i64: 2>, scalar_prefetch = 0 : i64, scratch_operands = 0 : i64, tpu.core_type = #tpu.core_type<tc>, window_params = [{transform_indices = @transform_0, window_bounds = array<i64: 8, 64, 3>}, {pipeline_mode = #tpu.pipeline_mode<synchronous>, transform_indices = @transform_1, window_bounds = array<i64: 3, 128>}, {pipeline_mode = #tpu.pipeline_mode<synchronous>, transform_indices = @transform_2, window_bounds = array<i64: 1, 128>}, {pipeline_mode = #tpu.pipeline_mode<synchronous>, transform_indices = @transform_3, window_bounds = array<i64: 128, 256>}, {pipeline_mode = #tpu.pipeline_mode<synchronous>, transform_indices = @transform_4, window_bounds = array<i64: 1, 256>}, {pipeline_mode = #tpu.pipeline_mode<synchronous>, transform_indices = @transform_5, window_bounds = array<i64: 256, 512>}, {pipeline_mode = #tpu.pipeline_mode<synchronous>, transform_indices = @transform_6, window_bounds = array<i64: 256, 512>}, {pipeline_mode = #tpu.pipeline_mode<synchronous>, transform_indices = @transform_7, window_bounds = array<i64: 1, 512>}, {pipeline_mode = #tpu.pipeline_mode<synchronous>, transform_indices = @transform_8, window_bounds = array<i64: 512, 128>}, {pipeline_mode = #tpu.pipeline_mode<synchronous>, transform_indices = @transform_9, window_bounds = array<i64: 1, 128>}, {transform_indices = @transform_10, window_bounds = array<i64: 8, 128>}]} {
    %c0 = arith.constant 0 : index
    %c0_0 = arith.constant 0 : index
    %c0_1 = arith.constant 0 : index
    %0 = vector.load %arg1[%c0, %c0_0, %c0_1] : memref<8x64x3xf32, #tpu.memory_space<vmem>>, vector<8x64x3xf32>
    %1 = vector.extract_strided_slice %0 {offsets = [0, 0, 0], sizes = [8, 64, 1], strides = [1, 1, 1]} : vector<8x64x3xf32> to vector<8x64x1xf32>
    %c0_2 = arith.constant 0 : index
    %c0_3 = arith.constant 0 : index
    %2 = vector.load %arg2[%c0_2, %c0_3] : memref<3x128xf32, #tpu.memory_space<vmem>>, vector<1x128xf32>
    %3 = vector.shape_cast %2 : vector<1x128xf32> to vector<1x1x128xf32>
    %4 = vector.broadcast %1 : vector<8x64x1xf32> to vector<8x64x128xf32>
    %5 = vector.broadcast %3 : vector<1x1x128xf32> to vector<8x64x128xf32>
    %6 = arith.mulf %4, %5 : vector<8x64x128xf32>
    %7 = vector.extract_strided_slice %0 {offsets = [0, 0, 1], sizes = [8, 64, 1], strides = [1, 1, 1]} : vector<8x64x3xf32> to vector<8x64x1xf32>
    %c1 = arith.constant 1 : index
    %c0_4 = arith.constant 0 : index
    %8 = vector.load %arg2[%c1, %c0_4] : memref<3x128xf32, #tpu.memory_space<vmem>>, vector<1x128xf32>
    %9 = vector.shape_cast %8 : vector<1x128xf32> to vector<1x1x128xf32>
    %10 = vector.broadcast %7 : vector<8x64x1xf32> to vector<8x64x128xf32>
    %11 = vector.broadcast %9 : vector<1x1x128xf32> to vector<8x64x128xf32>
    %12 = arith.mulf %10, %11 : vector<8x64x128xf32>
    %13 = arith.addf %6, %12 : vector<8x64x128xf32>
    %14 = vector.extract_strided_slice %0 {offsets = [0, 0, 2], sizes = [8, 64, 1], strides = [1, 1, 1]} : vector<8x64x3xf32> to vector<8x64x1xf32>
    %c2 = arith.constant 2 : index
    %c0_5 = arith.constant 0 : index
    %15 = vector.load %arg2[%c2, %c0_5] : memref<3x128xf32, #tpu.memory_space<vmem>>, vector<1x128xf32>
    %16 = vector.shape_cast %15 : vector<1x128xf32> to vector<1x1x128xf32>
    %17 = vector.broadcast %14 : vector<8x64x1xf32> to vector<8x64x128xf32>
    %18 = vector.broadcast %16 : vector<1x1x128xf32> to vector<8x64x128xf32>
    %19 = arith.mulf %17, %18 : vector<8x64x128xf32>
    %20 = arith.addf %13, %19 : vector<8x64x128xf32>
    %c0_6 = arith.constant 0 : index
    %c0_7 = arith.constant 0 : index
    %21 = vector.load %arg3[%c0_6, %c0_7] : memref<1x128xf32, #tpu.memory_space<vmem>>, vector<1x128xf32>
    %22 = vector.shape_cast %21 : vector<1x128xf32> to vector<1x1x128xf32>
    %23 = vector.broadcast %22 : vector<1x1x128xf32> to vector<8x64x128xf32>
    %24 = arith.addf %20, %23 : vector<8x64x128xf32>
    %cst = arith.constant 0.000000e+00 : f32
    %25 = vector.broadcast %cst : f32 to vector<8x64x128xf32>
    %26 = arith.maximumf %24, %25 : vector<8x64x128xf32>
    %27 = vector.shape_cast %26 : vector<8x64x128xf32> to vector<512x128xf32>
    %28 = arith.truncf %27 : vector<512x128xf32> to vector<512x128xbf16>
    %c0_8 = arith.constant 0 : index
    %c0_9 = arith.constant 0 : index
    %29 = vector.load %arg4[%c0_8, %c0_9] : memref<128x256xbf16, #tpu.memory_space<vmem>>, vector<128x256xbf16>
    %cst_10 = arith.constant dense<0.000000e+00> : vector<512x256xf32>
    %30 = tpu.matmul %28, %29, %cst_10 {dimension_numbers = #tpu.dot_dimension_numbers<[1], [0], [0], [1], [0, 0, 1, 1], [], []>} : vector<512x128xbf16>, vector<128x256xbf16>, vector<512x256xf32> -> vector<512x256xf32>
    %c0_11 = arith.constant 0 : index
    %c0_12 = arith.constant 0 : index
    %31 = vector.load %arg5[%c0_11, %c0_12] : memref<1x256xf32, #tpu.memory_space<vmem>>, vector<1x256xf32>
    %32 = vector.broadcast %31 : vector<1x256xf32> to vector<512x256xf32>
    %33 = arith.addf %30, %32 : vector<512x256xf32>
    %34 = vector.shape_cast %33 : vector<512x256xf32> to vector<8x64x256xf32>
    %cst_13 = arith.constant dense<0xFF800000> : vector<8x256xf32>
    %35 = vector.multi_reduction <maximumf>, %34, %cst_13 [1] : vector<8x64x256xf32> to vector<8x256xf32>
    %36 = arith.truncf %35 : vector<8x256xf32> to vector<8x256xbf16>
    %c0_14 = arith.constant 0 : index
    %c0_15 = arith.constant 0 : index
    %37 = vector.load %arg7[%c0_14, %c0_15] : memref<256x512xbf16, #tpu.memory_space<vmem>>, vector<256x512xbf16>
    %cst_16 = arith.constant dense<0.000000e+00> : vector<8x512xf32>
    %38 = tpu.matmul %36, %37, %cst_16 {dimension_numbers = #tpu.dot_dimension_numbers<[1], [0], [0], [1], [0, 0, 1, 1], [], []>} : vector<8x256xbf16>, vector<256x512xbf16>, vector<8x512xf32> -> vector<8x512xf32>
    %c0_17 = arith.constant 0 : index
    %c0_18 = arith.constant 0 : index
    %39 = vector.load %arg8[%c0_17, %c0_18] : memref<1x512xf32, #tpu.memory_space<vmem>>, vector<1x512xf32>
    %40 = vector.broadcast %39 : vector<1x512xf32> to vector<8x512xf32>
    %41 = arith.addf %38, %40 : vector<8x512xf32>
    %42 = arith.truncf %33 : vector<512x256xf32> to vector<512x256xbf16>
    %c0_19 = arith.constant 0 : index
    %c0_20 = arith.constant 0 : index
    %43 = vector.load %arg6[%c0_19, %c0_20] : memref<256x512xbf16, #tpu.memory_space<vmem>>, vector<256x512xbf16>
    %cst_21 = arith.constant dense<0.000000e+00> : vector<512x512xf32>
    %44 = tpu.matmul %42, %43, %cst_21 {dimension_numbers = #tpu.dot_dimension_numbers<[1], [0], [0], [1], [0, 0, 1, 1], [], []>} : vector<512x256xbf16>, vector<256x512xbf16>, vector<512x512xf32> -> vector<512x512xf32>
    %45 = vector.shape_cast %44 : vector<512x512xf32> to vector<8x64x512xf32>
    %46 = vector.shape_cast %41 : vector<8x512xf32> to vector<8x1x512xf32>
    %47 = vector.broadcast %46 : vector<8x1x512xf32> to vector<8x64x512xf32>
    %48 = arith.addf %45, %47 : vector<8x64x512xf32>
    %cst_22 = arith.constant 0.000000e+00 : f32
    %49 = vector.broadcast %cst_22 : f32 to vector<8x64x512xf32>
    %50 = arith.maximumf %48, %49 : vector<8x64x512xf32>
    %51 = vector.shape_cast %50 : vector<8x64x512xf32> to vector<512x512xf32>
    %52 = arith.truncf %51 : vector<512x512xf32> to vector<512x512xbf16>
    %c0_23 = arith.constant 0 : index
    %c0_24 = arith.constant 0 : index
    %53 = vector.load %arg9[%c0_23, %c0_24] : memref<512x128xbf16, #tpu.memory_space<vmem>>, vector<512x128xbf16>
    %cst_25 = arith.constant dense<0.000000e+00> : vector<512x128xf32>
    %54 = tpu.matmul %52, %53, %cst_25 {dimension_numbers = #tpu.dot_dimension_numbers<[1], [0], [0], [1], [0, 0, 1, 1], [], []>} : vector<512x512xbf16>, vector<512x128xbf16>, vector<512x128xf32> -> vector<512x128xf32>
    %55 = vector.shape_cast %54 : vector<512x128xf32> to vector<8x64x128xf32>
    %cst_26 = arith.constant dense<0xFF800000> : vector<8x128xf32>
    %56 = vector.multi_reduction <maximumf>, %55, %cst_26 [1] : vector<8x64x128xf32> to vector<8x128xf32>
    %c0_27 = arith.constant 0 : index
    %c0_28 = arith.constant 0 : index
    %57 = vector.load %arg10[%c0_27, %c0_28] : memref<1x128xf32, #tpu.memory_space<vmem>>, vector<1x128xf32>
    %58 = vector.broadcast %57 : vector<1x128xf32> to vector<8x128xf32>
    %59 = arith.addf %56, %58 : vector<8x128xf32>
    %c0_29 = arith.constant 0 : index
    %c0_30 = arith.constant 0 : index
    %60 = vector.load %arg11[%c0_29, %c0_30] : memref<8x128xf32, #tpu.memory_space<vmem>>, vector<8x128xf32>
    tpu.vector_store %arg11[%c0_29, %c0_30], %59 {strides = array<i32>} : memref<8x128xf32, #tpu.memory_space<vmem>>, vector<8x128xf32>,
    return
  }
  func.func @transform_0(%arg0: i32) -> (i32, i32, i32) {
    %c0_i32 = arith.constant 0 : i32
    %c0_i32_0 = arith.constant 0 : i32
    %c0_i32_1 = arith.constant 0 : i32
    return %arg0, %c0_i32, %c0_i32_0 : i32, i32, i32
  }
  func.func @transform_1(%arg0: i32) -> (i32, i32) {
    %c0_i32 = arith.constant 0 : i32
    %c0_i32_0 = arith.constant 0 : i32
    %c0_i32_1 = arith.constant 0 : i32
    return %c0_i32, %c0_i32_0 : i32, i32
  }
  func.func @transform_2(%arg0: i32) -> (i32, i32) {
    %c0_i32 = arith.constant 0 : i32
    %c0_i32_0 = arith.constant 0 : i32
    %c0_i32_1 = arith.constant 0 : i32
    return %c0_i32, %c0_i32_0 : i32, i32
  }
  func.func @transform_3(%arg0: i32) -> (i32, i32) {
    %c0_i32 = arith.constant 0 : i32
    %c0_i32_0 = arith.constant 0 : i32
    %c0_i32_1 = arith.constant 0 : i32
    return %c0_i32, %c0_i32_0 : i32, i32
  }
  func.func @transform_4(%arg0: i32) -> (i32, i32) {
    %c0_i32 = arith.constant 0 : i32
    %c0_i32_0 = arith.constant 0 : i32
    %c0_i32_1 = arith.constant 0 : i32
    return %c0_i32, %c0_i32_0 : i32, i32
  }
  func.func @transform_5(%arg0: i32) -> (i32, i32) {
    %c0_i32 = arith.constant 0 : i32
    %c0_i32_0 = arith.constant 0 : i32
    %c0_i32_1 = arith.constant 0 : i32
    return %c0_i32, %c0_i32_0 : i32, i32
  }
  func.func @transform_6(%arg0: i32) -> (i32, i32) {
    %c0_i32 = arith.constant 0 : i32
    %c0_i32_0 = arith.constant 0 : i32
    %c0_i32_1 = arith.constant 0 : i32
    return %c0_i32, %c0_i32_0 : i32, i32
  }
  func.func @transform_7(%arg0: i32) -> (i32, i32) {
    %c0_i32 = arith.constant 0 : i32
    %c0_i32_0 = arith.constant 0 : i32
    %c0_i32_1 = arith.constant 0 : i32
    return %c0_i32, %c0_i32_0 : i32, i32
  }
  func.func @transform_8(%arg0: i32) -> (i32, i32) {
    %c0_i32 = arith.constant 0 : i32
    %c0_i32_0 = arith.constant 0 : i32
    %c0_i32_1 = arith.constant 0 : i32
    return %c0_i32, %c0_i32_0 : i32, i32
  }
  func.func @transform_9(%arg0: i32) -> (i32, i32) {
    %c0_i32 = arith.constant 0 : i32
    %c0_i32_0 = arith.constant 0 : i32
    %c0_i32_1 = arith.constant 0 : i32
    return %c0_i32, %c0_i32_0 : i32, i32
  }
  func.func @transform_10(%arg0: i32) -> (i32, i32) {
    %c0_i32 = arith.constant 0 : i32
    %c0_i32_0 = arith.constant 0 : i32
    return %arg0, %c0_i32 : i32, i32
  }
}

</mosaic_0001>

<llo_original>
// kernel: _lambda_.3
$region0: #{_lambda_.3}
  #allocation0 [shape = 'u32[]', space=smem, size = 0x4, offset = 0x4, fixed_abs, tag = 'smem constant byte address 0x4 - core index']
  #allocation1 [shape = 'u32[144,128]{1,0:T(1,128)}', space=vmem, size = 0x12000, scoped, tag = 'internal scratch']
  #allocation2 [shape = 'f32[1,1]{1,0:T(1,128)S(1)}', space=vmem, size = 0x200, scoped, tag = 'scoped memory for _lambda_.3']
  %s0 = inlined_call_operand.vmem [shape: f32[2,8,128], index: 0, kind: input, shape index: {}]
  %s1 = inlined_call_operand.vmem [shape: bf16[128,128], index: 1, kind: input, shape index: {}]
  %s2 = inlined_call_operand.vmem [shape: f32[1,128], index: 2, kind: input, shape index: {}]
  %s3 = inlined_call_operand.vmem [shape: bf16[128,128], index: 3, kind: input, shape index: {}]
  %s4 = inlined_call_operand.vmem [shape: f32[1,128], index: 4, kind: input, shape index: {}]
  %s5 = inlined_call_operand.vmem [shape: bf16[128,128], index: 5, kind: input, shape index: {}]
  %s6 = inlined_call_operand.vmem [shape: f32[1,128], index: 6, kind: input, shape index: {}]
  %s7 = inlined_call_operand.vmem [shape: bf16[128,128], index: 7, kind: input, shape index: {}]
  %s8 = inlined_call_operand.vmem [shape: f32[1,128], index: 8, kind: input, shape index: {}]
  %s9 = inlined_call_operand.vmem [shape: f32[1,128], index: 9, kind: input, shape index: {}]
  %s10 = inlined_call_operand.vmem [shape: f32[1,128], index: 10, kind: input, shape index: {}]
  %s11 = inlined_call_operand.vmem [shape: f32[1,128], index: 11, kind: input, shape index: {}]
  %s12 = inlined_call_operand.<no memory space> [shape: f32[1,1], index: 12, kind: input, shape index: {}]
  %s13 = inlined_call_operand.vmem [shape: bf16[128,128], index: 13, kind: input, shape index: {}]
  %s14 = inlined_call_operand.vmem [shape: f32[1,128], index: 14, kind: input, shape index: {}]
  %s15 = inlined_call_operand.vmem [shape: bf16[128,128], index: 15, kind: input, shape index: {}]
  %s16 = inlined_call_operand.vmem [shape: f32[1,128], index: 16, kind: input, shape index: {}]
  %s17 = inlined_call_operand.vmem [shape: bf16[128,256], index: 17, kind: input, shape index: {}]
  %s18 = inlined_call_operand.vmem [shape: f32[1,256], index: 18, kind: input, shape index: {}]
  %s19 = inlined_call_operand.hbm [shape: f32[2,128], index: 19, kind: output, shape index: {0}]
  %s20 = inlined_call_operand.vmem [shape: f32[2,256], index: 20, kind: output, shape index: {1}]
  %s21 = inlined_call_operand.vmem [shape: f32[2,8], index: 21, kind: output, shape index: {2}]
  %22 = xla_tuple %s19, %s20, %s21
  %s23 = sld [smem:[#allocation0]]
  $region102: #{_lambda_.3} parent=0
    _
  %s25 = ssub.s32 1, %s23
  %s26 = scalar_select 0, %s25, %s23
  %v27 = vstv %s12
  %28 = vst [vmem:[#allocation2] sm:$0x1] %v27
  $region1: #{_lambda_.3} parent=0
    #allocation3 [shape = 'u8[1024]{0}', space=vmem, size = 0x400, scoped, tag = 'output window, operand 0, single buffered']
    #allocation4 [shape = 's32[1]{0}', space=sflag, size = 0x4, scoped, tag = 'scoped memory for _lambda_.3']
    %29 = vsyncpa [#allocation4], 0
    // Predicated region
    $region2: #{_lambda_.3} parent=1 // pred_check
      _
    $region3: #{_lambda_.3} parent=1 // pred_check_branch
      %31 = sbr.rel (0) target = $region5
    $region4: #{_lambda_.3} parent=1 // pred_region
      _
    $region5: #{_lambda_.3} parent=1 // pred_fallthru
      _
    // Predicated region
    $region6: #{_lambda_.3} parent=1 // pred_check
      _
    $region7: #{_lambda_.3} parent=1 // pred_check_branch
      %33 = sbr.rel (0) target = $region9
    $region8: #{_lambda_.3} parent=1 // pred_region
      _
    $region9: #{_lambda_.3} parent=1 // pred_fallthru
      _
    // Predicated region
    $region10: #{_lambda_.3} parent=1 // pred_check
      _
    $region11: #{_lambda_.3} parent=1 // pred_check_branch
      %35 = sbr.rel (0) target = $region13
    $region12: #{_lambda_.3} parent=1 // pred_region
      _
    $region13: #{_lambda_.3} parent=1 // pred_fallthru
      _
    // Predicated region
    $region14: #{_lambda_.3} parent=1 // pred_check
      _
    $region15: #{_lambda_.3} parent=1 // pred_check_branch
      %37 = sbr.rel (0) target = $region17
    $region16: #{_lambda_.3} parent=1 // pred_region
      _
    $region17: #{_lambda_.3} parent=1 // pred_fallthru
      _
    // Predicated region
    $region18: #{_lambda_.3} parent=1 // pred_check
      _
    $region19: #{_lambda_.3} parent=1 // pred_check_branch
      %39 = sbr.rel (0) target = $region21
    $region20: #{_lambda_.3} parent=1 // pred_region
      _
    $region21: #{_lambda_.3} parent=1 // pred_fallthru
      _
    // Predicated region
    $region22: #{_lambda_.3} parent=1 // pred_check
      _
    $region23: #{_lambda_.3} parent=1 // pred_check_branch
      %41 = sbr.rel (0) target = $region25
    $region24: #{_lambda_.3} parent=1 // pred_region
      _
    $region25: #{_lambda_.3} parent=1 // pred_fallthru
      _
    // Predicated region
    $region26: #{_lambda_.3} parent=1 // pred_check
      _
    $region27: #{_lambda_.3} parent=1 // pred_check_branch
      %43 = sbr.rel (0) target = $region29
    $region28: #{_lambda_.3} parent=1 // pred_region
      _
    $region29: #{_lambda_.3} parent=1 // pred_fallthru
      _
    // Predicated region
    $region30: #{_lambda_.3} parent=1 // pred_check
      _
    $region31: #{_lambda_.3} parent=1 // pred_check_branch
      %45 = sbr.rel (0) target = $region33
    $region32: #{_lambda_.3} parent=1 // pred_region
      _
    $region33: #{_lambda_.3} parent=1 // pred_fallthru
      _
    // Predicated region
    $region34: #{_lambda_.3} parent=1 // pred_check
      _
    $region35: #{_lambda_.3} parent=1 // pred_check_branch
      %47 = sbr.rel (0) target = $region37
    $region36: #{_lambda_.3} parent=1 // pred_region
      _
    $region37: #{_lambda_.3} parent=1 // pred_fallthru
      _
    // Predicated region
    $region38: #{_lambda_.3} parent=1 // pred_check
      _
    $region39: #{_lambda_.3} parent=1 // pred_check_branch
      %49 = sbr.rel (0) target = $region41
    $region40: #{_lambda_.3} parent=1 // pred_region
      _
    $region41: #{_lambda_.3} parent=1 // pred_fallthru
      _
    // Predicated region
    $region42: #{_lambda_.3} parent=1 // pred_check
      _
    $region43: #{_lambda_.3} parent=1 // pred_check_branch
      %51 = sbr.rel (0) target = $region45
    $region44: #{_lambda_.3} parent=1 // pred_region
      _
    $region45: #{_lambda_.3} parent=1 // pred_fallthru
      _
    // Predicated region
    $region46: #{_lambda_.3} parent=1 // pred_check
      _
    $region47: #{_lambda_.3} parent=1 // pred_check_branch
      %53 = sbr.rel (0) target = $region49
    $region48: #{_lambda_.3} parent=1 // pred_region
      _
    $region49: #{_lambda_.3} parent=1 // pred_fallthru
      _
    // Predicated region
    $region50: #{_lambda_.3} parent=1 // pred_check
      _
    $region51: #{_lambda_.3} parent=1 // pred_check_branch
      %55 = sbr.rel (0) target = $region53
    $region52: #{_lambda_.3} parent=1 // pred_region
      _
    $region53: #{_lambda_.3} parent=1 // pred_fallthru
      _
    // Predicated region
    $region54: #{_lambda_.3} parent=1 // pred_check
      _
    $region55: #{_lambda_.3} parent=1 // pred_check_branch
      %57 = sbr.rel (0) target = $region57
    $region56: #{_lambda_.3} parent=1 // pred_region
      _
    $region57: #{_lambda_.3} parent=1 // pred_fallthru
      _
    // Predicated region
    $region58: #{_lambda_.3} parent=1 // pred_check
      _
    $region59: #{_lambda_.3} parent=1 // pred_check_branch
      %59 = sbr.rel (0) target = $region61
    $region60: #{_lambda_.3} parent=1 // pred_region
      _
    $region61: #{_lambda_.3} parent=1 // pred_fallthru
      _
    // Predicated region
    $region62: #{_lambda_.3} parent=1 // pred_check
      _
    $region63: #{_lambda_.3} parent=1 // pred_check_branch
      %61 = sbr.rel (0) target = $region65
    $region64: #{_lambda_.3} parent=1 // pred_region
      _
    $region65: #{_lambda_.3} parent=1 // pred_fallthru
      _
    // Predicated region
    $region66: #{_lambda_.3} parent=1 // pred_check
      _
    $region67: #{_lambda_.3} parent=1 // pred_check_branch
      %63 = sbr.rel (0) target = $region69
    $region68: #{_lambda_.3} parent=1 // pred_region
      _
    $region69: #{_lambda_.3} parent=1 // pred_fallthru
      _
    // Predicated region
    $region70: #{_lambda_.3} parent=1 // pred_check
      _
    $region71: #{_lambda_.3} parent=1 // pred_check_branch
      %65 = sbr.rel (0) target = $region73
    $region72: #{_lambda_.3} parent=1 // pred_region
      _
    $region73: #{_lambda_.3} parent=1 // pred_fallthru
      _
    // Predicated region
    $region74: #{_lambda_.3} parent=1 // pred_check
      _
    $region75: #{_lambda_.3} parent=1 // pred_check_branch
      %67 = sbr.rel (0) target = $region77
    $region76: #{_lambda_.3} parent=1 // pred_region
      _
    $region77: #{_lambda_.3} parent=1 // pred_fallthru
      _
    %v69 = vld [vmem:[%s0] sm:$0xff]
    %v70 = vld [vmem:[%s0 + $0x8] sm:$0xff]
    %v71 = vpack.c.bf16 %v69, %v69
    %v72 = vpack.c.bf16 %v70, %v70
    %v73 = vld [vmem:[%s1] sm:$0xf]
    %v74 = vld [vmem:[%s1 + $0x4] sm:$0xf]
    %v75 = vld [vmem:[%s1 + $0x8] sm:$0xf]
    %v76 = vld [vmem:[%s1 + $0xc] sm:$0xf]
    %v77 = vld [vmem:[%s1 + $0x10] sm:$0xf]
    %v78 = vld [vmem:[%s1 + $0x14] sm:$0xf]
    %v79 = vld [vmem:[%s1 + $0x18] sm:$0xf]
    %v80 = vld [vmem:[%s1 + $0x1c] sm:$0xf]
    %v81 = vld [vmem:[%s1 + $0x20] sm:$0xf]
    %v82 = vld [vmem:[%s1 + $0x24] sm:$0xf]
    %v83 = vld [vmem:[%s1 + $0x28] sm:$0xf]
    %v84 = vld [vmem:[%s1 + $0x2c] sm:$0xf]
    %v85 = vld [vmem:[%s1 + $0x30] sm:$0xf]
    %v86 = vld [vmem:[%s1 + $0x34] sm:$0xf]
    %v87 = vld [vmem:[%s1 + $0x38] sm:$0xf]
    %v88 = vld [vmem:[%s1 + $0x3c] sm:$0xf]
    %v89 = vld [vmem:[%s2] sm:$0x1]
    %v91 = vlaneseq
    %v92 = vshrl.u32 %v91, 7
    %v93 = vsub.s32 0, %v92
    %v94 = vrot.slane %v89, %v93
    %v98 = vunpack.c.l.b16 %v71
    %v99 = vunpack.c.l.b16 %v72
    %v100 = vpack.c.b16 %v99, %v98
    %v118 = vunpack.c.l.b16 %v73
    %v119 = vunpack.c.l.b16 %v74
    %v120 = vunpack.c.l.b16 %v75
    %v121 = vunpack.c.l.b16 %v76
    %v122 = vunpack.c.l.b16 %v77
    %v123 = vunpack.c.l.b16 %v78
    %v124 = vunpack.c.l.b16 %v79
    %v125 = vunpack.c.l.b16 %v80
    %v126 = vunpack.c.l.b16 %v81
    %v127 = vunpack.c.l.b16 %v82
    %v128 = vunpack.c.l.b16 %v83
    %v129 = vunpack.c.l.b16 %v84
    %v130 = vunpack.c.l.b16 %v85
    %v131 = vunpack.c.l.b16 %v86
    %v132 = vunpack.c.l.b16 %v87
    %v133 = vunpack.c.l.b16 %v88
    %v134 = vpack.c.b16 %v119, %v118
    %v135 = vpack.c.b16 %v121, %v120
    %v136 = vpack.c.b16 %v123, %v122
    %v137 = vpack.c.b16 %v125, %v124
    %v138 = vpack.c.b16 %v127, %v126
    %v139 = vpack.c.b16 %v129, %v128
    %v140 = vpack.c.b16 %v131, %v130
    %v141 = vpack.c.b16 %v133, %v132
    %150 = vmatprep.subr.bf16.mxu0 0
    %151 = vmatpush1.bf16.msra.mxu0 %v134
    %152 = vmatprep.subr.bf16.mxu0 0
    %153 = vmatpush1.bf16.msra.mxu0 %v135
    %154 = vmatprep.subr.bf16.mxu0 0
    %155 = vmatpush1.bf16.msra.mxu0 %v136
    %156 = vmatprep.subr.bf16.mxu0 0
    %157 = vmatpush1.bf16.msra.mxu0 %v137
    %158 = vmatprep.subr.bf16.mxu0 0
    %159 = vmatpush1.bf16.msra.mxu0 %v138
    %160 = vmatprep.subr.bf16.mxu0 0
    %161 = vmatpush1.bf16.msra.mxu0 %v139
    %162 = vmatprep.subr.bf16.mxu0 0
    %163 = vmatpush1.bf16.msra.mxu0 %v140
    %164 = vmatprep.subr.bf16.mxu0 0
    %165 = vmatpush1.bf16.msra.mxu0 %v141
    %166 = vmatprep.subr.bf16.mxu0 0
    %167 = vmatpush1.bf16.msra.mxu0 0
    %168 = vmatprep.subr.bf16.mxu0 0
    %169 = vmatpush1.bf16.msra.mxu0 0
    %170 = vmatprep.subr.bf16.mxu0 0
    %171 = vmatpush1.bf16.msra.mxu0 0
    %172 = vmatprep.subr.bf16.mxu0 0
    %173 = vmatpush1.bf16.msra.mxu0 0
    %174 = vmatprep.subr.bf16.mxu0 0
    %175 = vmatpush1.bf16.msra.mxu0 0
    %176 = vmatprep.subr.bf16.mxu0 0
    %177 = vmatpush1.bf16.msra.mxu0 0
    %178 = vmatprep.subr.bf16.mxu0 0
    %179 = vmatpush1.bf16.msra.mxu0 0
    %180 = vmatprep.subr.bf16.mxu0 0
    %181 = vmatpush1.bf16.msra.mxu0 0
    %182 = vmatprep.mubr.bf16.mxu0 0
    %183 = vmatmul.mubr.bf16.gmra.mrb[0].mxu0 %v100
    %v184 = vpop.f32.mrb[0].mxu0
    %v185 = vadd.f32 %v94, %v184
    %v186 = vpop.f32.mrb[0].mxu0
    %v187 = vpop.f32.mrb[0].mxu0
    %v188 = vadd.f32 %v94, %v187
    %v189 = vpop.f32.mrb[0].mxu0
    %190 = vdwg.mxu0
    %v191 = vld [vmem:[%s3] sm:$0xf]
    %v192 = vld [vmem:[%s3 + $0x4] sm:$0xf]
    %v193 = vld [vmem:[%s3 + $0x8] sm:$0xf]
    %v194 = vld [vmem:[%s3 + $0xc] sm:$0xf]
    %v195 = vld [vmem:[%s3 + $0x10] sm:$0xf]
    %v196 = vld [vmem:[%s3 + $0x14] sm:$0xf]
    %v197 = vld [vmem:[%s3 + $0x18] sm:$0xf]
    %v198 = vld [vmem:[%s3 + $0x1c] sm:$0xf]
    %v199 = vld [vmem:[%s3 + $0x20] sm:$0xf]
    %v200 = vld [vmem:[%s3 + $0x24] sm:$0xf]
    %v201 = vld [vmem:[%s3 + $0x28] sm:$0xf]
    %v202 = vld [vmem:[%s3 + $0x2c] sm:$0xf]
    %v203 = vld [vmem:[%s3 + $0x30] sm:$0xf]
    %v204 = vld [vmem:[%s3 + $0x34] sm:$0xf]
    %v205 = vld [vmem:[%s3 + $0x38] sm:$0xf]
    %v206 = vld [vmem:[%s3 + $0x3c] sm:$0xf]
    %v207 = vld [vmem:[%s4] sm:$0x1]
    %v209 = vlaneseq
    %v210 = vshrl.u32 %v209, 7
    %v211 = vsub.s32 0, %v210
    %v212 = vrot.slane %v207, %v211
    %v230 = vunpack.c.l.b16 %v191
    %v231 = vunpack.c.l.b16 %v192
    %v232 = vunpack.c.l.b16 %v193
    %v233 = vunpack.c.l.b16 %v194
    %v234 = vunpack.c.l.b16 %v195
    %v235 = vunpack.c.l.b16 %v196
    %v236 = vunpack.c.l.b16 %v197
    %v237 = vunpack.c.l.b16 %v198
    %v238 = vunpack.c.l.b16 %v199
    %v239 = vunpack.c.l.b16 %v200
    %v240 = vunpack.c.l.b16 %v201
    %v241 = vunpack.c.l.b16 %v202
    %v242 = vunpack.c.l.b16 %v203
    %v243 = vunpack.c.l.b16 %v204
    %v244 = vunpack.c.l.b16 %v205
    %v245 = vunpack.c.l.b16 %v206
    %v246 = vpack.c.b16 %v231, %v230
    %v247 = vpack.c.b16 %v233, %v232
    %v248 = vpack.c.b16 %v235, %v234
    %v249 = vpack.c.b16 %v237, %v236
    %v250 = vpack.c.b16 %v239, %v238
    %v251 = vpack.c.b16 %v241, %v240
    %v252 = vpack.c.b16 %v243, %v242
    %v253 = vpack.c.b16 %v245, %v244
    %262 = vmatprep.subr.bf16.mxu0 0
    %263 = vmatpush1.bf16.msra.mxu0 %v246
    %264 = vmatprep.subr.bf16.mxu0 0
    %265 = vmatpush1.bf16.msra.mxu0 %v247
    %266 = vmatprep.subr.bf16.mxu0 0
    %267 = vmatpush1.bf16.msra.mxu0 %v248
    %268 = vmatprep.subr.bf16.mxu0 0
    %269 = vmatpush1.bf16.msra.mxu0 %v249
    %270 = vmatprep.subr.bf16.mxu0 0
    %271 = vmatpush1.bf16.msra.mxu0 %v250
    %272 = vmatprep.subr.bf16.mxu0 0
    %273 = vmatpush1.bf16.msra.mxu0 %v251
    %274 = vmatprep.subr.bf16.mxu0 0
    %275 = vmatpush1.bf16.msra.mxu0 %v252
    %276 = vmatprep.subr.bf16.mxu0 0
    %277 = vmatpush1.bf16.msra.mxu0 %v253
    %278 = vmatprep.subr.bf16.mxu0 0
    %279 = vmatpush1.bf16.msra.mxu0 0
    %280 = vmatprep.subr.bf16.mxu0 0
    %281 = vmatpush1.bf16.msra.mxu0 0
    %282 = vmatprep.subr.bf16.mxu0 0
    %283 = vmatpush1.bf16.msra.mxu0 0
    %284 = vmatprep.subr.bf16.mxu0 0
    %285 = vmatpush1.bf16.msra.mxu0 0
    %286 = vmatprep.subr.bf16.mxu0 0
    %287 = vmatpush1.bf16.msra.mxu0 0
    %288 = vmatprep.subr.bf16.mxu0 0
    %289 = vmatpush1.bf16.msra.mxu0 0
    %290 = vmatprep.subr.bf16.mxu0 0
    %291 = vmatpush1.bf16.msra.mxu0 0
    %292 = vmatprep.subr.bf16.mxu0 0
    %293 = vmatpush1.bf16.msra.mxu0 0
    %294 = vmatprep.mubr.bf16.mxu0 0
    %295 = vmatmul.mubr.bf16.gmra.mrb[0].mxu0 %v100
    %v296 = vpop.f32.mrb[0].mxu0
    %v297 = vadd.f32 %v212, %v296
    %v298 = vpop.f32.mrb[0].mxu0
    %v299 = vpop.f32.mrb[0].mxu0
    %v300 = vadd.f32 %v212, %v299
    %v301 = vpop.f32.mrb[0].mxu0
    %302 = vdwg.mxu0
    %v303 = vld [vmem:[%s5] sm:$0xf]
    %v304 = vld [vmem:[%s5 + $0x4] sm:$0xf]
    %v305 = vld [vmem:[%s5 + $0x8] sm:$0xf]
    %v306 = vld [vmem:[%s5 + $0xc] sm:$0xf]
    %v307 = vld [vmem:[%s5 + $0x10] sm:$0xf]
    %v308 = vld [vmem:[%s5 + $0x14] sm:$0xf]
    %v309 = vld [vmem:[%s5 + $0x18] sm:$0xf]
    %v310 = vld [vmem:[%s5 + $0x1c] sm:$0xf]
    %v311 = vld [vmem:[%s5 + $0x20] sm:$0xf]
    %v312 = vld [vmem:[%s5 + $0x24] sm:$0xf]
    %v313 = vld [vmem:[%s5 + $0x28] sm:$0xf]
    %v314 = vld [vmem:[%s5 + $0x2c] sm:$0xf]
    %v315 = vld [vmem:[%s5 + $0x30] sm:$0xf]
    %v316 = vld [vmem:[%s5 + $0x34] sm:$0xf]
    %v317 = vld [vmem:[%s5 + $0x38] sm:$0xf]
    %v318 = vld [vmem:[%s5 + $0x3c] sm:$0xf]
    %v319 = vld [vmem:[%s6] sm:$0x1]
    %v321 = vlaneseq
    %v322 = vshrl.u32 %v321, 7
    %v323 = vsub.s32 0, %v322
    %v324 = vrot.slane %v319, %v323
    %v342 = vunpack.c.l.b16 %v303
    %v343 = vunpack.c.l.b16 %v304
    %v344 = vunpack.c.l.b16 %v305
    %v345 = vunpack.c.l.b16 %v306
    %v346 = vunpack.c.l.b16 %v307
    %v347 = vunpack.c.l.b16 %v308
    %v348 = vunpack.c.l.b16 %v309
    %v349 = vunpack.c.l.b16 %v310
    %v350 = vunpack.c.l.b16 %v311
    %v351 = vunpack.c.l.b16 %v312
    %v352 = vunpack.c.l.b16 %v313
    %v353 = vunpack.c.l.b16 %v314
    %v354 = vunpack.c.l.b16 %v315
    %v355 = vunpack.c.l.b16 %v316
    %v356 = vunpack.c.l.b16 %v317
    %v357 = vunpack.c.l.b16 %v318
    %v358 = vpack.c.b16 %v343, %v342
    %v359 = vpack.c.b16 %v345, %v344
    %v360 = vpack.c.b16 %v347, %v346
    %v361 = vpack.c.b16 %v349, %v348
    %v362 = vpack.c.b16 %v351, %v350
    %v363 = vpack.c.b16 %v353, %v352
    %v364 = vpack.c.b16 %v355, %v354
    %v365 = vpack.c.b16 %v357, %v356
    %374 = vmatprep.subr.bf16.mxu0 0
    %375 = vmatpush1.bf16.msra.mxu0 %v358
    %376 = vmatprep.subr.bf16.mxu0 0
    %377 = vmatpush1.bf16.msra.mxu0 %v359
    %378 = vmatprep.subr.bf16.mxu0 0
    %379 = vmatpush1.bf16.msra.mxu0 %v360
    %380 = vmatprep.subr.bf16.mxu0 0
    %381 = vmatpush1.bf16.msra.mxu0 %v361
    %382 = vmatprep.subr.bf16.mxu0 0
    %383 = vmatpush1.bf16.msra.mxu0 %v362
    %384 = vmatprep.subr.bf16.mxu0 0
    %385 = vmatpush1.bf16.msra.mxu0 %v363
    %386 = vmatprep.subr.bf16.mxu0 0
    %387 = vmatpush1.bf16.msra.mxu0 %v364
    %388 = vmatprep.subr.bf16.mxu0 0
    %389 = vmatpush1.bf16.msra.mxu0 %v365
    %390 = vmatprep.subr.bf16.mxu0 0
    %391 = vmatpush1.bf16.msra.mxu0 0
    %392 = vmatprep.subr.bf16.mxu0 0
    %393 = vmatpush1.bf16.msra.mxu0 0
    %394 = vmatprep.subr.bf16.mxu0 0
    %395 = vmatpush1.bf16.msra.mxu0 0
    %396 = vmatprep.subr.bf16.mxu0 0
    %397 = vmatpush1.bf16.msra.mxu0 0
    %398 = vmatprep.subr.bf16.mxu0 0
    %399 = vmatpush1.bf16.msra.mxu0 0
    %400 = vmatprep.subr.bf16.mxu0 0
    %401 = vmatpush1.bf16.msra.mxu0 0
    %402 = vmatprep.subr.bf16.mxu0 0
    %403 = vmatpush1.bf16.msra.mxu0 0
    %404 = vmatprep.subr.bf16.mxu0 0
    %405 = vmatpush1.bf16.msra.mxu0 0
    %406 = vmatprep.mubr.bf16.mxu0 0
    %407 = vmatmul.mubr.bf16.gmra.mrb[0].mxu0 %v100
    %v408 = vpop.f32.mrb[0].mxu0
    %v409 = vadd.f32 %v324, %v408
    %v410 = vpop.f32.mrb[0].mxu0
    %v411 = vpop.f32.mrb[0].mxu0
    %v412 = vadd.f32 %v324, %v411
    %v413 = vpop.f32.mrb[0].mxu0
    %414 = vdwg.mxu0
    %v415 = vpack.c.bf16 %v185, %v185
    %v416 = vpack.c.bf16 %v188, %v188
    %v417 = vpack.c.bf16 %v297, %v297
    %v418 = vpack.c.bf16 %v300, %v300
    %419 = vmatprep.subr.bf16.mxu0 0
    %420 = vmatpush1.bf16.xpose.msra.mxu0 %v417
    %421 = vmatprep.subr.bf16.mxu0 0
    %422 = vmatpush1.bf16.xpose.msra.mxu0 0
    %423 = vmatprep.subr.bf16.mxu0 0
    %424 = vmatpush1.bf16.xpose.msra.mxu0 0
    %425 = vmatprep.subr.bf16.mxu0 0
    %426 = vmatpush1.bf16.xpose.msra.mxu0 0
    %427 = vmatprep.subr.bf16.mxu0 0
    %428 = vmatpush1.bf16.xpose.msra.mxu0 0
    %429 = vmatprep.subr.bf16.mxu0 0
    %430 = vmatpush1.bf16.xpose.msra.mxu0 0
    %431 = vmatprep.subr.bf16.mxu0 0
    %432 = vmatpush1.bf16.xpose.msra.mxu0 0
    %433 = vmatprep.subr.bf16.mxu0 0
    %434 = vmatpush1.bf16.xpose.msra.mxu0 0
    %435 = vmatprep.subr.bf16.mxu0 0
    %436 = vmatpush1.bf16.xpose.msra.mxu0 0
    %437 = vmatprep.subr.bf16.mxu0 0
    %438 = vmatpush1.bf16.xpose.msra.mxu0 0
    %439 = vmatprep.subr.bf16.mxu0 0
    %440 = vmatpush1.bf16.xpose.msra.mxu0 0
    %441 = vmatprep.subr.bf16.mxu0 0
    %442 = vmatpush1.bf16.xpose.msra.mxu0 0
    %443 = vmatprep.subr.bf16.mxu0 0
    %444 = vmatpush1.bf16.xpose.msra.mxu0 0
    %445 = vmatprep.subr.bf16.mxu0 0
    %446 = vmatpush1.bf16.xpose.msra.mxu0 0
    %447 = vmatprep.subr.bf16.mxu0 0
    %448 = vmatpush1.bf16.xpose.msra.mxu0 0
    %449 = vmatprep.subr.bf16.mxu0 0
    %450 = vmatpush1.bf16.xpose.msra.mxu0 0
    %451 = vmatprep.mubr.bf16.mxu0 0
    %452 = vmatmul.mubr.bf16.gmra.mrb[0].mxu0 %v415
    %v453 = vpop.f32.mrb[0].mxu0
    %v454 = vadd.f32 0.0, %v453
    %v455 = vpop.f32.mrb[0].mxu0
    %v456 = vpop.f32.mrb[0].mxu0
    %v457 = vpop.f32.mrb[0].mxu0
    %458 = vdwg.mxu0
    %459 = vmatprep.subr.bf16.mxu0 0
    %460 = vmatpush1.bf16.xpose.msra.mxu0 %v418
    %461 = vmatprep.subr.bf16.mxu0 0
    %462 = vmatpush1.bf16.xpose.msra.mxu0 0
    %463 = vmatprep.subr.bf16.mxu0 0
    %464 = vmatpush1.bf16.xpose.msra.mxu0 0
    %465 = vmatprep.subr.bf16.mxu0 0
    %466 = vmatpush1.bf16.xpose.msra.mxu0 0
    %467 = vmatprep.subr.bf16.mxu0 0
    %468 = vmatpush1.bf16.xpose.msra.mxu0 0
    %469 = vmatprep.subr.bf16.mxu0 0
    %470 = vmatpush1.bf16.xpose.msra.mxu0 0
    %471 = vmatprep.subr.bf16.mxu0 0
    %472 = vmatpush1.bf16.xpose.msra.mxu0 0
    %473 = vmatprep.subr.bf16.mxu0 0
    %474 = vmatpush1.bf16.xpose.msra.mxu0 0
    %475 = vmatprep.subr.bf16.mxu0 0
    %476 = vmatpush1.bf16.xpose.msra.mxu0 0
    %477 = vmatprep.subr.bf16.mxu0 0
    %478 = vmatpush1.bf16.xpose.msra.mxu0 0
    %479 = vmatprep.subr.bf16.mxu0 0
    %480 = vmatpush1.bf16.xpose.msra.mxu0 0
    %481 = vmatprep.subr.bf16.mxu0 0
    %482 = vmatpush1.bf16.xpose.msra.mxu0 0
    %483 = vmatprep.subr.bf16.mxu0 0
    %484 = vmatpush1.bf16.xpose.msra.mxu0 0
    %485 = vmatprep.subr.bf16.mxu0 0
    %486 = vmatpush1.bf16.xpose.msra.mxu0 0
    %487 = vmatprep.subr.bf16.mxu0 0
    %488 = vmatpush1.bf16.xpose.msra.mxu0 0
    %489 = vmatprep.subr.bf16.mxu0 0
    %490 = vmatpush1.bf16.xpose.msra.mxu0 0
    %491 = vmatprep.mubr.bf16.mxu0 0
    %492 = vmatmul.mubr.bf16.gmra.mrb[0].mxu0 %v416
    %v493 = vpop.f32.mrb[0].mxu0
    %v494 = vadd.f32 0.0, %v493
    %v495 = vpop.f32.mrb[0].mxu0
    %v496 = vpop.f32.mrb[0].mxu0
    %v497 = vpop.f32.mrb[0].mxu0
    %498 = vdwg.mxu0
    %v499 = vmul.f32 %v454, 0.088388346
    %v500 = vmul.f32 %v494, 0.088388346
    %vm501 = vcmask 64512
    %v502 = vsel %vm501, %v499, -inf
    %503 = vmax.xlane.f32.xlu0 %v502
    %v504 = vpop.xlane.xlu0 %503
    %v505 = vsel %vm501, %v500, -inf
    %506 = vmax.xlane.f32.xlu0 %v505
    %v507 = vpop.xlane.xlu0 %506
    %v508 = vsub.f32 %v499, %v504
    %v509 = vsub.f32 %v500, %v507
    %v510 = vmul.f32 %v508, 1.442695
    %v511 = vpow.pop %v510
    %v512 = vmul.f32 %v509, 1.442695
    %v513 = vpow.pop %v512
    %v514 = vsel %vm501, %v511, 0.0
    %515 = vadd.xlane.f32.xlu0 %v514
    %v516 = vpop.xlane.xlu0 %515
    %v517 = vsel %vm501, %v513, 0.0
    %518 = vadd.xlane.f32.xlu0 %v517
    %v519 = vpop.xlane.xlu0 %518
    %v520 = vrcp.pop %v516
    %v521 = vrcp.pop %v519
    %v522 = vmul.f32 %v511, %v520
    %v523 = vmul.f32 %v513, %v521
    %v524 = vpack.c.bf16 %v522, %v522
    %v525 = vpack.c.bf16 %v523, %v523
    %v526 = vpack.c.bf16 %v409, %v409
    %v527 = vpack.c.bf16 %v412, %v412
    %v529 = vsel %vm501, %v524, 0
    %vm531 = vcmask 1043456
    %v533 = vsel %vm531, %v526, 0
    %535 = vmatprep.subr.bf16.mxu0 0
    %536 = vmatpush1.bf16.msra.mxu0 %v533
    %537 = vmatprep.subr.bf16.mxu0 0
    %538 = vmatpush1.bf16.msra.mxu0 0
    %539 = vmatprep.subr.bf16.mxu0 0
    %540 = vmatpush1.bf16.msra.mxu0 0
    %541 = vmatprep.subr.bf16.mxu0 0
    %542 = vmatpush1.bf16.msra.mxu0 0
    %543 = vmatprep.subr.bf16.mxu0 0
    %544 = vmatpush1.bf16.msra.mxu0 0
    %545 = vmatprep.subr.bf16.mxu0 0
    %546 = vmatpush1.bf16.msra.mxu0 0
    %547 = vmatprep.subr.bf16.mxu0 0
    %548 = vmatpush1.bf16.msra.mxu0 0
    %549 = vmatprep.subr.bf16.mxu0 0
    %550 = vmatpush1.bf16.msra.mxu0 0
    %551 = vmatprep.subr.bf16.mxu0 0
    %552 = vmatpush1.bf16.msra.mxu0 0
    %553 = vmatprep.subr.bf16.mxu0 0
    %554 = vmatpush1.bf16.msra.mxu0 0
    %555 = vmatprep.subr.bf16.mxu0 0
    %556 = vmatpush1.bf16.msra.mxu0 0
    %557 = vmatprep.subr.bf16.mxu0 0
    %558 = vmatpush1.bf16.msra.mxu0 0
    %559 = vmatprep.subr.bf16.mxu0 0
    %560 = vmatpush1.bf16.msra.mxu0 0
    %561 = vmatprep.subr.bf16.mxu0 0
    %562 = vmatpush1.bf16.msra.mxu0 0
    %563 = vmatprep.subr.bf16.mxu0 0
    %564 = vmatpush1.bf16.msra.mxu0 0
    %565 = vmatprep.subr.bf16.mxu0 0
    %566 = vmatpush1.bf16.msra.mxu0 0
    %567 = vmatprep.mubr.bf16.mxu0 0
    %568 = vmatmul.mubr.bf16.gmra.mrb[0].mxu0 %v529
    %v569 = vpop.f32.mrb[0].mxu0
    %v570 = vadd.f32 0.0, %v569
    %v571 = vpop.f32.mrb[0].mxu0
    %v572 = vpop.f32.mrb[0].mxu0
    %v573 = vpop.f32.mrb[0].mxu0
    %574 = vdwg.mxu0
    %v576 = vsel %vm501, %v525, 0
    %v579 = vsel %vm531, %v527, 0
    %581 = vmatprep.subr.bf16.mxu0 0
    %582 = vmatpush1.bf16.msra.mxu0 %v579
    %583 = vmatprep.subr.bf16.mxu0 0
    %584 = vmatpush1.bf16.msra.mxu0 0
    %585 = vmatprep.subr.bf16.mxu0 0
    %586 = vmatpush1.bf16.msra.mxu0 0
    %587 = vmatprep.subr.bf16.mxu0 0
    %588 = vmatpush1.bf16.msra.mxu0 0
    %589 = vmatprep.subr.bf16.mxu0 0
    %590 = vmatpush1.bf16.msra.mxu0 0
    %591 = vmatprep.subr.bf16.mxu0 0
    %592 = vmatpush1.bf16.msra.mxu0 0
    %593 = vmatprep.subr.bf16.mxu0 0
    %594 = vmatpush1.bf16.msra.mxu0 0
    %595 = vmatprep.subr.bf16.mxu0 0
    %596 = vmatpush1.bf16.msra.mxu0 0
    %597 = vmatprep.subr.bf16.mxu0 0
    %598 = vmatpush1.bf16.msra.mxu0 0
    %599 = vmatprep.subr.bf16.mxu0 0
    %600 = vmatpush1.bf16.msra.mxu0 0
    %601 = vmatprep.subr.bf16.mxu0 0
    %602 = vmatpush1.bf16.msra.mxu0 0
    %603 = vmatprep.subr.bf16.mxu0 0
    %604 = vmatpush1.bf16.msra.mxu0 0
    %605 = vmatprep.subr.bf16.mxu0 0
    %606 = vmatpush1.bf16.msra.mxu0 0
    %607 = vmatprep.subr.bf16.mxu0 0
    %608 = vmatpush1.bf16.msra.mxu0 0
    %609 = vmatprep.subr.bf16.mxu0 0
    %610 = vmatpush1.bf16.msra.mxu0 0
    %611 = vmatprep.subr.bf16.mxu0 0
    %612 = vmatpush1.bf16.msra.mxu0 0
    %613 = vmatprep.mubr.bf16.mxu0 0
    %614 = vmatmul.mubr.bf16.gmra.mrb[0].mxu0 %v576
    %v615 = vpop.f32.mrb[0].mxu0
    %v616 = vadd.f32 0.0, %v615
    %v617 = vpop.f32.mrb[0].mxu0
    %v618 = vpop.f32.mrb[0].mxu0
    %v619 = vpop.f32.mrb[0].mxu0
    %620 = vdwg.mxu0
    %v621 = vpack.c.bf16 %v570, %v570
    %v622 = vpack.c.bf16 %v616, %v616
    %v623 = vld [vmem:[%s7] sm:$0xf]
    %v624 = vld [vmem:[%s7 + $0x4] sm:$0xf]
    %v625 = vld [vmem:[%s7 + $0x8] sm:$0xf]
    %v626 = vld [vmem:[%s7 + $0xc] sm:$0xf]
    %v627 = vld [vmem:[%s7 + $0x10] sm:$0xf]
    %v628 = vld [vmem:[%s7 + $0x14] sm:$0xf]
    %v629 = vld [vmem:[%s7 + $0x18] sm:$0xf]
    %v630 = vld [vmem:[%s7 + $0x1c] sm:$0xf]
    %v631 = vld [vmem:[%s7 + $0x20] sm:$0xf]
    %v632 = vld [vmem:[%s7 + $0x24] sm:$0xf]
    %v633 = vld [vmem:[%s7 + $0x28] sm:$0xf]
    %v634 = vld [vmem:[%s7 + $0x2c] sm:$0xf]
    %v635 = vld [vmem:[%s7 + $0x30] sm:$0xf]
    %v636 = vld [vmem:[%s7 + $0x34] sm:$0xf]
    %v637 = vld [vmem:[%s7 + $0x38] sm:$0xf]
    %v638 = vld [vmem:[%s7 + $0x3c] sm:$0xf]
    %v639 = vld [vmem:[%s8] sm:$0x1]
    %v641 = vlaneseq
    %v642 = vshrl.u32 %v641, 7
    %v643 = vsub.s32 0, %v642
    %v644 = vrot.slane %v639, %v643
    %v648 = vunpack.c.l.b16 %v621
    %v649 = vunpack.c.l.b16 %v622
    %v650 = vpack.c.b16 %v649, %v648
    %v668 = vunpack.c.l.b16 %v623
    %v669 = vunpack.c.l.b16 %v624
    %v670 = vunpack.c.l.b16 %v625
    %v671 = vunpack.c.l.b16 %v626
    %v672 = vunpack.c.l.b16 %v627
    %v673 = vunpack.c.l.b16 %v628
    %v674 = vunpack.c.l.b16 %v629
    %v675 = vunpack.c.l.b16 %v630
    %v676 = vunpack.c.l.b16 %v631
    %v677 = vunpack.c.l.b16 %v632
    %v678 = vunpack.c.l.b16 %v633
    %v679 = vunpack.c.l.b16 %v634
    %v680 = vunpack.c.l.b16 %v635
    %v681 = vunpack.c.l.b16 %v636
    %v682 = vunpack.c.l.b16 %v637
    %v683 = vunpack.c.l.b16 %v638
    %v684 = vpack.c.b16 %v669, %v668
    %v685 = vpack.c.b16 %v671, %v670
    %v686 = vpack.c.b16 %v673, %v672
    %v687 = vpack.c.b16 %v675, %v674
    %v688 = vpack.c.b16 %v677, %v676
    %v689 = vpack.c.b16 %v679, %v678
    %v690 = vpack.c.b16 %v681, %v680
    %v691 = vpack.c.b16 %v683, %v682
    %700 = vmatprep.subr.bf16.mxu0 0
    %701 = vmatpush1.bf16.msra.mxu0 %v684
    %702 = vmatprep.subr.bf16.mxu0 0
    %703 = vmatpush1.bf16.msra.mxu0 %v685
    %704 = vmatprep.subr.bf16.mxu0 0
    %705 = vmatpush1.bf16.msra.mxu0 %v686
    %706 = vmatprep.subr.bf16.mxu0 0
    %707 = vmatpush1.bf16.msra.mxu0 %v687
    %708 = vmatprep.subr.bf16.mxu0 0
    %709 = vmatpush1.bf16.msra.mxu0 %v688
    %710 = vmatprep.subr.bf16.mxu0 0
    %711 = vmatpush1.bf16.msra.mxu0 %v689
    %712 = vmatprep.subr.bf16.mxu0 0
    %713 = vmatpush1.bf16.msra.mxu0 %v690
    %714 = vmatprep.subr.bf16.mxu0 0
    %715 = vmatpush1.bf16.msra.mxu0 %v691
    %716 = vmatprep.subr.bf16.mxu0 0
    %717 = vmatpush1.bf16.msra.mxu0 0
    %718 = vmatprep.subr.bf16.mxu0 0
    %719 = vmatpush1.bf16.msra.mxu0 0
    %720 = vmatprep.subr.bf16.mxu0 0
    %721 = vmatpush1.bf16.msra.mxu0 0
    %722 = vmatprep.subr.bf16.mxu0 0
    %723 = vmatpush1.bf16.msra.mxu0 0
    %724 = vmatprep.subr.bf16.mxu0 0
    %725 = vmatpush1.bf16.msra.mxu0 0
    %726 = vmatprep.subr.bf16.mxu0 0
    %727 = vmatpush1.bf16.msra.mxu0 0
    %728 = vmatprep.subr.bf16.mxu0 0
    %729 = vmatpush1.bf16.msra.mxu0 0
    %730 = vmatprep.subr.bf16.mxu0 0
    %731 = vmatpush1.bf16.msra.mxu0 0
    %732 = vmatprep.mubr.bf16.mxu0 0
    %733 = vmatmul.mubr.bf16.gmra.mrb[0].mxu0 %v650
    %v734 = vpop.f32.mrb[0].mxu0
    %v735 = vadd.f32 %v644, %v734
    %v736 = vpop.f32.mrb[0].mxu0
    %v737 = vpop.f32.mrb[0].mxu0
    %v738 = vadd.f32 %v644, %v737
    %v739 = vpop.f32.mrb[0].mxu0
    %740 = vdwg.mxu0
    %v741 = vadd.f32 %v735, %v69
    %v742 = vadd.f32 %v738, %v70
    %743 = vadd.xlane.f32.xlu0 %v741
    %v744 = vpop.xlane.xlu0 %743
    %745 = vadd.xlane.f32.xlu0 %v742
    %v746 = vpop.xlane.xlu0 %745
    %v747 = vrcp.pop 128.0
    %v748 = vmul.f32 %v744, %v747
    %v749 = vmul.f32 %v746, %v747
    %v750 = vsub.f32 %v741, %v748
    %v751 = vsub.f32 %v742, %v749
    %v752 = vmul.f32 %v750, %v750
    %v753 = vmul.f32 %v751, %v751
    %754 = vadd.xlane.f32.xlu0 %v752
    %v755 = vpop.xlane.xlu0 %754
    %756 = vadd.xlane.f32.xlu0 %v753
    %v757 = vpop.xlane.xlu0 %756
    %v758 = vmul.f32 %v755, %v747
    %v759 = vmul.f32 %v757, %v747
    %v760 = vadd.f32 %v758, 1e-05
    %v761 = vadd.f32 %v759, 1e-05
    %v762 = vrsqrt.pop %v760
    %v763 = vrsqrt.pop %v761
    %v764 = vmul.f32 %v750, %v762
    %v765 = vmul.f32 %v751, %v763
    %v766 = vld [vmem:[%s9] sm:$0x1]
    %v768 = vlaneseq
    %v769 = vshrl.u32 %v768, 7
    %v770 = vsub.s32 0, %v769
    %v771 = vrot.slane %v766, %v770
    %v773 = vmul.f32 %v764, %v771
    %v774 = vmul.f32 %v765, %v771
    %v775 = vld [vmem:[%s10] sm:$0x1]
    %v777 = vlaneseq
    %v778 = vshrl.u32 %v777, 7
    %v779 = vsub.s32 0, %v778
    %v780 = vrot.slane %v775, %v779
    %v782 = vadd.f32 %v773, %v780
    %v783 = vadd.f32 %v774, %v780
    %v784 = vld [vmem:[%s11] sm:$0x1]
    %v786 = vlaneseq
    %v787 = vshrl.u32 %v786, 7
    %v788 = vsub.s32 0, %v787
    %v789 = vrot.slane %v784, %v788
    %v791 = vmul.f32 %v782, %v789
    %v792 = vmul.f32 %v783, %v789
    %793 = vadd.xlane.f32.xlu0 %v791
    %v794 = vpop.xlane.xlu0 %793
    %795 = vadd.xlane.f32.xlu0 %v792
    %v796 = vpop.xlane.xlu0 %795
    %v797 = vld [vmem:[#allocation2] sm:$0x1]
    %v799 = vlaneseq
    %v800 = vshrl.u32 %v799, 7
    %v801 = vsub.s32 0, %v800
    %v802 = vrot.slane %v797, %v801
    %803 = vset.pattern.permute.xlu0 0
    %804 = vperm.xlu0 %803, %v802
    %v805 = vpop.permute.xlu0 %804
    %v807 = vadd.f32 %v794, %v805
    %v808 = vadd.f32 %v796, %v805
    %v811 = vlaneseq
    %v812 = vand.u32 %v811, 127
    %v813 = vlaneseq
    %v814 = vshrl.u32 %v813, 7
    %v815 = vsub.s32 %v812, %v814
    %v816 = vrot.slane %v807, %v815
    %v817 = vlaneseq
    %v818 = vshrl.u32 %v817, 7
    %v819 = vsub.s32 %v812, %v818
    %v820 = vrot.slane %v808, %v819
    %vm821 = vcmask 1041409
    %v822 = vsel %vm821, %v820, %v816
    %vm824 = vcmask 58368
    %v825 = vsel %vm824, %v822, -inf
    %826 = vmax.xlane.f32.xlu0 %v825
    %v827 = vpop.xlane.xlu0 %826
    %v829 = vlaneseq
    %v830 = vshrl.u32 %v829, 7
    %v831 = vsub.s32 0, %v830
    %v832 = vrot.slane %v827, %v831
    %v833 = vlaneseq
    %v834 = vshrl.u32 %v833, 7
    %v835 = vsub.s32 1, %v834
    %v836 = vrot.slane %v827, %v835
    %v839 = vsub.f32 %v807, %v832
    %v840 = vsub.f32 %v808, %v836
    %v841 = vmul.f32 %v839, 1.442695
    %v842 = vpow.pop %v841
    %v843 = vmul.f32 %v840, 1.442695
    %v844 = vpow.pop %v843
    %847 = vset.pattern.permute.xlu0 0
    %848 = vperm.xlu0 %847, %v842
    %v849 = vpop.permute.xlu0 %848
    %850 = vset.pattern.permute.xlu0 0
    %851 = vperm.xlu0 %850, %v844
    %v852 = vpop.permute.xlu0 %851
    %v853 = vlaneseq
    %v854 = vshrl.u32 %v853, 7
    %v855 = vsub.s32 %v812, %v854
    %v856 = vrot.slane %v849, %v855
    %v857 = vlaneseq
    %v858 = vshrl.u32 %v857, 7
    %v859 = vsub.s32 %v812, %v858
    %v860 = vrot.slane %v852, %v859
    %v861 = vsel %vm821, %v860, %v856
    %v863 = vsel %vm824, %v861, 0.0
    %864 = vadd.xlane.f32.xlu0 %v863
    %v865 = vpop.xlane.xlu0 %864
    %v866 = vrcp.pop %v865
    %v868 = vlaneseq
    %v869 = vshrl.u32 %v868, 7
    %v870 = vsub.s32 0, %v869
    %v871 = vrot.slane %v866, %v870
    %v872 = vlaneseq
    %v873 = vshrl.u32 %v872, 7
    %v874 = vsub.s32 1, %v873
    %v875 = vrot.slane %v866, %v874
    %v878 = vmul.f32 %v842, %v871
    %v879 = vmul.f32 %v844, %v875
    %882 = vset.pattern.permute.xlu0 0
    %883 = vperm.xlu0 %882, %v878
    %v884 = vpop.permute.xlu0 %883
    %885 = vset.pattern.permute.xlu0 0
    %886 = vperm.xlu0 %885, %v879
    %v887 = vpop.permute.xlu0 %886
    %v888 = vlaneseq
    %v889 = vshrl.u32 %v888, 7
    %v890 = vsub.s32 %v812, %v889
    %v891 = vrot.slane %v884, %v890
    %v892 = vlaneseq
    %v893 = vshrl.u32 %v892, 7
    %v894 = vsub.s32 %v812, %v893
    %v895 = vrot.slane %v887, %v894
    %v896 = vsel %vm821, %v895, %v891
    %898 = vst.msk [vmem:[%s21] sm:$0x3] %vm824, %v896
    %v901 = vmul.f32 %v884, %v69
    %v902 = vmul.f32 %v887, %v70
    %v903 = vrot.slane %v901, 4
    %v904 = vadd.f32 %v901, %v903
    %v905 = vrot.slane %v904, 2
    %v906 = vadd.f32 %v904, %v905
    %v907 = vrot.slane %v906, 1
    %v908 = vadd.f32 %v906, %v907
    %v909 = vrot.slane %v902, 4
    %v910 = vadd.f32 %v902, %v909
    %v911 = vrot.slane %v910, 2
    %v912 = vadd.f32 %v910, %v911
    %v913 = vrot.slane %v912, 1
    %v914 = vadd.f32 %v912, %v913
    %v917 = vsel %vm821, %v914, %v908
    %919 = vst [vmem:[#allocation3] sm:$0x3] %v917
    %v920 = vpack.c.bf16 %v908, %v908
    %v921 = vpack.c.bf16 %v914, %v914
    %v922 = vld [vmem:[%s13] sm:$0xf]
    %v923 = vld [vmem:[%s13 + $0x4] sm:$0xf]
    %v924 = vld [vmem:[%s13 + $0x8] sm:$0xf]
    %v925 = vld [vmem:[%s13 + $0xc] sm:$0xf]
    %v926 = vld [vmem:[%s13 + $0x10] sm:$0xf]
    %v927 = vld [vmem:[%s13 + $0x14] sm:$0xf]
    %v928 = vld [vmem:[%s13 + $0x18] sm:$0xf]
    %v929 = vld [vmem:[%s13 + $0x1c] sm:$0xf]
    %v930 = vld [vmem:[%s13 + $0x20] sm:$0xf]
    %v931 = vld [vmem:[%s13 + $0x24] sm:$0xf]
    %v932 = vld [vmem:[%s13 + $0x28] sm:$0xf]
    %v933 = vld [vmem:[%s13 + $0x2c] sm:$0xf]
    %v934 = vld [vmem:[%s13 + $0x30] sm:$0xf]
    %v935 = vld [vmem:[%s13 + $0x34] sm:$0xf]
    %v936 = vld [vmem:[%s13 + $0x38] sm:$0xf]
    %v937 = vld [vmem:[%s13 + $0x3c] sm:$0xf]
    %v938 = vld [vmem:[%s14] sm:$0x1]
    %v940 = vlaneseq
    %v941 = vshrl.u32 %v940, 7
    %v942 = vsub.s32 0, %v941
    %v943 = vrot.slane %v938, %v942
    %v947 = vunpack.c.l.b16 %v920
    %v948 = vunpack.c.l.b16 %v921
    %v949 = vsel %vm821, %v948, %v947
    %v950 = vpack.c.b16 %v949, %v949
    %v968 = vunpack.c.l.b16 %v922
    %v969 = vunpack.c.l.b16 %v923
    %v970 = vunpack.c.l.b16 %v924
    %v971 = vunpack.c.l.b16 %v925
    %v972 = vunpack.c.l.b16 %v926
    %v973 = vunpack.c.l.b16 %v927
    %v974 = vunpack.c.l.b16 %v928
    %v975 = vunpack.c.l.b16 %v929
    %v976 = vunpack.c.l.b16 %v930
    %v977 = vunpack.c.l.b16 %v931
    %v978 = vunpack.c.l.b16 %v932
    %v979 = vunpack.c.l.b16 %v933
    %v980 = vunpack.c.l.b16 %v934
    %v981 = vunpack.c.l.b16 %v935
    %v982 = vunpack.c.l.b16 %v936
    %v983 = vunpack.c.l.b16 %v937
    %v984 = vpack.c.b16 %v969, %v968
    %v985 = vpack.c.b16 %v971, %v970
    %v986 = vpack.c.b16 %v973, %v972
    %v987 = vpack.c.b16 %v975, %v974
    %v988 = vpack.c.b16 %v977, %v976
    %v989 = vpack.c.b16 %v979, %v978
    %v990 = vpack.c.b16 %v981, %v980
    %v991 = vpack.c.b16 %v983, %v982
    %1000 = vmatprep.subr.bf16.mxu0 0
    %1001 = vmatpush1.bf16.msra.mxu0 %v984
    %1002 = vmatprep.subr.bf16.mxu0 0
    %1003 = vmatpush1.bf16.msra.mxu0 %v985
    %1004 = vmatprep.subr.bf16.mxu0 0
    %1005 = vmatpush1.bf16.msra.mxu0 %v986
    %1006 = vmatprep.subr.bf16.mxu0 0
    %1007 = vmatpush1.bf16.msra.mxu0 %v987
    %1008 = vmatprep.subr.bf16.mxu0 0
    %1009 = vmatpush1.bf16.msra.mxu0 %v988
    %1010 = vmatprep.subr.bf16.mxu0 0
    %1011 = vmatpush1.bf16.msra.mxu0 %v989
    %1012 = vmatprep.subr.bf16.mxu0 0
    %1013 = vmatpush1.bf16.msra.mxu0 %v990
    %1014 = vmatprep.subr.bf16.mxu0 0
    %1015 = vmatpush1.bf16.msra.mxu0 %v991
    %1016 = vmatprep.subr.bf16.mxu0 0
    %1017 = vmatpush1.bf16.msra.mxu0 0
    %1018 = vmatprep.subr.bf16.mxu0 0
    %1019 = vmatpush1.bf16.msra.mxu0 0
    %1020 = vmatprep.subr.bf16.mxu0 0
    %1021 = vmatpush1.bf16.msra.mxu0 0
    %1022 = vmatprep.subr.bf16.mxu0 0
    %1023 = vmatpush1.bf16.msra.mxu0 0
    %1024 = vmatprep.subr.bf16.mxu0 0
    %1025 = vmatpush1.bf16.msra.mxu0 0
    %1026 = vmatprep.subr.bf16.mxu0 0
    %1027 = vmatpush1.bf16.msra.mxu0 0
    %1028 = vmatprep.subr.bf16.mxu0 0
    %1029 = vmatpush1.bf16.msra.mxu0 0
    %1030 = vmatprep.subr.bf16.mxu0 0
    %1031 = vmatpush1.bf16.msra.mxu0 0
    %1032 = vmatprep.mubr.bf16.mxu0 0
    %1033 = vmatmul.mubr.bf16.gmra.mrb[0].mxu0 %v950
    %v1034 = vpop.f32.mrb[0].mxu0
    %v1035 = vadd.f32 %v943, %v1034
    %v1036 = vpop.f32.mrb[0].mxu0
    %v1037 = vpop.f32.mrb[0].mxu0
    %v1038 = vpop.f32.mrb[0].mxu0
    %1039 = vdwg.mxu0
    %v1040 = vmax.f32 %v1035, 0.0
    %v1041 = vpack.c.bf16 %v1040, %v1040
    %v1042 = vld [vmem:[%s15] sm:$0xf]
    %v1043 = vld [vmem:[%s15 + $0x4] sm:$0xf]
    %v1044 = vld [vmem:[%s15 + $0x8] sm:$0xf]
    %v1045 = vld [vmem:[%s15 + $0xc] sm:$0xf]
    %v1046 = vld [vmem:[%s15 + $0x10] sm:$0xf]
    %v1047 = vld [vmem:[%s15 + $0x14] sm:$0xf]
    %v1048 = vld [vmem:[%s15 + $0x18] sm:$0xf]
    %v1049 = vld [vmem:[%s15 + $0x1c] sm:$0xf]
    %v1050 = vld [vmem:[%s15 + $0x20] sm:$0xf]
    %v1051 = vld [vmem:[%s15 + $0x24] sm:$0xf]
    %v1052 = vld [vmem:[%s15 + $0x28] sm:$0xf]
    %v1053 = vld [vmem:[%s15 + $0x2c] sm:$0xf]
    %v1054 = vld [vmem:[%s15 + $0x30] sm:$0xf]
    %v1055 = vld [vmem:[%s15 + $0x34] sm:$0xf]
    %v1056 = vld [vmem:[%s15 + $0x38] sm:$0xf]
    %v1057 = vld [vmem:[%s15 + $0x3c] sm:$0xf]
    %v1058 = vld [vmem:[%s16] sm:$0x1]
    %v1060 = vlaneseq
    %v1061 = vshrl.u32 %v1060, 7
    %v1062 = vsub.s32 0, %v1061
    %v1063 = vrot.slane %v1058, %v1062
    %v1081 = vunpack.c.l.b16 %v1042
    %v1082 = vunpack.c.l.b16 %v1043
    %v1083 = vunpack.c.l.b16 %v1044
    %v1084 = vunpack.c.l.b16 %v1045
    %v1085 = vunpack.c.l.b16 %v1046
    %v1086 = vunpack.c.l.b16 %v1047
    %v1087 = vunpack.c.l.b16 %v1048
    %v1088 = vunpack.c.l.b16 %v1049
    %v1089 = vunpack.c.l.b16 %v1050
    %v1090 = vunpack.c.l.b16 %v1051
    %v1091 = vunpack.c.l.b16 %v1052
    %v1092 = vunpack.c.l.b16 %v1053
    %v1093 = vunpack.c.l.b16 %v1054
    %v1094 = vunpack.c.l.b16 %v1055
    %v1095 = vunpack.c.l.b16 %v1056
    %v1096 = vunpack.c.l.b16 %v1057
    %v1097 = vpack.c.b16 %v1082, %v1081
    %v1098 = vpack.c.b16 %v1084, %v1083
    %v1099 = vpack.c.b16 %v1086, %v1085
    %v1100 = vpack.c.b16 %v1088, %v1087
    %v1101 = vpack.c.b16 %v1090, %v1089
    %v1102 = vpack.c.b16 %v1092, %v1091
    %v1103 = vpack.c.b16 %v1094, %v1093
    %v1104 = vpack.c.b16 %v1096, %v1095
    %1113 = vmatprep.subr.bf16.mxu0 0
    %1114 = vmatpush1.bf16.msra.mxu0 %v1097
    %1115 = vmatprep.subr.bf16.mxu0 0
    %1116 = vmatpush1.bf16.msra.mxu0 %v1098
    %1117 = vmatprep.subr.bf16.mxu0 0
    %1118 = vmatpush1.bf16.msra.mxu0 %v1099
    %1119 = vmatprep.subr.bf16.mxu0 0
    %1120 = vmatpush1.bf16.msra.mxu0 %v1100
    %1121 = vmatprep.subr.bf16.mxu0 0
    %1122 = vmatpush1.bf16.msra.mxu0 %v1101
    %1123 = vmatprep.subr.bf16.mxu0 0
    %1124 = vmatpush1.bf16.msra.mxu0 %v1102
    %1125 = vmatprep.subr.bf16.mxu0 0
    %1126 = vmatpush1.bf16.msra.mxu0 %v1103
    %1127 = vmatprep.subr.bf16.mxu0 0
    %1128 = vmatpush1.bf16.msra.mxu0 %v1104
    %1129 = vmatprep.subr.bf16.mxu0 0
    %1130 = vmatpush1.bf16.msra.mxu0 0
    %1131 = vmatprep.subr.bf16.mxu0 0
    %1132 = vmatpush1.bf16.msra.mxu0 0
    %1133 = vmatprep.subr.bf16.mxu0 0
    %1134 = vmatpush1.bf16.msra.mxu0 0
    %1135 = vmatprep.subr.bf16.mxu0 0
    %1136 = vmatpush1.bf16.msra.mxu0 0
    %1137 = vmatprep.subr.bf16.mxu0 0
    %1138 = vmatpush1.bf16.msra.mxu0 0
    %1139 = vmatprep.subr.bf16.mxu0 0
    %1140 = vmatpush1.bf16.msra.mxu0 0
    %1141 = vmatprep.subr.bf16.mxu0 0
    %1142 = vmatpush1.bf16.msra.mxu0 0
    %1143 = vmatprep.subr.bf16.mxu0 0
    %1144 = vmatpush1.bf16.msra.mxu0 0
    %1145 = vmatprep.mubr.bf16.mxu0 0
    %1146 = vmatmul.mubr.bf16.gmra.mrb[0].mxu0 %v1041
    %v1147 = vpop.f32.mrb[0].mxu0
    %v1148 = vadd.f32 %v1063, %v1147
    %v1149 = vpop.f32.mrb[0].mxu0
    %v1150 = vpop.f32.mrb[0].mxu0
    %v1151 = vpop.f32.mrb[0].mxu0
    %1152 = vdwg.mxu0
    %v1153 = vmax.f32 %v1148, 0.0
    %v1154 = vpack.c.bf16 %v1153, %v1153
    %v1155 = vld [vmem:[%s17] sm:$0xff]
    %v1156 = vld [vmem:[%s17 + $0x8] sm:$0xff]
    %v1157 = vld [vmem:[%s17 + $0x10] sm:$0xff]
    %v1158 = vld [vmem:[%s17 + $0x18] sm:$0xff]
    %v1159 = vld [vmem:[%s17 + $0x20] sm:$0xff]
    %v1160 = vld [vmem:[%s17 + $0x28] sm:$0xff]
    %v1161 = vld [vmem:[%s17 + $0x30] sm:$0xff]
    %v1162 = vld [vmem:[%s17 + $0x38] sm:$0xff]
    %v1163 = vld [vmem:[%s17 + $0x40] sm:$0xff]
    %v1164 = vld [vmem:[%s17 + $0x48] sm:$0xff]
    %v1165 = vld [vmem:[%s17 + $0x50] sm:$0xff]
    %v1166 = vld [vmem:[%s17 + $0x58] sm:$0xff]
    %v1167 = vld [vmem:[%s17 + $0x60] sm:$0xff]
    %v1168 = vld [vmem:[%s17 + $0x68] sm:$0xff]
    %v1169 = vld [vmem:[%s17 + $0x70] sm:$0xff]
    %v1170 = vld [vmem:[%s17 + $0x78] sm:$0xff]
    %v1171 = vld [vmem:[%s18] sm:$0x3]
    %v1173 = vlaneseq
    %v1174 = vshrl.u32 %v1173, 7
    %v1175 = vsub.s32 0, %v1174
    %v1176 = vrot.slane %v1171, %v1175
    %v1177 = vlaneseq
    %v1178 = vshrl.u32 %v1177, 7
    %v1179 = vsub.s32 1, %v1178
    %v1180 = vrot.slane %v1171, %v1179
    %v1199 = vunpack.c.l.b16 %v1155
    %v1200 = vunpack.c.h.b16 %v1155
    %v1201 = vunpack.c.l.b16 %v1156
    %v1202 = vunpack.c.h.b16 %v1156
    %v1203 = vunpack.c.l.b16 %v1157
    %v1204 = vunpack.c.h.b16 %v1157
    %v1205 = vunpack.c.l.b16 %v1158
    %v1206 = vunpack.c.h.b16 %v1158
    %v1207 = vunpack.c.l.b16 %v1159
    %v1208 = vunpack.c.h.b16 %v1159
    %v1209 = vunpack.c.l.b16 %v1160
    %v1210 = vunpack.c.h.b16 %v1160
    %v1211 = vunpack.c.l.b16 %v1161
    %v1212 = vunpack.c.h.b16 %v1161
    %v1213 = vunpack.c.l.b16 %v1162
    %v1214 = vunpack.c.h.b16 %v1162
    %v1215 = vunpack.c.l.b16 %v1163
    %v1216 = vunpack.c.h.b16 %v1163
    %v1217 = vunpack.c.l.b16 %v1164
    %v1218 = vunpack.c.h.b16 %v1164
    %v1219 = vunpack.c.l.b16 %v1165
    %v1220 = vunpack.c.h.b16 %v1165
    %v1221 = vunpack.c.l.b16 %v1166
    %v1222 = vunpack.c.h.b16 %v1166
    %v1223 = vunpack.c.l.b16 %v1167
    %v1224 = vunpack.c.h.b16 %v1167
    %v1225 = vunpack.c.l.b16 %v1168
    %v1226 = vunpack.c.h.b16 %v1168
    %v1227 = vunpack.c.l.b16 %v1169
    %v1228 = vunpack.c.h.b16 %v1169
    %v1229 = vunpack.c.l.b16 %v1170
    %v1230 = vunpack.c.h.b16 %v1170
    %v1231 = vpack.c.b16 %v1201, %v1199
    %v1232 = vpack.c.b16 %v1202, %v1200
    %v1233 = vpack.c.b16 %v1205, %v1203
    %v1234 = vpack.c.b16 %v1206, %v1204
    %v1235 = vpack.c.b16 %v1209, %v1207
    %v1236 = vpack.c.b16 %v1210, %v1208
    %v1237 = vpack.c.b16 %v1213, %v1211
    %v1238 = vpack.c.b16 %v1214, %v1212
    %v1239 = vpack.c.b16 %v1217, %v1215
    %v1240 = vpack.c.b16 %v1218, %v1216
    %v1241 = vpack.c.b16 %v1221, %v1219
    %v1242 = vpack.c.b16 %v1222, %v1220
    %v1243 = vpack.c.b16 %v1225, %v1223
    %v1244 = vpack.c.b16 %v1226, %v1224
    %v1245 = vpack.c.b16 %v1229, %v1227
    %v1246 = vpack.c.b16 %v1230, %v1228
    %1263 = vmatprep.subr.bf16.mxu0 %v1232
    %1264 = vmatpush1.bf16.msra.mxu0 %v1231
    %1265 = vmatprep.subr.bf16.mxu0 %v1234
    %1266 = vmatpush1.bf16.msra.mxu0 %v1233
    %1267 = vmatprep.subr.bf16.mxu0 %v1236
    %1268 = vmatpush1.bf16.msra.mxu0 %v1235
    %1269 = vmatprep.subr.bf16.mxu0 %v1238
    %1270 = vmatpush1.bf16.msra.mxu0 %v1237
    %1271 = vmatprep.subr.bf16.mxu0 %v1240
    %1272 = vmatpush1.bf16.msra.mxu0 %v1239
    %1273 = vmatprep.subr.bf16.mxu0 %v1242
    %1274 = vmatpush1.bf16.msra.mxu0 %v1241
    %1275 = vmatprep.subr.bf16.mxu0 %v1244
    %1276 = vmatpush1.bf16.msra.mxu0 %v1243
    %1277 = vmatprep.subr.bf16.mxu0 %v1246
    %1278 = vmatpush1.bf16.msra.mxu0 %v1245
    %1279 = vmatprep.subr.bf16.mxu0 0
    %1280 = vmatpush1.bf16.msra.mxu0 0
    %1281 = vmatprep.subr.bf16.mxu0 0
    %1282 = vmatpush1.bf16.msra.mxu0 0
    %1283 = vmatprep.subr.bf16.mxu0 0
    %1284 = vmatpush1.bf16.msra.mxu0 0
    %1285 = vmatprep.subr.bf16.mxu0 0
    %1286 = vmatpush1.bf16.msra.mxu0 0
    %1287 = vmatprep.subr.bf16.mxu0 0
    %1288 = vmatpush1.bf16.msra.mxu0 0
    %1289 = vmatprep.subr.bf16.mxu0 0
    %1290 = vmatpush1.bf16.msra.mxu0 0
    %1291 = vmatprep.subr.bf16.mxu0 0
    %1292 = vmatpush1.bf16.msra.mxu0 0
    %1293 = vmatprep.subr.bf16.mxu0 0
    %1294 = vmatpush1.bf16.msra.mxu0 0
    %1295 = vmatprep.mubr.bf16.mxu0 0
    %1296 = vmatmul.mubr.bf16.gmra.mrb[0].mxu0 %v1154
    %v1297 = vpop.f32.mrb[0].mxu0
    %v1298 = vadd.f32 %v1176, %v1297
    %v1299 = vpop.f32.mrb[0].mxu0
    %v1300 = vadd.f32 %v1180, %v1299
    %v1301 = vpop.f32.mrb[0].mxu0
    %v1302 = vpop.f32.mrb[0].mxu0
    %1303 = vdwg.mxu0
    %v1306 = vcombine.low %v1298, %v1300
    %v1308 = vunpack.c.l.s4 1983009808
    %v1309 = vunpack.c.0.s8 %v1308
    %v1310 = vlaneseq
    %v1311 = vshrl.u32 %v1310, 7
    %v1312 = vsub.s32 %v1309, %v1311
    %v1313 = vrot.slane %v1306, %v1312
    %1315 = vst [vmem:[%s20] sm:$0xf] %v1313
    // Predicated region
    $region78: #{_lambda_.3} parent=1 // pred_check
      _
    $region79: #{_lambda_.3} parent=1 // pred_check_branch
      %1317 = sbr.rel (0) target = $region81
    $region80: #{_lambda_.3} parent=1 // pred_region
      %s1319 = ssub.s32 32, 32
      %1320 = vsyncadd [#allocation4], %s1319
      %s1322 = sshll.u32 [#allocation3], 4
      %s1323 = int_to_ptr.vmem [resolvable:$true] %s1322
      %1325 = dma.vmem_to_hbm [thread:$0]  %s1323, 32, %s19, [#allocation4]
    $region81: #{_lambda_.3} parent=1 // pred_fallthru
      _
    // Predicated region
    $region82: #{_lambda_.3} parent=1 // pred_check
      _
    $region83: #{_lambda_.3} parent=1 // pred_check_branch
      %1327 = sbr.rel (0) target = $region85
    $region84: #{_lambda_.3} parent=1 // pred_region
      _
    $region85: #{_lambda_.3} parent=1 // pred_fallthru
      _
    // Predicated region
    $region86: #{_lambda_.3} parent=1 // pred_check
      _
    $region87: #{_lambda_.3} parent=1 // pred_check_branch
      %1329 = sbr.rel (0) target = $region89
    $region88: #{_lambda_.3} parent=1 // pred_region
      _
    $region89: #{_lambda_.3} parent=1 // pred_fallthru
      _
    // Predicated region
    $region90: #{_lambda_.3} parent=1 // pred_check
      _
    $region91: #{_lambda_.3} parent=1 // pred_check_branch
      %1331 = sbr.rel (0) target = $region93
    $region92: #{_lambda_.3} parent=1 // pred_region
      %1332 = dma.done [#allocation4], 32
    $region93: #{_lambda_.3} parent=1 // pred_fallthru
      _
    // Predicated region
    $region94: #{_lambda_.3} parent=1 // pred_check
      _
    $region95: #{_lambda_.3} parent=1 // pred_check_branch
      %1334 = sbr.rel (0) target = $region97
    $region96: #{_lambda_.3} parent=1 // pred_region
      _
    $region97: #{_lambda_.3} parent=1 // pred_fallthru
      _
    // Predicated region
    $region98: #{_lambda_.3} parent=1 // pred_check
      _
    $region99: #{_lambda_.3} parent=1 // pred_check_branch
      %1336 = sbr.rel (0) target = $region101
    $region100: #{_lambda_.3} parent=1 // pred_region
      _
    $region101: #{_lambda_.3} parent=1 // pred_fallthru
      _
    %1337 = vsyncpa [#allocation4], 1

// kernel: _lambda_.2
$region0: #{_lambda_.2}
  #allocation0 [shape = 'u32[]', space=smem, size = 0x4, offset = 0x4, fixed_abs, tag = 'smem constant byte address 0x4 - core index']
  #allocation1 [shape = 'u32[144,128]{1,0:T(1,128)}', space=vmem, size = 0x12000, scoped, tag = 'internal scratch']
  %s0 = inlined_call_operand.vmem [shape: f32[16,64,3], index: 0, kind: input, shape index: {}]
  %s1 = inlined_call_operand.vmem [shape: f32[3,128], index: 1, kind: input, shape index: {}]
  %s2 = inlined_call_operand.vmem [shape: f32[1,128], index: 2, kind: input, shape index: {}]
  %s3 = inlined_call_operand.hbm [shape: bf16[128,256], index: 3, kind: input, shape index: {}]
  %s4 = inlined_call_operand.vmem [shape: f32[1,256], index: 4, kind: input, shape index: {}]
  %s5 = inlined_call_operand.vmem [shape: bf16[256,512], index: 5, kind: input, shape index: {}]
  %s6 = inlined_call_operand.vmem [shape: bf16[256,512], index: 6, kind: input, shape index: {}]
  %s7 = inlined_call_operand.vmem [shape: f32[1,512], index: 7, kind: input, shape index: {}]
  %s8 = inlined_call_operand.hbm [shape: bf16[512,128], index: 8, kind: input, shape index: {}]
  %s9 = inlined_call_operand.vmem [shape: f32[1,128], index: 9, kind: input, shape index: {}]
  %s10 = inlined_call_operand.vmem [shape: f32[16,128], index: 10, kind: output, shape index: {}]
  %s11 = sld [smem:[#allocation0]]
  $region81: #{_lambda_.2} parent=0
    _
  %s13 = ssub.s32 1, %s11
  %s14 = scalar_select 0, %s13, %s11
  $region1: #{_lambda_.2} parent=0
    #allocation2 [shape = 'u8[65536]{0}', space=vmem, size = 0x10000, scoped, tag = 'input window, operand 3, single buffered']
    #allocation3 [shape = 's32[2]{0}', space=sflag, size = 0x8, scoped, tag = 'scoped memory for _lambda_.2']
    #allocation4 [shape = 'u8[131072]{0}', space=vmem, size = 0x20000, scoped, tag = 'input window, operand 8, single buffered']
    #allocation5 [shape = 's32[1]{0}', space=sflag, size = 0x4, scoped, tag = 'scoped memory for _lambda_.2']
    %15 = vsyncpa [#allocation3], 0
    %16 = vsyncpa [#allocation5], 0
    loop: start=0, step=1, limit=4
    $region2: #{_lambda_.2} parent=1 // loop_pre_header
      _
    $region3: #{_lambda_.2} parent=1 // loop_header
      %s18 = sphi 0, %s22
      %p19 = scmp.ge.s32.totalorder %s18, 4
      %s28 = sphi 0, %s30
      %s31 = sphi 0, %s28
      %s32 = sphi 0, %s31
      %s48 = sphi 0, %s32
      %s52 = sphi 0, %s52
      %s54 = sphi 0, %s52
      %s55 = sphi 0, %s54
      %s69 = sphi 0, %s55
      %s73 = sphi 0, %s73
      %s75 = sphi 0, %s73
      %s76 = sphi 0, %s75
      %s90 = sphi 0, %s76
      %s94 = sphi 0, %s94
      %s96 = sphi 0, %s94
      %s97 = sphi 0, %s96
      %s111 = sphi 0, %s97
      %s115 = sphi 0, %s115
      %s117 = sphi 0, %s115
      %s118 = sphi 0, %s117
      %s132 = sphi 0, %s118
      %s136 = sphi 0, %s136
      %s138 = sphi 0, %s136
      %s139 = sphi 0, %s138
      %s153 = sphi 0, %s139
      %s157 = sphi 0, %s157
      %s159 = sphi 0, %s157
      %s160 = sphi 0, %s159
      %s174 = sphi 0, %s160
      %s178 = sphi 0, %s178
      %s180 = sphi 0, %s178
      %s181 = sphi 0, %s180
      %s195 = sphi 0, %s181
      %s199 = sphi 0, %s199
      %s201 = sphi 0, %s199
      %s202 = sphi 0, %s201
      %s216 = sphi 0, %s202
      %s220 = sphi 0, %s220
      %s222 = sphi 0, %s220
      %s223 = sphi 0, %s222
      %s237 = sphi 0, %s223
      %s243 = sphi 0, %s245
      %s246 = sphi 0, %s243
      %s247 = sphi 0, %s246
      %s263 = sphi 0, %s247
    $region4: #{_lambda_.2} parent=1 // loop_header_branch
      %21 = sbr.rel (%p19) target = $region8
    $region5: #{_lambda_.2} parent=1 // loop_body
      %s23 = ssub.s32 %s18, 1
      %s24 = ssub.s32 %s18, 2
      %s25 = sadd.s32 %s18, 1
      %s26 = ssub.s32 %s18, %s25
      %p27 = scmp.eq.s32.totalorder %s26, 0
      %s29 = sadd.s32 %s28, 1
      %s30 = scalar_select %p27, %s28, %s29
      %p33 = pneg %p27
      %p34 = scmp.eq.s32.totalorder %s18, 1
      %p35 = por %p33, %p34
      %p36 = scmp.ne.s32.totalorder %s28, %s31
      %p37 = scmp.eq.s32.totalorder %s18, 0
      %p38 = por %p36, %p37
      %p39 = scmp.ne.s32.totalorder %s28, %s31
      %p40 = scmp.eq.s32.totalorder %s23, 1
      %p41 = por %p39, %p40
      %p42 = scmp.ne.s32.totalorder %s31, %s32
      %p43 = scmp.eq.s32.totalorder %s23, 0
      %p44 = por %p42, %p43
      %p45 = scmp.ne.s32.totalorder %s31, %s32
      %p46 = scmp.eq.s32.totalorder %s24, 1
      %p47 = por %p45, %p46
      %p49 = scmp.ne.s32.totalorder %s32, %s48
      %p50 = scmp.eq.s32.totalorder %s24, 0
      %p51 = por %p49, %p50
      %s53 = sadd.s32 %s52, 1
      %p56 = scmp.eq.s32.totalorder %s18, 1
      %p57 = scmp.ne.s32.totalorder %s52, %s54
      %p58 = scmp.eq.s32.totalorder %s18, 0
      %p59 = por %p57, %p58
      %p60 = scmp.ne.s32.totalorder %s52, %s54
      %p61 = scmp.eq.s32.totalorder %s23, 1
      %p62 = por %p60, %p61
      %p63 = scmp.ne.s32.totalorder %s54, %s55
      %p64 = scmp.eq.s32.totalorder %s23, 0
      %p65 = por %p63, %p64
      %p66 = scmp.ne.s32.totalorder %s54, %s55
      %p67 = scmp.eq.s32.totalorder %s24, 1
      %p68 = por %p66, %p67
      %p70 = scmp.ne.s32.totalorder %s55, %s69
      %p71 = scmp.eq.s32.totalorder %s24, 0
      %p72 = por %p70, %p71
      %s74 = sadd.s32 %s73, 1
      %p77 = scmp.eq.s32.totalorder %s18, 1
      %p78 = scmp.ne.s32.totalorder %s73, %s75
      %p79 = scmp.eq.s32.totalorder %s18, 0
      %p80 = por %p78, %p79
      %p81 = scmp.ne.s32.totalorder %s73, %s75
      %p82 = scmp.eq.s32.totalorder %s23, 1
      %p83 = por %p81, %p82
      %p84 = scmp.ne.s32.totalorder %s75, %s76
      %p85 = scmp.eq.s32.totalorder %s23, 0
      %p86 = por %p84, %p85
      %p87 = scmp.ne.s32.totalorder %s75, %s76
      %p88 = scmp.eq.s32.totalorder %s24, 1
      %p89 = por %p87, %p88
      %p91 = scmp.ne.s32.totalorder %s76, %s90
      %p92 = scmp.eq.s32.totalorder %s24, 0
      %p93 = por %p91, %p92
      %s95 = sadd.s32 %s94, 1
      %p98 = scmp.eq.s32.totalorder %s18, 1
      %p99 = scmp.ne.s32.totalorder %s94, %s96
      %p100 = scmp.eq.s32.totalorder %s18, 0
      %p101 = por %p99, %p100
      %p102 = scmp.ne.s32.totalorder %s94, %s96
      %p103 = scmp.eq.s32.totalorder %s23, 1
      %p104 = por %p102, %p103
      %p105 = scmp.ne.s32.totalorder %s96, %s97
      %p106 = scmp.eq.s32.totalorder %s23, 0
      %p107 = por %p105, %p106
      %p108 = scmp.ne.s32.totalorder %s96, %s97
      %p109 = scmp.eq.s32.totalorder %s24, 1
      %p110 = por %p108, %p109
      %p112 = scmp.ne.s32.totalorder %s97, %s111
      %p113 = scmp.eq.s32.totalorder %s24, 0
      %p114 = por %p112, %p113
      %s116 = sadd.s32 %s115, 1
      %p119 = scmp.eq.s32.totalorder %s18, 1
      %p120 = scmp.ne.s32.totalorder %s115, %s117
      %p121 = scmp.eq.s32.totalorder %s18, 0
      %p122 = por %p120, %p121
      %p123 = scmp.ne.s32.totalorder %s115, %s117
      %p124 = scmp.eq.s32.totalorder %s23, 1
      %p125 = por %p123, %p124
      %p126 = scmp.ne.s32.totalorder %s117, %s118
      %p127 = scmp.eq.s32.totalorder %s23, 0
      %p128 = por %p126, %p127
      %p129 = scmp.ne.s32.totalorder %s117, %s118
      %p130 = scmp.eq.s32.totalorder %s24, 1
      %p131 = por %p129, %p130
      %p133 = scmp.ne.s32.totalorder %s118, %s132
      %p134 = scmp.eq.s32.totalorder %s24, 0
      %p135 = por %p133, %p134
      %s137 = sadd.s32 %s136, 1
      %p140 = scmp.eq.s32.totalorder %s18, 1
      %p141 = scmp.ne.s32.totalorder %s136, %s138
      %p142 = scmp.eq.s32.totalorder %s18, 0
      %p143 = por %p141, %p142
      %p144 = scmp.ne.s32.totalorder %s136, %s138
      %p145 = scmp.eq.s32.totalorder %s23, 1
      %p146 = por %p144, %p145
      %p147 = scmp.ne.s32.totalorder %s138, %s139
      %p148 = scmp.eq.s32.totalorder %s23, 0
      %p149 = por %p147, %p148
      %p150 = scmp.ne.s32.totalorder %s138, %s139
      %p151 = scmp.eq.s32.totalorder %s24, 1
      %p152 = por %p150, %p151
      %p154 = scmp.ne.s32.totalorder %s139, %s153
      %p155 = scmp.eq.s32.totalorder %s24, 0
      %p156 = por %p154, %p155
      %s158 = sadd.s32 %s157, 1
      %p161 = scmp.eq.s32.totalorder %s18, 1
      %p162 = scmp.ne.s32.totalorder %s157, %s159
      %p163 = scmp.eq.s32.totalorder %s18, 0
      %p164 = por %p162, %p163
      %p165 = scmp.ne.s32.totalorder %s157, %s159
      %p166 = scmp.eq.s32.totalorder %s23, 1
      %p167 = por %p165, %p166
      %p168 = scmp.ne.s32.totalorder %s159, %s160
      %p169 = scmp.eq.s32.totalorder %s23, 0
      %p170 = por %p168, %p169
      %p171 = scmp.ne.s32.totalorder %s159, %s160
      %p172 = scmp.eq.s32.totalorder %s24, 1
      %p173 = por %p171, %p172
      %p175 = scmp.ne.s32.totalorder %s160, %s174
      %p176 = scmp.eq.s32.totalorder %s24, 0
      %p177 = por %p175, %p176
      %s179 = sadd.s32 %s178, 1
      %p182 = scmp.eq.s32.totalorder %s18, 1
      %p183 = scmp.ne.s32.totalorder %s178, %s180
      %p184 = scmp.eq.s32.totalorder %s18, 0
      %p185 = por %p183, %p184
      %p186 = scmp.ne.s32.totalorder %s178, %s180
      %p187 = scmp.eq.s32.totalorder %s23, 1
      %p188 = por %p186, %p187
      %p189 = scmp.ne.s32.totalorder %s180, %s181
      %p190 = scmp.eq.s32.totalorder %s23, 0
      %p191 = por %p189, %p190
      %p192 = scmp.ne.s32.totalorder %s180, %s181
      %p193 = scmp.eq.s32.totalorder %s24, 1
      %p194 = por %p192, %p193
      %p196 = scmp.ne.s32.totalorder %s181, %s195
      %p197 = scmp.eq.s32.totalorder %s24, 0
      %p198 = por %p196, %p197
      %s200 = sadd.s32 %s199, 1
      %p203 = scmp.eq.s32.totalorder %s18, 1
      %p204 = scmp.ne.s32.totalorder %s199, %s201
      %p205 = scmp.eq.s32.totalorder %s18, 0
      %p206 = por %p204, %p205
      %p207 = scmp.ne.s32.totalorder %s199, %s201
      %p208 = scmp.eq.s32.totalorder %s23, 1
      %p209 = por %p207, %p208
      %p210 = scmp.ne.s32.totalorder %s201, %s202
      %p211 = scmp.eq.s32.totalorder %s23, 0
      %p212 = por %p210, %p211
      %p213 = scmp.ne.s32.totalorder %s201, %s202
      %p214 = scmp.eq.s32.totalorder %s24, 1
      %p215 = por %p213, %p214
      %p217 = scmp.ne.s32.totalorder %s202, %s216
      %p218 = scmp.eq.s32.totalorder %s24, 0
      %p219 = por %p217, %p218
      %s221 = sadd.s32 %s220, 1
      %p224 = scmp.eq.s32.totalorder %s18, 1
      %p225 = scmp.ne.s32.totalorder %s220, %s222
      %p226 = scmp.eq.s32.totalorder %s18, 0
      %p227 = por %p225, %p226
      %p228 = scmp.ne.s32.totalorder %s220, %s222
      %p229 = scmp.eq.s32.totalorder %s23, 1
      %p230 = por %p228, %p229
      %p231 = scmp.ne.s32.totalorder %s222, %s223
      %p232 = scmp.eq.s32.totalorder %s23, 0
      %p233 = por %p231, %p232
      %p234 = scmp.ne.s32.totalorder %s222, %s223
      %p235 = scmp.eq.s32.totalorder %s24, 1
      %p236 = por %p234, %p235
      %p238 = scmp.ne.s32.totalorder %s223, %s237
      %p239 = scmp.eq.s32.totalorder %s24, 0
      %p240 = por %p238, %p239
      %s241 = ssub.s32 %s18, %s25
      %p242 = scmp.eq.s32.totalorder %s241, 0
      %s244 = sadd.s32 %s243, 1
      %s245 = scalar_select %p242, %s243, %s244
      %p248 = pneg %p242
      %p249 = scmp.eq.s32.totalorder %s18, 1
      %p250 = por %p248, %p249
      %p251 = scmp.ne.s32.totalorder %s243, %s246
      %p252 = scmp.eq.s32.totalorder %s18, 0
      %p253 = por %p251, %p252
      %p254 = scmp.ne.s32.totalorder %s243, %s246
      %p255 = scmp.eq.s32.totalorder %s23, 1
      %p256 = por %p254, %p255
      %p257 = scmp.ne.s32.totalorder %s246, %s247
      %p258 = scmp.eq.s32.totalorder %s23, 0
      %p259 = por %p257, %p258
      %p260 = scmp.ne.s32.totalorder %s246, %s247
      %p261 = scmp.eq.s32.totalorder %s24, 1
      %p262 = por %p260, %p261
      %p264 = scmp.ne.s32.totalorder %s247, %s263
      %p265 = scmp.eq.s32.totalorder %s24, 0
      %p266 = por %p264, %p265
      %p267 = scmp.le.s32.totalorder 1, %s18
      %p268 = scmp.lt.s32.totalorder %s18, 3
      %p269 = pnand %p267, %p268
      %p270 = pneg %p269
      // Predicated region
      $region9: #{_lambda_.2} parent=5 // pred_check
        _
      $region10: #{_lambda_.2} parent=5 // pred_check_branch
        %272 = sbr.rel (%p269) target = $region12
      $region11: #{_lambda_.2} parent=5 // pred_region
        %s273 = ssub.s32 %s18, 1
        // Predicated region
        $region13: #{_lambda_.2} parent=11 // pred_check
          %p274 = pneg %p65
        $region14: #{_lambda_.2} parent=11 // pred_check_branch
          %276 = sbr.rel (%p274) target = $region16
        $region15: #{_lambda_.2} parent=11 // pred_region
          _
        $region16: #{_lambda_.2} parent=11 // pred_fallthru
          _
        // Predicated region
        $region17: #{_lambda_.2} parent=11 // pred_check
          %p277 = pneg %p86
        $region18: #{_lambda_.2} parent=11 // pred_check_branch
          %279 = sbr.rel (%p277) target = $region20
        $region19: #{_lambda_.2} parent=11 // pred_region
          _
        $region20: #{_lambda_.2} parent=11 // pred_fallthru
          _
        // Predicated region
        $region21: #{_lambda_.2} parent=11 // pred_check
          %p280 = pneg %p107
        $region22: #{_lambda_.2} parent=11 // pred_check_branch
          %282 = sbr.rel (%p280) target = $region24
        $region23: #{_lambda_.2} parent=11 // pred_region
          %s284 = ssub.s32 2048, 2048
          %285 = vsyncadd [#allocation3], %s284
          %s286 = sshll.u32 [#allocation2], 4
          %s287 = int_to_ptr.vmem [resolvable:$true] %s286
          %292 = dma.hbm_to_vmem [thread:$0]  %s3, 2048, %s287, [#allocation3], 128, 128, 8
        $region24: #{_lambda_.2} parent=11 // pred_fallthru
          _
        // Predicated region
        $region25: #{_lambda_.2} parent=11 // pred_check
          %p293 = pneg %p128
        $region26: #{_lambda_.2} parent=11 // pred_check_branch
          %295 = sbr.rel (%p293) target = $region28
        $region27: #{_lambda_.2} parent=11 // pred_region
          _
        $region28: #{_lambda_.2} parent=11 // pred_fallthru
          _
        // Predicated region
        $region29: #{_lambda_.2} parent=11 // pred_check
          %p296 = pneg %p149
        $region30: #{_lambda_.2} parent=11 // pred_check_branch
          %298 = sbr.rel (%p296) target = $region32
        $region31: #{_lambda_.2} parent=11 // pred_region
          _
        $region32: #{_lambda_.2} parent=11 // pred_fallthru
          _
        // Predicated region
        $region33: #{_lambda_.2} parent=11 // pred_check
          %p299 = pneg %p170
        $region34: #{_lambda_.2} parent=11 // pred_check_branch
          %301 = sbr.rel (%p299) target = $region36
        $region35: #{_lambda_.2} parent=11 // pred_region
          _
        $region36: #{_lambda_.2} parent=11 // pred_fallthru
          _
        // Predicated region
        $region37: #{_lambda_.2} parent=11 // pred_check
          %p302 = pneg %p191
        $region38: #{_lambda_.2} parent=11 // pred_check_branch
          %304 = sbr.rel (%p302) target = $region40
        $region39: #{_lambda_.2} parent=11 // pred_region
          _
        $region40: #{_lambda_.2} parent=11 // pred_fallthru
          _
        // Predicated region
        $region41: #{_lambda_.2} parent=11 // pred_check
          %p305 = pneg %p212
        $region42: #{_lambda_.2} parent=11 // pred_check_branch
          %307 = sbr.rel (%p305) target = $region44
        $region43: #{_lambda_.2} parent=11 // pred_region
          %s309 = ssub.s32 4096, 4096
          %310 = vsyncadd [#allocation5], %s309
          %s311 = sshll.u32 [#allocation4], 4
          %s312 = int_to_ptr.vmem [resolvable:$true] %s311
          %317 = dma.hbm_to_vmem [thread:$0]  %s8, 4096, %s312, [#allocation5], 64, 64, 4
        $region44: #{_lambda_.2} parent=11 // pred_fallthru
          _
        // Predicated region
        $region45: #{_lambda_.2} parent=11 // pred_check
          %p318 = pneg %p233
        $region46: #{_lambda_.2} parent=11 // pred_check_branch
          %320 = sbr.rel (%p318) target = $region48
        $region47: #{_lambda_.2} parent=11 // pred_region
          _
        $region48: #{_lambda_.2} parent=11 // pred_fallthru
          _
      $region12: #{_lambda_.2} parent=5 // pred_fallthru
        _
      %p321 = scmp.lt.s32.totalorder %s18, 2
      // Predicated region
      $region49: #{_lambda_.2} parent=5 // pred_check
        %p322 = pneg %p321
      $region50: #{_lambda_.2} parent=5 // pred_check_branch
        %324 = sbr.rel (%p322) target = $region52
      $region51: #{_lambda_.2} parent=5 // pred_region
        // Predicated region
        $region53: #{_lambda_.2} parent=51 // pred_check
          %p325 = pneg %p38
        $region54: #{_lambda_.2} parent=51 // pred_check_branch
          %327 = sbr.rel (%p325) target = $region56
        $region55: #{_lambda_.2} parent=51 // pred_region
          %s328 = smul.u32 8, %s18
          %p329 = scmp.lt.s32.totalorder %s328, 15
          %s330 = scalar_select %p329, %s328, 15
          %s331 = smul.addr %s330, 8
          %s332 = smul.addr %s331, 8
          %s333 = scalar_lea.vmem %s0, %s332
          %s334 = smul.u32 8, %s18
        $region56: #{_lambda_.2} parent=51 // pred_fallthru
          _
      $region52: #{_lambda_.2} parent=5 // pred_fallthru
        _
      %p335 = scmp.le.s32.totalorder 1, %s18
      %p336 = scmp.lt.s32.totalorder %s18, 3
      %p337 = pnand %p335, %p336
      %p338 = pneg %p337
      // Predicated region
      $region57: #{_lambda_.2} parent=5 // pred_check
        _
      $region58: #{_lambda_.2} parent=5 // pred_check_branch
        %340 = sbr.rel (%p337) target = $region60
      $region59: #{_lambda_.2} parent=5 // pred_region
        %s341 = ssub.s32 %s18, 1
        // Predicated region
        $region61: #{_lambda_.2} parent=59 // pred_check
          %p342 = pneg %p107
        $region62: #{_lambda_.2} parent=59 // pred_check_branch
          %344 = sbr.rel (%p342) target = $region64
        $region63: #{_lambda_.2} parent=59 // pred_region
          %345 = dma.done [#allocation3], 2048
        $region64: #{_lambda_.2} parent=59 // pred_fallthru
          _
        // Predicated region
        $region65: #{_lambda_.2} parent=59 // pred_check
          %p346 = pneg %p212
        $region66: #{_lambda_.2} parent=59 // pred_check_branch
          %348 = sbr.rel (%p346) target = $region68
        $region67: #{_lambda_.2} parent=59 // pred_region
          %349 = dma.done [#allocation5], 4096
        $region68: #{_lambda_.2} parent=59 // pred_fallthru
          _
        %s350 = smul.u32 8, %s23
        %p351 = scmp.lt.s32.totalorder %s350, 15
        %s352 = scalar_select %p351, %s350, 15
        %s353 = smul.addr %s352, 8
        %s354 = smul.addr %s353, 8
        %s355 = scalar_lea.vmem %s0, %s354
        %p356 = pneg %p44
        %p357 = pneg %p41
        %p358 = pneg %p65
        %p359 = pneg %p62
        %p360 = pneg %p86
        %p361 = pneg %p83
        %p362 = pneg %p107
        %p363 = pneg %p104
        %p364 = pneg %p128
        %p365 = pneg %p125
        %p366 = pneg %p149
        %p367 = pneg %p146
        %p368 = pneg %p170
        %p369 = pneg %p167
        %p370 = pneg %p191
        %p371 = pneg %p188
        %p372 = pneg %p212
        %p373 = pneg %p209
        %p374 = pneg %p233
        %p375 = pneg %p230
        %p376 = pneg %p259
        %p377 = pneg %p256
        %p378 = scmp.lt.s32.totalorder %s23, 1
        %s379 = scalar_select %p378, %s23, 1
        %s380 = smul.addr %s379, 8
        %s381 = scalar_lea.vmem %s10, %s380
        %s382 = smul.u32 8, %s23
        %p383 = scmp.lt.s32.totalorder %s382, 15
        %s384 = scalar_select %p383, %s382, 15
        %s385 = smul.addr %s384, 8
        %s386 = smul.addr %s385, 8
        %s387 = scalar_lea.vmem %s0, %s386
        %s388 = smul.u32 8, %s23
        %p389 = scmp.lt.s32.totalorder %s23, 1
        %s390 = scalar_select %p389, %s23, 1
        %s391 = smul.addr %s390, 8
        %s392 = scalar_lea.vmem %s10, %s391
        %v394 = vld [vmem:[%s387] sm:$0xff]
        %v395 = vld [vmem:[%s387 + $0x8] sm:$0xff]
        %v396 = vld [vmem:[%s387 + $0x10] sm:$0xff]
        %v397 = vld [vmem:[%s387 + $0x18] sm:$0xff]
        %v398 = vld [vmem:[%s387 + $0x20] sm:$0xff]
        %v399 = vld [vmem:[%s387 + $0x28] sm:$0xff]
        %v400 = vld [vmem:[%s387 + $0x30] sm:$0xff]
        %v401 = vld [vmem:[%s387 + $0x38] sm:$0xff]
        %v402 = vld [vmem:[%s387 + $0x40] sm:$0xff]
        %v403 = vld [vmem:[%s387 + $0x48] sm:$0xff]
        %v404 = vld [vmem:[%s387 + $0x50] sm:$0xff]
        %v405 = vld [vmem:[%s387 + $0x58] sm:$0xff]
        %v406 = vld [vmem:[%s387 + $0x60] sm:$0xff]
        %v407 = vld [vmem:[%s387 + $0x68] sm:$0xff]
        %v408 = vld [vmem:[%s387 + $0x70] sm:$0xff]
        %v409 = vld [vmem:[%s387 + $0x78] sm:$0xff]
        %v410 = vld [vmem:[%s387 + $0x80] sm:$0xff]
        %v411 = vld [vmem:[%s387 + $0x88] sm:$0xff]
        %v412 = vld [vmem:[%s387 + $0x90] sm:$0xff]
        %v413 = vld [vmem:[%s387 + $0x98] sm:$0xff]
        %v414 = vld [vmem:[%s387 + $0xa0] sm:$0xff]
        %v415 = vld [vmem:[%s387 + $0xa8] sm:$0xff]
        %v416 = vld [vmem:[%s387 + $0xb0] sm:$0xff]
        %v417 = vld [vmem:[%s387 + $0xb8] sm:$0xff]
        %v418 = vld [vmem:[%s387 + $0xc0] sm:$0xff]
        %v419 = vld [vmem:[%s387 + $0xc8] sm:$0xff]
        %v420 = vld [vmem:[%s387 + $0xd0] sm:$0xff]
        %v421 = vld [vmem:[%s387 + $0xd8] sm:$0xff]
        %v422 = vld [vmem:[%s387 + $0xe0] sm:$0xff]
        %v423 = vld [vmem:[%s387 + $0xe8] sm:$0xff]
        %v424 = vld [vmem:[%s387 + $0xf0] sm:$0xff]
        %v425 = vld [vmem:[%s387 + $0xf8] sm:$0xff]
        %v426 = vld [vmem:[%s387 + $0x100] sm:$0xff]
        %v427 = vld [vmem:[%s387 + $0x108] sm:$0xff]
        %v428 = vld [vmem:[%s387 + $0x110] sm:$0xff]
        %v429 = vld [vmem:[%s387 + $0x118] sm:$0xff]
        %v430 = vld [vmem:[%s387 + $0x120] sm:$0xff]
        %v431 = vld [vmem:[%s387 + $0x128] sm:$0xff]
        %v432 = vld [vmem:[%s387 + $0x130] sm:$0xff]
        %v433 = vld [vmem:[%s387 + $0x138] sm:$0xff]
        %v434 = vld [vmem:[%s387 + $0x140] sm:$0xff]
        %v435 = vld [vmem:[%s387 + $0x148] sm:$0xff]
        %v436 = vld [vmem:[%s387 + $0x150] sm:$0xff]
        %v437 = vld [vmem:[%s387 + $0x158] sm:$0xff]
        %v438 = vld [vmem:[%s387 + $0x160] sm:$0xff]
        %v439 = vld [vmem:[%s387 + $0x168] sm:$0xff]
        %v440 = vld [vmem:[%s387 + $0x170] sm:$0xff]
        %v441 = vld [vmem:[%s387 + $0x178] sm:$0xff]
        %v442 = vld [vmem:[%s387 + $0x180] sm:$0xff]
        %v443 = vld [vmem:[%s387 + $0x188] sm:$0xff]
        %v444 = vld [vmem:[%s387 + $0x190] sm:$0xff]
        %v445 = vld [vmem:[%s387 + $0x198] sm:$0xff]
        %v446 = vld [vmem:[%s387 + $0x1a0] sm:$0xff]
        %v447 = vld [vmem:[%s387 + $0x1a8] sm:$0xff]
        %v448 = vld [vmem:[%s387 + $0x1b0] sm:$0xff]
        %v449 = vld [vmem:[%s387 + $0x1b8] sm:$0xff]
        %v450 = vld [vmem:[%s387 + $0x1c0] sm:$0xff]
        %v451 = vld [vmem:[%s387 + $0x1c8] sm:$0xff]
        %v452 = vld [vmem:[%s387 + $0x1d0] sm:$0xff]
        %v453 = vld [vmem:[%s387 + $0x1d8] sm:$0xff]
        %v454 = vld [vmem:[%s387 + $0x1e0] sm:$0xff]
        %v455 = vld [vmem:[%s387 + $0x1e8] sm:$0xff]
        %v456 = vld [vmem:[%s387 + $0x1f0] sm:$0xff]
        %v457 = vld [vmem:[%s387 + $0x1f8] sm:$0xff]
        %v458 = vld [vmem:[%s1] sm:$0x1]
        %460 = vset.pattern.permute.xlu0 0
        %461 = vperm.xlu0 %460, %v394
        %v462 = vpop.permute.xlu0 %461
        %465 = vset.pattern.permute.xlu0 0
        %466 = vperm.xlu0 %465, %v395
        %v467 = vpop.permute.xlu0 %466
        %470 = vset.pattern.permute.xlu0 0
        %471 = vperm.xlu0 %470, %v396
        %v472 = vpop.permute.xlu0 %471
        %475 = vset.pattern.permute.xlu0 0
        %476 = vperm.xlu0 %475, %v397
        %v477 = vpop.permute.xlu0 %476
        %480 = vset.pattern.permute.xlu0 0
        %481 = vperm.xlu0 %480, %v398
        %v482 = vpop.permute.xlu0 %481
        %485 = vset.pattern.permute.xlu0 0
        %486 = vperm.xlu0 %485, %v399
        %v487 = vpop.permute.xlu0 %486
        %490 = vset.pattern.permute.xlu0 0
        %491 = vperm.xlu0 %490, %v400
        %v492 = vpop.permute.xlu0 %491
        %495 = vset.pattern.permute.xlu0 0
        %496 = vperm.xlu0 %495, %v401
        %v497 = vpop.permute.xlu0 %496
        %500 = vset.pattern.permute.xlu0 0
        %501 = vperm.xlu0 %500, %v402
        %v502 = vpop.permute.xlu0 %501
        %505 = vset.pattern.permute.xlu0 0
        %506 = vperm.xlu0 %505, %v403
        %v507 = vpop.permute.xlu0 %506
        %510 = vset.pattern.permute.xlu0 0
        %511 = vperm.xlu0 %510, %v404
        %v512 = vpop.permute.xlu0 %511
        %515 = vset.pattern.permute.xlu0 0
        %516 = vperm.xlu0 %515, %v405
        %v517 = vpop.permute.xlu0 %516
        %520 = vset.pattern.permute.xlu0 0
        %521 = vperm.xlu0 %520, %v406
        %v522 = vpop.permute.xlu0 %521
        %525 = vset.pattern.permute.xlu0 0
        %526 = vperm.xlu0 %525, %v407
        %v527 = vpop.permute.xlu0 %526
        %530 = vset.pattern.permute.xlu0 0
        %531 = vperm.xlu0 %530, %v408
        %v532 = vpop.permute.xlu0 %531
        %535 = vset.pattern.permute.xlu0 0
        %536 = vperm.xlu0 %535, %v409
        %v537 = vpop.permute.xlu0 %536
        %540 = vset.pattern.permute.xlu0 0
        %541 = vperm.xlu0 %540, %v410
        %v542 = vpop.permute.xlu0 %541
        %545 = vset.pattern.permute.xlu0 0
        %546 = vperm.xlu0 %545, %v411
        %v547 = vpop.permute.xlu0 %546
        %550 = vset.pattern.permute.xlu0 0
        %551 = vperm.xlu0 %550, %v412
        %v552 = vpop.permute.xlu0 %551
        %555 = vset.pattern.permute.xlu0 0
        %556 = vperm.xlu0 %555, %v413
        %v557 = vpop.permute.xlu0 %556
        %560 = vset.pattern.permute.xlu0 0
        %561 = vperm.xlu0 %560, %v414
        %v562 = vpop.permute.xlu0 %561
        %565 = vset.pattern.permute.xlu0 0
        %566 = vperm.xlu0 %565, %v415
        %v567 = vpop.permute.xlu0 %566
        %570 = vset.pattern.permute.xlu0 0
        %571 = vperm.xlu0 %570, %v416
        %v572 = vpop.permute.xlu0 %571
        %575 = vset.pattern.permute.xlu0 0
        %576 = vperm.xlu0 %575, %v417
        %v577 = vpop.permute.xlu0 %576
        %580 = vset.pattern.permute.xlu0 0
        %581 = vperm.xlu0 %580, %v418
        %v582 = vpop.permute.xlu0 %581
        %585 = vset.pattern.permute.xlu0 0
        %586 = vperm.xlu0 %585, %v419
        %v587 = vpop.permute.xlu0 %586
        %590 = vset.pattern.permute.xlu0 0
        %591 = vperm.xlu0 %590, %v420
        %v592 = vpop.permute.xlu0 %591
        %595 = vset.pattern.permute.xlu0 0
        %596 = vperm.xlu0 %595, %v421
        %v597 = vpop.permute.xlu0 %596
        %600 = vset.pattern.permute.xlu0 0
        %601 = vperm.xlu0 %600, %v422
        %v602 = vpop.permute.xlu0 %601
        %605 = vset.pattern.permute.xlu0 0
        %606 = vperm.xlu0 %605, %v423
        %v607 = vpop.permute.xlu0 %606
        %610 = vset.pattern.permute.xlu0 0
        %611 = vperm.xlu0 %610, %v424
        %v612 = vpop.permute.xlu0 %611
        %615 = vset.pattern.permute.xlu0 0
        %616 = vperm.xlu0 %615, %v425
        %v617 = vpop.permute.xlu0 %616
        %620 = vset.pattern.permute.xlu0 0
        %621 = vperm.xlu0 %620, %v426
        %v622 = vpop.permute.xlu0 %621
        %625 = vset.pattern.permute.xlu0 0
        %626 = vperm.xlu0 %625, %v427
        %v627 = vpop.permute.xlu0 %626
        %630 = vset.pattern.permute.xlu0 0
        %631 = vperm.xlu0 %630, %v428
        %v632 = vpop.permute.xlu0 %631
        %635 = vset.pattern.permute.xlu0 0
        %636 = vperm.xlu0 %635, %v429
        %v637 = vpop.permute.xlu0 %636
        %640 = vset.pattern.permute.xlu0 0
        %641 = vperm.xlu0 %640, %v430
        %v642 = vpop.permute.xlu0 %641
        %645 = vset.pattern.permute.xlu0 0
        %646 = vperm.xlu0 %645, %v431
        %v647 = vpop.permute.xlu0 %646
        %650 = vset.pattern.permute.xlu0 0
        %651 = vperm.xlu0 %650, %v432
        %v652 = vpop.permute.xlu0 %651
        %655 = vset.pattern.permute.xlu0 0
        %656 = vperm.xlu0 %655, %v433
        %v657 = vpop.permute.xlu0 %656
        %660 = vset.pattern.permute.xlu0 0
        %661 = vperm.xlu0 %660, %v434
        %v662 = vpop.permute.xlu0 %661
        %665 = vset.pattern.permute.xlu0 0
        %666 = vperm.xlu0 %665, %v435
        %v667 = vpop.permute.xlu0 %666
        %670 = vset.pattern.permute.xlu0 0
        %671 = vperm.xlu0 %670, %v436
        %v672 = vpop.permute.xlu0 %671
        %675 = vset.pattern.permute.xlu0 0
        %676 = vperm.xlu0 %675, %v437
        %v677 = vpop.permute.xlu0 %676
        %680 = vset.pattern.permute.xlu0 0
        %681 = vperm.xlu0 %680, %v438
        %v682 = vpop.permute.xlu0 %681
        %685 = vset.pattern.permute.xlu0 0
        %686 = vperm.xlu0 %685, %v439
        %v687 = vpop.permute.xlu0 %686
        %690 = vset.pattern.permute.xlu0 0
        %691 = vperm.xlu0 %690, %v440
        %v692 = vpop.permute.xlu0 %691
        %695 = vset.pattern.permute.xlu0 0
        %696 = vperm.xlu0 %695, %v441
        %v697 = vpop.permute.xlu0 %696
        %700 = vset.pattern.permute.xlu0 0
        %701 = vperm.xlu0 %700, %v442
        %v702 = vpop.permute.xlu0 %701
        %705 = vset.pattern.permute.xlu0 0
        %706 = vperm.xlu0 %705, %v443
        %v707 = vpop.permute.xlu0 %706
        %710 = vset.pattern.permute.xlu0 0
        %711 = vperm.xlu0 %710, %v444
        %v712 = vpop.permute.xlu0 %711
        %715 = vset.pattern.permute.xlu0 0
        %716 = vperm.xlu0 %715, %v445
        %v717 = vpop.permute.xlu0 %716
        %720 = vset.pattern.permute.xlu0 0
        %721 = vperm.xlu0 %720, %v446
        %v722 = vpop.permute.xlu0 %721
        %725 = vset.pattern.permute.xlu0 0
        %726 = vperm.xlu0 %725, %v447
        %v727 = vpop.permute.xlu0 %726
        %730 = vset.pattern.permute.xlu0 0
        %731 = vperm.xlu0 %730, %v448
        %v732 = vpop.permute.xlu0 %731
        %735 = vset.pattern.permute.xlu0 0
        %736 = vperm.xlu0 %735, %v449
        %v737 = vpop.permute.xlu0 %736
        %740 = vset.pattern.permute.xlu0 0
        %741 = vperm.xlu0 %740, %v450
        %v742 = vpop.permute.xlu0 %741
        %745 = vset.pattern.permute.xlu0 0
        %746 = vperm.xlu0 %745, %v451
        %v747 = vpop.permute.xlu0 %746
        %750 = vset.pattern.permute.xlu0 0
        %751 = vperm.xlu0 %750, %v452
        %v752 = vpop.permute.xlu0 %751
        %755 = vset.pattern.permute.xlu0 0
        %756 = vperm.xlu0 %755, %v453
        %v757 = vpop.permute.xlu0 %756
        %760 = vset.pattern.permute.xlu0 0
        %761 = vperm.xlu0 %760, %v454
        %v762 = vpop.permute.xlu0 %761
        %765 = vset.pattern.permute.xlu0 0
        %766 = vperm.xlu0 %765, %v455
        %v767 = vpop.permute.xlu0 %766
        %770 = vset.pattern.permute.xlu0 0
        %771 = vperm.xlu0 %770, %v456
        %v772 = vpop.permute.xlu0 %771
        %775 = vset.pattern.permute.xlu0 0
        %776 = vperm.xlu0 %775, %v457
        %v777 = vpop.permute.xlu0 %776
        %v779 = vlaneseq
        %v780 = vshrl.u32 %v779, 7
        %v781 = vsub.s32 0, %v780
        %v782 = vrot.slane %v458, %v781
        %v783 = vmul.f32 %v462, %v782
        %v784 = vmul.f32 %v467, %v782
        %v785 = vmul.f32 %v472, %v782
        %v786 = vmul.f32 %v477, %v782
        %v787 = vmul.f32 %v482, %v782
        %v788 = vmul.f32 %v487, %v782
        %v789 = vmul.f32 %v492, %v782
        %v790 = vmul.f32 %v497, %v782
        %v791 = vmul.f32 %v502, %v782
        %v792 = vmul.f32 %v507, %v782
        %v793 = vmul.f32 %v512, %v782
        %v794 = vmul.f32 %v517, %v782
        %v795 = vmul.f32 %v522, %v782
        %v796 = vmul.f32 %v527, %v782
        %v797 = vmul.f32 %v532, %v782
        %v798 = vmul.f32 %v537, %v782
        %v799 = vmul.f32 %v542, %v782
        %v800 = vmul.f32 %v547, %v782
        %v801 = vmul.f32 %v552, %v782
        %v802 = vmul.f32 %v557, %v782
        %v803 = vmul.f32 %v562, %v782
        %v804 = vmul.f32 %v567, %v782
        %v805 = vmul.f32 %v572, %v782
        %v806 = vmul.f32 %v577, %v782
        %v807 = vmul.f32 %v582, %v782
        %v808 = vmul.f32 %v587, %v782
        %v809 = vmul.f32 %v592, %v782
        %v810 = vmul.f32 %v597, %v782
        %v811 = vmul.f32 %v602, %v782
        %v812 = vmul.f32 %v607, %v782
        %v813 = vmul.f32 %v612, %v782
        %v814 = vmul.f32 %v617, %v782
        %v815 = vmul.f32 %v622, %v782
        %v816 = vmul.f32 %v627, %v782
        %v817 = vmul.f32 %v632, %v782
        %v818 = vmul.f32 %v637, %v782
        %v819 = vmul.f32 %v642, %v782
        %v820 = vmul.f32 %v647, %v782
        %v821 = vmul.f32 %v652, %v782
        %v822 = vmul.f32 %v657, %v782
        %v823 = vmul.f32 %v662, %v782
        %v824 = vmul.f32 %v667, %v782
        %v825 = vmul.f32 %v672, %v782
        %v826 = vmul.f32 %v677, %v782
        %v827 = vmul.f32 %v682, %v782
        %v828 = vmul.f32 %v687, %v782
        %v829 = vmul.f32 %v692, %v782
        %v830 = vmul.f32 %v697, %v782
        %v831 = vmul.f32 %v702, %v782
        %v832 = vmul.f32 %v707, %v782
        %v833 = vmul.f32 %v712, %v782
        %v834 = vmul.f32 %v717, %v782
        %v835 = vmul.f32 %v722, %v782
        %v836 = vmul.f32 %v727, %v782
        %v837 = vmul.f32 %v732, %v782
        %v838 = vmul.f32 %v737, %v782
        %v839 = vmul.f32 %v742, %v782
        %v840 = vmul.f32 %v747, %v782
        %v841 = vmul.f32 %v752, %v782
        %v842 = vmul.f32 %v757, %v782
        %v843 = vmul.f32 %v762, %v782
        %v844 = vmul.f32 %v767, %v782
        %v845 = vmul.f32 %v772, %v782
        %v846 = vmul.f32 %v777, %v782
        %v847 = vld [vmem:[%s1 + $0x1] sm:$0x1]
        %848 = vset.pattern.permute.xlu0 1
        %849 = vperm.xlu0 %848, %v394
        %v850 = vpop.permute.xlu0 %849
        %852 = vset.pattern.permute.xlu0 1
        %853 = vperm.xlu0 %852, %v395
        %v854 = vpop.permute.xlu0 %853
        %856 = vset.pattern.permute.xlu0 1
        %857 = vperm.xlu0 %856, %v396
        %v858 = vpop.permute.xlu0 %857
        %860 = vset.pattern.permute.xlu0 1
        %861 = vperm.xlu0 %860, %v397
        %v862 = vpop.permute.xlu0 %861
        %864 = vset.pattern.permute.xlu0 1
        %865 = vperm.xlu0 %864, %v398
        %v866 = vpop.permute.xlu0 %865
        %868 = vset.pattern.permute.xlu0 1
        %869 = vperm.xlu0 %868, %v399
        %v870 = vpop.permute.xlu0 %869
        %872 = vset.pattern.permute.xlu0 1
        %873 = vperm.xlu0 %872, %v400
        %v874 = vpop.permute.xlu0 %873
        %876 = vset.pattern.permute.xlu0 1
        %877 = vperm.xlu0 %876, %v401
        %v878 = vpop.permute.xlu0 %877
        %880 = vset.pattern.permute.xlu0 1
        %881 = vperm.xlu0 %880, %v402
        %v882 = vpop.permute.xlu0 %881
        %884 = vset.pattern.permute.xlu0 1
        %885 = vperm.xlu0 %884, %v403
        %v886 = vpop.permute.xlu0 %885
        %888 = vset.pattern.permute.xlu0 1
        %889 = vperm.xlu0 %888, %v404
        %v890 = vpop.permute.xlu0 %889
        %892 = vset.pattern.permute.xlu0 1
        %893 = vperm.xlu0 %892, %v405
        %v894 = vpop.permute.xlu0 %893
        %896 = vset.pattern.permute.xlu0 1
        %897 = vperm.xlu0 %896, %v406
        %v898 = vpop.permute.xlu0 %897
        %900 = vset.pattern.permute.xlu0 1
        %901 = vperm.xlu0 %900, %v407
        %v902 = vpop.permute.xlu0 %901
        %904 = vset.pattern.permute.xlu0 1
        %905 = vperm.xlu0 %904, %v408
        %v906 = vpop.permute.xlu0 %905
        %908 = vset.pattern.permute.xlu0 1
        %909 = vperm.xlu0 %908, %v409
        %v910 = vpop.permute.xlu0 %909
        %912 = vset.pattern.permute.xlu0 1
        %913 = vperm.xlu0 %912, %v410
        %v914 = vpop.permute.xlu0 %913
        %916 = vset.pattern.permute.xlu0 1
        %917 = vperm.xlu0 %916, %v411
        %v918 = vpop.permute.xlu0 %917
        %920 = vset.pattern.permute.xlu0 1
        %921 = vperm.xlu0 %920, %v412
        %v922 = vpop.permute.xlu0 %921
        %924 = vset.pattern.permute.xlu0 1
        %925 = vperm.xlu0 %924, %v413
        %v926 = vpop.permute.xlu0 %925
        %928 = vset.pattern.permute.xlu0 1
        %929 = vperm.xlu0 %928, %v414
        %v930 = vpop.permute.xlu0 %929
        %932 = vset.pattern.permute.xlu0 1
        %933 = vperm.xlu0 %932, %v415
        %v934 = vpop.permute.xlu0 %933
        %936 = vset.pattern.permute.xlu0 1
        %937 = vperm.xlu0 %936, %v416
        %v938 = vpop.permute.xlu0 %937
        %940 = vset.pattern.permute.xlu0 1
        %941 = vperm.xlu0 %940, %v417
        %v942 = vpop.permute.xlu0 %941
        %944 = vset.pattern.permute.xlu0 1
        %945 = vperm.xlu0 %944, %v418
        %v946 = vpop.permute.xlu0 %945
        %948 = vset.pattern.permute.xlu0 1
        %949 = vperm.xlu0 %948, %v419
        %v950 = vpop.permute.xlu0 %949
        %952 = vset.pattern.permute.xlu0 1
        %953 = vperm.xlu0 %952, %v420
        %v954 = vpop.permute.xlu0 %953
        %956 = vset.pattern.permute.xlu0 1
        %957 = vperm.xlu0 %956, %v421
        %v958 = vpop.permute.xlu0 %957
        %960 = vset.pattern.permute.xlu0 1
        %961 = vperm.xlu0 %960, %v422
        %v962 = vpop.permute.xlu0 %961
        %964 = vset.pattern.permute.xlu0 1
        %965 = vperm.xlu0 %964, %v423
        %v966 = vpop.permute.xlu0 %965
        %968 = vset.pattern.permute.xlu0 1
        %969 = vperm.xlu0 %968, %v424
        %v970 = vpop.permute.xlu0 %969
        %972 = vset.pattern.permute.xlu0 1
        %973 = vperm.xlu0 %972, %v425
        %v974 = vpop.permute.xlu0 %973
        %976 = vset.pattern.permute.xlu0 1
        %977 = vperm.xlu0 %976, %v426
        %v978 = vpop.permute.xlu0 %977
        %980 = vset.pattern.permute.xlu0 1
        %981 = vperm.xlu0 %980, %v427
        %v982 = vpop.permute.xlu0 %981
        %984 = vset.pattern.permute.xlu0 1
        %985 = vperm.xlu0 %984, %v428
        %v986 = vpop.permute.xlu0 %985
        %988 = vset.pattern.permute.xlu0 1
        %989 = vperm.xlu0 %988, %v429
        %v990 = vpop.permute.xlu0 %989
        %992 = vset.pattern.permute.xlu0 1
        %993 = vperm.xlu0 %992, %v430
        %v994 = vpop.permute.xlu0 %993
        %996 = vset.pattern.permute.xlu0 1
        %997 = vperm.xlu0 %996, %v431
        %v998 = vpop.permute.xlu0 %997
        %1000 = vset.pattern.permute.xlu0 1
        %1001 = vperm.xlu0 %1000, %v432
        %v1002 = vpop.permute.xlu0 %1001
        %1004 = vset.pattern.permute.xlu0 1
        %1005 = vperm.xlu0 %1004, %v433
        %v1006 = vpop.permute.xlu0 %1005
        %1008 = vset.pattern.permute.xlu0 1
        %1009 = vperm.xlu0 %1008, %v434
        %v1010 = vpop.permute.xlu0 %1009
        %1012 = vset.pattern.permute.xlu0 1
        %1013 = vperm.xlu0 %1012, %v435
        %v1014 = vpop.permute.xlu0 %1013
        %1016 = vset.pattern.permute.xlu0 1
        %1017 = vperm.xlu0 %1016, %v436
        %v1018 = vpop.permute.xlu0 %1017
        %1020 = vset.pattern.permute.xlu0 1
        %1021 = vperm.xlu0 %1020, %v437
        %v1022 = vpop.permute.xlu0 %1021
        %1024 = vset.pattern.permute.xlu0 1
        %1025 = vperm.xlu0 %1024, %v438
        %v1026 = vpop.permute.xlu0 %1025
        %1028 = vset.pattern.permute.xlu0 1
        %1029 = vperm.xlu0 %1028, %v439
        %v1030 = vpop.permute.xlu0 %1029
        %1032 = vset.pattern.permute.xlu0 1
        %1033 = vperm.xlu0 %1032, %v440
        %v1034 = vpop.permute.xlu0 %1033
        %1036 = vset.pattern.permute.xlu0 1
        %1037 = vperm.xlu0 %1036, %v441
        %v1038 = vpop.permute.xlu0 %1037
        %1040 = vset.pattern.permute.xlu0 1
        %1041 = vperm.xlu0 %1040, %v442
        %v1042 = vpop.permute.xlu0 %1041
        %1044 = vset.pattern.permute.xlu0 1
        %1045 = vperm.xlu0 %1044, %v443
        %v1046 = vpop.permute.xlu0 %1045
        %1048 = vset.pattern.permute.xlu0 1
        %1049 = vperm.xlu0 %1048, %v444
        %v1050 = vpop.permute.xlu0 %1049
        %1052 = vset.pattern.permute.xlu0 1
        %1053 = vperm.xlu0 %1052, %v445
        %v1054 = vpop.permute.xlu0 %1053
        %1056 = vset.pattern.permute.xlu0 1
        %1057 = vperm.xlu0 %1056, %v446
        %v1058 = vpop.permute.xlu0 %1057
        %1060 = vset.pattern.permute.xlu0 1
        %1061 = vperm.xlu0 %1060, %v447
        %v1062 = vpop.permute.xlu0 %1061
        %1064 = vset.pattern.permute.xlu0 1
        %1065 = vperm.xlu0 %1064, %v448
        %v1066 = vpop.permute.xlu0 %1065
        %1068 = vset.pattern.permute.xlu0 1
        %1069 = vperm.xlu0 %1068, %v449
        %v1070 = vpop.permute.xlu0 %1069
        %1072 = vset.pattern.permute.xlu0 1
        %1073 = vperm.xlu0 %1072, %v450
        %v1074 = vpop.permute.xlu0 %1073
        %1076 = vset.pattern.permute.xlu0 1
        %1077 = vperm.xlu0 %1076, %v451
        %v1078 = vpop.permute.xlu0 %1077
        %1080 = vset.pattern.permute.xlu0 1
        %1081 = vperm.xlu0 %1080, %v452
        %v1082 = vpop.permute.xlu0 %1081
        %1084 = vset.pattern.permute.xlu0 1
        %1085 = vperm.xlu0 %1084, %v453
        %v1086 = vpop.permute.xlu0 %1085
        %1088 = vset.pattern.permute.xlu0 1
        %1089 = vperm.xlu0 %1088, %v454
        %v1090 = vpop.permute.xlu0 %1089
        %1092 = vset.pattern.permute.xlu0 1
        %1093 = vperm.xlu0 %1092, %v455
        %v1094 = vpop.permute.xlu0 %1093
        %1096 = vset.pattern.permute.xlu0 1
        %1097 = vperm.xlu0 %1096, %v456
        %v1098 = vpop.permute.xlu0 %1097
        %1100 = vset.pattern.permute.xlu0 1
        %1101 = vperm.xlu0 %1100, %v457
        %v1102 = vpop.permute.xlu0 %1101
        %v1104 = vlaneseq
        %v1105 = vshrl.u32 %v1104, 7
        %v1106 = vsub.s32 0, %v1105
        %v1107 = vrot.slane %v847, %v1106
        %v1108 = vmul.f32 %v850, %v1107
        %v1109 = vmul.f32 %v854, %v1107
        %v1110 = vmul.f32 %v858, %v1107
        %v1111 = vmul.f32 %v862, %v1107
        %v1112 = vmul.f32 %v866, %v1107
        %v1113 = vmul.f32 %v870, %v1107
        %v1114 = vmul.f32 %v874, %v1107
        %v1115 = vmul.f32 %v878, %v1107
        %v1116 = vmul.f32 %v882, %v1107
        %v1117 = vmul.f32 %v886, %v1107
        %v1118 = vmul.f32 %v890, %v1107
        %v1119 = vmul.f32 %v894, %v1107
        %v1120 = vmul.f32 %v898, %v1107
        %v1121 = vmul.f32 %v902, %v1107
        %v1122 = vmul.f32 %v906, %v1107
        %v1123 = vmul.f32 %v910, %v1107
        %v1124 = vmul.f32 %v914, %v1107
        %v1125 = vmul.f32 %v918, %v1107
        %v1126 = vmul.f32 %v922, %v1107
        %v1127 = vmul.f32 %v926, %v1107
        %v1128 = vmul.f32 %v930, %v1107
        %v1129 = vmul.f32 %v934, %v1107
        %v1130 = vmul.f32 %v938, %v1107
        %v1131 = vmul.f32 %v942, %v1107
        %v1132 = vmul.f32 %v946, %v1107
        %v1133 = vmul.f32 %v950, %v1107
        %v1134 = vmul.f32 %v954, %v1107
        %v1135 = vmul.f32 %v958, %v1107
        %v1136 = vmul.f32 %v962, %v1107
        %v1137 = vmul.f32 %v966, %v1107
        %v1138 = vmul.f32 %v970, %v1107
        %v1139 = vmul.f32 %v974, %v1107
        %v1140 = vmul.f32 %v978, %v1107
        %v1141 = vmul.f32 %v982, %v1107
        %v1142 = vmul.f32 %v986, %v1107
        %v1143 = vmul.f32 %v990, %v1107
        %v1144 = vmul.f32 %v994, %v1107
        %v1145 = vmul.f32 %v998, %v1107
        %v1146 = vmul.f32 %v1002, %v1107
        %v1147 = vmul.f32 %v1006, %v1107
        %v1148 = vmul.f32 %v1010, %v1107
        %v1149 = vmul.f32 %v1014, %v1107
        %v1150 = vmul.f32 %v1018, %v1107
        %v1151 = vmul.f32 %v1022, %v1107
        %v1152 = vmul.f32 %v1026, %v1107
        %v1153 = vmul.f32 %v1030, %v1107
        %v1154 = vmul.f32 %v1034, %v1107
        %v1155 = vmul.f32 %v1038, %v1107
        %v1156 = vmul.f32 %v1042, %v1107
        %v1157 = vmul.f32 %v1046, %v1107
        %v1158 = vmul.f32 %v1050, %v1107
        %v1159 = vmul.f32 %v1054, %v1107
        %v1160 = vmul.f32 %v1058, %v1107
        %v1161 = vmul.f32 %v1062, %v1107
        %v1162 = vmul.f32 %v1066, %v1107
        %v1163 = vmul.f32 %v1070, %v1107
        %v1164 = vmul.f32 %v1074, %v1107
        %v1165 = vmul.f32 %v1078, %v1107
        %v1166 = vmul.f32 %v1082, %v1107
        %v1167 = vmul.f32 %v1086, %v1107
        %v1168 = vmul.f32 %v1090, %v1107
        %v1169 = vmul.f32 %v1094, %v1107
        %v1170 = vmul.f32 %v1098, %v1107
        %v1171 = vmul.f32 %v1102, %v1107
        %v1172 = vadd.f32 %v783, %v1108
        %v1173 = vadd.f32 %v784, %v1109
        %v1174 = vadd.f32 %v785, %v1110
        %v1175 = vadd.f32 %v786, %v1111
        %v1176 = vadd.f32 %v787, %v1112
        %v1177 = vadd.f32 %v788, %v1113
        %v1178 = vadd.f32 %v789, %v1114
        %v1179 = vadd.f32 %v790, %v1115
        %v1180 = vadd.f32 %v791, %v1116
        %v1181 = vadd.f32 %v792, %v1117
        %v1182 = vadd.f32 %v793, %v1118
        %v1183 = vadd.f32 %v794, %v1119
        %v1184 = vadd.f32 %v795, %v1120
        %v1185 = vadd.f32 %v796, %v1121
        %v1186 = vadd.f32 %v797, %v1122
        %v1187 = vadd.f32 %v798, %v1123
        %v1188 = vadd.f32 %v799, %v1124
        %v1189 = vadd.f32 %v800, %v1125
        %v1190 = vadd.f32 %v801, %v1126
        %v1191 = vadd.f32 %v802, %v1127
        %v1192 = vadd.f32 %v803, %v1128
        %v1193 = vadd.f32 %v804, %v1129
        %v1194 = vadd.f32 %v805, %v1130
        %v1195 = vadd.f32 %v806, %v1131
        %v1196 = vadd.f32 %v807, %v1132
        %v1197 = vadd.f32 %v808, %v1133
        %v1198 = vadd.f32 %v809, %v1134
        %v1199 = vadd.f32 %v810, %v1135
        %v1200 = vadd.f32 %v811, %v1136
        %v1201 = vadd.f32 %v812, %v1137
        %v1202 = vadd.f32 %v813, %v1138
        %v1203 = vadd.f32 %v814, %v1139
        %v1204 = vadd.f32 %v815, %v1140
        %v1205 = vadd.f32 %v816, %v1141
        %v1206 = vadd.f32 %v817, %v1142
        %v1207 = vadd.f32 %v818, %v1143
        %v1208 = vadd.f32 %v819, %v1144
        %v1209 = vadd.f32 %v820, %v1145
        %v1210 = vadd.f32 %v821, %v1146
        %v1211 = vadd.f32 %v822, %v1147
        %v1212 = vadd.f32 %v823, %v1148
        %v1213 = vadd.f32 %v824, %v1149
        %v1214 = vadd.f32 %v825, %v1150
        %v1215 = vadd.f32 %v826, %v1151
        %v1216 = vadd.f32 %v827, %v1152
        %v1217 = vadd.f32 %v828, %v1153
        %v1218 = vadd.f32 %v829, %v1154
        %v1219 = vadd.f32 %v830, %v1155
        %v1220 = vadd.f32 %v831, %v1156
        %v1221 = vadd.f32 %v832, %v1157
        %v1222 = vadd.f32 %v833, %v1158
        %v1223 = vadd.f32 %v834, %v1159
        %v1224 = vadd.f32 %v835, %v1160
        %v1225 = vadd.f32 %v836, %v1161
        %v1226 = vadd.f32 %v837, %v1162
        %v1227 = vadd.f32 %v838, %v1163
        %v1228 = vadd.f32 %v839, %v1164
        %v1229 = vadd.f32 %v840, %v1165
        %v1230 = vadd.f32 %v841, %v1166
        %v1231 = vadd.f32 %v842, %v1167
        %v1232 = vadd.f32 %v843, %v1168
        %v1233 = vadd.f32 %v844, %v1169
        %v1234 = vadd.f32 %v845, %v1170
        %v1235 = vadd.f32 %v846, %v1171
        %v1236 = vld [vmem:[%s1 + $0x2] sm:$0x1]
        %1237 = vset.pattern.permute.xlu0 2
        %1238 = vperm.xlu0 %1237, %v394
        %v1239 = vpop.permute.xlu0 %1238
        %1241 = vset.pattern.permute.xlu0 2
        %1242 = vperm.xlu0 %1241, %v395
        %v1243 = vpop.permute.xlu0 %1242
        %1245 = vset.pattern.permute.xlu0 2
        %1246 = vperm.xlu0 %1245, %v396
        %v1247 = vpop.permute.xlu0 %1246
        %1249 = vset.pattern.permute.xlu0 2
        %1250 = vperm.xlu0 %1249, %v397
        %v1251 = vpop.permute.xlu0 %1250
        %1253 = vset.pattern.permute.xlu0 2
        %1254 = vperm.xlu0 %1253, %v398
        %v1255 = vpop.permute.xlu0 %1254
        %1257 = vset.pattern.permute.xlu0 2
        %1258 = vperm.xlu0 %1257, %v399
        %v1259 = vpop.permute.xlu0 %1258
        %1261 = vset.pattern.permute.xlu0 2
        %1262 = vperm.xlu0 %1261, %v400
        %v1263 = vpop.permute.xlu0 %1262
        %1265 = vset.pattern.permute.xlu0 2
        %1266 = vperm.xlu0 %1265, %v401
        %v1267 = vpop.permute.xlu0 %1266
        %1269 = vset.pattern.permute.xlu0 2
        %1270 = vperm.xlu0 %1269, %v402
        %v1271 = vpop.permute.xlu0 %1270
        %1273 = vset.pattern.permute.xlu0 2
        %1274 = vperm.xlu0 %1273, %v403
        %v1275 = vpop.permute.xlu0 %1274
        %1277 = vset.pattern.permute.xlu0 2
        %1278 = vperm.xlu0 %1277, %v404
        %v1279 = vpop.permute.xlu0 %1278
        %1281 = vset.pattern.permute.xlu0 2
        %1282 = vperm.xlu0 %1281, %v405
        %v1283 = vpop.permute.xlu0 %1282
        %1285 = vset.pattern.permute.xlu0 2
        %1286 = vperm.xlu0 %1285, %v406
        %v1287 = vpop.permute.xlu0 %1286
        %1289 = vset.pattern.permute.xlu0 2
        %1290 = vperm.xlu0 %1289, %v407
        %v1291 = vpop.permute.xlu0 %1290
        %1293 = vset.pattern.permute.xlu0 2
        %1294 = vperm.xlu0 %1293, %v408
        %v1295 = vpop.permute.xlu0 %1294
        %1297 = vset.pattern.permute.xlu0 2
        %1298 = vperm.xlu0 %1297, %v409
        %v1299 = vpop.permute.xlu0 %1298
        %1301 = vset.pattern.permute.xlu0 2
        %1302 = vperm.xlu0 %1301, %v410
        %v1303 = vpop.permute.xlu0 %1302
        %1305 = vset.pattern.permute.xlu0 2
        %1306 = vperm.xlu0 %1305, %v411
        %v1307 = vpop.permute.xlu0 %1306
        %1309 = vset.pattern.permute.xlu0 2
        %1310 = vperm.xlu0 %1309, %v412
        %v1311 = vpop.permute.xlu0 %1310
        %1313 = vset.pattern.permute.xlu0 2
        %1314 = vperm.xlu0 %1313, %v413
        %v1315 = vpop.permute.xlu0 %1314
        %1317 = vset.pattern.permute.xlu0 2
        %1318 = vperm.xlu0 %1317, %v414
        %v1319 = vpop.permute.xlu0 %1318
        %1321 = vset.pattern.permute.xlu0 2
        %1322 = vperm.xlu0 %1321, %v415
        %v1323 = vpop.permute.xlu0 %1322
        %1325 = vset.pattern.permute.xlu0 2
        %1326 = vperm.xlu0 %1325, %v416
        %v1327 = vpop.permute.xlu0 %1326
        %1329 = vset.pattern.permute.xlu0 2
        %1330 = vperm.xlu0 %1329, %v417
        %v1331 = vpop.permute.xlu0 %1330
        %1333 = vset.pattern.permute.xlu0 2
        %1334 = vperm.xlu0 %1333, %v418
        %v1335 = vpop.permute.xlu0 %1334
        %1337 = vset.pattern.permute.xlu0 2
        %1338 = vperm.xlu0 %1337, %v419
        %v1339 = vpop.permute.xlu0 %1338
        %1341 = vset.pattern.permute.xlu0 2
        %1342 = vperm.xlu0 %1341, %v420
        %v1343 = vpop.permute.xlu0 %1342
        %1345 = vset.pattern.permute.xlu0 2
        %1346 = vperm.xlu0 %1345, %v421
        %v1347 = vpop.permute.xlu0 %1346
        %1349 = vset.pattern.permute.xlu0 2
        %1350 = vperm.xlu0 %1349, %v422
        %v1351 = vpop.permute.xlu0 %1350
        %1353 = vset.pattern.permute.xlu0 2
        %1354 = vperm.xlu0 %1353, %v423
        %v1355 = vpop.permute.xlu0 %1354
        %1357 = vset.pattern.permute.xlu0 2
        %1358 = vperm.xlu0 %1357, %v424
        %v1359 = vpop.permute.xlu0 %1358
        %1361 = vset.pattern.permute.xlu0 2
        %1362 = vperm.xlu0 %1361, %v425
        %v1363 = vpop.permute.xlu0 %1362
        %1365 = vset.pattern.permute.xlu0 2
        %1366 = vperm.xlu0 %1365, %v426
        %v1367 = vpop.permute.xlu0 %1366
        %1369 = vset.pattern.permute.xlu0 2
        %1370 = vperm.xlu0 %1369, %v427
        %v1371 = vpop.permute.xlu0 %1370
        %1373 = vset.pattern.permute.xlu0 2
        %1374 = vperm.xlu0 %1373, %v428
        %v1375 = vpop.permute.xlu0 %1374
        %1377 = vset.pattern.permute.xlu0 2
        %1378 = vperm.xlu0 %1377, %v429
        %v1379 = vpop.permute.xlu0 %1378
        %1381 = vset.pattern.permute.xlu0 2
        %1382 = vperm.xlu0 %1381, %v430
        %v1383 = vpop.permute.xlu0 %1382
        %1385 = vset.pattern.permute.xlu0 2
        %1386 = vperm.xlu0 %1385, %v431
        %v1387 = vpop.permute.xlu0 %1386
        %1389 = vset.pattern.permute.xlu0 2
        %1390 = vperm.xlu0 %1389, %v432
        %v1391 = vpop.permute.xlu0 %1390
        %1393 = vset.pattern.permute.xlu0 2
        %1394 = vperm.xlu0 %1393, %v433
        %v1395 = vpop.permute.xlu0 %1394
        %1397 = vset.pattern.permute.xlu0 2
        %1398 = vperm.xlu0 %1397, %v434
        %v1399 = vpop.permute.xlu0 %1398
        %1401 = vset.pattern.permute.xlu0 2
        %1402 = vperm.xlu0 %1401, %v435
        %v1403 = vpop.permute.xlu0 %1402
        %1405 = vset.pattern.permute.xlu0 2
        %1406 = vperm.xlu0 %1405, %v436
        %v1407 = vpop.permute.xlu0 %1406
        %1409 = vset.pattern.permute.xlu0 2
        %1410 = vperm.xlu0 %1409, %v437
        %v1411 = vpop.permute.xlu0 %1410
        %1413 = vset.pattern.permute.xlu0 2
        %1414 = vperm.xlu0 %1413, %v438
        %v1415 = vpop.permute.xlu0 %1414
        %1417 = vset.pattern.permute.xlu0 2
        %1418 = vperm.xlu0 %1417, %v439
        %v1419 = vpop.permute.xlu0 %1418
        %1421 = vset.pattern.permute.xlu0 2
        %1422 = vperm.xlu0 %1421, %v440
        %v1423 = vpop.permute.xlu0 %1422
        %1425 = vset.pattern.permute.xlu0 2
        %1426 = vperm.xlu0 %1425, %v441
        %v1427 = vpop.permute.xlu0 %1426
        %1429 = vset.pattern.permute.xlu0 2
        %1430 = vperm.xlu0 %1429, %v442
        %v1431 = vpop.permute.xlu0 %1430
        %1433 = vset.pattern.permute.xlu0 2
        %1434 = vperm.xlu0 %1433, %v443
        %v1435 = vpop.permute.xlu0 %1434
        %1437 = vset.pattern.permute.xlu0 2
        %1438 = vperm.xlu0 %1437, %v444
        %v1439 = vpop.permute.xlu0 %1438
        %1441 = vset.pattern.permute.xlu0 2
        %1442 = vperm.xlu0 %1441, %v445
        %v1443 = vpop.permute.xlu0 %1442
        %1445 = vset.pattern.permute.xlu0 2
        %1446 = vperm.xlu0 %1445, %v446
        %v1447 = vpop.permute.xlu0 %1446
        %1449 = vset.pattern.permute.xlu0 2
        %1450 = vperm.xlu0 %1449, %v447
        %v1451 = vpop.permute.xlu0 %1450
        %1453 = vset.pattern.permute.xlu0 2
        %1454 = vperm.xlu0 %1453, %v448
        %v1455 = vpop.permute.xlu0 %1454
        %1457 = vset.pattern.permute.xlu0 2
        %1458 = vperm.xlu0 %1457, %v449
        %v1459 = vpop.permute.xlu0 %1458
        %1461 = vset.pattern.permute.xlu0 2
        %1462 = vperm.xlu0 %1461, %v450
        %v1463 = vpop.permute.xlu0 %1462
        %1465 = vset.pattern.permute.xlu0 2
        %1466 = vperm.xlu0 %1465, %v451
        %v1467 = vpop.permute.xlu0 %1466
        %1469 = vset.pattern.permute.xlu0 2
        %1470 = vperm.xlu0 %1469, %v452
        %v1471 = vpop.permute.xlu0 %1470
        %1473 = vset.pattern.permute.xlu0 2
        %1474 = vperm.xlu0 %1473, %v453
        %v1475 = vpop.permute.xlu0 %1474
        %1477 = vset.pattern.permute.xlu0 2
        %1478 = vperm.xlu0 %1477, %v454
        %v1479 = vpop.permute.xlu0 %1478
        %1481 = vset.pattern.permute.xlu0 2
        %1482 = vperm.xlu0 %1481, %v455
        %v1483 = vpop.permute.xlu0 %1482
        %1485 = vset.pattern.permute.xlu0 2
        %1486 = vperm.xlu0 %1485, %v456
        %v1487 = vpop.permute.xlu0 %1486
        %1489 = vset.pattern.permute.xlu0 2
        %1490 = vperm.xlu0 %1489, %v457
        %v1491 = vpop.permute.xlu0 %1490
        %v1493 = vlaneseq
        %v1494 = vshrl.u32 %v1493, 7
        %v1495 = vsub.s32 0, %v1494
        %v1496 = vrot.slane %v1236, %v1495
        %v1497 = vmul.f32 %v1239, %v1496
        %v1498 = vmul.f32 %v1243, %v1496
        %v1499 = vmul.f32 %v1247, %v1496
        %v1500 = vmul.f32 %v1251, %v1496
        %v1501 = vmul.f32 %v1255, %v1496
        %v1502 = vmul.f32 %v1259, %v1496
        %v1503 = vmul.f32 %v1263, %v1496
        %v1504 = vmul.f32 %v1267, %v1496
        %v1505 = vmul.f32 %v1271, %v1496
        %v1506 = vmul.f32 %v1275, %v1496
        %v1507 = vmul.f32 %v1279, %v1496
        %v1508 = vmul.f32 %v1283, %v1496
        %v1509 = vmul.f32 %v1287, %v1496
        %v1510 = vmul.f32 %v1291, %v1496
        %v1511 = vmul.f32 %v1295, %v1496
        %v1512 = vmul.f32 %v1299, %v1496
        %v1513 = vmul.f32 %v1303, %v1496
        %v1514 = vmul.f32 %v1307, %v1496
        %v1515 = vmul.f32 %v1311, %v1496
        %v1516 = vmul.f32 %v1315, %v1496
        %v1517 = vmul.f32 %v1319, %v1496
        %v1518 = vmul.f32 %v1323, %v1496
        %v1519 = vmul.f32 %v1327, %v1496
        %v1520 = vmul.f32 %v1331, %v1496
        %v1521 = vmul.f32 %v1335, %v1496
        %v1522 = vmul.f32 %v1339, %v1496
        %v1523 = vmul.f32 %v1343, %v1496
        %v1524 = vmul.f32 %v1347, %v1496
        %v1525 = vmul.f32 %v1351, %v1496
        %v1526 = vmul.f32 %v1355, %v1496
        %v1527 = vmul.f32 %v1359, %v1496
        %v1528 = vmul.f32 %v1363, %v1496
        %v1529 = vmul.f32 %v1367, %v1496
        %v1530 = vmul.f32 %v1371, %v1496
        %v1531 = vmul.f32 %v1375, %v1496
        %v1532 = vmul.f32 %v1379, %v1496
        %v1533 = vmul.f32 %v1383, %v1496
        %v1534 = vmul.f32 %v1387, %v1496
        %v1535 = vmul.f32 %v1391, %v1496
        %v1536 = vmul.f32 %v1395, %v1496
        %v1537 = vmul.f32 %v1399, %v1496
        %v1538 = vmul.f32 %v1403, %v1496
        %v1539 = vmul.f32 %v1407, %v1496
        %v1540 = vmul.f32 %v1411, %v1496
        %v1541 = vmul.f32 %v1415, %v1496
        %v1542 = vmul.f32 %v1419, %v1496
        %v1543 = vmul.f32 %v1423, %v1496
        %v1544 = vmul.f32 %v1427, %v1496
        %v1545 = vmul.f32 %v1431, %v1496
        %v1546 = vmul.f32 %v1435, %v1496
        %v1547 = vmul.f32 %v1439, %v1496
        %v1548 = vmul.f32 %v1443, %v1496
        %v1549 = vmul.f32 %v1447, %v1496
        %v1550 = vmul.f32 %v1451, %v1496
        %v1551 = vmul.f32 %v1455, %v1496
        %v1552 = vmul.f32 %v1459, %v1496
        %v1553 = vmul.f32 %v1463, %v1496
        %v1554 = vmul.f32 %v1467, %v1496
        %v1555 = vmul.f32 %v1471, %v1496
        %v1556 = vmul.f32 %v1475, %v1496
        %v1557 = vmul.f32 %v1479, %v1496
        %v1558 = vmul.f32 %v1483, %v1496
        %v1559 = vmul.f32 %v1487, %v1496
        %v1560 = vmul.f32 %v1491, %v1496
        %v1561 = vadd.f32 %v1172, %v1497
        %v1562 = vadd.f32 %v1173, %v1498
        %v1563 = vadd.f32 %v1174, %v1499
        %v1564 = vadd.f32 %v1175, %v1500
        %v1565 = vadd.f32 %v1176, %v1501
        %v1566 = vadd.f32 %v1177, %v1502
        %v1567 = vadd.f32 %v1178, %v1503
        %v1568 = vadd.f32 %v1179, %v1504
        %v1569 = vadd.f32 %v1180, %v1505
        %v1570 = vadd.f32 %v1181, %v1506
        %v1571 = vadd.f32 %v1182, %v1507
        %v1572 = vadd.f32 %v1183, %v1508
        %v1573 = vadd.f32 %v1184, %v1509
        %v1574 = vadd.f32 %v1185, %v1510
        %v1575 = vadd.f32 %v1186, %v1511
        %v1576 = vadd.f32 %v1187, %v1512
        %v1577 = vadd.f32 %v1188, %v1513
        %v1578 = vadd.f32 %v1189, %v1514
        %v1579 = vadd.f32 %v1190, %v1515
        %v1580 = vadd.f32 %v1191, %v1516
        %v1581 = vadd.f32 %v1192, %v1517
        %v1582 = vadd.f32 %v1193, %v1518
        %v1583 = vadd.f32 %v1194, %v1519
        %v1584 = vadd.f32 %v1195, %v1520
        %v1585 = vadd.f32 %v1196, %v1521
        %v1586 = vadd.f32 %v1197, %v1522
        %v1587 = vadd.f32 %v1198, %v1523
        %v1588 = vadd.f32 %v1199, %v1524
        %v1589 = vadd.f32 %v1200, %v1525
        %v1590 = vadd.f32 %v1201, %v1526
        %v1591 = vadd.f32 %v1202, %v1527
        %v1592 = vadd.f32 %v1203, %v1528
        %v1593 = vadd.f32 %v1204, %v1529
        %v1594 = vadd.f32 %v1205, %v1530
        %v1595 = vadd.f32 %v1206, %v1531
        %v1596 = vadd.f32 %v1207, %v1532
        %v1597 = vadd.f32 %v1208, %v1533
        %v1598 = vadd.f32 %v1209, %v1534
        %v1599 = vadd.f32 %v1210, %v1535
        %v1600 = vadd.f32 %v1211, %v1536
        %v1601 = vadd.f32 %v1212, %v1537
        %v1602 = vadd.f32 %v1213, %v1538
        %v1603 = vadd.f32 %v1214, %v1539
        %v1604 = vadd.f32 %v1215, %v1540
        %v1605 = vadd.f32 %v1216, %v1541
        %v1606 = vadd.f32 %v1217, %v1542
        %v1607 = vadd.f32 %v1218, %v1543
        %v1608 = vadd.f32 %v1219, %v1544
        %v1609 = vadd.f32 %v1220, %v1545
        %v1610 = vadd.f32 %v1221, %v1546
        %v1611 = vadd.f32 %v1222, %v1547
        %v1612 = vadd.f32 %v1223, %v1548
        %v1613 = vadd.f32 %v1224, %v1549
        %v1614 = vadd.f32 %v1225, %v1550
        %v1615 = vadd.f32 %v1226, %v1551
        %v1616 = vadd.f32 %v1227, %v1552
        %v1617 = vadd.f32 %v1228, %v1553
        %v1618 = vadd.f32 %v1229, %v1554
        %v1619 = vadd.f32 %v1230, %v1555
        %v1620 = vadd.f32 %v1231, %v1556
        %v1621 = vadd.f32 %v1232, %v1557
        %v1622 = vadd.f32 %v1233, %v1558
        %v1623 = vadd.f32 %v1234, %v1559
        %v1624 = vadd.f32 %v1235, %v1560
        %v1625 = vld [vmem:[%s2] sm:$0x1]
        %v1627 = vlaneseq
        %v1628 = vshrl.u32 %v1627, 7
        %v1629 = vsub.s32 0, %v1628
        %v1630 = vrot.slane %v1625, %v1629
        %v1632 = vadd.f32 %v1561, %v1630
        %v1633 = vadd.f32 %v1562, %v1630
        %v1634 = vadd.f32 %v1563, %v1630
        %v1635 = vadd.f32 %v1564, %v1630
        %v1636 = vadd.f32 %v1565, %v1630
        %v1637 = vadd.f32 %v1566, %v1630
        %v1638 = vadd.f32 %v1567, %v1630
        %v1639 = vadd.f32 %v1568, %v1630
        %v1640 = vadd.f32 %v1569, %v1630
        %v1641 = vadd.f32 %v1570, %v1630
        %v1642 = vadd.f32 %v1571, %v1630
        %v1643 = vadd.f32 %v1572, %v1630
        %v1644 = vadd.f32 %v1573, %v1630
        %v1645 = vadd.f32 %v1574, %v1630
        %v1646 = vadd.f32 %v1575, %v1630
        %v1647 = vadd.f32 %v1576, %v1630
        %v1648 = vadd.f32 %v1577, %v1630
        %v1649 = vadd.f32 %v1578, %v1630
        %v1650 = vadd.f32 %v1579, %v1630
        %v1651 = vadd.f32 %v1580, %v1630
        %v1652 = vadd.f32 %v1581, %v1630
        %v1653 = vadd.f32 %v1582, %v1630
        %v1654 = vadd.f32 %v1583, %v1630
        %v1655 = vadd.f32 %v1584, %v1630
        %v1656 = vadd.f32 %v1585, %v1630
        %v1657 = vadd.f32 %v1586, %v1630
        %v1658 = vadd.f32 %v1587, %v1630
        %v1659 = vadd.f32 %v1588, %v1630
        %v1660 = vadd.f32 %v1589, %v1630
        %v1661 = vadd.f32 %v1590, %v1630
        %v1662 = vadd.f32 %v1591, %v1630
        %v1663 = vadd.f32 %v1592, %v1630
        %v1664 = vadd.f32 %v1593, %v1630
        %v1665 = vadd.f32 %v1594, %v1630
        %v1666 = vadd.f32 %v1595, %v1630
        %v1667 = vadd.f32 %v1596, %v1630
        %v1668 = vadd.f32 %v1597, %v1630
        %v1669 = vadd.f32 %v1598, %v1630
        %v1670 = vadd.f32 %v1599, %v1630
        %v1671 = vadd.f32 %v1600, %v1630
        %v1672 = vadd.f32 %v1601, %v1630
        %v1673 = vadd.f32 %v1602, %v1630
        %v1674 = vadd.f32 %v1603, %v1630
        %v1675 = vadd.f32 %v1604, %v1630
        %v1676 = vadd.f32 %v1605, %v1630
        %v1677 = vadd.f32 %v1606, %v1630
        %v1678 = vadd.f32 %v1607, %v1630
        %v1679 = vadd.f32 %v1608, %v1630
        %v1680 = vadd.f32 %v1609, %v1630
        %v1681 = vadd.f32 %v1610, %v1630
        %v1682 = vadd.f32 %v1611, %v1630
        %v1683 = vadd.f32 %v1612, %v1630
        %v1684 = vadd.f32 %v1613, %v1630
        %v1685 = vadd.f32 %v1614, %v1630
        %v1686 = vadd.f32 %v1615, %v1630
        %v1687 = vadd.f32 %v1616, %v1630
        %v1688 = vadd.f32 %v1617, %v1630
        %v1689 = vadd.f32 %v1618, %v1630
        %v1690 = vadd.f32 %v1619, %v1630
        %v1691 = vadd.f32 %v1620, %v1630
        %v1692 = vadd.f32 %v1621, %v1630
        %v1693 = vadd.f32 %v1622, %v1630
        %v1694 = vadd.f32 %v1623, %v1630
        %v1695 = vadd.f32 %v1624, %v1630
        %v1696 = vmax.f32 %v1632, 0.0
        %v1697 = vmax.f32 %v1633, 0.0
        %v1698 = vmax.f32 %v1634, 0.0
        %v1699 = vmax.f32 %v1635, 0.0
        %v1700 = vmax.f32 %v1636, 0.0
        %v1701 = vmax.f32 %v1637, 0.0
        %v1702 = vmax.f32 %v1638, 0.0
        %v1703 = vmax.f32 %v1639, 0.0
        %v1704 = vmax.f32 %v1640, 0.0
        %v1705 = vmax.f32 %v1641, 0.0
        %v1706 = vmax.f32 %v1642, 0.0
        %v1707 = vmax.f32 %v1643, 0.0
        %v1708 = vmax.f32 %v1644, 0.0
        %v1709 = vmax.f32 %v1645, 0.0
        %v1710 = vmax.f32 %v1646, 0.0
        %v1711 = vmax.f32 %v1647, 0.0
        %v1712 = vmax.f32 %v1648, 0.0
        %v1713 = vmax.f32 %v1649, 0.0
        %v1714 = vmax.f32 %v1650, 0.0
        %v1715 = vmax.f32 %v1651, 0.0
        %v1716 = vmax.f32 %v1652, 0.0
        %v1717 = vmax.f32 %v1653, 0.0
        %v1718 = vmax.f32 %v1654, 0.0
        %v1719 = vmax.f32 %v1655, 0.0
        %v1720 = vmax.f32 %v1656, 0.0
        %v1721 = vmax.f32 %v1657, 0.0
        %v1722 = vmax.f32 %v1658, 0.0
        %v1723 = vmax.f32 %v1659, 0.0
        %v1724 = vmax.f32 %v1660, 0.0
        %v1725 = vmax.f32 %v1661, 0.0
        %v1726 = vmax.f32 %v1662, 0.0
        %v1727 = vmax.f32 %v1663, 0.0
        %v1728 = vmax.f32 %v1664, 0.0
        %v1729 = vmax.f32 %v1665, 0.0
        %v1730 = vmax.f32 %v1666, 0.0
        %v1731 = vmax.f32 %v1667, 0.0
        %v1732 = vmax.f32 %v1668, 0.0
        %v1733 = vmax.f32 %v1669, 0.0
        %v1734 = vmax.f32 %v1670, 0.0
        %v1735 = vmax.f32 %v1671, 0.0
        %v1736 = vmax.f32 %v1672, 0.0
        %v1737 = vmax.f32 %v1673, 0.0
        %v1738 = vmax.f32 %v1674, 0.0
        %v1739 = vmax.f32 %v1675, 0.0
        %v1740 = vmax.f32 %v1676, 0.0
        %v1741 = vmax.f32 %v1677, 0.0
        %v1742 = vmax.f32 %v1678, 0.0
        %v1743 = vmax.f32 %v1679, 0.0
        %v1744 = vmax.f32 %v1680, 0.0
        %v1745 = vmax.f32 %v1681, 0.0
        %v1746 = vmax.f32 %v1682, 0.0
        %v1747 = vmax.f32 %v1683, 0.0
        %v1748 = vmax.f32 %v1684, 0.0
        %v1749 = vmax.f32 %v1685, 0.0
        %v1750 = vmax.f32 %v1686, 0.0
        %v1751 = vmax.f32 %v1687, 0.0
        %v1752 = vmax.f32 %v1688, 0.0
        %v1753 = vmax.f32 %v1689, 0.0
        %v1754 = vmax.f32 %v1690, 0.0
        %v1755 = vmax.f32 %v1691, 0.0
        %v1756 = vmax.f32 %v1692, 0.0
        %v1757 = vmax.f32 %v1693, 0.0
        %v1758 = vmax.f32 %v1694, 0.0
        %v1759 = vmax.f32 %v1695, 0.0
        %v1760 = vpack.c.bf16 %v1697, %v1696
        %v1761 = vpack.c.bf16 %v1699, %v1698
        %v1762 = vpack.c.bf16 %v1701, %v1700
        %v1763 = vpack.c.bf16 %v1703, %v1702
        %v1764 = vpack.c.bf16 %v1705, %v1704
        %v1765 = vpack.c.bf16 %v1707, %v1706
        %v1766 = vpack.c.bf16 %v1709, %v1708
        %v1767 = vpack.c.bf16 %v1711, %v1710
        %v1768 = vpack.c.bf16 %v1713, %v1712
        %v1769 = vpack.c.bf16 %v1715, %v1714
        %v1770 = vpack.c.bf16 %v1717, %v1716
        %v1771 = vpack.c.bf16 %v1719, %v1718
        %v1772 = vpack.c.bf16 %v1721, %v1720
        %v1773 = vpack.c.bf16 %v1723, %v1722
        %v1774 = vpack.c.bf16 %v1725, %v1724
        %v1775 = vpack.c.bf16 %v1727, %v1726
        %v1776 = vpack.c.bf16 %v1729, %v1728
        %v1777 = vpack.c.bf16 %v1731, %v1730
        %v1778 = vpack.c.bf16 %v1733, %v1732
        %v1779 = vpack.c.bf16 %v1735, %v1734
        %v1780 = vpack.c.bf16 %v1737, %v1736
        %v1781 = vpack.c.bf16 %v1739, %v1738
        %v1782 = vpack.c.bf16 %v1741, %v1740
        %v1783 = vpack.c.bf16 %v1743, %v1742
        %v1784 = vpack.c.bf16 %v1745, %v1744
        %v1785 = vpack.c.bf16 %v1747, %v1746
        %v1786 = vpack.c.bf16 %v1749, %v1748
        %v1787 = vpack.c.bf16 %v1751, %v1750
        %v1788 = vpack.c.bf16 %v1753, %v1752
        %v1789 = vpack.c.bf16 %v1755, %v1754
        %v1790 = vpack.c.bf16 %v1757, %v1756
        %v1791 = vpack.c.bf16 %v1759, %v1758
        %v1792 = vld [vmem:[#allocation2] sm:$0xff]
        %v1793 = vld [vmem:[#allocation2 + $0x8] sm:$0xff]
        %v1794 = vld [vmem:[#allocation2 + $0x10] sm:$0xff]
        %v1795 = vld [vmem:[#allocation2 + $0x18] sm:$0xff]
        %v1796 = vld [vmem:[#allocation2 + $0x20] sm:$0xff]
        %v1797 = vld [vmem:[#allocation2 + $0x28] sm:$0xff]
        %v1798 = vld [vmem:[#allocation2 + $0x30] sm:$0xff]
        %v1799 = vld [vmem:[#allocation2 + $0x38] sm:$0xff]
        %v1800 = vld [vmem:[#allocation2 + $0x40] sm:$0xff]
        %v1801 = vld [vmem:[#allocation2 + $0x48] sm:$0xff]
        %v1802 = vld [vmem:[#allocation2 + $0x50] sm:$0xff]
        %v1803 = vld [vmem:[#allocation2 + $0x58] sm:$0xff]
        %v1804 = vld [vmem:[#allocation2 + $0x60] sm:$0xff]
        %v1805 = vld [vmem:[#allocation2 + $0x68] sm:$0xff]
        %v1806 = vld [vmem:[#allocation2 + $0x70] sm:$0xff]
        %v1807 = vld [vmem:[#allocation2 + $0x78] sm:$0xff]
        %v1808 = vld [vmem:[%s4] sm:$0x3]
        %v1810 = vlaneseq
        %v1811 = vshrl.u32 %v1810, 7
        %v1812 = vsub.s32 0, %v1811
        %v1813 = vrot.slane %v1808, %v1812
        %v1814 = vlaneseq
        %v1815 = vshrl.u32 %v1814, 7
        %v1816 = vsub.s32 1, %v1815
        %v1817 = vrot.slane %v1808, %v1816
        %v1836 = vunpack.c.l.b16 %v1792
        %v1837 = vunpack.c.h.b16 %v1792
        %v1838 = vunpack.c.l.b16 %v1793
        %v1839 = vunpack.c.h.b16 %v1793
        %v1840 = vunpack.c.l.b16 %v1794
        %v1841 = vunpack.c.h.b16 %v1794
        %v1842 = vunpack.c.l.b16 %v1795
        %v1843 = vunpack.c.h.b16 %v1795
        %v1844 = vunpack.c.l.b16 %v1796
        %v1845 = vunpack.c.h.b16 %v1796
        %v1846 = vunpack.c.l.b16 %v1797
        %v1847 = vunpack.c.h.b16 %v1797
        %v1848 = vunpack.c.l.b16 %v1798
        %v1849 = vunpack.c.h.b16 %v1798
        %v1850 = vunpack.c.l.b16 %v1799
        %v1851 = vunpack.c.h.b16 %v1799
        %v1852 = vunpack.c.l.b16 %v1800
        %v1853 = vunpack.c.h.b16 %v1800
        %v1854 = vunpack.c.l.b16 %v1801
        %v1855 = vunpack.c.h.b16 %v1801
        %v1856 = vunpack.c.l.b16 %v1802
        %v1857 = vunpack.c.h.b16 %v1802
        %v1858 = vunpack.c.l.b16 %v1803
        %v1859 = vunpack.c.h.b16 %v1803
        %v1860 = vunpack.c.l.b16 %v1804
        %v1861 = vunpack.c.h.b16 %v1804
        %v1862 = vunpack.c.l.b16 %v1805
        %v1863 = vunpack.c.h.b16 %v1805
        %v1864 = vunpack.c.l.b16 %v1806
        %v1865 = vunpack.c.h.b16 %v1806
        %v1866 = vunpack.c.l.b16 %v1807
        %v1867 = vunpack.c.h.b16 %v1807
        %v1868 = vpack.c.b16 %v1838, %v1836
        %v1869 = vpack.c.b16 %v1839, %v1837
        %v1870 = vpack.c.b16 %v1842, %v1840
        %v1871 = vpack.c.b16 %v1843, %v1841
        %v1872 = vpack.c.b16 %v1846, %v1844
        %v1873 = vpack.c.b16 %v1847, %v1845
        %v1874 = vpack.c.b16 %v1850, %v1848
        %v1875 = vpack.c.b16 %v1851, %v1849
        %v1876 = vpack.c.b16 %v1854, %v1852
        %v1877 = vpack.c.b16 %v1855, %v1853
        %v1878 = vpack.c.b16 %v1858, %v1856
        %v1879 = vpack.c.b16 %v1859, %v1857
        %v1880 = vpack.c.b16 %v1862, %v1860
        %v1881 = vpack.c.b16 %v1863, %v1861
        %v1882 = vpack.c.b16 %v1866, %v1864
        %v1883 = vpack.c.b16 %v1867, %v1865
        %1900 = vmatprep.subr.bf16.mxu0 %v1869
        %1901 = vmatpush1.bf16.msra.mxu0 %v1868
        %1902 = vmatprep.subr.bf16.mxu0 %v1871
        %1903 = vmatpush1.bf16.msra.mxu0 %v1870
        %1904 = vmatprep.subr.bf16.mxu0 %v1873
        %1905 = vmatpush1.bf16.msra.mxu0 %v1872
        %1906 = vmatprep.subr.bf16.mxu0 %v1875
        %1907 = vmatpush1.bf16.msra.mxu0 %v1874
        %1908 = vmatprep.subr.bf16.mxu0 %v1877
        %1909 = vmatpush1.bf16.msra.mxu0 %v1876
        %1910 = vmatprep.subr.bf16.mxu0 %v1879
        %1911 = vmatpush1.bf16.msra.mxu0 %v1878
        %1912 = vmatprep.subr.bf16.mxu0 %v1881
        %1913 = vmatpush1.bf16.msra.mxu0 %v1880
        %1914 = vmatprep.subr.bf16.mxu0 %v1883
        %1915 = vmatpush1.bf16.msra.mxu0 %v1882
        %1916 = vmatprep.subr.bf16.mxu0 0
        %1917 = vmatpush1.bf16.msra.mxu0 0
        %1918 = vmatprep.subr.bf16.mxu0 0
        %1919 = vmatpush1.bf16.msra.mxu0 0
        %1920 = vmatprep.subr.bf16.mxu0 0
        %1921 = vmatpush1.bf16.msra.mxu0 0
        %1922 = vmatprep.subr.bf16.mxu0 0
        %1923 = vmatpush1.bf16.msra.mxu0 0
        %1924 = vmatprep.subr.bf16.mxu0 0
        %1925 = vmatpush1.bf16.msra.mxu0 0
        %1926 = vmatprep.subr.bf16.mxu0 0
        %1927 = vmatpush1.bf16.msra.mxu0 0
        %1928 = vmatprep.subr.bf16.mxu0 0
        %1929 = vmatpush1.bf16.msra.mxu0 0
        %1930 = vmatprep.subr.bf16.mxu0 0
        %1931 = vmatpush1.bf16.msra.mxu0 0
        %1932 = vmatprep.mubr.bf16.mxu0 0
        %1933 = vmatmul.mubr.bf16.gmra.mrb[0].mxu0 %v1760
        %v1934 = vpop.f32.mrb[0].mxu0
        %v1935 = vadd.f32 %v1813, %v1934
        %v1936 = vpop.f32.mrb[0].mxu0
        %v1937 = vadd.f32 %v1817, %v1936
        %v1938 = vpop.f32.mrb[0].mxu0
        %v1939 = vadd.f32 %v1813, %v1938
        %v1940 = vpop.f32.mrb[0].mxu0
        %v1941 = vadd.f32 %v1817, %v1940
        %1942 = vmatprep.mubr.bf16.mxu0 0
        %1943 = vmatmul.mubr.bf16.gmra.mrb[0].mxu0 %v1761
        %v1944 = vpop.f32.mrb[0].mxu0
        %v1945 = vadd.f32 %v1813, %v1944
        %v1946 = vpop.f32.mrb[0].mxu0
        %v1947 = vadd.f32 %v1817, %v1946
        %v1948 = vpop.f32.mrb[0].mxu0
        %v1949 = vadd.f32 %v1813, %v1948
        %v1950 = vpop.f32.mrb[0].mxu0
        %v1951 = vadd.f32 %v1817, %v1950
        %1952 = vmatprep.mubr.bf16.mxu0 0
        %1953 = vmatmul.mubr.bf16.gmra.mrb[0].mxu0 %v1762
        %v1954 = vpop.f32.mrb[0].mxu0
        %v1955 = vadd.f32 %v1813, %v1954
        %v1956 = vpop.f32.mrb[0].mxu0
        %v1957 = vadd.f32 %v1817, %v1956
        %v1958 = vpop.f32.mrb[0].mxu0
        %v1959 = vadd.f32 %v1813, %v1958
        %v1960 = vpop.f32.mrb[0].mxu0
        %v1961 = vadd.f32 %v1817, %v1960
        %1962 = vmatprep.mubr.bf16.mxu0 0
        %1963 = vmatmul.mubr.bf16.gmra.mrb[0].mxu0 %v1763
        %v1964 = vpop.f32.mrb[0].mxu0
        %v1965 = vadd.f32 %v1813, %v1964
        %v1966 = vpop.f32.mrb[0].mxu0
        %v1967 = vadd.f32 %v1817, %v1966
        %v1968 = vpop.f32.mrb[0].mxu0
        %v1969 = vadd.f32 %v1813, %v1968
        %v1970 = vpop.f32.mrb[0].mxu0
        %v1971 = vadd.f32 %v1817, %v1970
        %1972 = vmatprep.mubr.bf16.mxu0 0
        %1973 = vmatmul.mubr.bf16.gmra.mrb[0].mxu0 %v1764
        %v1974 = vpop.f32.mrb[0].mxu0
        %v1975 = vadd.f32 %v1813, %v1974
        %v1976 = vpop.f32.mrb[0].mxu0
        %v1977 = vadd.f32 %v1817, %v1976
        %v1978 = vpop.f32.mrb[0].mxu0
        %v1979 = vadd.f32 %v1813, %v1978
        %v1980 = vpop.f32.mrb[0].mxu0
        %v1981 = vadd.f32 %v1817, %v1980
        %1982 = vmatprep.mubr.bf16.mxu0 0
        %1983 = vmatmul.mubr.bf16.gmra.mrb[0].mxu0 %v1765
        %v1984 = vpop.f32.mrb[0].mxu0
        %v1985 = vadd.f32 %v1813, %v1984
        %v1986 = vpop.f32.mrb[0].mxu0
        %v1987 = vadd.f32 %v1817, %v1986
        %v1988 = vpop.f32.mrb[0].mxu0
        %v1989 = vadd.f32 %v1813, %v1988
        %v1990 = vpop.f32.mrb[0].mxu0
        %v1991 = vadd.f32 %v1817, %v1990
        %1992 = vmatprep.mubr.bf16.mxu0 0
        %1993 = vmatmul.mubr.bf16.gmra.mrb[0].mxu0 %v1766
        %v1994 = vpop.f32.mrb[0].mxu0
        %v1995 = vadd.f32 %v1813, %v1994
        %v1996 = vpop.f32.mrb[0].mxu0
        %v1997 = vadd.f32 %v1817, %v1996
        %v1998 = vpop.f32.mrb[0].mxu0
        %v1999 = vadd.f32 %v1813, %v1998
        %v2000 = vpop.f32.mrb[0].mxu0
        %v2001 = vadd.f32 %v1817, %v2000
        %2002 = vmatprep.mubr.bf16.mxu0 0
        %2003 = vmatmul.mubr.bf16.gmra.mrb[0].mxu0 %v1767
        %v2004 = vpop.f32.mrb[0].mxu0
        %v2005 = vadd.f32 %v1813, %v2004
        %v2006 = vpop.f32.mrb[0].mxu0
        %v2007 = vadd.f32 %v1817, %v2006
        %v2008 = vpop.f32.mrb[0].mxu0
        %v2009 = vadd.f32 %v1813, %v2008
        %v2010 = vpop.f32.mrb[0].mxu0
        %v2011 = vadd.f32 %v1817, %v2010
        %2012 = vmatprep.mubr.bf16.mxu0 0
        %2013 = vmatmul.mubr.bf16.gmra.mrb[0].mxu0 %v1768
        %v2014 = vpop.f32.mrb[0].mxu0
        %v2015 = vadd.f32 %v1813, %v2014
        %v2016 = vpop.f32.mrb[0].mxu0
        %v2017 = vadd.f32 %v1817, %v2016
        %v2018 = vpop.f32.mrb[0].mxu0
        %v2019 = vadd.f32 %v1813, %v2018
        %v2020 = vpop.f32.mrb[0].mxu0
        %v2021 = vadd.f32 %v1817, %v2020
        %2022 = vmatprep.mubr.bf16.mxu0 0
        %2023 = vmatmul.mubr.bf16.gmra.mrb[0].mxu0 %v1769
        %v2024 = vpop.f32.mrb[0].mxu0
        %v2025 = vadd.f32 %v1813, %v2024
        %v2026 = vpop.f32.mrb[0].mxu0
        %v2027 = vadd.f32 %v1817, %v2026
        %v2028 = vpop.f32.mrb[0].mxu0
        %v2029 = vadd.f32 %v1813, %v2028
        %v2030 = vpop.f32.mrb[0].mxu0
        %v2031 = vadd.f32 %v1817, %v2030
        %2032 = vmatprep.mubr.bf16.mxu0 0
        %2033 = vmatmul.mubr.bf16.gmra.mrb[0].mxu0 %v1770
        %v2034 = vpop.f32.mrb[0].mxu0
        %v2035 = vadd.f32 %v1813, %v2034
        %v2036 = vpop.f32.mrb[0].mxu0
        %v2037 = vadd.f32 %v1817, %v2036
        %v2038 = vpop.f32.mrb[0].mxu0
        %v2039 = vadd.f32 %v1813, %v2038
        %v2040 = vpop.f32.mrb[0].mxu0
        %v2041 = vadd.f32 %v1817, %v2040
        %2042 = vmatprep.mubr.bf16.mxu0 0
        %2043 = vmatmul.mubr.bf16.gmra.mrb[0].mxu0 %v1771
        %v2044 = vpop.f32.mrb[0].mxu0
        %v2045 = vadd.f32 %v1813, %v2044
        %v2046 = vpop.f32.mrb[0].mxu0
        %v2047 = vadd.f32 %v1817, %v2046
        %v2048 = vpop.f32.mrb[0].mxu0
        %v2049 = vadd.f32 %v1813, %v2048
        %v2050 = vpop.f32.mrb[0].mxu0
        %v2051 = vadd.f32 %v1817, %v2050
        %2052 = vmatprep.mubr.bf16.mxu0 0
        %2053 = vmatmul.mubr.bf16.gmra.mrb[0].mxu0 %v1772
        %v2054 = vpop.f32.mrb[0].mxu0
        %v2055 = vadd.f32 %v1813, %v2054
        %v2056 = vpop.f32.mrb[0].mxu0
        %v2057 = vadd.f32 %v1817, %v2056
        %v2058 = vpop.f32.mrb[0].mxu0
        %v2059 = vadd.f32 %v1813, %v2058
        %v2060 = vpop.f32.mrb[0].mxu0
        %v2061 = vadd.f32 %v1817, %v2060
        %2062 = vmatprep.mubr.bf16.mxu0 0
        %2063 = vmatmul.mubr.bf16.gmra.mrb[0].mxu0 %v1773
        %v2064 = vpop.f32.mrb[0].mxu0
        %v2065 = vadd.f32 %v1813, %v2064
        %v2066 = vpop.f32.mrb[0].mxu0
        %v2067 = vadd.f32 %v1817, %v2066
        %v2068 = vpop.f32.mrb[0].mxu0
        %v2069 = vadd.f32 %v1813, %v2068
        %v2070 = vpop.f32.mrb[0].mxu0
        %v2071 = vadd.f32 %v1817, %v2070
        %2072 = vmatprep.mubr.bf16.mxu0 0
        %2073 = vmatmul.mubr.bf16.gmra.mrb[0].mxu0 %v1774
        %v2074 = vpop.f32.mrb[0].mxu0
        %v2075 = vadd.f32 %v1813, %v2074
        %v2076 = vpop.f32.mrb[0].mxu0
        %v2077 = vadd.f32 %v1817, %v2076
        %v2078 = vpop.f32.mrb[0].mxu0
        %v2079 = vadd.f32 %v1813, %v2078
        %v2080 = vpop.f32.mrb[0].mxu0
        %v2081 = vadd.f32 %v1817, %v2080
        %2082 = vmatprep.mubr.bf16.mxu0 0
        %2083 = vmatmul.mubr.bf16.gmra.mrb[0].mxu0 %v1775
        %v2084 = vpop.f32.mrb[0].mxu0
        %v2085 = vadd.f32 %v1813, %v2084
        %v2086 = vpop.f32.mrb[0].mxu0
        %v2087 = vadd.f32 %v1817, %v2086
        %v2088 = vpop.f32.mrb[0].mxu0
        %v2089 = vadd.f32 %v1813, %v2088
        %v2090 = vpop.f32.mrb[0].mxu0
        %v2091 = vadd.f32 %v1817, %v2090
        %2092 = vmatprep.mubr.bf16.mxu0 0
        %2093 = vmatmul.mubr.bf16.gmra.mrb[0].mxu0 %v1776
        %v2094 = vpop.f32.mrb[0].mxu0
        %v2095 = vadd.f32 %v1813, %v2094
        %v2096 = vpop.f32.mrb[0].mxu0
        %v2097 = vadd.f32 %v1817, %v2096
        %v2098 = vpop.f32.mrb[0].mxu0
        %v2099 = vadd.f32 %v1813, %v2098
        %v2100 = vpop.f32.mrb[0].mxu0
        %v2101 = vadd.f32 %v1817, %v2100
        %2102 = vmatprep.mubr.bf16.mxu0 0
        %2103 = vmatmul.mubr.bf16.gmra.mrb[0].mxu0 %v1777
        %v2104 = vpop.f32.mrb[0].mxu0
        %v2105 = vadd.f32 %v1813, %v2104
        %v2106 = vpop.f32.mrb[0].mxu0
        %v2107 = vadd.f32 %v1817, %v2106
        %v2108 = vpop.f32.mrb[0].mxu0
        %v2109 = vadd.f32 %v1813, %v2108
        %v2110 = vpop.f32.mrb[0].mxu0
        %v2111 = vadd.f32 %v1817, %v2110
        %2112 = vmatprep.mubr.bf16.mxu0 0
        %2113 = vmatmul.mubr.bf16.gmra.mrb[0].mxu0 %v1778
        %v2114 = vpop.f32.mrb[0].mxu0
        %v2115 = vadd.f32 %v1813, %v2114
        %v2116 = vpop.f32.mrb[0].mxu0
        %v2117 = vadd.f32 %v1817, %v2116
        %v2118 = vpop.f32.mrb[0].mxu0
        %v2119 = vadd.f32 %v1813, %v2118
        %v2120 = vpop.f32.mrb[0].mxu0
        %v2121 = vadd.f32 %v1817, %v2120
        %2122 = vmatprep.mubr.bf16.mxu0 0
        %2123 = vmatmul.mubr.bf16.gmra.mrb[0].mxu0 %v1779
        %v2124 = vpop.f32.mrb[0].mxu0
        %v2125 = vadd.f32 %v1813, %v2124
        %v2126 = vpop.f32.mrb[0].mxu0
        %v2127 = vadd.f32 %v1817, %v2126
        %v2128 = vpop.f32.mrb[0].mxu0
        %v2129 = vadd.f32 %v1813, %v2128
        %v2130 = vpop.f32.mrb[0].mxu0
        %v2131 = vadd.f32 %v1817, %v2130
        %2132 = vmatprep.mubr.bf16.mxu0 0
        %2133 = vmatmul.mubr.bf16.gmra.mrb[0].mxu0 %v1780
        %v2134 = vpop.f32.mrb[0].mxu0
        %v2135 = vadd.f32 %v1813, %v2134
        %v2136 = vpop.f32.mrb[0].mxu0
        %v2137 = vadd.f32 %v1817, %v2136
        %v2138 = vpop.f32.mrb[0].mxu0
        %v2139 = vadd.f32 %v1813, %v2138
        %v2140 = vpop.f32.mrb[0].mxu0
        %v2141 = vadd.f32 %v1817, %v2140
        %2142 = vmatprep.mubr.bf16.mxu0 0
        %2143 = vmatmul.mubr.bf16.gmra.mrb[0].mxu0 %v1781
        %v2144 = vpop.f32.mrb[0].mxu0
        %v2145 = vadd.f32 %v1813, %v2144
        %v2146 = vpop.f32.mrb[0].mxu0
        %v2147 = vadd.f32 %v1817, %v2146
        %v2148 = vpop.f32.mrb[0].mxu0
        %v2149 = vadd.f32 %v1813, %v2148
        %v2150 = vpop.f32.mrb[0].mxu0
        %v2151 = vadd.f32 %v1817, %v2150
        %2152 = vmatprep.mubr.bf16.mxu0 0
        %2153 = vmatmul.mubr.bf16.gmra.mrb[0].mxu0 %v1782
        %v2154 = vpop.f32.mrb[0].mxu0
        %v2155 = vadd.f32 %v1813, %v2154
        %v2156 = vpop.f32.mrb[0].mxu0
        %v2157 = vadd.f32 %v1817, %v2156
        %v2158 = vpop.f32.mrb[0].mxu0
        %v2159 = vadd.f32 %v1813, %v2158
        %v2160 = vpop.f32.mrb[0].mxu0
        %v2161 = vadd.f32 %v1817, %v2160
        %2162 = vmatprep.mubr.bf16.mxu0 0
        %2163 = vmatmul.mubr.bf16.gmra.mrb[0].mxu0 %v1783
        %v2164 = vpop.f32.mrb[0].mxu0
        %v2165 = vadd.f32 %v1813, %v2164
        %v2166 = vpop.f32.mrb[0].mxu0
        %v2167 = vadd.f32 %v1817, %v2166
        %v2168 = vpop.f32.mrb[0].mxu0
        %v2169 = vadd.f32 %v1813, %v2168
        %v2170 = vpop.f32.mrb[0].mxu0
        %v2171 = vadd.f32 %v1817, %v2170
        %2172 = vmatprep.mubr.bf16.mxu0 0
        %2173 = vmatmul.mubr.bf16.gmra.mrb[0].mxu0 %v1784
        %v2174 = vpop.f32.mrb[0].mxu0
        %v2175 = vadd.f32 %v1813, %v2174
        %v2176 = vpop.f32.mrb[0].mxu0
        %v2177 = vadd.f32 %v1817, %v2176
        %v2178 = vpop.f32.mrb[0].mxu0
        %v2179 = vadd.f32 %v1813, %v2178
        %v2180 = vpop.f32.mrb[0].mxu0
        %v2181 = vadd.f32 %v1817, %v2180
        %2182 = vmatprep.mubr.bf16.mxu0 0
        %2183 = vmatmul.mubr.bf16.gmra.mrb[0].mxu0 %v1785
        %v2184 = vpop.f32.mrb[0].mxu0
        %v2185 = vadd.f32 %v1813, %v2184
        %v2186 = vpop.f32.mrb[0].mxu0
        %v2187 = vadd.f32 %v1817, %v2186
        %v2188 = vpop.f32.mrb[0].mxu0
        %v2189 = vadd.f32 %v1813, %v2188
        %v2190 = vpop.f32.mrb[0].mxu0
        %v2191 = vadd.f32 %v1817, %v2190
        %2192 = vmatprep.mubr.bf16.mxu0 0
        %2193 = vmatmul.mubr.bf16.gmra.mrb[0].mxu0 %v1786
        %v2194 = vpop.f32.mrb[0].mxu0
        %v2195 = vadd.f32 %v1813, %v2194
        %v2196 = vpop.f32.mrb[0].mxu0
        %v2197 = vadd.f32 %v1817, %v2196
        %v2198 = vpop.f32.mrb[0].mxu0
        %v2199 = vadd.f32 %v1813, %v2198
        %v2200 = vpop.f32.mrb[0].mxu0
        %v2201 = vadd.f32 %v1817, %v2200
        %2202 = vmatprep.mubr.bf16.mxu0 0
        %2203 = vmatmul.mubr.bf16.gmra.mrb[0].mxu0 %v1787
        %v2204 = vpop.f32.mrb[0].mxu0
        %v2205 = vadd.f32 %v1813, %v2204
        %v2206 = vpop.f32.mrb[0].mxu0
        %v2207 = vadd.f32 %v1817, %v2206
        %v2208 = vpop.f32.mrb[0].mxu0
        %v2209 = vadd.f32 %v1813, %v2208
        %v2210 = vpop.f32.mrb[0].mxu0
        %v2211 = vadd.f32 %v1817, %v2210
        %2212 = vmatprep.mubr.bf16.mxu0 0
        %2213 = vmatmul.mubr.bf16.gmra.mrb[0].mxu0 %v1788
        %v2214 = vpop.f32.mrb[0].mxu0
        %v2215 = vadd.f32 %v1813, %v2214
        %v2216 = vpop.f32.mrb[0].mxu0
        %v2217 = vadd.f32 %v1817, %v2216
        %v2218 = vpop.f32.mrb[0].mxu0
        %v2219 = vadd.f32 %v1813, %v2218
        %v2220 = vpop.f32.mrb[0].mxu0
        %v2221 = vadd.f32 %v1817, %v2220
        %2222 = vmatprep.mubr.bf16.mxu0 0
        %2223 = vmatmul.mubr.bf16.gmra.mrb[0].mxu0 %v1789
        %v2224 = vpop.f32.mrb[0].mxu0
        %v2225 = vadd.f32 %v1813, %v2224
        %v2226 = vpop.f32.mrb[0].mxu0
        %v2227 = vadd.f32 %v1817, %v2226
        %v2228 = vpop.f32.mrb[0].mxu0
        %v2229 = vadd.f32 %v1813, %v2228
        %v2230 = vpop.f32.mrb[0].mxu0
        %v2231 = vadd.f32 %v1817, %v2230
        %2232 = vmatprep.mubr.bf16.mxu0 0
        %2233 = vmatmul.mubr.bf16.gmra.mrb[0].mxu0 %v1790
        %v2234 = vpop.f32.mrb[0].mxu0
        %v2235 = vadd.f32 %v1813, %v2234
        %v2236 = vpop.f32.mrb[0].mxu0
        %v2237 = vadd.f32 %v1817, %v2236
        %v2238 = vpop.f32.mrb[0].mxu0
        %v2239 = vadd.f32 %v1813, %v2238
        %v2240 = vpop.f32.mrb[0].mxu0
        %v2241 = vadd.f32 %v1817, %v2240
        %2242 = vmatprep.mubr.bf16.mxu0 0
        %2243 = vmatmul.mubr.bf16.gmra.mrb[0].mxu0 %v1791
        %v2244 = vpop.f32.mrb[0].mxu0
        %v2245 = vadd.f32 %v1813, %v2244
        %v2246 = vpop.f32.mrb[0].mxu0
        %v2247 = vadd.f32 %v1817, %v2246
        %v2248 = vpop.f32.mrb[0].mxu0
        %v2249 = vadd.f32 %v1813, %v2248
        %v2250 = vpop.f32.mrb[0].mxu0
        %v2251 = vadd.f32 %v1817, %v2250
        %2252 = vdwg.mxu0
        %v2253 = vmax.f32 %v1935, %v1939
        %v2254 = vmax.f32 %v2253, %v1945
        %v2255 = vmax.f32 %v2254, %v1949
        %v2256 = vmax.f32 %v2255, %v1955
        %v2257 = vmax.f32 %v2256, %v1959
        %v2258 = vmax.f32 %v2257, %v1965
        %v2259 = vmax.f32 %v2258, %v1969
        %v2260 = vrot.slane %v2259, 4
        %v2261 = vmax.f32 %v2259, %v2260
        %v2262 = vrot.slane %v2261, 2
        %v2263 = vmax.f32 %v2261, %v2262
        %v2264 = vrot.slane %v2263, 1
        %v2265 = vmax.f32 %v2263, %v2264
        %v2266 = vmax.f32 %v1937, %v1941
        %v2267 = vmax.f32 %v2266, %v1947
        %v2268 = vmax.f32 %v2267, %v1951
        %v2269 = vmax.f32 %v2268, %v1957
        %v2270 = vmax.f32 %v2269, %v1961
        %v2271 = vmax.f32 %v2270, %v1967
        %v2272 = vmax.f32 %v2271, %v1971
        %v2273 = vrot.slane %v2272, 4
        %v2274 = vmax.f32 %v2272, %v2273
        %v2275 = vrot.slane %v2274, 2
        %v2276 = vmax.f32 %v2274, %v2275
        %v2277 = vrot.slane %v2276, 1
        %v2278 = vmax.f32 %v2276, %v2277
        %v2279 = vmax.f32 %v1975, %v1979
        %v2280 = vmax.f32 %v2279, %v1985
        %v2281 = vmax.f32 %v2280, %v1989
        %v2282 = vmax.f32 %v2281, %v1995
        %v2283 = vmax.f32 %v2282, %v1999
        %v2284 = vmax.f32 %v2283, %v2005
        %v2285 = vmax.f32 %v2284, %v2009
        %v2286 = vrot.slane %v2285, 4
        %v2287 = vmax.f32 %v2285, %v2286
        %v2288 = vrot.slane %v2287, 2
        %v2289 = vmax.f32 %v2287, %v2288
        %v2290 = vrot.slane %v2289, 1
        %v2291 = vmax.f32 %v2289, %v2290
        %v2292 = vmax.f32 %v1977, %v1981
        %v2293 = vmax.f32 %v2292, %v1987
        %v2294 = vmax.f32 %v2293, %v1991
        %v2295 = vmax.f32 %v2294, %v1997
        %v2296 = vmax.f32 %v2295, %v2001
        %v2297 = vmax.f32 %v2296, %v2007
        %v2298 = vmax.f32 %v2297, %v2011
        %v2299 = vrot.slane %v2298, 4
        %v2300 = vmax.f32 %v2298, %v2299
        %v2301 = vrot.slane %v2300, 2
        %v2302 = vmax.f32 %v2300, %v2301
        %v2303 = vrot.slane %v2302, 1
        %v2304 = vmax.f32 %v2302, %v2303
        %v2305 = vmax.f32 %v2015, %v2019
        %v2306 = vmax.f32 %v2305, %v2025
        %v2307 = vmax.f32 %v2306, %v2029
        %v2308 = vmax.f32 %v2307, %v2035
        %v2309 = vmax.f32 %v2308, %v2039
        %v2310 = vmax.f32 %v2309, %v2045
        %v2311 = vmax.f32 %v2310, %v2049
        %v2312 = vrot.slane %v2311, 4
        %v2313 = vmax.f32 %v2311, %v2312
        %v2314 = vrot.slane %v2313, 2
        %v2315 = vmax.f32 %v2313, %v2314
        %v2316 = vrot.slane %v2315, 1
        %v2317 = vmax.f32 %v2315, %v2316
        %v2318 = vmax.f32 %v2017, %v2021
        %v2319 = vmax.f32 %v2318, %v2027
        %v2320 = vmax.f32 %v2319, %v2031
        %v2321 = vmax.f32 %v2320, %v2037
        %v2322 = vmax.f32 %v2321, %v2041
        %v2323 = vmax.f32 %v2322, %v2047
        %v2324 = vmax.f32 %v2323, %v2051
        %v2325 = vrot.slane %v2324, 4
        %v2326 = vmax.f32 %v2324, %v2325
        %v2327 = vrot.slane %v2326, 2
        %v2328 = vmax.f32 %v2326, %v2327
        %v2329 = vrot.slane %v2328, 1
        %v2330 = vmax.f32 %v2328, %v2329
        %v2331 = vmax.f32 %v2055, %v2059
        %v2332 = vmax.f32 %v2331, %v2065
        %v2333 = vmax.f32 %v2332, %v2069
        %v2334 = vmax.f32 %v2333, %v2075
        %v2335 = vmax.f32 %v2334, %v2079
        %v2336 = vmax.f32 %v2335, %v2085
        %v2337 = vmax.f32 %v2336, %v2089
        %v2338 = vrot.slane %v2337, 4
        %v2339 = vmax.f32 %v2337, %v2338
        %v2340 = vrot.slane %v2339, 2
        %v2341 = vmax.f32 %v2339, %v2340
        %v2342 = vrot.slane %v2341, 1
        %v2343 = vmax.f32 %v2341, %v2342
        %v2344 = vmax.f32 %v2057, %v2061
        %v2345 = vmax.f32 %v2344, %v2067
        %v2346 = vmax.f32 %v2345, %v2071
        %v2347 = vmax.f32 %v2346, %v2077
        %v2348 = vmax.f32 %v2347, %v2081
        %v2349 = vmax.f32 %v2348, %v2087
        %v2350 = vmax.f32 %v2349, %v2091
        %v2351 = vrot.slane %v2350, 4
        %v2352 = vmax.f32 %v2350, %v2351
        %v2353 = vrot.slane %v2352, 2
        %v2354 = vmax.f32 %v2352, %v2353
        %v2355 = vrot.slane %v2354, 1
        %v2356 = vmax.f32 %v2354, %v2355
        %v2357 = vmax.f32 %v2095, %v2099
        %v2358 = vmax.f32 %v2357, %v2105
        %v2359 = vmax.f32 %v2358, %v2109
        %v2360 = vmax.f32 %v2359, %v2115
        %v2361 = vmax.f32 %v2360, %v2119
        %v2362 = vmax.f32 %v2361, %v2125
        %v2363 = vmax.f32 %v2362, %v2129
        %v2364 = vrot.slane %v2363, 4
        %v2365 = vmax.f32 %v2363, %v2364
        %v2366 = vrot.slane %v2365, 2
        %v2367 = vmax.f32 %v2365, %v2366
        %v2368 = vrot.slane %v2367, 1
        %v2369 = vmax.f32 %v2367, %v2368
        %v2370 = vmax.f32 %v2097, %v2101
        %v2371 = vmax.f32 %v2370, %v2107
        %v2372 = vmax.f32 %v2371, %v2111
        %v2373 = vmax.f32 %v2372, %v2117
        %v2374 = vmax.f32 %v2373, %v2121
        %v2375 = vmax.f32 %v2374, %v2127
        %v2376 = vmax.f32 %v2375, %v2131
        %v2377 = vrot.slane %v2376, 4
        %v2378 = vmax.f32 %v2376, %v2377
        %v2379 = vrot.slane %v2378, 2
        %v2380 = vmax.f32 %v2378, %v2379
        %v2381 = vrot.slane %v2380, 1
        %v2382 = vmax.f32 %v2380, %v2381
        %v2383 = vmax.f32 %v2135, %v2139
        %v2384 = vmax.f32 %v2383, %v2145
        %v2385 = vmax.f32 %v2384, %v2149
        %v2386 = vmax.f32 %v2385, %v2155
        %v2387 = vmax.f32 %v2386, %v2159
        %v2388 = vmax.f32 %v2387, %v2165
        %v2389 = vmax.f32 %v2388, %v2169
        %v2390 = vrot.slane %v2389, 4
        %v2391 = vmax.f32 %v2389, %v2390
        %v2392 = vrot.slane %v2391, 2
        %v2393 = vmax.f32 %v2391, %v2392
        %v2394 = vrot.slane %v2393, 1
        %v2395 = vmax.f32 %v2393, %v2394
        %v2396 = vmax.f32 %v2137, %v2141
        %v2397 = vmax.f32 %v2396, %v2147
        %v2398 = vmax.f32 %v2397, %v2151
        %v2399 = vmax.f32 %v2398, %v2157
        %v2400 = vmax.f32 %v2399, %v2161
        %v2401 = vmax.f32 %v2400, %v2167
        %v2402 = vmax.f32 %v2401, %v2171
        %v2403 = vrot.slane %v2402, 4
        %v2404 = vmax.f32 %v2402, %v2403
        %v2405 = vrot.slane %v2404, 2
        %v2406 = vmax.f32 %v2404, %v2405
        %v2407 = vrot.slane %v2406, 1
        %v2408 = vmax.f32 %v2406, %v2407
        %v2409 = vmax.f32 %v2175, %v2179
        %v2410 = vmax.f32 %v2409, %v2185
        %v2411 = vmax.f32 %v2410, %v2189
        %v2412 = vmax.f32 %v2411, %v2195
        %v2413 = vmax.f32 %v2412, %v2199
        %v2414 = vmax.f32 %v2413, %v2205
        %v2415 = vmax.f32 %v2414, %v2209
        %v2416 = vrot.slane %v2415, 4
        %v2417 = vmax.f32 %v2415, %v2416
        %v2418 = vrot.slane %v2417, 2
        %v2419 = vmax.f32 %v2417, %v2418
        %v2420 = vrot.slane %v2419, 1
        %v2421 = vmax.f32 %v2419, %v2420
        %v2422 = vmax.f32 %v2177, %v2181
        %v2423 = vmax.f32 %v2422, %v2187
        %v2424 = vmax.f32 %v2423, %v2191
        %v2425 = vmax.f32 %v2424, %v2197
        %v2426 = vmax.f32 %v2425, %v2201
        %v2427 = vmax.f32 %v2426, %v2207
        %v2428 = vmax.f32 %v2427, %v2211
        %v2429 = vrot.slane %v2428, 4
        %v2430 = vmax.f32 %v2428, %v2429
        %v2431 = vrot.slane %v2430, 2
        %v2432 = vmax.f32 %v2430, %v2431
        %v2433 = vrot.slane %v2432, 1
        %v2434 = vmax.f32 %v2432, %v2433
        %v2435 = vmax.f32 %v2215, %v2219
        %v2436 = vmax.f32 %v2435, %v2225
        %v2437 = vmax.f32 %v2436, %v2229
        %v2438 = vmax.f32 %v2437, %v2235
        %v2439 = vmax.f32 %v2438, %v2239
        %v2440 = vmax.f32 %v2439, %v2245
        %v2441 = vmax.f32 %v2440, %v2249
        %v2442 = vrot.slane %v2441, 4
        %v2443 = vmax.f32 %v2441, %v2442
        %v2444 = vrot.slane %v2443, 2
        %v2445 = vmax.f32 %v2443, %v2444
        %v2446 = vrot.slane %v2445, 1
        %v2447 = vmax.f32 %v2445, %v2446
        %v2448 = vmax.f32 %v2217, %v2221
        %v2449 = vmax.f32 %v2448, %v2227
        %v2450 = vmax.f32 %v2449, %v2231
        %v2451 = vmax.f32 %v2450, %v2237
        %v2452 = vmax.f32 %v2451, %v2241
        %v2453 = vmax.f32 %v2452, %v2247
        %v2454 = vmax.f32 %v2453, %v2251
        %v2455 = vrot.slane %v2454, 4
        %v2456 = vmax.f32 %v2454, %v2455
        %v2457 = vrot.slane %v2456, 2
        %v2458 = vmax.f32 %v2456, %v2457
        %v2459 = vrot.slane %v2458, 1
        %v2460 = vmax.f32 %v2458, %v2459
        %v2461 = vpack.c.bf16 %v2265, %v2265
        %v2462 = vpack.c.bf16 %v2278, %v2278
        %v2463 = vpack.c.bf16 %v2291, %v2291
        %v2464 = vpack.c.bf16 %v2304, %v2304
        %v2465 = vpack.c.bf16 %v2317, %v2317
        %v2466 = vpack.c.bf16 %v2330, %v2330
        %v2467 = vpack.c.bf16 %v2343, %v2343
        %v2468 = vpack.c.bf16 %v2356, %v2356
        %v2469 = vpack.c.bf16 %v2369, %v2369
        %v2470 = vpack.c.bf16 %v2382, %v2382
        %v2471 = vpack.c.bf16 %v2395, %v2395
        %v2472 = vpack.c.bf16 %v2408, %v2408
        %v2473 = vpack.c.bf16 %v2421, %v2421
        %v2474 = vpack.c.bf16 %v2434, %v2434
        %v2475 = vpack.c.bf16 %v2447, %v2447
        %v2476 = vpack.c.bf16 %v2460, %v2460
        %v2477 = vld [vmem:[%s6] sm:$0xff]
        %v2478 = vld [vmem:[%s6 + $0x8] sm:$0xff]
        %v2479 = vld [vmem:[%s6 + $0x10] sm:$0xff]
        %v2480 = vld [vmem:[%s6 + $0x18] sm:$0xff]
        %v2481 = vld [vmem:[%s6 + $0x20] sm:$0xff]
        %v2482 = vld [vmem:[%s6 + $0x28] sm:$0xff]
        %v2483 = vld [vmem:[%s6 + $0x30] sm:$0xff]
        %v2484 = vld [vmem:[%s6 + $0x38] sm:$0xff]
        %v2485 = vld [vmem:[%s6 + $0x40] sm:$0xff]
        %v2486 = vld [vmem:[%s6 + $0x48] sm:$0xff]
        %v2487 = vld [vmem:[%s6 + $0x50] sm:$0xff]
        %v2488 = vld [vmem:[%s6 + $0x58] sm:$0xff]
        %v2489 = vld [vmem:[%s6 + $0x60] sm:$0xff]
        %v2490 = vld [vmem:[%s6 + $0x68] sm:$0xff]
        %v2491 = vld [vmem:[%s6 + $0x70] sm:$0xff]
        %v2492 = vld [vmem:[%s6 + $0x78] sm:$0xff]
        %v2493 = vld [vmem:[%s6 + $0x80] sm:$0xff]
        %v2494 = vld [vmem:[%s6 + $0x88] sm:$0xff]
        %v2495 = vld [vmem:[%s6 + $0x90] sm:$0xff]
        %v2496 = vld [vmem:[%s6 + $0x98] sm:$0xff]
        %v2497 = vld [vmem:[%s6 + $0xa0] sm:$0xff]
        %v2498 = vld [vmem:[%s6 + $0xa8] sm:$0xff]
        %v2499 = vld [vmem:[%s6 + $0xb0] sm:$0xff]
        %v2500 = vld [vmem:[%s6 + $0xb8] sm:$0xff]
        %v2501 = vld [vmem:[%s6 + $0xc0] sm:$0xff]
        %v2502 = vld [vmem:[%s6 + $0xc8] sm:$0xff]
        %v2503 = vld [vmem:[%s6 + $0xd0] sm:$0xff]
        %v2504 = vld [vmem:[%s6 + $0xd8] sm:$0xff]
        %v2505 = vld [vmem:[%s6 + $0xe0] sm:$0xff]
        %v2506 = vld [vmem:[%s6 + $0xe8] sm:$0xff]
        %v2507 = vld [vmem:[%s6 + $0xf0] sm:$0xff]
        %v2508 = vld [vmem:[%s6 + $0xf8] sm:$0xff]
        %v2509 = vld [vmem:[%s6 + $0x100] sm:$0xff]
        %v2510 = vld [vmem:[%s6 + $0x108] sm:$0xff]
        %v2511 = vld [vmem:[%s6 + $0x110] sm:$0xff]
        %v2512 = vld [vmem:[%s6 + $0x118] sm:$0xff]
        %v2513 = vld [vmem:[%s6 + $0x120] sm:$0xff]
        %v2514 = vld [vmem:[%s6 + $0x128] sm:$0xff]
        %v2515 = vld [vmem:[%s6 + $0x130] sm:$0xff]
        %v2516 = vld [vmem:[%s6 + $0x138] sm:$0xff]
        %v2517 = vld [vmem:[%s6 + $0x140] sm:$0xff]
        %v2518 = vld [vmem:[%s6 + $0x148] sm:$0xff]
        %v2519 = vld [vmem:[%s6 + $0x150] sm:$0xff]
        %v2520 = vld [vmem:[%s6 + $0x158] sm:$0xff]
        %v2521 = vld [vmem:[%s6 + $0x160] sm:$0xff]
        %v2522 = vld [vmem:[%s6 + $0x168] sm:$0xff]
        %v2523 = vld [vmem:[%s6 + $0x170] sm:$0xff]
        %v2524 = vld [vmem:[%s6 + $0x178] sm:$0xff]
        %v2525 = vld [vmem:[%s6 + $0x180] sm:$0xff]
        %v2526 = vld [vmem:[%s6 + $0x188] sm:$0xff]
        %v2527 = vld [vmem:[%s6 + $0x190] sm:$0xff]
        %v2528 = vld [vmem:[%s6 + $0x198] sm:$0xff]
        %v2529 = vld [vmem:[%s6 + $0x1a0] sm:$0xff]
        %v2530 = vld [vmem:[%s6 + $0x1a8] sm:$0xff]
        %v2531 = vld [vmem:[%s6 + $0x1b0] sm:$0xff]
        %v2532 = vld [vmem:[%s6 + $0x1b8] sm:$0xff]
        %v2533 = vld [vmem:[%s6 + $0x1c0] sm:$0xff]
        %v2534 = vld [vmem:[%s6 + $0x1c8] sm:$0xff]
        %v2535 = vld [vmem:[%s6 + $0x1d0] sm:$0xff]
        %v2536 = vld [vmem:[%s6 + $0x1d8] sm:$0xff]
        %v2537 = vld [vmem:[%s6 + $0x1e0] sm:$0xff]
        %v2538 = vld [vmem:[%s6 + $0x1e8] sm:$0xff]
        %v2539 = vld [vmem:[%s6 + $0x1f0] sm:$0xff]
        %v2540 = vld [vmem:[%s6 + $0x1f8] sm:$0xff]
        %v2541 = vld [vmem:[%s7] sm:$0xf]
        %v2543 = vlaneseq
        %v2544 = vshrl.u32 %v2543, 7
        %v2545 = vsub.s32 0, %v2544
        %v2546 = vrot.slane %v2541, %v2545
        %v2547 = vlaneseq
        %v2548 = vshrl.u32 %v2547, 7
        %v2549 = vsub.s32 1, %v2548
        %v2550 = vrot.slane %v2541, %v2549
        %v2551 = vlaneseq
        %v2552 = vshrl.u32 %v2551, 7
        %v2553 = vsub.s32 2, %v2552
        %v2554 = vrot.slane %v2541, %v2553
        %v2555 = vlaneseq
        %v2556 = vshrl.u32 %v2555, 7
        %v2557 = vsub.s32 3, %v2556
        %v2558 = vrot.slane %v2541, %v2557
        %v2579 = vunpack.c.l.b16 %v2461
        %v2580 = vunpack.c.l.b16 %v2462
        %v2581 = vunpack.c.l.b16 %v2463
        %v2582 = vunpack.c.l.b16 %v2464
        %v2583 = vunpack.c.l.b16 %v2465
        %v2584 = vunpack.c.l.b16 %v2466
        %v2585 = vunpack.c.l.b16 %v2467
        %v2586 = vunpack.c.l.b16 %v2468
        %v2587 = vunpack.c.l.b16 %v2469
        %v2588 = vunpack.c.l.b16 %v2470
        %v2589 = vunpack.c.l.b16 %v2471
        %v2590 = vunpack.c.l.b16 %v2472
        %v2591 = vunpack.c.l.b16 %v2473
        %v2592 = vunpack.c.l.b16 %v2474
        %v2593 = vunpack.c.l.b16 %v2475
        %v2594 = vunpack.c.l.b16 %v2476
        %vm2595 = vcmask 1041409
        %v2596 = vsel %vm2595, %v2581, %v2579
        %vm2597 = vcmask 1042434
        %v2598 = vsel %vm2597, %v2583, %v2596
        %vm2599 = vcmask 1043459
        %v2600 = vsel %vm2599, %v2585, %v2598
        %vm2601 = vcmask 1044484
        %v2602 = vsel %vm2601, %v2587, %v2600
        %vm2603 = vcmask 1045509
        %v2604 = vsel %vm2603, %v2589, %v2602
        %vm2605 = vcmask 1046534
        %v2606 = vsel %vm2605, %v2591, %v2604
        %vm2607 = vcmask 1047559
        %v2608 = vsel %vm2607, %v2593, %v2606
        %v2609 = vsel %vm2595, %v2582, %v2580
        %v2610 = vsel %vm2597, %v2584, %v2609
        %v2611 = vsel %vm2599, %v2586, %v2610
        %v2612 = vsel %vm2601, %v2588, %v2611
        %v2613 = vsel %vm2603, %v2590, %v2612
        %v2614 = vsel %vm2605, %v2592, %v2613
        %v2615 = vsel %vm2607, %v2594, %v2614
        %v2616 = vpack.c.b16 %v2608, %v2608
        %v2617 = vpack.c.b16 %v2615, %v2615
        %v2684 = vunpack.c.l.b16 %v2477
        %v2685 = vunpack.c.h.b16 %v2477
        %v2686 = vunpack.c.l.b16 %v2478
        %v2687 = vunpack.c.h.b16 %v2478
        %v2688 = vunpack.c.l.b16 %v2479
        %v2689 = vunpack.c.h.b16 %v2479
        %v2690 = vunpack.c.l.b16 %v2480
        %v2691 = vunpack.c.h.b16 %v2480
        %v2692 = vunpack.c.l.b16 %v2481
        %v2693 = vunpack.c.h.b16 %v2481
        %v2694 = vunpack.c.l.b16 %v2482
        %v2695 = vunpack.c.h.b16 %v2482
        %v2696 = vunpack.c.l.b16 %v2483
        %v2697 = vunpack.c.h.b16 %v2483
        %v2698 = vunpack.c.l.b16 %v2484
        %v2699 = vunpack.c.h.b16 %v2484
        %v2700 = vunpack.c.l.b16 %v2485
        %v2701 = vunpack.c.h.b16 %v2485
        %v2702 = vunpack.c.l.b16 %v2486
        %v2703 = vunpack.c.h.b16 %v2486
        %v2704 = vunpack.c.l.b16 %v2487
        %v2705 = vunpack.c.h.b16 %v2487
        %v2706 = vunpack.c.l.b16 %v2488
        %v2707 = vunpack.c.h.b16 %v2488
        %v2708 = vunpack.c.l.b16 %v2489
        %v2709 = vunpack.c.h.b16 %v2489
        %v2710 = vunpack.c.l.b16 %v2490
        %v2711 = vunpack.c.h.b16 %v2490
        %v2712 = vunpack.c.l.b16 %v2491
        %v2713 = vunpack.c.h.b16 %v2491
        %v2714 = vunpack.c.l.b16 %v2492
        %v2715 = vunpack.c.h.b16 %v2492
        %v2716 = vunpack.c.l.b16 %v2493
        %v2717 = vunpack.c.h.b16 %v2493
        %v2718 = vunpack.c.l.b16 %v2494
        %v2719 = vunpack.c.h.b16 %v2494
        %v2720 = vunpack.c.l.b16 %v2495
        %v2721 = vunpack.c.h.b16 %v2495
        %v2722 = vunpack.c.l.b16 %v2496
        %v2723 = vunpack.c.h.b16 %v2496
        %v2724 = vunpack.c.l.b16 %v2497
        %v2725 = vunpack.c.h.b16 %v2497
        %v2726 = vunpack.c.l.b16 %v2498
        %v2727 = vunpack.c.h.b16 %v2498
        %v2728 = vunpack.c.l.b16 %v2499
        %v2729 = vunpack.c.h.b16 %v2499
        %v2730 = vunpack.c.l.b16 %v2500
        %v2731 = vunpack.c.h.b16 %v2500
        %v2732 = vunpack.c.l.b16 %v2501
        %v2733 = vunpack.c.h.b16 %v2501
        %v2734 = vunpack.c.l.b16 %v2502
        %v2735 = vunpack.c.h.b16 %v2502
        %v2736 = vunpack.c.l.b16 %v2503
        %v2737 = vunpack.c.h.b16 %v2503
        %v2738 = vunpack.c.l.b16 %v2504
        %v2739 = vunpack.c.h.b16 %v2504
        %v2740 = vunpack.c.l.b16 %v2505
        %v2741 = vunpack.c.h.b16 %v2505
        %v2742 = vunpack.c.l.b16 %v2506
        %v2743 = vunpack.c.h.b16 %v2506
        %v2744 = vunpack.c.l.b16 %v2507
        %v2745 = vunpack.c.h.b16 %v2507
        %v2746 = vunpack.c.l.b16 %v2508
        %v2747 = vunpack.c.h.b16 %v2508
        %v2748 = vunpack.c.l.b16 %v2509
        %v2749 = vunpack.c.h.b16 %v2509
        %v2750 = vunpack.c.l.b16 %v2510
        %v2751 = vunpack.c.h.b16 %v2510
        %v2752 = vunpack.c.l.b16 %v2511
        %v2753 = vunpack.c.h.b16 %v2511
        %v2754 = vunpack.c.l.b16 %v2512
        %v2755 = vunpack.c.h.b16 %v2512
        %v2756 = vunpack.c.l.b16 %v2513
        %v2757 = vunpack.c.h.b16 %v2513
        %v2758 = vunpack.c.l.b16 %v2514
        %v2759 = vunpack.c.h.b16 %v2514
        %v2760 = vunpack.c.l.b16 %v2515
        %v2761 = vunpack.c.h.b16 %v2515
        %v2762 = vunpack.c.l.b16 %v2516
        %v2763 = vunpack.c.h.b16 %v2516
        %v2764 = vunpack.c.l.b16 %v2517
        %v2765 = vunpack.c.h.b16 %v2517
        %v2766 = vunpack.c.l.b16 %v2518
        %v2767 = vunpack.c.h.b16 %v2518
        %v2768 = vunpack.c.l.b16 %v2519
        %v2769 = vunpack.c.h.b16 %v2519
        %v2770 = vunpack.c.l.b16 %v2520
        %v2771 = vunpack.c.h.b16 %v2520
        %v2772 = vunpack.c.l.b16 %v2521
        %v2773 = vunpack.c.h.b16 %v2521
        %v2774 = vunpack.c.l.b16 %v2522
        %v2775 = vunpack.c.h.b16 %v2522
        %v2776 = vunpack.c.l.b16 %v2523
        %v2777 = vunpack.c.h.b16 %v2523
        %v2778 = vunpack.c.l.b16 %v2524
        %v2779 = vunpack.c.h.b16 %v2524
        %v2780 = vunpack.c.l.b16 %v2525
        %v2781 = vunpack.c.h.b16 %v2525
        %v2782 = vunpack.c.l.b16 %v2526
        %v2783 = vunpack.c.h.b16 %v2526
        %v2784 = vunpack.c.l.b16 %v2527
        %v2785 = vunpack.c.h.b16 %v2527
        %v2786 = vunpack.c.l.b16 %v2528
        %v2787 = vunpack.c.h.b16 %v2528
        %v2788 = vunpack.c.l.b16 %v2529
        %v2789 = vunpack.c.h.b16 %v2529
        %v2790 = vunpack.c.l.b16 %v2530
        %v2791 = vunpack.c.h.b16 %v2530
        %v2792 = vunpack.c.l.b16 %v2531
        %v2793 = vunpack.c.h.b16 %v2531
        %v2794 = vunpack.c.l.b16 %v2532
        %v2795 = vunpack.c.h.b16 %v2532
        %v2796 = vunpack.c.l.b16 %v2533
        %v2797 = vunpack.c.h.b16 %v2533
        %v2798 = vunpack.c.l.b16 %v2534
        %v2799 = vunpack.c.h.b16 %v2534
        %v2800 = vunpack.c.l.b16 %v2535
        %v2801 = vunpack.c.h.b16 %v2535
        %v2802 = vunpack.c.l.b16 %v2536
        %v2803 = vunpack.c.h.b16 %v2536
        %v2804 = vunpack.c.l.b16 %v2537
        %v2805 = vunpack.c.h.b16 %v2537
        %v2806 = vunpack.c.l.b16 %v2538
        %v2807 = vunpack.c.h.b16 %v2538
        %v2808 = vunpack.c.l.b16 %v2539
        %v2809 = vunpack.c.h.b16 %v2539
        %v2810 = vunpack.c.l.b16 %v2540
        %v2811 = vunpack.c.h.b16 %v2540
        %v2812 = vpack.c.b16 %v2688, %v2684
        %v2813 = vpack.c.b16 %v2689, %v2685
        %v2814 = vpack.c.b16 %v2690, %v2686
        %v2815 = vpack.c.b16 %v2691, %v2687
        %v2816 = vpack.c.b16 %v2696, %v2692
        %v2817 = vpack.c.b16 %v2697, %v2693
        %v2818 = vpack.c.b16 %v2698, %v2694
        %v2819 = vpack.c.b16 %v2699, %v2695
        %v2820 = vpack.c.b16 %v2704, %v2700
        %v2821 = vpack.c.b16 %v2705, %v2701
        %v2822 = vpack.c.b16 %v2706, %v2702
        %v2823 = vpack.c.b16 %v2707, %v2703
        %v2824 = vpack.c.b16 %v2712, %v2708
        %v2825 = vpack.c.b16 %v2713, %v2709
        %v2826 = vpack.c.b16 %v2714, %v2710
        %v2827 = vpack.c.b16 %v2715, %v2711
        %v2828 = vpack.c.b16 %v2720, %v2716
        %v2829 = vpack.c.b16 %v2721, %v2717
        %v2830 = vpack.c.b16 %v2722, %v2718
        %v2831 = vpack.c.b16 %v2723, %v2719
        %v2832 = vpack.c.b16 %v2728, %v2724
        %v2833 = vpack.c.b16 %v2729, %v2725
        %v2834 = vpack.c.b16 %v2730, %v2726
        %v2835 = vpack.c.b16 %v2731, %v2727
        %v2836 = vpack.c.b16 %v2736, %v2732
        %v2837 = vpack.c.b16 %v2737, %v2733
        %v2838 = vpack.c.b16 %v2738, %v2734
        %v2839 = vpack.c.b16 %v2739, %v2735
        %v2840 = vpack.c.b16 %v2744, %v2740
        %v2841 = vpack.c.b16 %v2745, %v2741
        %v2842 = vpack.c.b16 %v2746, %v2742
        %v2843 = vpack.c.b16 %v2747, %v2743
        %v2844 = vpack.c.b16 %v2752, %v2748
        %v2845 = vpack.c.b16 %v2753, %v2749
        %v2846 = vpack.c.b16 %v2754, %v2750
        %v2847 = vpack.c.b16 %v2755, %v2751
        %v2848 = vpack.c.b16 %v2760, %v2756
        %v2849 = vpack.c.b16 %v2761, %v2757
        %v2850 = vpack.c.b16 %v2762, %v2758
        %v2851 = vpack.c.b16 %v2763, %v2759
        %v2852 = vpack.c.b16 %v2768, %v2764
        %v2853 = vpack.c.b16 %v2769, %v2765
        %v2854 = vpack.c.b16 %v2770, %v2766
        %v2855 = vpack.c.b16 %v2771, %v2767
        %v2856 = vpack.c.b16 %v2776, %v2772
        %v2857 = vpack.c.b16 %v2777, %v2773
        %v2858 = vpack.c.b16 %v2778, %v2774
        %v2859 = vpack.c.b16 %v2779, %v2775
        %v2860 = vpack.c.b16 %v2784, %v2780
        %v2861 = vpack.c.b16 %v2785, %v2781
        %v2862 = vpack.c.b16 %v2786, %v2782
        %v2863 = vpack.c.b16 %v2787, %v2783
        %v2864 = vpack.c.b16 %v2792, %v2788
        %v2865 = vpack.c.b16 %v2793, %v2789
        %v2866 = vpack.c.b16 %v2794, %v2790
        %v2867 = vpack.c.b16 %v2795, %v2791
        %v2868 = vpack.c.b16 %v2800, %v2796
        %v2869 = vpack.c.b16 %v2801, %v2797
        %v2870 = vpack.c.b16 %v2802, %v2798
        %v2871 = vpack.c.b16 %v2803, %v2799
        %v2872 = vpack.c.b16 %v2808, %v2804
        %v2873 = vpack.c.b16 %v2809, %v2805
        %v2874 = vpack.c.b16 %v2810, %v2806
        %v2875 = vpack.c.b16 %v2811, %v2807
        %2940 = vmatprep.subr.bf16.mxu0 %v2813
        %2941 = vmatpush1.bf16.msra.mxu0 %v2812
        %2942 = vmatprep.subr.bf16.mxu0 %v2817
        %2943 = vmatpush1.bf16.msra.mxu0 %v2816
        %2944 = vmatprep.subr.bf16.mxu0 %v2821
        %2945 = vmatpush1.bf16.msra.mxu0 %v2820
        %2946 = vmatprep.subr.bf16.mxu0 %v2825
        %2947 = vmatpush1.bf16.msra.mxu0 %v2824
        %2948 = vmatprep.subr.bf16.mxu0 %v2829
        %2949 = vmatpush1.bf16.msra.mxu0 %v2828
        %2950 = vmatprep.subr.bf16.mxu0 %v2833
        %2951 = vmatpush1.bf16.msra.mxu0 %v2832
        %2952 = vmatprep.subr.bf16.mxu0 %v2837
        %2953 = vmatpush1.bf16.msra.mxu0 %v2836
        %2954 = vmatprep.subr.bf16.mxu0 %v2841
        %2955 = vmatpush1.bf16.msra.mxu0 %v2840
        %2956 = vmatprep.subr.bf16.mxu0 %v2845
        %2957 = vmatpush1.bf16.msra.mxu0 %v2844
        %2958 = vmatprep.subr.bf16.mxu0 %v2849
        %2959 = vmatpush1.bf16.msra.mxu0 %v2848
        %2960 = vmatprep.subr.bf16.mxu0 %v2853
        %2961 = vmatpush1.bf16.msra.mxu0 %v2852
        %2962 = vmatprep.subr.bf16.mxu0 %v2857
        %2963 = vmatpush1.bf16.msra.mxu0 %v2856
        %2964 = vmatprep.subr.bf16.mxu0 %v2861
        %2965 = vmatpush1.bf16.msra.mxu0 %v2860
        %2966 = vmatprep.subr.bf16.mxu0 %v2865
        %2967 = vmatpush1.bf16.msra.mxu0 %v2864
        %2968 = vmatprep.subr.bf16.mxu0 %v2869
        %2969 = vmatpush1.bf16.msra.mxu0 %v2868
        %2970 = vmatprep.subr.bf16.mxu0 %v2873
        %2971 = vmatpush1.bf16.msra.mxu0 %v2872
        %2972 = vmatprep.mubr.bf16.mxu0 %v2617
        %2973 = vmatmul.mubr.bf16.gmra.mrb[0].mxu0 %v2616
        %v2974 = vpop.f32.mrb[0].mxu0
        %v2975 = vadd.f32 %v2546, %v2974
        %v2976 = vpop.f32.mrb[0].mxu0
        %v2977 = vadd.f32 %v2550, %v2976
        %v2978 = vpop.f32.mrb[0].mxu0
        %v2979 = vpop.f32.mrb[0].mxu0
        %2980 = vdwg.mxu0
        %2981 = vmatprep.subr.bf16.mxu0 %v2815
        %2982 = vmatpush1.bf16.msra.mxu0 %v2814
        %2983 = vmatprep.subr.bf16.mxu0 %v2819
        %2984 = vmatpush1.bf16.msra.mxu0 %v2818
        %2985 = vmatprep.subr.bf16.mxu0 %v2823
        %2986 = vmatpush1.bf16.msra.mxu0 %v2822
        %2987 = vmatprep.subr.bf16.mxu0 %v2827
        %2988 = vmatpush1.bf16.msra.mxu0 %v2826
        %2989 = vmatprep.subr.bf16.mxu0 %v2831
        %2990 = vmatpush1.bf16.msra.mxu0 %v2830
        %2991 = vmatprep.subr.bf16.mxu0 %v2835
        %2992 = vmatpush1.bf16.msra.mxu0 %v2834
        %2993 = vmatprep.subr.bf16.mxu0 %v2839
        %2994 = vmatpush1.bf16.msra.mxu0 %v2838
        %2995 = vmatprep.subr.bf16.mxu0 %v2843
        %2996 = vmatpush1.bf16.msra.mxu0 %v2842
        %2997 = vmatprep.subr.bf16.mxu0 %v2847
        %2998 = vmatpush1.bf16.msra.mxu0 %v2846
        %2999 = vmatprep.subr.bf16.mxu0 %v2851
        %3000 = vmatpush1.bf16.msra.mxu0 %v2850
        %3001 = vmatprep.subr.bf16.mxu0 %v2855
        %3002 = vmatpush1.bf16.msra.mxu0 %v2854
        %3003 = vmatprep.subr.bf16.mxu0 %v2859
        %3004 = vmatpush1.bf16.msra.mxu0 %v2858
        %3005 = vmatprep.subr.bf16.mxu0 %v2863
        %3006 = vmatpush1.bf16.msra.mxu0 %v2862
        %3007 = vmatprep.subr.bf16.mxu0 %v2867
        %3008 = vmatpush1.bf16.msra.mxu0 %v2866
        %3009 = vmatprep.subr.bf16.mxu0 %v2871
        %3010 = vmatpush1.bf16.msra.mxu0 %v2870
        %3011 = vmatprep.subr.bf16.mxu0 %v2875
        %3012 = vmatpush1.bf16.msra.mxu0 %v2874
        %3013 = vmatprep.mubr.bf16.mxu0 %v2617
        %3014 = vmatmul.mubr.bf16.gmra.mrb[0].mxu0 %v2616
        %v3015 = vpop.f32.mrb[0].mxu0
        %v3016 = vadd.f32 %v2554, %v3015
        %v3017 = vpop.f32.mrb[0].mxu0
        %v3018 = vadd.f32 %v2558, %v3017
        %v3019 = vpop.f32.mrb[0].mxu0
        %v3020 = vpop.f32.mrb[0].mxu0
        %3021 = vdwg.mxu0
        %v3022 = vpack.c.bf16 %v1939, %v1935
        %v3023 = vpack.c.bf16 %v1941, %v1937
        %v3024 = vpack.c.bf16 %v1949, %v1945
        %v3025 = vpack.c.bf16 %v1951, %v1947
        %v3026 = vpack.c.bf16 %v1959, %v1955
        %v3027 = vpack.c.bf16 %v1961, %v1957
        %v3028 = vpack.c.bf16 %v1969, %v1965
        %v3029 = vpack.c.bf16 %v1971, %v1967
        %v3030 = vpack.c.bf16 %v1979, %v1975
        %v3031 = vpack.c.bf16 %v1981, %v1977
        %v3032 = vpack.c.bf16 %v1989, %v1985
        %v3033 = vpack.c.bf16 %v1991, %v1987
        %v3034 = vpack.c.bf16 %v1999, %v1995
        %v3035 = vpack.c.bf16 %v2001, %v1997
        %v3036 = vpack.c.bf16 %v2009, %v2005
        %v3037 = vpack.c.bf16 %v2011, %v2007
        %v3038 = vpack.c.bf16 %v2019, %v2015
        %v3039 = vpack.c.bf16 %v2021, %v2017
        %v3040 = vpack.c.bf16 %v2029, %v2025
        %v3041 = vpack.c.bf16 %v2031, %v2027
        %v3042 = vpack.c.bf16 %v2039, %v2035
        %v3043 = vpack.c.bf16 %v2041, %v2037
        %v3044 = vpack.c.bf16 %v2049, %v2045
        %v3045 = vpack.c.bf16 %v2051, %v2047
        %v3046 = vpack.c.bf16 %v2059, %v2055
        %v3047 = vpack.c.bf16 %v2061, %v2057
        %v3048 = vpack.c.bf16 %v2069, %v2065
        %v3049 = vpack.c.bf16 %v2071, %v2067
        %v3050 = vpack.c.bf16 %v2079, %v2075
        %v3051 = vpack.c.bf16 %v2081, %v2077
        %v3052 = vpack.c.bf16 %v2089, %v2085
        %v3053 = vpack.c.bf16 %v2091, %v2087
        %v3054 = vpack.c.bf16 %v2099, %v2095
        %v3055 = vpack.c.bf16 %v2101, %v2097
        %v3056 = vpack.c.bf16 %v2109, %v2105
        %v3057 = vpack.c.bf16 %v2111, %v2107
        %v3058 = vpack.c.bf16 %v2119, %v2115
        %v3059 = vpack.c.bf16 %v2121, %v2117
        %v3060 = vpack.c.bf16 %v2129, %v2125
        %v3061 = vpack.c.bf16 %v2131, %v2127
        %v3062 = vpack.c.bf16 %v2139, %v2135
        %v3063 = vpack.c.bf16 %v2141, %v2137
        %v3064 = vpack.c.bf16 %v2149, %v2145
        %v3065 = vpack.c.bf16 %v2151, %v2147
        %v3066 = vpack.c.bf16 %v2159, %v2155
        %v3067 = vpack.c.bf16 %v2161, %v2157
        %v3068 = vpack.c.bf16 %v2169, %v2165
        %v3069 = vpack.c.bf16 %v2171, %v2167
        %v3070 = vpack.c.bf16 %v2179, %v2175
        %v3071 = vpack.c.bf16 %v2181, %v2177
        %v3072 = vpack.c.bf16 %v2189, %v2185
        %v3073 = vpack.c.bf16 %v2191, %v2187
        %v3074 = vpack.c.bf16 %v2199, %v2195
        %v3075 = vpack.c.bf16 %v2201, %v2197
        %v3076 = vpack.c.bf16 %v2209, %v2205
        %v3077 = vpack.c.bf16 %v2211, %v2207
        %v3078 = vpack.c.bf16 %v2219, %v2215
        %v3079 = vpack.c.bf16 %v2221, %v2217
        %v3080 = vpack.c.bf16 %v2229, %v2225
        %v3081 = vpack.c.bf16 %v2231, %v2227
        %v3082 = vpack.c.bf16 %v2239, %v2235
        %v3083 = vpack.c.bf16 %v2241, %v2237
        %v3084 = vpack.c.bf16 %v2249, %v2245
        %v3085 = vpack.c.bf16 %v2251, %v2247
        %v3086 = vld [vmem:[%s5] sm:$0xff]
        %v3087 = vld [vmem:[%s5 + $0x8] sm:$0xff]
        %v3088 = vld [vmem:[%s5 + $0x10] sm:$0xff]
        %v3089 = vld [vmem:[%s5 + $0x18] sm:$0xff]
        %v3090 = vld [vmem:[%s5 + $0x20] sm:$0xff]
        %v3091 = vld [vmem:[%s5 + $0x28] sm:$0xff]
        %v3092 = vld [vmem:[%s5 + $0x30] sm:$0xff]
        %v3093 = vld [vmem:[%s5 + $0x38] sm:$0xff]
        %v3094 = vld [vmem:[%s5 + $0x40] sm:$0xff]
        %v3095 = vld [vmem:[%s5 + $0x48] sm:$0xff]
        %v3096 = vld [vmem:[%s5 + $0x50] sm:$0xff]
        %v3097 = vld [vmem:[%s5 + $0x58] sm:$0xff]
        %v3098 = vld [vmem:[%s5 + $0x60] sm:$0xff]
        %v3099 = vld [vmem:[%s5 + $0x68] sm:$0xff]
        %v3100 = vld [vmem:[%s5 + $0x70] sm:$0xff]
        %v3101 = vld [vmem:[%s5 + $0x78] sm:$0xff]
        %v3102 = vld [vmem:[%s5 + $0x80] sm:$0xff]
        %v3103 = vld [vmem:[%s5 + $0x88] sm:$0xff]
        %v3104 = vld [vmem:[%s5 + $0x90] sm:$0xff]
        %v3105 = vld [vmem:[%s5 + $0x98] sm:$0xff]
        %v3106 = vld [vmem:[%s5 + $0xa0] sm:$0xff]
        %v3107 = vld [vmem:[%s5 + $0xa8] sm:$0xff]
        %v3108 = vld [vmem:[%s5 + $0xb0] sm:$0xff]
        %v3109 = vld [vmem:[%s5 + $0xb8] sm:$0xff]
        %v3110 = vld [vmem:[%s5 + $0xc0] sm:$0xff]
        %v3111 = vld [vmem:[%s5 + $0xc8] sm:$0xff]
        %v3112 = vld [vmem:[%s5 + $0xd0] sm:$0xff]
        %v3113 = vld [vmem:[%s5 + $0xd8] sm:$0xff]
        %v3114 = vld [vmem:[%s5 + $0xe0] sm:$0xff]
        %v3115 = vld [vmem:[%s5 + $0xe8] sm:$0xff]
        %v3116 = vld [vmem:[%s5 + $0xf0] sm:$0xff]
        %v3117 = vld [vmem:[%s5 + $0xf8] sm:$0xff]
        %v3118 = vld [vmem:[%s5 + $0x100] sm:$0xff]
        %v3119 = vld [vmem:[%s5 + $0x108] sm:$0xff]
        %v3120 = vld [vmem:[%s5 + $0x110] sm:$0xff]
        %v3121 = vld [vmem:[%s5 + $0x118] sm:$0xff]
        %v3122 = vld [vmem:[%s5 + $0x120] sm:$0xff]
        %v3123 = vld [vmem:[%s5 + $0x128] sm:$0xff]
        %v3124 = vld [vmem:[%s5 + $0x130] sm:$0xff]
        %v3125 = vld [vmem:[%s5 + $0x138] sm:$0xff]
        %v3126 = vld [vmem:[%s5 + $0x140] sm:$0xff]
        %v3127 = vld [vmem:[%s5 + $0x148] sm:$0xff]
        %v3128 = vld [vmem:[%s5 + $0x150] sm:$0xff]
        %v3129 = vld [vmem:[%s5 + $0x158] sm:$0xff]
        %v3130 = vld [vmem:[%s5 + $0x160] sm:$0xff]
        %v3131 = vld [vmem:[%s5 + $0x168] sm:$0xff]
        %v3132 = vld [vmem:[%s5 + $0x170] sm:$0xff]
        %v3133 = vld [vmem:[%s5 + $0x178] sm:$0xff]
        %v3134 = vld [vmem:[%s5 + $0x180] sm:$0xff]
        %v3135 = vld [vmem:[%s5 + $0x188] sm:$0xff]
        %v3136 = vld [vmem:[%s5 + $0x190] sm:$0xff]
        %v3137 = vld [vmem:[%s5 + $0x198] sm:$0xff]
        %v3138 = vld [vmem:[%s5 + $0x1a0] sm:$0xff]
        %v3139 = vld [vmem:[%s5 + $0x1a8] sm:$0xff]
        %v3140 = vld [vmem:[%s5 + $0x1b0] sm:$0xff]
        %v3141 = vld [vmem:[%s5 + $0x1b8] sm:$0xff]
        %v3142 = vld [vmem:[%s5 + $0x1c0] sm:$0xff]
        %v3143 = vld [vmem:[%s5 + $0x1c8] sm:$0xff]
        %v3144 = vld [vmem:[%s5 + $0x1d0] sm:$0xff]
        %v3145 = vld [vmem:[%s5 + $0x1d8] sm:$0xff]
        %v3146 = vld [vmem:[%s5 + $0x1e0] sm:$0xff]
        %v3147 = vld [vmem:[%s5 + $0x1e8] sm:$0xff]
        %v3148 = vld [vmem:[%s5 + $0x1f0] sm:$0xff]
        %v3149 = vld [vmem:[%s5 + $0x1f8] sm:$0xff]
        %v3214 = vunpack.c.l.b16 %v3086
        %v3215 = vunpack.c.h.b16 %v3086
        %v3216 = vunpack.c.l.b16 %v3087
        %v3217 = vunpack.c.h.b16 %v3087
        %v3218 = vunpack.c.l.b16 %v3088
        %v3219 = vunpack.c.h.b16 %v3088
        %v3220 = vunpack.c.l.b16 %v3089
        %v3221 = vunpack.c.h.b16 %v3089
        %v3222 = vunpack.c.l.b16 %v3090
        %v3223 = vunpack.c.h.b16 %v3090
        %v3224 = vunpack.c.l.b16 %v3091
        %v3225 = vunpack.c.h.b16 %v3091
        %v3226 = vunpack.c.l.b16 %v3092
        %v3227 = vunpack.c.h.b16 %v3092
        %v3228 = vunpack.c.l.b16 %v3093
        %v3229 = vunpack.c.h.b16 %v3093
        %v3230 = vunpack.c.l.b16 %v3094
        %v3231 = vunpack.c.h.b16 %v3094
        %v3232 = vunpack.c.l.b16 %v3095
        %v3233 = vunpack.c.h.b16 %v3095
        %v3234 = vunpack.c.l.b16 %v3096
        %v3235 = vunpack.c.h.b16 %v3096
        %v3236 = vunpack.c.l.b16 %v3097
        %v3237 = vunpack.c.h.b16 %v3097
        %v3238 = vunpack.c.l.b16 %v3098
        %v3239 = vunpack.c.h.b16 %v3098
        %v3240 = vunpack.c.l.b16 %v3099
        %v3241 = vunpack.c.h.b16 %v3099
        %v3242 = vunpack.c.l.b16 %v3100
        %v3243 = vunpack.c.h.b16 %v3100
        %v3244 = vunpack.c.l.b16 %v3101
        %v3245 = vunpack.c.h.b16 %v3101
        %v3246 = vunpack.c.l.b16 %v3102
        %v3247 = vunpack.c.h.b16 %v3102
        %v3248 = vunpack.c.l.b16 %v3103
        %v3249 = vunpack.c.h.b16 %v3103
        %v3250 = vunpack.c.l.b16 %v3104
        %v3251 = vunpack.c.h.b16 %v3104
        %v3252 = vunpack.c.l.b16 %v3105
        %v3253 = vunpack.c.h.b16 %v3105
        %v3254 = vunpack.c.l.b16 %v3106
        %v3255 = vunpack.c.h.b16 %v3106
        %v3256 = vunpack.c.l.b16 %v3107
        %v3257 = vunpack.c.h.b16 %v3107
        %v3258 = vunpack.c.l.b16 %v3108
        %v3259 = vunpack.c.h.b16 %v3108
        %v3260 = vunpack.c.l.b16 %v3109
        %v3261 = vunpack.c.h.b16 %v3109
        %v3262 = vunpack.c.l.b16 %v3110
        %v3263 = vunpack.c.h.b16 %v3110
        %v3264 = vunpack.c.l.b16 %v3111
        %v3265 = vunpack.c.h.b16 %v3111
        %v3266 = vunpack.c.l.b16 %v3112
        %v3267 = vunpack.c.h.b16 %v3112
        %v3268 = vunpack.c.l.b16 %v3113
        %v3269 = vunpack.c.h.b16 %v3113
        %v3270 = vunpack.c.l.b16 %v3114
        %v3271 = vunpack.c.h.b16 %v3114
        %v3272 = vunpack.c.l.b16 %v3115
        %v3273 = vunpack.c.h.b16 %v3115
        %v3274 = vunpack.c.l.b16 %v3116
        %v3275 = vunpack.c.h.b16 %v3116
        %v3276 = vunpack.c.l.b16 %v3117
        %v3277 = vunpack.c.h.b16 %v3117
        %v3278 = vunpack.c.l.b16 %v3118
        %v3279 = vunpack.c.h.b16 %v3118
        %v3280 = vunpack.c.l.b16 %v3119
        %v3281 = vunpack.c.h.b16 %v3119
        %v3282 = vunpack.c.l.b16 %v3120
        %v3283 = vunpack.c.h.b16 %v3120
        %v3284 = vunpack.c.l.b16 %v3121
        %v3285 = vunpack.c.h.b16 %v3121
        %v3286 = vunpack.c.l.b16 %v3122
        %v3287 = vunpack.c.h.b16 %v3122
        %v3288 = vunpack.c.l.b16 %v3123
        %v3289 = vunpack.c.h.b16 %v3123
        %v3290 = vunpack.c.l.b16 %v3124
        %v3291 = vunpack.c.h.b16 %v3124
        %v3292 = vunpack.c.l.b16 %v3125
        %v3293 = vunpack.c.h.b16 %v3125
        %v3294 = vunpack.c.l.b16 %v3126
        %v3295 = vunpack.c.h.b16 %v3126
        %v3296 = vunpack.c.l.b16 %v3127
        %v3297 = vunpack.c.h.b16 %v3127
        %v3298 = vunpack.c.l.b16 %v3128
        %v3299 = vunpack.c.h.b16 %v3128
        %v3300 = vunpack.c.l.b16 %v3129
        %v3301 = vunpack.c.h.b16 %v3129
        %v3302 = vunpack.c.l.b16 %v3130
        %v3303 = vunpack.c.h.b16 %v3130
        %v3304 = vunpack.c.l.b16 %v3131
        %v3305 = vunpack.c.h.b16 %v3131
        %v3306 = vunpack.c.l.b16 %v3132
        %v3307 = vunpack.c.h.b16 %v3132
        %v3308 = vunpack.c.l.b16 %v3133
        %v3309 = vunpack.c.h.b16 %v3133
        %v3310 = vunpack.c.l.b16 %v3134
        %v3311 = vunpack.c.h.b16 %v3134
        %v3312 = vunpack.c.l.b16 %v3135
        %v3313 = vunpack.c.h.b16 %v3135
        %v3314 = vunpack.c.l.b16 %v3136
        %v3315 = vunpack.c.h.b16 %v3136
        %v3316 = vunpack.c.l.b16 %v3137
        %v3317 = vunpack.c.h.b16 %v3137
        %v3318 = vunpack.c.l.b16 %v3138
        %v3319 = vunpack.c.h.b16 %v3138
        %v3320 = vunpack.c.l.b16 %v3139
        %v3321 = vunpack.c.h.b16 %v3139
        %v3322 = vunpack.c.l.b16 %v3140
        %v3323 = vunpack.c.h.b16 %v3140
        %v3324 = vunpack.c.l.b16 %v3141
        %v3325 = vunpack.c.h.b16 %v3141
        %v3326 = vunpack.c.l.b16 %v3142
        %v3327 = vunpack.c.h.b16 %v3142
        %v3328 = vunpack.c.l.b16 %v3143
        %v3329 = vunpack.c.h.b16 %v3143
        %v3330 = vunpack.c.l.b16 %v3144
        %v3331 = vunpack.c.h.b16 %v3144
        %v3332 = vunpack.c.l.b16 %v3145
        %v3333 = vunpack.c.h.b16 %v3145
        %v3334 = vunpack.c.l.b16 %v3146
        %v3335 = vunpack.c.h.b16 %v3146
        %v3336 = vunpack.c.l.b16 %v3147
        %v3337 = vunpack.c.h.b16 %v3147
        %v3338 = vunpack.c.l.b16 %v3148
        %v3339 = vunpack.c.h.b16 %v3148
        %v3340 = vunpack.c.l.b16 %v3149
        %v3341 = vunpack.c.h.b16 %v3149
        %v3342 = vpack.c.b16 %v3218, %v3214
        %v3343 = vpack.c.b16 %v3219, %v3215
        %v3344 = vpack.c.b16 %v3220, %v3216
        %v3345 = vpack.c.b16 %v3221, %v3217
        %v3346 = vpack.c.b16 %v3226, %v3222
        %v3347 = vpack.c.b16 %v3227, %v3223
        %v3348 = vpack.c.b16 %v3228, %v3224
        %v3349 = vpack.c.b16 %v3229, %v3225
        %v3350 = vpack.c.b16 %v3234, %v3230
        %v3351 = vpack.c.b16 %v3235, %v3231
        %v3352 = vpack.c.b16 %v3236, %v3232
        %v3353 = vpack.c.b16 %v3237, %v3233
        %v3354 = vpack.c.b16 %v3242, %v3238
        %v3355 = vpack.c.b16 %v3243, %v3239
        %v3356 = vpack.c.b16 %v3244, %v3240
        %v3357 = vpack.c.b16 %v3245, %v3241
        %v3358 = vpack.c.b16 %v3250, %v3246
        %v3359 = vpack.c.b16 %v3251, %v3247
        %v3360 = vpack.c.b16 %v3252, %v3248
        %v3361 = vpack.c.b16 %v3253, %v3249
        %v3362 = vpack.c.b16 %v3258, %v3254
        %v3363 = vpack.c.b16 %v3259, %v3255
        %v3364 = vpack.c.b16 %v3260, %v3256
        %v3365 = vpack.c.b16 %v3261, %v3257
        %v3366 = vpack.c.b16 %v3266, %v3262
        %v3367 = vpack.c.b16 %v3267, %v3263
        %v3368 = vpack.c.b16 %v3268, %v3264
        %v3369 = vpack.c.b16 %v3269, %v3265
        %v3370 = vpack.c.b16 %v3274, %v3270
        %v3371 = vpack.c.b16 %v3275, %v3271
        %v3372 = vpack.c.b16 %v3276, %v3272
        %v3373 = vpack.c.b16 %v3277, %v3273
        %v3374 = vpack.c.b16 %v3282, %v3278
        %v3375 = vpack.c.b16 %v3283, %v3279
        %v3376 = vpack.c.b16 %v3284, %v3280
        %v3377 = vpack.c.b16 %v3285, %v3281
        %v3378 = vpack.c.b16 %v3290, %v3286
        %v3379 = vpack.c.b16 %v3291, %v3287
        %v3380 = vpack.c.b16 %v3292, %v3288
        %v3381 = vpack.c.b16 %v3293, %v3289
        %v3382 = vpack.c.b16 %v3298, %v3294
        %v3383 = vpack.c.b16 %v3299, %v3295
        %v3384 = vpack.c.b16 %v3300, %v3296
        %v3385 = vpack.c.b16 %v3301, %v3297
        %v3386 = vpack.c.b16 %v3306, %v3302
        %v3387 = vpack.c.b16 %v3307, %v3303
        %v3388 = vpack.c.b16 %v3308, %v3304
        %v3389 = vpack.c.b16 %v3309, %v3305
        %v3390 = vpack.c.b16 %v3314, %v3310
        %v3391 = vpack.c.b16 %v3315, %v3311
        %v3392 = vpack.c.b16 %v3316, %v3312
        %v3393 = vpack.c.b16 %v3317, %v3313
        %v3394 = vpack.c.b16 %v3322, %v3318
        %v3395 = vpack.c.b16 %v3323, %v3319
        %v3396 = vpack.c.b16 %v3324, %v3320
        %v3397 = vpack.c.b16 %v3325, %v3321
        %v3398 = vpack.c.b16 %v3330, %v3326
        %v3399 = vpack.c.b16 %v3331, %v3327
        %v3400 = vpack.c.b16 %v3332, %v3328
        %v3401 = vpack.c.b16 %v3333, %v3329
        %v3402 = vpack.c.b16 %v3338, %v3334
        %v3403 = vpack.c.b16 %v3339, %v3335
        %v3404 = vpack.c.b16 %v3340, %v3336
        %v3405 = vpack.c.b16 %v3341, %v3337
        %3470 = vmatprep.subr.bf16.mxu0 %v3343
        %3471 = vmatpush1.bf16.msra.mxu0 %v3342
        %3472 = vmatprep.subr.bf16.mxu0 %v3347
        %3473 = vmatpush1.bf16.msra.mxu0 %v3346
        %3474 = vmatprep.subr.bf16.mxu0 %v3351
        %3475 = vmatpush1.bf16.msra.mxu0 %v3350
        %3476 = vmatprep.subr.bf16.mxu0 %v3355
        %3477 = vmatpush1.bf16.msra.mxu0 %v3354
        %3478 = vmatprep.subr.bf16.mxu0 %v3359
        %3479 = vmatpush1.bf16.msra.mxu0 %v3358
        %3480 = vmatprep.subr.bf16.mxu0 %v3363
        %3481 = vmatpush1.bf16.msra.mxu0 %v3362
        %3482 = vmatprep.subr.bf16.mxu0 %v3367
        %3483 = vmatpush1.bf16.msra.mxu0 %v3366
        %3484 = vmatprep.subr.bf16.mxu0 %v3371
        %3485 = vmatpush1.bf16.msra.mxu0 %v3370
        %3486 = vmatprep.subr.bf16.mxu0 %v3375
        %3487 = vmatpush1.bf16.msra.mxu0 %v3374
        %3488 = vmatprep.subr.bf16.mxu0 %v3379
        %3489 = vmatpush1.bf16.msra.mxu0 %v3378
        %3490 = vmatprep.subr.bf16.mxu0 %v3383
        %3491 = vmatpush1.bf16.msra.mxu0 %v3382
        %3492 = vmatprep.subr.bf16.mxu0 %v3387
        %3493 = vmatpush1.bf16.msra.mxu0 %v3386
        %3494 = vmatprep.subr.bf16.mxu0 %v3391
        %3495 = vmatpush1.bf16.msra.mxu0 %v3390
        %3496 = vmatprep.subr.bf16.mxu0 %v3395
        %3497 = vmatpush1.bf16.msra.mxu0 %v3394
        %3498 = vmatprep.subr.bf16.mxu0 %v3399
        %3499 = vmatpush1.bf16.msra.mxu0 %v3398
        %3500 = vmatprep.subr.bf16.mxu0 %v3403
        %3501 = vmatpush1.bf16.msra.mxu0 %v3402
        %3502 = vmatprep.mubr.bf16.mxu0 %v3023
        %3503 = vmatmul.mubr.bf16.gmra.mrb[0].mxu0 %v3022
        %v3504 = vpop.f32.mrb[0].mxu0
        %v3505 = vadd.f32 0.0, %v3504
        %v3506 = vpop.f32.mrb[0].mxu0
        %v3507 = vadd.f32 0.0, %v3506
        %v3508 = vpop.f32.mrb[0].mxu0
        %v3509 = vadd.f32 0.0, %v3508
        %v3510 = vpop.f32.mrb[0].mxu0
        %v3511 = vadd.f32 0.0, %v3510
        %3512 = vmatprep.mubr.bf16.mxu0 %v3025
        %3513 = vmatmul.mubr.bf16.gmra.mrb[0].mxu0 %v3024
        %v3514 = vpop.f32.mrb[0].mxu0
        %v3515 = vadd.f32 0.0, %v3514
        %v3516 = vpop.f32.mrb[0].mxu0
        %v3517 = vadd.f32 0.0, %v3516
        %v3518 = vpop.f32.mrb[0].mxu0
        %v3519 = vadd.f32 0.0, %v3518
        %v3520 = vpop.f32.mrb[0].mxu0
        %v3521 = vadd.f32 0.0, %v3520
        %3522 = vmatprep.mubr.bf16.mxu0 %v3027
        %3523 = vmatmul.mubr.bf16.gmra.mrb[0].mxu0 %v3026
        %v3524 = vpop.f32.mrb[0].mxu0
        %v3525 = vadd.f32 0.0, %v3524
        %v3526 = vpop.f32.mrb[0].mxu0
        %v3527 = vadd.f32 0.0, %v3526
        %v3528 = vpop.f32.mrb[0].mxu0
        %v3529 = vadd.f32 0.0, %v3528
        %v3530 = vpop.f32.mrb[0].mxu0
        %v3531 = vadd.f32 0.0, %v3530
        %3532 = vmatprep.mubr.bf16.mxu0 %v3029
        %3533 = vmatmul.mubr.bf16.gmra.mrb[0].mxu0 %v3028
        %v3534 = vpop.f32.mrb[0].mxu0
        %v3535 = vadd.f32 0.0, %v3534
        %v3536 = vpop.f32.mrb[0].mxu0
        %v3537 = vadd.f32 0.0, %v3536
        %v3538 = vpop.f32.mrb[0].mxu0
        %v3539 = vadd.f32 0.0, %v3538
        %v3540 = vpop.f32.mrb[0].mxu0
        %v3541 = vadd.f32 0.0, %v3540
        %3542 = vmatprep.mubr.bf16.mxu0 %v3031
        %3543 = vmatmul.mubr.bf16.gmra.mrb[0].mxu0 %v3030
        %v3544 = vpop.f32.mrb[0].mxu0
        %v3545 = vadd.f32 0.0, %v3544
        %v3546 = vpop.f32.mrb[0].mxu0
        %v3547 = vadd.f32 0.0, %v3546
        %v3548 = vpop.f32.mrb[0].mxu0
        %v3549 = vadd.f32 0.0, %v3548
        %v3550 = vpop.f32.mrb[0].mxu0
        %v3551 = vadd.f32 0.0, %v3550
        %3552 = vmatprep.mubr.bf16.mxu0 %v3033
        %3553 = vmatmul.mubr.bf16.gmra.mrb[0].mxu0 %v3032
        %v3554 = vpop.f32.mrb[0].mxu0
        %v3555 = vadd.f32 0.0, %v3554
        %v3556 = vpop.f32.mrb[0].mxu0
        %v3557 = vadd.f32 0.0, %v3556
        %v3558 = vpop.f32.mrb[0].mxu0
        %v3559 = vadd.f32 0.0, %v3558
        %v3560 = vpop.f32.mrb[0].mxu0
        %v3561 = vadd.f32 0.0, %v3560
        %3562 = vmatprep.mubr.bf16.mxu0 %v3035
        %3563 = vmatmul.mubr.bf16.gmra.mrb[0].mxu0 %v3034
        %v3564 = vpop.f32.mrb[0].mxu0
        %v3565 = vadd.f32 0.0, %v3564
        %v3566 = vpop.f32.mrb[0].mxu0
        %v3567 = vadd.f32 0.0, %v3566
        %v3568 = vpop.f32.mrb[0].mxu0
        %v3569 = vadd.f32 0.0, %v3568
        %v3570 = vpop.f32.mrb[0].mxu0
        %v3571 = vadd.f32 0.0, %v3570
        %3572 = vmatprep.mubr.bf16.mxu0 %v3037
        %3573 = vmatmul.mubr.bf16.gmra.mrb[0].mxu0 %v3036
        %v3574 = vpop.f32.mrb[0].mxu0
        %v3575 = vadd.f32 0.0, %v3574
        %v3576 = vpop.f32.mrb[0].mxu0
        %v3577 = vadd.f32 0.0, %v3576
        %v3578 = vpop.f32.mrb[0].mxu0
        %v3579 = vadd.f32 0.0, %v3578
        %v3580 = vpop.f32.mrb[0].mxu0
        %v3581 = vadd.f32 0.0, %v3580
        %3582 = vmatprep.mubr.bf16.mxu0 %v3039
        %3583 = vmatmul.mubr.bf16.gmra.mrb[0].mxu0 %v3038
        %v3584 = vpop.f32.mrb[0].mxu0
        %v3585 = vadd.f32 0.0, %v3584
        %v3586 = vpop.f32.mrb[0].mxu0
        %v3587 = vadd.f32 0.0, %v3586
        %v3588 = vpop.f32.mrb[0].mxu0
        %v3589 = vadd.f32 0.0, %v3588
        %v3590 = vpop.f32.mrb[0].mxu0
        %v3591 = vadd.f32 0.0, %v3590
        %3592 = vmatprep.mubr.bf16.mxu0 %v3041
        %3593 = vmatmul.mubr.bf16.gmra.mrb[0].mxu0 %v3040
        %v3594 = vpop.f32.mrb[0].mxu0
        %v3595 = vadd.f32 0.0, %v3594
        %v3596 = vpop.f32.mrb[0].mxu0
        %v3597 = vadd.f32 0.0, %v3596
        %v3598 = vpop.f32.mrb[0].mxu0
        %v3599 = vadd.f32 0.0, %v3598
        %v3600 = vpop.f32.mrb[0].mxu0
        %v3601 = vadd.f32 0.0, %v3600
        %3602 = vmatprep.mubr.bf16.mxu0 %v3043
        %3603 = vmatmul.mubr.bf16.gmra.mrb[0].mxu0 %v3042
        %v3604 = vpop.f32.mrb[0].mxu0
        %v3605 = vadd.f32 0.0, %v3604
        %v3606 = vpop.f32.mrb[0].mxu0
        %v3607 = vadd.f32 0.0, %v3606
        %v3608 = vpop.f32.mrb[0].mxu0
        %v3609 = vadd.f32 0.0, %v3608
        %v3610 = vpop.f32.mrb[0].mxu0
        %v3611 = vadd.f32 0.0, %v3610
        %3612 = vmatprep.mubr.bf16.mxu0 %v3045
        %3613 = vmatmul.mubr.bf16.gmra.mrb[0].mxu0 %v3044
        %v3614 = vpop.f32.mrb[0].mxu0
        %v3615 = vadd.f32 0.0, %v3614
        %v3616 = vpop.f32.mrb[0].mxu0
        %v3617 = vadd.f32 0.0, %v3616
        %v3618 = vpop.f32.mrb[0].mxu0
        %v3619 = vadd.f32 0.0, %v3618
        %v3620 = vpop.f32.mrb[0].mxu0
        %v3621 = vadd.f32 0.0, %v3620
        %3622 = vmatprep.mubr.bf16.mxu0 %v3047
        %3623 = vmatmul.mubr.bf16.gmra.mrb[0].mxu0 %v3046
        %v3624 = vpop.f32.mrb[0].mxu0
        %v3625 = vadd.f32 0.0, %v3624
        %v3626 = vpop.f32.mrb[0].mxu0
        %v3627 = vadd.f32 0.0, %v3626
        %v3628 = vpop.f32.mrb[0].mxu0
        %v3629 = vadd.f32 0.0, %v3628
        %v3630 = vpop.f32.mrb[0].mxu0
        %v3631 = vadd.f32 0.0, %v3630
        %3632 = vmatprep.mubr.bf16.mxu0 %v3049
        %3633 = vmatmul.mubr.bf16.gmra.mrb[0].mxu0 %v3048
        %v3634 = vpop.f32.mrb[0].mxu0
        %v3635 = vadd.f32 0.0, %v3634
        %v3636 = vpop.f32.mrb[0].mxu0
        %v3637 = vadd.f32 0.0, %v3636
        %v3638 = vpop.f32.mrb[0].mxu0
        %v3639 = vadd.f32 0.0, %v3638
        %v3640 = vpop.f32.mrb[0].mxu0
        %v3641 = vadd.f32 0.0, %v3640
        %3642 = vmatprep.mubr.bf16.mxu0 %v3051
        %3643 = vmatmul.mubr.bf16.gmra.mrb[0].mxu0 %v3050
        %v3644 = vpop.f32.mrb[0].mxu0
        %v3645 = vadd.f32 0.0, %v3644
        %v3646 = vpop.f32.mrb[0].mxu0
        %v3647 = vadd.f32 0.0, %v3646
        %v3648 = vpop.f32.mrb[0].mxu0
        %v3649 = vadd.f32 0.0, %v3648
        %v3650 = vpop.f32.mrb[0].mxu0
        %v3651 = vadd.f32 0.0, %v3650
        %3652 = vmatprep.mubr.bf16.mxu0 %v3053
        %3653 = vmatmul.mubr.bf16.gmra.mrb[0].mxu0 %v3052
        %v3654 = vpop.f32.mrb[0].mxu0
        %v3655 = vadd.f32 0.0, %v3654
        %v3656 = vpop.f32.mrb[0].mxu0
        %v3657 = vadd.f32 0.0, %v3656
        %v3658 = vpop.f32.mrb[0].mxu0
        %v3659 = vadd.f32 0.0, %v3658
        %v3660 = vpop.f32.mrb[0].mxu0
        %v3661 = vadd.f32 0.0, %v3660
        %3662 = vmatprep.mubr.bf16.mxu0 %v3055
        %3663 = vmatmul.mubr.bf16.gmra.mrb[0].mxu0 %v3054
        %v3664 = vpop.f32.mrb[0].mxu0
        %v3665 = vadd.f32 0.0, %v3664
        %v3666 = vpop.f32.mrb[0].mxu0
        %v3667 = vadd.f32 0.0, %v3666
        %v3668 = vpop.f32.mrb[0].mxu0
        %v3669 = vadd.f32 0.0, %v3668
        %v3670 = vpop.f32.mrb[0].mxu0
        %v3671 = vadd.f32 0.0, %v3670
        %3672 = vmatprep.mubr.bf16.mxu0 %v3057
        %3673 = vmatmul.mubr.bf16.gmra.mrb[0].mxu0 %v3056
        %v3674 = vpop.f32.mrb[0].mxu0
        %v3675 = vadd.f32 0.0, %v3674
        %v3676 = vpop.f32.mrb[0].mxu0
        %v3677 = vadd.f32 0.0, %v3676
        %v3678 = vpop.f32.mrb[0].mxu0
        %v3679 = vadd.f32 0.0, %v3678
        %v3680 = vpop.f32.mrb[0].mxu0
        %v3681 = vadd.f32 0.0, %v3680
        %3682 = vmatprep.mubr.bf16.mxu0 %v3059
        %3683 = vmatmul.mubr.bf16.gmra.mrb[0].mxu0 %v3058
        %v3684 = vpop.f32.mrb[0].mxu0
        %v3685 = vadd.f32 0.0, %v3684
        %v3686 = vpop.f32.mrb[0].mxu0
        %v3687 = vadd.f32 0.0, %v3686
        %v3688 = vpop.f32.mrb[0].mxu0
        %v3689 = vadd.f32 0.0, %v3688
        %v3690 = vpop.f32.mrb[0].mxu0
        %v3691 = vadd.f32 0.0, %v3690
        %3692 = vmatprep.mubr.bf16.mxu0 %v3061
        %3693 = vmatmul.mubr.bf16.gmra.mrb[0].mxu0 %v3060
        %v3694 = vpop.f32.mrb[0].mxu0
        %v3695 = vadd.f32 0.0, %v3694
        %v3696 = vpop.f32.mrb[0].mxu0
        %v3697 = vadd.f32 0.0, %v3696
        %v3698 = vpop.f32.mrb[0].mxu0
        %v3699 = vadd.f32 0.0, %v3698
        %v3700 = vpop.f32.mrb[0].mxu0
        %v3701 = vadd.f32 0.0, %v3700
        %3702 = vmatprep.mubr.bf16.mxu0 %v3063
        %3703 = vmatmul.mubr.bf16.gmra.mrb[0].mxu0 %v3062
        %v3704 = vpop.f32.mrb[0].mxu0
        %v3705 = vadd.f32 0.0, %v3704
        %v3706 = vpop.f32.mrb[0].mxu0
        %v3707 = vadd.f32 0.0, %v3706
        %v3708 = vpop.f32.mrb[0].mxu0
        %v3709 = vadd.f32 0.0, %v3708
        %v3710 = vpop.f32.mrb[0].mxu0
        %v3711 = vadd.f32 0.0, %v3710
        %3712 = vmatprep.mubr.bf16.mxu0 %v3065
        %3713 = vmatmul.mubr.bf16.gmra.mrb[0].mxu0 %v3064
        %v3714 = vpop.f32.mrb[0].mxu0
        %v3715 = vadd.f32 0.0, %v3714
        %v3716 = vpop.f32.mrb[0].mxu0
        %v3717 = vadd.f32 0.0, %v3716
        %v3718 = vpop.f32.mrb[0].mxu0
        %v3719 = vadd.f32 0.0, %v3718
        %v3720 = vpop.f32.mrb[0].mxu0
        %v3721 = vadd.f32 0.0, %v3720
        %3722 = vmatprep.mubr.bf16.mxu0 %v3067
        %3723 = vmatmul.mubr.bf16.gmra.mrb[0].mxu0 %v3066
        %v3724 = vpop.f32.mrb[0].mxu0
        %v3725 = vadd.f32 0.0, %v3724
        %v3726 = vpop.f32.mrb[0].mxu0
        %v3727 = vadd.f32 0.0, %v3726
        %v3728 = vpop.f32.mrb[0].mxu0
        %v3729 = vadd.f32 0.0, %v3728
        %v3730 = vpop.f32.mrb[0].mxu0
        %v3731 = vadd.f32 0.0, %v3730
        %3732 = vmatprep.mubr.bf16.mxu0 %v3069
        %3733 = vmatmul.mubr.bf16.gmra.mrb[0].mxu0 %v3068
        %v3734 = vpop.f32.mrb[0].mxu0
        %v3735 = vadd.f32 0.0, %v3734
        %v3736 = vpop.f32.mrb[0].mxu0
        %v3737 = vadd.f32 0.0, %v3736
        %v3738 = vpop.f32.mrb[0].mxu0
        %v3739 = vadd.f32 0.0, %v3738
        %v3740 = vpop.f32.mrb[0].mxu0
        %v3741 = vadd.f32 0.0, %v3740
        %3742 = vmatprep.mubr.bf16.mxu0 %v3071
        %3743 = vmatmul.mubr.bf16.gmra.mrb[0].mxu0 %v3070
        %v3744 = vpop.f32.mrb[0].mxu0
        %v3745 = vadd.f32 0.0, %v3744
        %v3746 = vpop.f32.mrb[0].mxu0
        %v3747 = vadd.f32 0.0, %v3746
        %v3748 = vpop.f32.mrb[0].mxu0
        %v3749 = vadd.f32 0.0, %v3748
        %v3750 = vpop.f32.mrb[0].mxu0
        %v3751 = vadd.f32 0.0, %v3750
        %3752 = vmatprep.mubr.bf16.mxu0 %v3073
        %3753 = vmatmul.mubr.bf16.gmra.mrb[0].mxu0 %v3072
        %v3754 = vpop.f32.mrb[0].mxu0
        %v3755 = vadd.f32 0.0, %v3754
        %v3756 = vpop.f32.mrb[0].mxu0
        %v3757 = vadd.f32 0.0, %v3756
        %v3758 = vpop.f32.mrb[0].mxu0
        %v3759 = vadd.f32 0.0, %v3758
        %v3760 = vpop.f32.mrb[0].mxu0
        %v3761 = vadd.f32 0.0, %v3760
        %3762 = vmatprep.mubr.bf16.mxu0 %v3075
        %3763 = vmatmul.mubr.bf16.gmra.mrb[0].mxu0 %v3074
        %v3764 = vpop.f32.mrb[0].mxu0
        %v3765 = vadd.f32 0.0, %v3764
        %v3766 = vpop.f32.mrb[0].mxu0
        %v3767 = vadd.f32 0.0, %v3766
        %v3768 = vpop.f32.mrb[0].mxu0
        %v3769 = vadd.f32 0.0, %v3768
        %v3770 = vpop.f32.mrb[0].mxu0
        %v3771 = vadd.f32 0.0, %v3770
        %3772 = vmatprep.mubr.bf16.mxu0 %v3077
        %3773 = vmatmul.mubr.bf16.gmra.mrb[0].mxu0 %v3076
        %v3774 = vpop.f32.mrb[0].mxu0
        %v3775 = vadd.f32 0.0, %v3774
        %v3776 = vpop.f32.mrb[0].mxu0
        %v3777 = vadd.f32 0.0, %v3776
        %v3778 = vpop.f32.mrb[0].mxu0
        %v3779 = vadd.f32 0.0, %v3778
        %v3780 = vpop.f32.mrb[0].mxu0
        %v3781 = vadd.f32 0.0, %v3780
        %3782 = vmatprep.mubr.bf16.mxu0 %v3079
        %3783 = vmatmul.mubr.bf16.gmra.mrb[0].mxu0 %v3078
        %v3784 = vpop.f32.mrb[0].mxu0
        %v3785 = vadd.f32 0.0, %v3784
        %v3786 = vpop.f32.mrb[0].mxu0
        %v3787 = vadd.f32 0.0, %v3786
        %v3788 = vpop.f32.mrb[0].mxu0
        %v3789 = vadd.f32 0.0, %v3788
        %v3790 = vpop.f32.mrb[0].mxu0
        %v3791 = vadd.f32 0.0, %v3790
        %3792 = vmatprep.mubr.bf16.mxu0 %v3081
        %3793 = vmatmul.mubr.bf16.gmra.mrb[0].mxu0 %v3080
        %v3794 = vpop.f32.mrb[0].mxu0
        %v3795 = vadd.f32 0.0, %v3794
        %v3796 = vpop.f32.mrb[0].mxu0
        %v3797 = vadd.f32 0.0, %v3796
        %v3798 = vpop.f32.mrb[0].mxu0
        %v3799 = vadd.f32 0.0, %v3798
        %v3800 = vpop.f32.mrb[0].mxu0
        %v3801 = vadd.f32 0.0, %v3800
        %3802 = vmatprep.mubr.bf16.mxu0 %v3083
        %3803 = vmatmul.mubr.bf16.gmra.mrb[0].mxu0 %v3082
        %v3804 = vpop.f32.mrb[0].mxu0
        %v3805 = vadd.f32 0.0, %v3804
        %v3806 = vpop.f32.mrb[0].mxu0
        %v3807 = vadd.f32 0.0, %v3806
        %v3808 = vpop.f32.mrb[0].mxu0
        %v3809 = vadd.f32 0.0, %v3808
        %v3810 = vpop.f32.mrb[0].mxu0
        %v3811 = vadd.f32 0.0, %v3810
        %3812 = vmatprep.mubr.bf16.mxu0 %v3085
        %3813 = vmatmul.mubr.bf16.gmra.mrb[0].mxu0 %v3084
        %v3814 = vpop.f32.mrb[0].mxu0
        %v3815 = vadd.f32 0.0, %v3814
        %v3816 = vpop.f32.mrb[0].mxu0
        %v3817 = vadd.f32 0.0, %v3816
        %v3818 = vpop.f32.mrb[0].mxu0
        %v3819 = vadd.f32 0.0, %v3818
        %v3820 = vpop.f32.mrb[0].mxu0
        %v3821 = vadd.f32 0.0, %v3820
        %3822 = vdwg.mxu0
        %3823 = vmatprep.subr.bf16.mxu0 %v3345
        %3824 = vmatpush1.bf16.msra.mxu0 %v3344
        %3825 = vmatprep.subr.bf16.mxu0 %v3349
        %3826 = vmatpush1.bf16.msra.mxu0 %v3348
        %3827 = vmatprep.subr.bf16.mxu0 %v3353
        %3828 = vmatpush1.bf16.msra.mxu0 %v3352
        %3829 = vmatprep.subr.bf16.mxu0 %v3357
        %3830 = vmatpush1.bf16.msra.mxu0 %v3356
        %3831 = vmatprep.subr.bf16.mxu0 %v3361
        %3832 = vmatpush1.bf16.msra.mxu0 %v3360
        %3833 = vmatprep.subr.bf16.mxu0 %v3365
        %3834 = vmatpush1.bf16.msra.mxu0 %v3364
        %3835 = vmatprep.subr.bf16.mxu0 %v3369
        %3836 = vmatpush1.bf16.msra.mxu0 %v3368
        %3837 = vmatprep.subr.bf16.mxu0 %v3373
        %3838 = vmatpush1.bf16.msra.mxu0 %v3372
        %3839 = vmatprep.subr.bf16.mxu0 %v3377
        %3840 = vmatpush1.bf16.msra.mxu0 %v3376
        %3841 = vmatprep.subr.bf16.mxu0 %v3381
        %3842 = vmatpush1.bf16.msra.mxu0 %v3380
        %3843 = vmatprep.subr.bf16.mxu0 %v3385
        %3844 = vmatpush1.bf16.msra.mxu0 %v3384
        %3845 = vmatprep.subr.bf16.mxu0 %v3389
        %3846 = vmatpush1.bf16.msra.mxu0 %v3388
        %3847 = vmatprep.subr.bf16.mxu0 %v3393
        %3848 = vmatpush1.bf16.msra.mxu0 %v3392
        %3849 = vmatprep.subr.bf16.mxu0 %v3397
        %3850 = vmatpush1.bf16.msra.mxu0 %v3396
        %3851 = vmatprep.subr.bf16.mxu0 %v3401
        %3852 = vmatpush1.bf16.msra.mxu0 %v3400
        %3853 = vmatprep.subr.bf16.mxu0 %v3405
        %3854 = vmatpush1.bf16.msra.mxu0 %v3404
        %3855 = vmatprep.mubr.bf16.mxu0 %v3023
        %3856 = vmatmul.mubr.bf16.gmra.mrb[0].mxu0 %v3022
        %v3857 = vpop.f32.mrb[0].mxu0
        %v3858 = vadd.f32 0.0, %v3857
        %v3859 = vpop.f32.mrb[0].mxu0
        %v3860 = vadd.f32 0.0, %v3859
        %v3861 = vpop.f32.mrb[0].mxu0
        %v3862 = vadd.f32 0.0, %v3861
        %v3863 = vpop.f32.mrb[0].mxu0
        %v3864 = vadd.f32 0.0, %v3863
        %3865 = vmatprep.mubr.bf16.mxu0 %v3025
        %3866 = vmatmul.mubr.bf16.gmra.mrb[0].mxu0 %v3024
        %v3867 = vpop.f32.mrb[0].mxu0
        %v3868 = vadd.f32 0.0, %v3867
        %v3869 = vpop.f32.mrb[0].mxu0
        %v3870 = vadd.f32 0.0, %v3869
        %v3871 = vpop.f32.mrb[0].mxu0
        %v3872 = vadd.f32 0.0, %v3871
        %v3873 = vpop.f32.mrb[0].mxu0
        %v3874 = vadd.f32 0.0, %v3873
        %3875 = vmatprep.mubr.bf16.mxu0 %v3027
        %3876 = vmatmul.mubr.bf16.gmra.mrb[0].mxu0 %v3026
        %v3877 = vpop.f32.mrb[0].mxu0
        %v3878 = vadd.f32 0.0, %v3877
        %v3879 = vpop.f32.mrb[0].mxu0
        %v3880 = vadd.f32 0.0, %v3879
        %v3881 = vpop.f32.mrb[0].mxu0
        %v3882 = vadd.f32 0.0, %v3881
        %v3883 = vpop.f32.mrb[0].mxu0
        %v3884 = vadd.f32 0.0, %v3883
        %3885 = vmatprep.mubr.bf16.mxu0 %v3029
        %3886 = vmatmul.mubr.bf16.gmra.mrb[0].mxu0 %v3028
        %v3887 = vpop.f32.mrb[0].mxu0
        %v3888 = vadd.f32 0.0, %v3887
        %v3889 = vpop.f32.mrb[0].mxu0
        %v3890 = vadd.f32 0.0, %v3889
        %v3891 = vpop.f32.mrb[0].mxu0
        %v3892 = vadd.f32 0.0, %v3891
        %v3893 = vpop.f32.mrb[0].mxu0
        %v3894 = vadd.f32 0.0, %v3893
        %3895 = vmatprep.mubr.bf16.mxu0 %v3031
        %3896 = vmatmul.mubr.bf16.gmra.mrb[0].mxu0 %v3030
        %v3897 = vpop.f32.mrb[0].mxu0
        %v3898 = vadd.f32 0.0, %v3897
        %v3899 = vpop.f32.mrb[0].mxu0
        %v3900 = vadd.f32 0.0, %v3899
        %v3901 = vpop.f32.mrb[0].mxu0
        %v3902 = vadd.f32 0.0, %v3901
        %v3903 = vpop.f32.mrb[0].mxu0
        %v3904 = vadd.f32 0.0, %v3903
        %3905 = vmatprep.mubr.bf16.mxu0 %v3033
        %3906 = vmatmul.mubr.bf16.gmra.mrb[0].mxu0 %v3032
        %v3907 = vpop.f32.mrb[0].mxu0
        %v3908 = vadd.f32 0.0, %v3907
        %v3909 = vpop.f32.mrb[0].mxu0
        %v3910 = vadd.f32 0.0, %v3909
        %v3911 = vpop.f32.mrb[0].mxu0
        %v3912 = vadd.f32 0.0, %v3911
        %v3913 = vpop.f32.mrb[0].mxu0
        %v3914 = vadd.f32 0.0, %v3913
        %3915 = vmatprep.mubr.bf16.mxu0 %v3035
        %3916 = vmatmul.mubr.bf16.gmra.mrb[0].mxu0 %v3034
        %v3917 = vpop.f32.mrb[0].mxu0
        %v3918 = vadd.f32 0.0, %v3917
        %v3919 = vpop.f32.mrb[0].mxu0
        %v3920 = vadd.f32 0.0, %v3919
        %v3921 = vpop.f32.mrb[0].mxu0
        %v3922 = vadd.f32 0.0, %v3921
        %v3923 = vpop.f32.mrb[0].mxu0
        %v3924 = vadd.f32 0.0, %v3923
        %3925 = vmatprep.mubr.bf16.mxu0 %v3037
        %3926 = vmatmul.mubr.bf16.gmra.mrb[0].mxu0 %v3036
        %v3927 = vpop.f32.mrb[0].mxu0
        %v3928 = vadd.f32 0.0, %v3927
        %v3929 = vpop.f32.mrb[0].mxu0
        %v3930 = vadd.f32 0.0, %v3929
        %v3931 = vpop.f32.mrb[0].mxu0
        %v3932 = vadd.f32 0.0, %v3931
        %v3933 = vpop.f32.mrb[0].mxu0
        %v3934 = vadd.f32 0.0, %v3933
        %3935 = vmatprep.mubr.bf16.mxu0 %v3039
        %3936 = vmatmul.mubr.bf16.gmra.mrb[0].mxu0 %v3038
        %v3937 = vpop.f32.mrb[0].mxu0
        %v3938 = vadd.f32 0.0, %v3937
        %v3939 = vpop.f32.mrb[0].mxu0
        %v3940 = vadd.f32 0.0, %v3939
        %v3941 = vpop.f32.mrb[0].mxu0
        %v3942 = vadd.f32 0.0, %v3941
        %v3943 = vpop.f32.mrb[0].mxu0
        %v3944 = vadd.f32 0.0, %v3943
        %3945 = vmatprep.mubr.bf16.mxu0 %v3041
        %3946 = vmatmul.mubr.bf16.gmra.mrb[0].mxu0 %v3040
        %v3947 = vpop.f32.mrb[0].mxu0
        %v3948 = vadd.f32 0.0, %v3947
        %v3949 = vpop.f32.mrb[0].mxu0
        %v3950 = vadd.f32 0.0, %v3949
        %v3951 = vpop.f32.mrb[0].mxu0
        %v3952 = vadd.f32 0.0, %v3951
        %v3953 = vpop.f32.mrb[0].mxu0
        %v3954 = vadd.f32 0.0, %v3953
        %3955 = vmatprep.mubr.bf16.mxu0 %v3043
        %3956 = vmatmul.mubr.bf16.gmra.mrb[0].mxu0 %v3042
        %v3957 = vpop.f32.mrb[0].mxu0
        %v3958 = vadd.f32 0.0, %v3957
        %v3959 = vpop.f32.mrb[0].mxu0
        %v3960 = vadd.f32 0.0, %v3959
        %v3961 = vpop.f32.mrb[0].mxu0
        %v3962 = vadd.f32 0.0, %v3961
        %v3963 = vpop.f32.mrb[0].mxu0
        %v3964 = vadd.f32 0.0, %v3963
        %3965 = vmatprep.mubr.bf16.mxu0 %v3045
        %3966 = vmatmul.mubr.bf16.gmra.mrb[0].mxu0 %v3044
        %v3967 = vpop.f32.mrb[0].mxu0
        %v3968 = vadd.f32 0.0, %v3967
        %v3969 = vpop.f32.mrb[0].mxu0
        %v3970 = vadd.f32 0.0, %v3969
        %v3971 = vpop.f32.mrb[0].mxu0
        %v3972 = vadd.f32 0.0, %v3971
        %v3973 = vpop.f32.mrb[0].mxu0
        %v3974 = vadd.f32 0.0, %v3973
        %3975 = vmatprep.mubr.bf16.mxu0 %v3047
        %3976 = vmatmul.mubr.bf16.gmra.mrb[0].mxu0 %v3046
        %v3977 = vpop.f32.mrb[0].mxu0
        %v3978 = vadd.f32 0.0, %v3977
        %v3979 = vpop.f32.mrb[0].mxu0
        %v3980 = vadd.f32 0.0, %v3979
        %v3981 = vpop.f32.mrb[0].mxu0
        %v3982 = vadd.f32 0.0, %v3981
        %v3983 = vpop.f32.mrb[0].mxu0
        %v3984 = vadd.f32 0.0, %v3983
        %3985 = vmatprep.mubr.bf16.mxu0 %v3049
        %3986 = vmatmul.mubr.bf16.gmra.mrb[0].mxu0 %v3048
        %v3987 = vpop.f32.mrb[0].mxu0
        %v3988 = vadd.f32 0.0, %v3987
        %v3989 = vpop.f32.mrb[0].mxu0
        %v3990 = vadd.f32 0.0, %v3989
        %v3991 = vpop.f32.mrb[0].mxu0
        %v3992 = vadd.f32 0.0, %v3991
        %v3993 = vpop.f32.mrb[0].mxu0
        %v3994 = vadd.f32 0.0, %v3993
        %3995 = vmatprep.mubr.bf16.mxu0 %v3051
        %3996 = vmatmul.mubr.bf16.gmra.mrb[0].mxu0 %v3050
        %v3997 = vpop.f32.mrb[0].mxu0
        %v3998 = vadd.f32 0.0, %v3997
        %v3999 = vpop.f32.mrb[0].mxu0
        %v4000 = vadd.f32 0.0, %v3999
        %v4001 = vpop.f32.mrb[0].mxu0
        %v4002 = vadd.f32 0.0, %v4001
        %v4003 = vpop.f32.mrb[0].mxu0
        %v4004 = vadd.f32 0.0, %v4003
        %4005 = vmatprep.mubr.bf16.mxu0 %v3053
        %4006 = vmatmul.mubr.bf16.gmra.mrb[0].mxu0 %v3052
        %v4007 = vpop.f32.mrb[0].mxu0
        %v4008 = vadd.f32 0.0, %v4007
        %v4009 = vpop.f32.mrb[0].mxu0
        %v4010 = vadd.f32 0.0, %v4009
        %v4011 = vpop.f32.mrb[0].mxu0
        %v4012 = vadd.f32 0.0, %v4011
        %v4013 = vpop.f32.mrb[0].mxu0
        %v4014 = vadd.f32 0.0, %v4013
        %4015 = vmatprep.mubr.bf16.mxu0 %v3055
        %4016 = vmatmul.mubr.bf16.gmra.mrb[0].mxu0 %v3054
        %v4017 = vpop.f32.mrb[0].mxu0
        %v4018 = vadd.f32 0.0, %v4017
        %v4019 = vpop.f32.mrb[0].mxu0
        %v4020 = vadd.f32 0.0, %v4019
        %v4021 = vpop.f32.mrb[0].mxu0
        %v4022 = vadd.f32 0.0, %v4021
        %v4023 = vpop.f32.mrb[0].mxu0
        %v4024 = vadd.f32 0.0, %v4023
        %4025 = vmatprep.mubr.bf16.mxu0 %v3057
        %4026 = vmatmul.mubr.bf16.gmra.mrb[0].mxu0 %v3056
        %v4027 = vpop.f32.mrb[0].mxu0
        %v4028 = vadd.f32 0.0, %v4027
        %v4029 = vpop.f32.mrb[0].mxu0
        %v4030 = vadd.f32 0.0, %v4029
        %v4031 = vpop.f32.mrb[0].mxu0
        %v4032 = vadd.f32 0.0, %v4031
        %v4033 = vpop.f32.mrb[0].mxu0
        %v4034 = vadd.f32 0.0, %v4033
        %4035 = vmatprep.mubr.bf16.mxu0 %v3059
        %4036 = vmatmul.mubr.bf16.gmra.mrb[0].mxu0 %v3058
        %v4037 = vpop.f32.mrb[0].mxu0
        %v4038 = vadd.f32 0.0, %v4037
        %v4039 = vpop.f32.mrb[0].mxu0
        %v4040 = vadd.f32 0.0, %v4039
        %v4041 = vpop.f32.mrb[0].mxu0
        %v4042 = vadd.f32 0.0, %v4041
        %v4043 = vpop.f32.mrb[0].mxu0
        %v4044 = vadd.f32 0.0, %v4043
        %4045 = vmatprep.mubr.bf16.mxu0 %v3061
        %4046 = vmatmul.mubr.bf16.gmra.mrb[0].mxu0 %v3060
        %v4047 = vpop.f32.mrb[0].mxu0
        %v4048 = vadd.f32 0.0, %v4047
        %v4049 = vpop.f32.mrb[0].mxu0
        %v4050 = vadd.f32 0.0, %v4049
        %v4051 = vpop.f32.mrb[0].mxu0
        %v4052 = vadd.f32 0.0, %v4051
        %v4053 = vpop.f32.mrb[0].mxu0
        %v4054 = vadd.f32 0.0, %v4053
        %4055 = vmatprep.mubr.bf16.mxu0 %v3063
        %4056 = vmatmul.mubr.bf16.gmra.mrb[0].mxu0 %v3062
        %v4057 = vpop.f32.mrb[0].mxu0
        %v4058 = vadd.f32 0.0, %v4057
        %v4059 = vpop.f32.mrb[0].mxu0
        %v4060 = vadd.f32 0.0, %v4059
        %v4061 = vpop.f32.mrb[0].mxu0
        %v4062 = vadd.f32 0.0, %v4061
        %v4063 = vpop.f32.mrb[0].mxu0
        %v4064 = vadd.f32 0.0, %v4063
        %4065 = vmatprep.mubr.bf16.mxu0 %v3065
        %4066 = vmatmul.mubr.bf16.gmra.mrb[0].mxu0 %v3064
        %v4067 = vpop.f32.mrb[0].mxu0
        %v4068 = vadd.f32 0.0, %v4067
        %v4069 = vpop.f32.mrb[0].mxu0
        %v4070 = vadd.f32 0.0, %v4069
        %v4071 = vpop.f32.mrb[0].mxu0
        %v4072 = vadd.f32 0.0, %v4071
        %v4073 = vpop.f32.mrb[0].mxu0
        %v4074 = vadd.f32 0.0, %v4073
        %4075 = vmatprep.mubr.bf16.mxu0 %v3067
        %4076 = vmatmul.mubr.bf16.gmra.mrb[0].mxu0 %v3066
        %v4077 = vpop.f32.mrb[0].mxu0
        %v4078 = vadd.f32 0.0, %v4077
        %v4079 = vpop.f32.mrb[0].mxu0
        %v4080 = vadd.f32 0.0, %v4079
        %v4081 = vpop.f32.mrb[0].mxu0
        %v4082 = vadd.f32 0.0, %v4081
        %v4083 = vpop.f32.mrb[0].mxu0
        %v4084 = vadd.f32 0.0, %v4083
        %4085 = vmatprep.mubr.bf16.mxu0 %v3069
        %4086 = vmatmul.mubr.bf16.gmra.mrb[0].mxu0 %v3068
        %v4087 = vpop.f32.mrb[0].mxu0
        %v4088 = vadd.f32 0.0, %v4087
        %v4089 = vpop.f32.mrb[0].mxu0
        %v4090 = vadd.f32 0.0, %v4089
        %v4091 = vpop.f32.mrb[0].mxu0
        %v4092 = vadd.f32 0.0, %v4091
        %v4093 = vpop.f32.mrb[0].mxu0
        %v4094 = vadd.f32 0.0, %v4093
        %4095 = vmatprep.mubr.bf16.mxu0 %v3071
        %4096 = vmatmul.mubr.bf16.gmra.mrb[0].mxu0 %v3070
        %v4097 = vpop.f32.mrb[0].mxu0
        %v4098 = vadd.f32 0.0, %v4097
        %v4099 = vpop.f32.mrb[0].mxu0
        %v4100 = vadd.f32 0.0, %v4099
        %v4101 = vpop.f32.mrb[0].mxu0
        %v4102 = vadd.f32 0.0, %v4101
        %v4103 = vpop.f32.mrb[0].mxu0
        %v4104 = vadd.f32 0.0, %v4103
        %4105 = vmatprep.mubr.bf16.mxu0 %v3073
        %4106 = vmatmul.mubr.bf16.gmra.mrb[0].mxu0 %v3072
        %v4107 = vpop.f32.mrb[0].mxu0
        %v4108 = vadd.f32 0.0, %v4107
        %v4109 = vpop.f32.mrb[0].mxu0
        %v4110 = vadd.f32 0.0, %v4109
        %v4111 = vpop.f32.mrb[0].mxu0
        %v4112 = vadd.f32 0.0, %v4111
        %v4113 = vpop.f32.mrb[0].mxu0
        %v4114 = vadd.f32 0.0, %v4113
        %4115 = vmatprep.mubr.bf16.mxu0 %v3075
        %4116 = vmatmul.mubr.bf16.gmra.mrb[0].mxu0 %v3074
        %v4117 = vpop.f32.mrb[0].mxu0
        %v4118 = vadd.f32 0.0, %v4117
        %v4119 = vpop.f32.mrb[0].mxu0
        %v4120 = vadd.f32 0.0, %v4119
        %v4121 = vpop.f32.mrb[0].mxu0
        %v4122 = vadd.f32 0.0, %v4121
        %v4123 = vpop.f32.mrb[0].mxu0
        %v4124 = vadd.f32 0.0, %v4123
        %4125 = vmatprep.mubr.bf16.mxu0 %v3077
        %4126 = vmatmul.mubr.bf16.gmra.mrb[0].mxu0 %v3076
        %v4127 = vpop.f32.mrb[0].mxu0
        %v4128 = vadd.f32 0.0, %v4127
        %v4129 = vpop.f32.mrb[0].mxu0
        %v4130 = vadd.f32 0.0, %v4129
        %v4131 = vpop.f32.mrb[0].mxu0
        %v4132 = vadd.f32 0.0, %v4131
        %v4133 = vpop.f32.mrb[0].mxu0
        %v4134 = vadd.f32 0.0, %v4133
        %4135 = vmatprep.mubr.bf16.mxu0 %v3079
        %4136 = vmatmul.mubr.bf16.gmra.mrb[0].mxu0 %v3078
        %v4137 = vpop.f32.mrb[0].mxu0
        %v4138 = vadd.f32 0.0, %v4137
        %v4139 = vpop.f32.mrb[0].mxu0
        %v4140 = vadd.f32 0.0, %v4139
        %v4141 = vpop.f32.mrb[0].mxu0
        %v4142 = vadd.f32 0.0, %v4141
        %v4143 = vpop.f32.mrb[0].mxu0
        %v4144 = vadd.f32 0.0, %v4143
        %4145 = vmatprep.mubr.bf16.mxu0 %v3081
        %4146 = vmatmul.mubr.bf16.gmra.mrb[0].mxu0 %v3080
        %v4147 = vpop.f32.mrb[0].mxu0
        %v4148 = vadd.f32 0.0, %v4147
        %v4149 = vpop.f32.mrb[0].mxu0
        %v4150 = vadd.f32 0.0, %v4149
        %v4151 = vpop.f32.mrb[0].mxu0
        %v4152 = vadd.f32 0.0, %v4151
        %v4153 = vpop.f32.mrb[0].mxu0
        %v4154 = vadd.f32 0.0, %v4153
        %4155 = vmatprep.mubr.bf16.mxu0 %v3083
        %4156 = vmatmul.mubr.bf16.gmra.mrb[0].mxu0 %v3082
        %v4157 = vpop.f32.mrb[0].mxu0
        %v4158 = vadd.f32 0.0, %v4157
        %v4159 = vpop.f32.mrb[0].mxu0
        %v4160 = vadd.f32 0.0, %v4159
        %v4161 = vpop.f32.mrb[0].mxu0
        %v4162 = vadd.f32 0.0, %v4161
        %v4163 = vpop.f32.mrb[0].mxu0
        %v4164 = vadd.f32 0.0, %v4163
        %4165 = vmatprep.mubr.bf16.mxu0 %v3085
        %4166 = vmatmul.mubr.bf16.gmra.mrb[0].mxu0 %v3084
        %v4167 = vpop.f32.mrb[0].mxu0
        %v4168 = vadd.f32 0.0, %v4167
        %v4169 = vpop.f32.mrb[0].mxu0
        %v4170 = vadd.f32 0.0, %v4169
        %v4171 = vpop.f32.mrb[0].mxu0
        %v4172 = vadd.f32 0.0, %v4171
        %v4173 = vpop.f32.mrb[0].mxu0
        %v4174 = vadd.f32 0.0, %v4173
        %4175 = vdwg.mxu0
        %v4180 = vcombine.low %v2975, %v2977
        %v4181 = vcombine.high %v2975, %v2977
        %v4182 = vcombine.low %v3016, %v3018
        %v4183 = vcombine.high %v3016, %v3018
        %v4185 = vunpack.c.l.s4 1966171168
        %v4186 = vunpack.c.0.s8 %v4185
        %v4187 = vlaneseq
        %v4188 = vshrl.u32 %v4187, 7
        %v4189 = vsub.s32 %v4186, %v4188
        %v4190 = vrot.slane %v4180, %v4189
        %v4192 = vunpack.c.l.s4 1966171168
        %v4193 = vunpack.c.0.s8 %v4192
        %v4194 = vlaneseq
        %v4195 = vshrl.u32 %v4194, 7
        %v4196 = vsub.s32 %v4193, %v4195
        %v4197 = vrot.slane %v4181, %v4196
        %v4199 = vunpack.c.l.s4 1966171168
        %v4200 = vunpack.c.0.s8 %v4199
        %v4201 = vlaneseq
        %v4202 = vshrl.u32 %v4201, 7
        %v4203 = vsub.s32 %v4200, %v4202
        %v4204 = vrot.slane %v4182, %v4203
        %v4206 = vunpack.c.l.s4 1966171168
        %v4207 = vunpack.c.0.s8 %v4206
        %v4208 = vlaneseq
        %v4209 = vshrl.u32 %v4208, 7
        %v4210 = vsub.s32 %v4207, %v4209
        %v4211 = vrot.slane %v4183, %v4210
        %v4212 = vcombine.low %v4190, %v4204
        %v4213 = vcombine.high %v4190, %v4204
        %v4214 = vcombine.low %v4197, %v4211
        %v4215 = vcombine.high %v4197, %v4211
        %v4217 = vunpack.c.l.s4 1966171168
        %v4218 = vunpack.c.0.s8 %v4217
        %v4219 = vlaneseq
        %v4220 = vshrl.u32 %v4219, 7
        %v4221 = vsub.s32 %v4218, %v4220
        %v4222 = vrot.slane %v4212, %v4221
        %v4224 = vunpack.c.l.s4 1966171168
        %v4225 = vunpack.c.0.s8 %v4224
        %v4226 = vlaneseq
        %v4227 = vshrl.u32 %v4226, 7
        %v4228 = vsub.s32 %v4225, %v4227
        %v4229 = vrot.slane %v4214, %v4228
        %v4231 = vunpack.c.l.s4 1966171168
        %v4232 = vunpack.c.0.s8 %v4231
        %v4233 = vlaneseq
        %v4234 = vshrl.u32 %v4233, 7
        %v4235 = vsub.s32 %v4232, %v4234
        %v4236 = vrot.slane %v4213, %v4235
        %v4238 = vunpack.c.l.s4 1966171168
        %v4239 = vunpack.c.0.s8 %v4238
        %v4240 = vlaneseq
        %v4241 = vshrl.u32 %v4240, 7
        %v4242 = vsub.s32 %v4239, %v4241
        %v4243 = vrot.slane %v4215, %v4242
        %v4244 = vcombine.high %v4222, %v4222
        %v4245 = vcombine.high %v4229, %v4229
        %v4246 = vcombine.high %v4236, %v4236
        %v4247 = vcombine.high %v4243, %v4243
        %v4248 = vlaneseq
        %v4249 = vshrl.u32 %v4248, 7
        %v4250 = vsub.s32 0, %v4249
        %v4251 = vrot.slane %v4222, %v4250
        %v4252 = vlaneseq
        %v4253 = vshrl.u32 %v4252, 7
        %v4254 = vsub.s32 1, %v4253
        %v4255 = vrot.slane %v4222, %v4254
        %v4256 = vlaneseq
        %v4257 = vshrl.u32 %v4256, 7
        %v4258 = vsub.s32 2, %v4257
        %v4259 = vrot.slane %v4222, %v4258
        %v4260 = vlaneseq
        %v4261 = vshrl.u32 %v4260, 7
        %v4262 = vsub.s32 3, %v4261
        %v4263 = vrot.slane %v4222, %v4262
        %v4264 = vlaneseq
        %v4265 = vshrl.u32 %v4264, 7
        %v4266 = vsub.s32 0, %v4265
        %v4267 = vrot.slane %v4236, %v4266
        %v4268 = vlaneseq
        %v4269 = vshrl.u32 %v4268, 7
        %v4270 = vsub.s32 1, %v4269
        %v4271 = vrot.slane %v4236, %v4270
        %v4272 = vlaneseq
        %v4273 = vshrl.u32 %v4272, 7
        %v4274 = vsub.s32 2, %v4273
        %v4275 = vrot.slane %v4236, %v4274
        %v4276 = vlaneseq
        %v4277 = vshrl.u32 %v4276, 7
        %v4278 = vsub.s32 3, %v4277
        %v4279 = vrot.slane %v4236, %v4278
        %v4280 = vlaneseq
        %v4281 = vshrl.u32 %v4280, 7
        %v4282 = vsub.s32 0, %v4281
        %v4283 = vrot.slane %v4244, %v4282
        %v4284 = vlaneseq
        %v4285 = vshrl.u32 %v4284, 7
        %v4286 = vsub.s32 1, %v4285
        %v4287 = vrot.slane %v4244, %v4286
        %v4288 = vlaneseq
        %v4289 = vshrl.u32 %v4288, 7
        %v4290 = vsub.s32 2, %v4289
        %v4291 = vrot.slane %v4244, %v4290
        %v4292 = vlaneseq
        %v4293 = vshrl.u32 %v4292, 7
        %v4294 = vsub.s32 3, %v4293
        %v4295 = vrot.slane %v4244, %v4294
        %v4296 = vlaneseq
        %v4297 = vshrl.u32 %v4296, 7
        %v4298 = vsub.s32 0, %v4297
        %v4299 = vrot.slane %v4246, %v4298
        %v4300 = vlaneseq
        %v4301 = vshrl.u32 %v4300, 7
        %v4302 = vsub.s32 1, %v4301
        %v4303 = vrot.slane %v4246, %v4302
        %v4304 = vlaneseq
        %v4305 = vshrl.u32 %v4304, 7
        %v4306 = vsub.s32 2, %v4305
        %v4307 = vrot.slane %v4246, %v4306
        %v4308 = vlaneseq
        %v4309 = vshrl.u32 %v4308, 7
        %v4310 = vsub.s32 3, %v4309
        %v4311 = vrot.slane %v4246, %v4310
        %v4312 = vlaneseq
        %v4313 = vshrl.u32 %v4312, 7
        %v4314 = vsub.s32 0, %v4313
        %v4315 = vrot.slane %v4229, %v4314
        %v4316 = vlaneseq
        %v4317 = vshrl.u32 %v4316, 7
        %v4318 = vsub.s32 1, %v4317
        %v4319 = vrot.slane %v4229, %v4318
        %v4320 = vlaneseq
        %v4321 = vshrl.u32 %v4320, 7
        %v4322 = vsub.s32 2, %v4321
        %v4323 = vrot.slane %v4229, %v4322
        %v4324 = vlaneseq
        %v4325 = vshrl.u32 %v4324, 7
        %v4326 = vsub.s32 3, %v4325
        %v4327 = vrot.slane %v4229, %v4326
        %v4328 = vlaneseq
        %v4329 = vshrl.u32 %v4328, 7
        %v4330 = vsub.s32 0, %v4329
        %v4331 = vrot.slane %v4243, %v4330
        %v4332 = vlaneseq
        %v4333 = vshrl.u32 %v4332, 7
        %v4334 = vsub.s32 1, %v4333
        %v4335 = vrot.slane %v4243, %v4334
        %v4336 = vlaneseq
        %v4337 = vshrl.u32 %v4336, 7
        %v4338 = vsub.s32 2, %v4337
        %v4339 = vrot.slane %v4243, %v4338
        %v4340 = vlaneseq
        %v4341 = vshrl.u32 %v4340, 7
        %v4342 = vsub.s32 3, %v4341
        %v4343 = vrot.slane %v4243, %v4342
        %v4344 = vlaneseq
        %v4345 = vshrl.u32 %v4344, 7
        %v4346 = vsub.s32 0, %v4345
        %v4347 = vrot.slane %v4245, %v4346
        %v4348 = vlaneseq
        %v4349 = vshrl.u32 %v4348, 7
        %v4350 = vsub.s32 1, %v4349
        %v4351 = vrot.slane %v4245, %v4350
        %v4352 = vlaneseq
        %v4353 = vshrl.u32 %v4352, 7
        %v4354 = vsub.s32 2, %v4353
        %v4355 = vrot.slane %v4245, %v4354
        %v4356 = vlaneseq
        %v4357 = vshrl.u32 %v4356, 7
        %v4358 = vsub.s32 3, %v4357
        %v4359 = vrot.slane %v4245, %v4358
        %v4360 = vlaneseq
        %v4361 = vshrl.u32 %v4360, 7
        %v4362 = vsub.s32 0, %v4361
        %v4363 = vrot.slane %v4247, %v4362
        %v4364 = vlaneseq
        %v4365 = vshrl.u32 %v4364, 7
        %v4366 = vsub.s32 1, %v4365
        %v4367 = vrot.slane %v4247, %v4366
        %v4368 = vlaneseq
        %v4369 = vshrl.u32 %v4368, 7
        %v4370 = vsub.s32 2, %v4369
        %v4371 = vrot.slane %v4247, %v4370
        %v4372 = vlaneseq
        %v4373 = vshrl.u32 %v4372, 7
        %v4374 = vsub.s32 3, %v4373
        %v4375 = vrot.slane %v4247, %v4374
        %v4408 = vadd.f32 %v3505, %v4251
        %v4409 = vadd.f32 %v3507, %v4255
        %v4410 = vadd.f32 %v3858, %v4259
        %v4411 = vadd.f32 %v3860, %v4263
        %v4412 = vadd.f32 %v3509, %v4251
        %v4413 = vadd.f32 %v3511, %v4255
        %v4414 = vadd.f32 %v3862, %v4259
        %v4415 = vadd.f32 %v3864, %v4263
        %v4416 = vadd.f32 %v3515, %v4251
        %v4417 = vadd.f32 %v3517, %v4255
        %v4418 = vadd.f32 %v3868, %v4259
        %v4419 = vadd.f32 %v3870, %v4263
        %v4420 = vadd.f32 %v3519, %v4251
        %v4421 = vadd.f32 %v3521, %v4255
        %v4422 = vadd.f32 %v3872, %v4259
        %v4423 = vadd.f32 %v3874, %v4263
        %v4424 = vadd.f32 %v3525, %v4251
        %v4425 = vadd.f32 %v3527, %v4255
        %v4426 = vadd.f32 %v3878, %v4259
        %v4427 = vadd.f32 %v3880, %v4263
        %v4428 = vadd.f32 %v3529, %v4251
        %v4429 = vadd.f32 %v3531, %v4255
        %v4430 = vadd.f32 %v3882, %v4259
        %v4431 = vadd.f32 %v3884, %v4263
        %v4432 = vadd.f32 %v3535, %v4251
        %v4433 = vadd.f32 %v3537, %v4255
        %v4434 = vadd.f32 %v3888, %v4259
        %v4435 = vadd.f32 %v3890, %v4263
        %v4436 = vadd.f32 %v3539, %v4251
        %v4437 = vadd.f32 %v3541, %v4255
        %v4438 = vadd.f32 %v3892, %v4259
        %v4439 = vadd.f32 %v3894, %v4263
        %v4440 = vadd.f32 %v3545, %v4267
        %v4441 = vadd.f32 %v3547, %v4271
        %v4442 = vadd.f32 %v3898, %v4275
        %v4443 = vadd.f32 %v3900, %v4279
        %v4444 = vadd.f32 %v3549, %v4267
        %v4445 = vadd.f32 %v3551, %v4271
        %v4446 = vadd.f32 %v3902, %v4275
        %v4447 = vadd.f32 %v3904, %v4279
        %v4448 = vadd.f32 %v3555, %v4267
        %v4449 = vadd.f32 %v3557, %v4271
        %v4450 = vadd.f32 %v3908, %v4275
        %v4451 = vadd.f32 %v3910, %v4279
        %v4452 = vadd.f32 %v3559, %v4267
        %v4453 = vadd.f32 %v3561, %v4271
        %v4454 = vadd.f32 %v3912, %v4275
        %v4455 = vadd.f32 %v3914, %v4279
        %v4456 = vadd.f32 %v3565, %v4267
        %v4457 = vadd.f32 %v3567, %v4271
        %v4458 = vadd.f32 %v3918, %v4275
        %v4459 = vadd.f32 %v3920, %v4279
        %v4460 = vadd.f32 %v3569, %v4267
        %v4461 = vadd.f32 %v3571, %v4271
        %v4462 = vadd.f32 %v3922, %v4275
        %v4463 = vadd.f32 %v3924, %v4279
        %v4464 = vadd.f32 %v3575, %v4267
        %v4465 = vadd.f32 %v3577, %v4271
        %v4466 = vadd.f32 %v3928, %v4275
        %v4467 = vadd.f32 %v3930, %v4279
        %v4468 = vadd.f32 %v3579, %v4267
        %v4469 = vadd.f32 %v3581, %v4271
        %v4470 = vadd.f32 %v3932, %v4275
        %v4471 = vadd.f32 %v3934, %v4279
        %v4472 = vadd.f32 %v3585, %v4283
        %v4473 = vadd.f32 %v3587, %v4287
        %v4474 = vadd.f32 %v3938, %v4291
        %v4475 = vadd.f32 %v3940, %v4295
        %v4476 = vadd.f32 %v3589, %v4283
        %v4477 = vadd.f32 %v3591, %v4287
        %v4478 = vadd.f32 %v3942, %v4291
        %v4479 = vadd.f32 %v3944, %v4295
        %v4480 = vadd.f32 %v3595, %v4283
        %v4481 = vadd.f32 %v3597, %v4287
        %v4482 = vadd.f32 %v3948, %v4291
        %v4483 = vadd.f32 %v3950, %v4295
        %v4484 = vadd.f32 %v3599, %v4283
        %v4485 = vadd.f32 %v3601, %v4287
        %v4486 = vadd.f32 %v3952, %v4291
        %v4487 = vadd.f32 %v3954, %v4295
        %v4488 = vadd.f32 %v3605, %v4283
        %v4489 = vadd.f32 %v3607, %v4287
        %v4490 = vadd.f32 %v3958, %v4291
        %v4491 = vadd.f32 %v3960, %v4295
        %v4492 = vadd.f32 %v3609, %v4283
        %v4493 = vadd.f32 %v3611, %v4287
        %v4494 = vadd.f32 %v3962, %v4291
        %v4495 = vadd.f32 %v3964, %v4295
        %v4496 = vadd.f32 %v3615, %v4283
        %v4497 = vadd.f32 %v3617, %v4287
        %v4498 = vadd.f32 %v3968, %v4291
        %v4499 = vadd.f32 %v3970, %v4295
        %v4500 = vadd.f32 %v3619, %v4283
        %v4501 = vadd.f32 %v3621, %v4287
        %v4502 = vadd.f32 %v3972, %v4291
        %v4503 = vadd.f32 %v3974, %v4295
        %v4504 = vadd.f32 %v3625, %v4299
        %v4505 = vadd.f32 %v3627, %v4303
        %v4506 = vadd.f32 %v3978, %v4307
        %v4507 = vadd.f32 %v3980, %v4311
        %v4508 = vadd.f32 %v3629, %v4299
        %v4509 = vadd.f32 %v3631, %v4303
        %v4510 = vadd.f32 %v3982, %v4307
        %v4511 = vadd.f32 %v3984, %v4311
        %v4512 = vadd.f32 %v3635, %v4299
        %v4513 = vadd.f32 %v3637, %v4303
        %v4514 = vadd.f32 %v3988, %v4307
        %v4515 = vadd.f32 %v3990, %v4311
        %v4516 = vadd.f32 %v3639, %v4299
        %v4517 = vadd.f32 %v3641, %v4303
        %v4518 = vadd.f32 %v3992, %v4307
        %v4519 = vadd.f32 %v3994, %v4311
        %v4520 = vadd.f32 %v3645, %v4299
        %v4521 = vadd.f32 %v3647, %v4303
        %v4522 = vadd.f32 %v3998, %v4307
        %v4523 = vadd.f32 %v4000, %v4311
        %v4524 = vadd.f32 %v3649, %v4299
        %v4525 = vadd.f32 %v3651, %v4303
        %v4526 = vadd.f32 %v4002, %v4307
        %v4527 = vadd.f32 %v4004, %v4311
        %v4528 = vadd.f32 %v3655, %v4299
        %v4529 = vadd.f32 %v3657, %v4303
        %v4530 = vadd.f32 %v4008, %v4307
        %v4531 = vadd.f32 %v4010, %v4311
        %v4532 = vadd.f32 %v3659, %v4299
        %v4533 = vadd.f32 %v3661, %v4303
        %v4534 = vadd.f32 %v4012, %v4307
        %v4535 = vadd.f32 %v4014, %v4311
        %v4536 = vadd.f32 %v3665, %v4315
        %v4537 = vadd.f32 %v3667, %v4319
        %v4538 = vadd.f32 %v4018, %v4323
        %v4539 = vadd.f32 %v4020, %v4327
        %v4540 = vadd.f32 %v3669, %v4315
        %v4541 = vadd.f32 %v3671, %v4319
        %v4542 = vadd.f32 %v4022, %v4323
        %v4543 = vadd.f32 %v4024, %v4327
        %v4544 = vadd.f32 %v3675, %v4315
        %v4545 = vadd.f32 %v3677, %v4319
        %v4546 = vadd.f32 %v4028, %v4323
        %v4547 = vadd.f32 %v4030, %v4327
        %v4548 = vadd.f32 %v3679, %v4315
        %v4549 = vadd.f32 %v3681, %v4319
        %v4550 = vadd.f32 %v4032, %v4323
        %v4551 = vadd.f32 %v4034, %v4327
        %v4552 = vadd.f32 %v3685, %v4315
        %v4553 = vadd.f32 %v3687, %v4319
        %v4554 = vadd.f32 %v4038, %v4323
        %v4555 = vadd.f32 %v4040, %v4327
        %v4556 = vadd.f32 %v3689, %v4315
        %v4557 = vadd.f32 %v3691, %v4319
        %v4558 = vadd.f32 %v4042, %v4323
        %v4559 = vadd.f32 %v4044, %v4327
        %v4560 = vadd.f32 %v3695, %v4315
        %v4561 = vadd.f32 %v3697, %v4319
        %v4562 = vadd.f32 %v4048, %v4323
        %v4563 = vadd.f32 %v4050, %v4327
        %v4564 = vadd.f32 %v3699, %v4315
        %v4565 = vadd.f32 %v3701, %v4319
        %v4566 = vadd.f32 %v4052, %v4323
        %v4567 = vadd.f32 %v4054, %v4327
        %v4568 = vadd.f32 %v3705, %v4331
        %v4569 = vadd.f32 %v3707, %v4335
        %v4570 = vadd.f32 %v4058, %v4339
        %v4571 = vadd.f32 %v4060, %v4343
        %v4572 = vadd.f32 %v3709, %v4331
        %v4573 = vadd.f32 %v3711, %v4335
        %v4574 = vadd.f32 %v4062, %v4339
        %v4575 = vadd.f32 %v4064, %v4343
        %v4576 = vadd.f32 %v3715, %v4331
        %v4577 = vadd.f32 %v3717, %v4335
        %v4578 = vadd.f32 %v4068, %v4339
        %v4579 = vadd.f32 %v4070, %v4343
        %v4580 = vadd.f32 %v3719, %v4331
        %v4581 = vadd.f32 %v3721, %v4335
        %v4582 = vadd.f32 %v4072, %v4339
        %v4583 = vadd.f32 %v4074, %v4343
        %v4584 = vadd.f32 %v3725, %v4331
        %v4585 = vadd.f32 %v3727, %v4335
        %v4586 = vadd.f32 %v4078, %v4339
        %v4587 = vadd.f32 %v4080, %v4343
        %v4588 = vadd.f32 %v3729, %v4331
        %v4589 = vadd.f32 %v3731, %v4335
        %v4590 = vadd.f32 %v4082, %v4339
        %v4591 = vadd.f32 %v4084, %v4343
        %v4592 = vadd.f32 %v3735, %v4331
        %v4593 = vadd.f32 %v3737, %v4335
        %v4594 = vadd.f32 %v4088, %v4339
        %v4595 = vadd.f32 %v4090, %v4343
        %v4596 = vadd.f32 %v3739, %v4331
        %v4597 = vadd.f32 %v3741, %v4335
        %v4598 = vadd.f32 %v4092, %v4339
        %v4599 = vadd.f32 %v4094, %v4343
        %v4600 = vadd.f32 %v3745, %v4347
        %v4601 = vadd.f32 %v3747, %v4351
        %v4602 = vadd.f32 %v4098, %v4355
        %v4603 = vadd.f32 %v4100, %v4359
        %v4604 = vadd.f32 %v3749, %v4347
        %v4605 = vadd.f32 %v3751, %v4351
        %v4606 = vadd.f32 %v4102, %v4355
        %v4607 = vadd.f32 %v4104, %v4359
        %v4608 = vadd.f32 %v3755, %v4347
        %v4609 = vadd.f32 %v3757, %v4351
        %v4610 = vadd.f32 %v4108, %v4355
        %v4611 = vadd.f32 %v4110, %v4359
        %v4612 = vadd.f32 %v3759, %v4347
        %v4613 = vadd.f32 %v3761, %v4351
        %v4614 = vadd.f32 %v4112, %v4355
        %v4615 = vadd.f32 %v4114, %v4359
        %v4616 = vadd.f32 %v3765, %v4347
        %v4617 = vadd.f32 %v3767, %v4351
        %v4618 = vadd.f32 %v4118, %v4355
        %v4619 = vadd.f32 %v4120, %v4359
        %v4620 = vadd.f32 %v3769, %v4347
        %v4621 = vadd.f32 %v3771, %v4351
        %v4622 = vadd.f32 %v4122, %v4355
        %v4623 = vadd.f32 %v4124, %v4359
        %v4624 = vadd.f32 %v3775, %v4347
        %v4625 = vadd.f32 %v3777, %v4351
        %v4626 = vadd.f32 %v4128, %v4355
        %v4627 = vadd.f32 %v4130, %v4359
        %v4628 = vadd.f32 %v3779, %v4347
        %v4629 = vadd.f32 %v3781, %v4351
        %v4630 = vadd.f32 %v4132, %v4355
        %v4631 = vadd.f32 %v4134, %v4359
        %v4632 = vadd.f32 %v3785, %v4363
        %v4633 = vadd.f32 %v3787, %v4367
        %v4634 = vadd.f32 %v4138, %v4371
        %v4635 = vadd.f32 %v4140, %v4375
        %v4636 = vadd.f32 %v3789, %v4363
        %v4637 = vadd.f32 %v3791, %v4367
        %v4638 = vadd.f32 %v4142, %v4371
        %v4639 = vadd.f32 %v4144, %v4375
        %v4640 = vadd.f32 %v3795, %v4363
        %v4641 = vadd.f32 %v3797, %v4367
        %v4642 = vadd.f32 %v4148, %v4371
        %v4643 = vadd.f32 %v4150, %v4375
        %v4644 = vadd.f32 %v3799, %v4363
        %v4645 = vadd.f32 %v3801, %v4367
        %v4646 = vadd.f32 %v4152, %v4371
        %v4647 = vadd.f32 %v4154, %v4375
        %v4648 = vadd.f32 %v3805, %v4363
        %v4649 = vadd.f32 %v3807, %v4367
        %v4650 = vadd.f32 %v4158, %v4371
        %v4651 = vadd.f32 %v4160, %v4375
        %v4652 = vadd.f32 %v3809, %v4363
        %v4653 = vadd.f32 %v3811, %v4367
        %v4654 = vadd.f32 %v4162, %v4371
        %v4655 = vadd.f32 %v4164, %v4375
        %v4656 = vadd.f32 %v3815, %v4363
        %v4657 = vadd.f32 %v3817, %v4367
        %v4658 = vadd.f32 %v4168, %v4371
        %v4659 = vadd.f32 %v4170, %v4375
        %v4660 = vadd.f32 %v3819, %v4363
        %v4661 = vadd.f32 %v3821, %v4367
        %v4662 = vadd.f32 %v4172, %v4371
        %v4663 = vadd.f32 %v4174, %v4375
        %v4664 = vmax.f32 %v4408, 0.0
        %v4665 = vmax.f32 %v4409, 0.0
        %v4666 = vmax.f32 %v4410, 0.0
        %v4667 = vmax.f32 %v4411, 0.0
        %v4668 = vmax.f32 %v4412, 0.0
        %v4669 = vmax.f32 %v4413, 0.0
        %v4670 = vmax.f32 %v4414, 0.0
        %v4671 = vmax.f32 %v4415, 0.0
        %v4672 = vmax.f32 %v4416, 0.0
        %v4673 = vmax.f32 %v4417, 0.0
        %v4674 = vmax.f32 %v4418, 0.0
        %v4675 = vmax.f32 %v4419, 0.0
        %v4676 = vmax.f32 %v4420, 0.0
        %v4677 = vmax.f32 %v4421, 0.0
        %v4678 = vmax.f32 %v4422, 0.0
        %v4679 = vmax.f32 %v4423, 0.0
        %v4680 = vmax.f32 %v4424, 0.0
        %v4681 = vmax.f32 %v4425, 0.0
        %v4682 = vmax.f32 %v4426, 0.0
        %v4683 = vmax.f32 %v4427, 0.0
        %v4684 = vmax.f32 %v4428, 0.0
        %v4685 = vmax.f32 %v4429, 0.0
        %v4686 = vmax.f32 %v4430, 0.0
        %v4687 = vmax.f32 %v4431, 0.0
        %v4688 = vmax.f32 %v4432, 0.0
        %v4689 = vmax.f32 %v4433, 0.0
        %v4690 = vmax.f32 %v4434, 0.0
        %v4691 = vmax.f32 %v4435, 0.0
        %v4692 = vmax.f32 %v4436, 0.0
        %v4693 = vmax.f32 %v4437, 0.0
        %v4694 = vmax.f32 %v4438, 0.0
        %v4695 = vmax.f32 %v4439, 0.0
        %v4696 = vmax.f32 %v4440, 0.0
        %v4697 = vmax.f32 %v4441, 0.0
        %v4698 = vmax.f32 %v4442, 0.0
        %v4699 = vmax.f32 %v4443, 0.0
        %v4700 = vmax.f32 %v4444, 0.0
        %v4701 = vmax.f32 %v4445, 0.0
        %v4702 = vmax.f32 %v4446, 0.0
        %v4703 = vmax.f32 %v4447, 0.0
        %v4704 = vmax.f32 %v4448, 0.0
        %v4705 = vmax.f32 %v4449, 0.0
        %v4706 = vmax.f32 %v4450, 0.0
        %v4707 = vmax.f32 %v4451, 0.0
        %v4708 = vmax.f32 %v4452, 0.0
        %v4709 = vmax.f32 %v4453, 0.0
        %v4710 = vmax.f32 %v4454, 0.0
        %v4711 = vmax.f32 %v4455, 0.0
        %v4712 = vmax.f32 %v4456, 0.0
        %v4713 = vmax.f32 %v4457, 0.0
        %v4714 = vmax.f32 %v4458, 0.0
        %v4715 = vmax.f32 %v4459, 0.0
        %v4716 = vmax.f32 %v4460, 0.0
        %v4717 = vmax.f32 %v4461, 0.0
        %v4718 = vmax.f32 %v4462, 0.0
        %v4719 = vmax.f32 %v4463, 0.0
        %v4720 = vmax.f32 %v4464, 0.0
        %v4721 = vmax.f32 %v4465, 0.0
        %v4722 = vmax.f32 %v4466, 0.0
        %v4723 = vmax.f32 %v4467, 0.0
        %v4724 = vmax.f32 %v4468, 0.0
        %v4725 = vmax.f32 %v4469, 0.0
        %v4726 = vmax.f32 %v4470, 0.0
        %v4727 = vmax.f32 %v4471, 0.0
        %v4728 = vmax.f32 %v4472, 0.0
        %v4729 = vmax.f32 %v4473, 0.0
        %v4730 = vmax.f32 %v4474, 0.0
        %v4731 = vmax.f32 %v4475, 0.0
        %v4732 = vmax.f32 %v4476, 0.0
        %v4733 = vmax.f32 %v4477, 0.0
        %v4734 = vmax.f32 %v4478, 0.0
        %v4735 = vmax.f32 %v4479, 0.0
        %v4736 = vmax.f32 %v4480, 0.0
        %v4737 = vmax.f32 %v4481, 0.0
        %v4738 = vmax.f32 %v4482, 0.0
        %v4739 = vmax.f32 %v4483, 0.0
        %v4740 = vmax.f32 %v4484, 0.0
        %v4741 = vmax.f32 %v4485, 0.0
        %v4742 = vmax.f32 %v4486, 0.0
        %v4743 = vmax.f32 %v4487, 0.0
        %v4744 = vmax.f32 %v4488, 0.0
        %v4745 = vmax.f32 %v4489, 0.0
        %v4746 = vmax.f32 %v4490, 0.0
        %v4747 = vmax.f32 %v4491, 0.0
        %v4748 = vmax.f32 %v4492, 0.0
        %v4749 = vmax.f32 %v4493, 0.0
        %v4750 = vmax.f32 %v4494, 0.0
        %v4751 = vmax.f32 %v4495, 0.0
        %v4752 = vmax.f32 %v4496, 0.0
        %v4753 = vmax.f32 %v4497, 0.0
        %v4754 = vmax.f32 %v4498, 0.0
        %v4755 = vmax.f32 %v4499, 0.0
        %v4756 = vmax.f32 %v4500, 0.0
        %v4757 = vmax.f32 %v4501, 0.0
        %v4758 = vmax.f32 %v4502, 0.0
        %v4759 = vmax.f32 %v4503, 0.0
        %v4760 = vmax.f32 %v4504, 0.0
        %v4761 = vmax.f32 %v4505, 0.0
        %v4762 = vmax.f32 %v4506, 0.0
        %v4763 = vmax.f32 %v4507, 0.0
        %v4764 = vmax.f32 %v4508, 0.0
        %v4765 = vmax.f32 %v4509, 0.0
        %v4766 = vmax.f32 %v4510, 0.0
        %v4767 = vmax.f32 %v4511, 0.0
        %v4768 = vmax.f32 %v4512, 0.0
        %v4769 = vmax.f32 %v4513, 0.0
        %v4770 = vmax.f32 %v4514, 0.0
        %v4771 = vmax.f32 %v4515, 0.0
        %v4772 = vmax.f32 %v4516, 0.0
        %v4773 = vmax.f32 %v4517, 0.0
        %v4774 = vmax.f32 %v4518, 0.0
        %v4775 = vmax.f32 %v4519, 0.0
        %v4776 = vmax.f32 %v4520, 0.0
        %v4777 = vmax.f32 %v4521, 0.0
        %v4778 = vmax.f32 %v4522, 0.0
        %v4779 = vmax.f32 %v4523, 0.0
        %v4780 = vmax.f32 %v4524, 0.0
        %v4781 = vmax.f32 %v4525, 0.0
        %v4782 = vmax.f32 %v4526, 0.0
        %v4783 = vmax.f32 %v4527, 0.0
        %v4784 = vmax.f32 %v4528, 0.0
        %v4785 = vmax.f32 %v4529, 0.0
        %v4786 = vmax.f32 %v4530, 0.0
        %v4787 = vmax.f32 %v4531, 0.0
        %v4788 = vmax.f32 %v4532, 0.0
        %v4789 = vmax.f32 %v4533, 0.0
        %v4790 = vmax.f32 %v4534, 0.0
        %v4791 = vmax.f32 %v4535, 0.0
        %v4792 = vmax.f32 %v4536, 0.0
        %v4793 = vmax.f32 %v4537, 0.0
        %v4794 = vmax.f32 %v4538, 0.0
        %v4795 = vmax.f32 %v4539, 0.0
        %v4796 = vmax.f32 %v4540, 0.0
        %v4797 = vmax.f32 %v4541, 0.0
        %v4798 = vmax.f32 %v4542, 0.0
        %v4799 = vmax.f32 %v4543, 0.0
        %v4800 = vmax.f32 %v4544, 0.0
        %v4801 = vmax.f32 %v4545, 0.0
        %v4802 = vmax.f32 %v4546, 0.0
        %v4803 = vmax.f32 %v4547, 0.0
        %v4804 = vmax.f32 %v4548, 0.0
        %v4805 = vmax.f32 %v4549, 0.0
        %v4806 = vmax.f32 %v4550, 0.0
        %v4807 = vmax.f32 %v4551, 0.0
        %v4808 = vmax.f32 %v4552, 0.0
        %v4809 = vmax.f32 %v4553, 0.0
        %v4810 = vmax.f32 %v4554, 0.0
        %v4811 = vmax.f32 %v4555, 0.0
        %v4812 = vmax.f32 %v4556, 0.0
        %v4813 = vmax.f32 %v4557, 0.0
        %v4814 = vmax.f32 %v4558, 0.0
        %v4815 = vmax.f32 %v4559, 0.0
        %v4816 = vmax.f32 %v4560, 0.0
        %v4817 = vmax.f32 %v4561, 0.0
        %v4818 = vmax.f32 %v4562, 0.0
        %v4819 = vmax.f32 %v4563, 0.0
        %v4820 = vmax.f32 %v4564, 0.0
        %v4821 = vmax.f32 %v4565, 0.0
        %v4822 = vmax.f32 %v4566, 0.0
        %v4823 = vmax.f32 %v4567, 0.0
        %v4824 = vmax.f32 %v4568, 0.0
        %v4825 = vmax.f32 %v4569, 0.0
        %v4826 = vmax.f32 %v4570, 0.0
        %v4827 = vmax.f32 %v4571, 0.0
        %v4828 = vmax.f32 %v4572, 0.0
        %v4829 = vmax.f32 %v4573, 0.0
        %v4830 = vmax.f32 %v4574, 0.0
        %v4831 = vmax.f32 %v4575, 0.0
        %v4832 = vmax.f32 %v4576, 0.0
        %v4833 = vmax.f32 %v4577, 0.0
        %v4834 = vmax.f32 %v4578, 0.0
        %v4835 = vmax.f32 %v4579, 0.0
        %v4836 = vmax.f32 %v4580, 0.0
        %v4837 = vmax.f32 %v4581, 0.0
        %v4838 = vmax.f32 %v4582, 0.0
        %v4839 = vmax.f32 %v4583, 0.0
        %v4840 = vmax.f32 %v4584, 0.0
        %v4841 = vmax.f32 %v4585, 0.0
        %v4842 = vmax.f32 %v4586, 0.0
        %v4843 = vmax.f32 %v4587, 0.0
        %v4844 = vmax.f32 %v4588, 0.0
        %v4845 = vmax.f32 %v4589, 0.0
        %v4846 = vmax.f32 %v4590, 0.0
        %v4847 = vmax.f32 %v4591, 0.0
        %v4848 = vmax.f32 %v4592, 0.0
        %v4849 = vmax.f32 %v4593, 0.0
        %v4850 = vmax.f32 %v4594, 0.0
        %v4851 = vmax.f32 %v4595, 0.0
        %v4852 = vmax.f32 %v4596, 0.0
        %v4853 = vmax.f32 %v4597, 0.0
        %v4854 = vmax.f32 %v4598, 0.0
        %v4855 = vmax.f32 %v4599, 0.0
        %v4856 = vmax.f32 %v4600, 0.0
        %v4857 = vmax.f32 %v4601, 0.0
        %v4858 = vmax.f32 %v4602, 0.0
        %v4859 = vmax.f32 %v4603, 0.0
        %v4860 = vmax.f32 %v4604, 0.0
        %v4861 = vmax.f32 %v4605, 0.0
        %v4862 = vmax.f32 %v4606, 0.0
        %v4863 = vmax.f32 %v4607, 0.0
        %v4864 = vmax.f32 %v4608, 0.0
        %v4865 = vmax.f32 %v4609, 0.0
        %v4866 = vmax.f32 %v4610, 0.0
        %v4867 = vmax.f32 %v4611, 0.0
        %v4868 = vmax.f32 %v4612, 0.0
        %v4869 = vmax.f32 %v4613, 0.0
        %v4870 = vmax.f32 %v4614, 0.0
        %v4871 = vmax.f32 %v4615, 0.0
        %v4872 = vmax.f32 %v4616, 0.0
        %v4873 = vmax.f32 %v4617, 0.0
        %v4874 = vmax.f32 %v4618, 0.0
        %v4875 = vmax.f32 %v4619, 0.0
        %v4876 = vmax.f32 %v4620, 0.0
        %v4877 = vmax.f32 %v4621, 0.0
        %v4878 = vmax.f32 %v4622, 0.0
        %v4879 = vmax.f32 %v4623, 0.0
        %v4880 = vmax.f32 %v4624, 0.0
        %v4881 = vmax.f32 %v4625, 0.0
        %v4882 = vmax.f32 %v4626, 0.0
        %v4883 = vmax.f32 %v4627, 0.0
        %v4884 = vmax.f32 %v4628, 0.0
        %v4885 = vmax.f32 %v4629, 0.0
        %v4886 = vmax.f32 %v4630, 0.0
        %v4887 = vmax.f32 %v4631, 0.0
        %v4888 = vmax.f32 %v4632, 0.0
        %v4889 = vmax.f32 %v4633, 0.0
        %v4890 = vmax.f32 %v4634, 0.0
        %v4891 = vmax.f32 %v4635, 0.0
        %v4892 = vmax.f32 %v4636, 0.0
        %v4893 = vmax.f32 %v4637, 0.0
        %v4894 = vmax.f32 %v4638, 0.0
        %v4895 = vmax.f32 %v4639, 0.0
        %v4896 = vmax.f32 %v4640, 0.0
        %v4897 = vmax.f32 %v4641, 0.0
        %v4898 = vmax.f32 %v4642, 0.0
        %v4899 = vmax.f32 %v4643, 0.0
        %v4900 = vmax.f32 %v4644, 0.0
        %v4901 = vmax.f32 %v4645, 0.0
        %v4902 = vmax.f32 %v4646, 0.0
        %v4903 = vmax.f32 %v4647, 0.0
        %v4904 = vmax.f32 %v4648, 0.0
        %v4905 = vmax.f32 %v4649, 0.0
        %v4906 = vmax.f32 %v4650, 0.0
        %v4907 = vmax.f32 %v4651, 0.0
        %v4908 = vmax.f32 %v4652, 0.0
        %v4909 = vmax.f32 %v4653, 0.0
        %v4910 = vmax.f32 %v4654, 0.0
        %v4911 = vmax.f32 %v4655, 0.0
        %v4912 = vmax.f32 %v4656, 0.0
        %v4913 = vmax.f32 %v4657, 0.0
        %v4914 = vmax.f32 %v4658, 0.0
        %v4915 = vmax.f32 %v4659, 0.0
        %v4916 = vmax.f32 %v4660, 0.0
        %v4917 = vmax.f32 %v4661, 0.0
        %v4918 = vmax.f32 %v4662, 0.0
        %v4919 = vmax.f32 %v4663, 0.0
        %v4920 = vpack.c.bf16 %v4668, %v4664
        %v4921 = vpack.c.bf16 %v4669, %v4665
        %v4922 = vpack.c.bf16 %v4670, %v4666
        %v4923 = vpack.c.bf16 %v4671, %v4667
        %v4924 = vpack.c.bf16 %v4676, %v4672
        %v4925 = vpack.c.bf16 %v4677, %v4673
        %v4926 = vpack.c.bf16 %v4678, %v4674
        %v4927 = vpack.c.bf16 %v4679, %v4675
        %v4928 = vpack.c.bf16 %v4684, %v4680
        %v4929 = vpack.c.bf16 %v4685, %v4681
        %v4930 = vpack.c.bf16 %v4686, %v4682
        %v4931 = vpack.c.bf16 %v4687, %v4683
        %v4932 = vpack.c.bf16 %v4692, %v4688
        %v4933 = vpack.c.bf16 %v4693, %v4689
        %v4934 = vpack.c.bf16 %v4694, %v4690
        %v4935 = vpack.c.bf16 %v4695, %v4691
        %v4936 = vpack.c.bf16 %v4700, %v4696
        %v4937 = vpack.c.bf16 %v4701, %v4697
        %v4938 = vpack.c.bf16 %v4702, %v4698
        %v4939 = vpack.c.bf16 %v4703, %v4699
        %v4940 = vpack.c.bf16 %v4708, %v4704
        %v4941 = vpack.c.bf16 %v4709, %v4705
        %v4942 = vpack.c.bf16 %v4710, %v4706
        %v4943 = vpack.c.bf16 %v4711, %v4707
        %v4944 = vpack.c.bf16 %v4716, %v4712
        %v4945 = vpack.c.bf16 %v4717, %v4713
        %v4946 = vpack.c.bf16 %v4718, %v4714
        %v4947 = vpack.c.bf16 %v4719, %v4715
        %v4948 = vpack.c.bf16 %v4724, %v4720
        %v4949 = vpack.c.bf16 %v4725, %v4721
        %v4950 = vpack.c.bf16 %v4726, %v4722
        %v4951 = vpack.c.bf16 %v4727, %v4723
        %v4952 = vpack.c.bf16 %v4732, %v4728
        %v4953 = vpack.c.bf16 %v4733, %v4729
        %v4954 = vpack.c.bf16 %v4734, %v4730
        %v4955 = vpack.c.bf16 %v4735, %v4731
        %v4956 = vpack.c.bf16 %v4740, %v4736
        %v4957 = vpack.c.bf16 %v4741, %v4737
        %v4958 = vpack.c.bf16 %v4742, %v4738
        %v4959 = vpack.c.bf16 %v4743, %v4739
        %v4960 = vpack.c.bf16 %v4748, %v4744
        %v4961 = vpack.c.bf16 %v4749, %v4745
        %v4962 = vpack.c.bf16 %v4750, %v4746
        %v4963 = vpack.c.bf16 %v4751, %v4747
        %v4964 = vpack.c.bf16 %v4756, %v4752
        %v4965 = vpack.c.bf16 %v4757, %v4753
        %v4966 = vpack.c.bf16 %v4758, %v4754
        %v4967 = vpack.c.bf16 %v4759, %v4755
        %v4968 = vpack.c.bf16 %v4764, %v4760
        %v4969 = vpack.c.bf16 %v4765, %v4761
        %v4970 = vpack.c.bf16 %v4766, %v4762
        %v4971 = vpack.c.bf16 %v4767, %v4763
        %v4972 = vpack.c.bf16 %v4772, %v4768
        %v4973 = vpack.c.bf16 %v4773, %v4769
        %v4974 = vpack.c.bf16 %v4774, %v4770
        %v4975 = vpack.c.bf16 %v4775, %v4771
        %v4976 = vpack.c.bf16 %v4780, %v4776
        %v4977 = vpack.c.bf16 %v4781, %v4777
        %v4978 = vpack.c.bf16 %v4782, %v4778
        %v4979 = vpack.c.bf16 %v4783, %v4779
        %v4980 = vpack.c.bf16 %v4788, %v4784
        %v4981 = vpack.c.bf16 %v4789, %v4785
        %v4982 = vpack.c.bf16 %v4790, %v4786
        %v4983 = vpack.c.bf16 %v4791, %v4787
        %v4984 = vpack.c.bf16 %v4796, %v4792
        %v4985 = vpack.c.bf16 %v4797, %v4793
        %v4986 = vpack.c.bf16 %v4798, %v4794
        %v4987 = vpack.c.bf16 %v4799, %v4795
        %v4988 = vpack.c.bf16 %v4804, %v4800
        %v4989 = vpack.c.bf16 %v4805, %v4801
        %v4990 = vpack.c.bf16 %v4806, %v4802
        %v4991 = vpack.c.bf16 %v4807, %v4803
        %v4992 = vpack.c.bf16 %v4812, %v4808
        %v4993 = vpack.c.bf16 %v4813, %v4809
        %v4994 = vpack.c.bf16 %v4814, %v4810
        %v4995 = vpack.c.bf16 %v4815, %v4811
        %v4996 = vpack.c.bf16 %v4820, %v4816
        %v4997 = vpack.c.bf16 %v4821, %v4817
        %v4998 = vpack.c.bf16 %v4822, %v4818
        %v4999 = vpack.c.bf16 %v4823, %v4819
        %v5000 = vpack.c.bf16 %v4828, %v4824
        %v5001 = vpack.c.bf16 %v4829, %v4825
        %v5002 = vpack.c.bf16 %v4830, %v4826
        %v5003 = vpack.c.bf16 %v4831, %v4827
        %v5004 = vpack.c.bf16 %v4836, %v4832
        %v5005 = vpack.c.bf16 %v4837, %v4833
        %v5006 = vpack.c.bf16 %v4838, %v4834
        %v5007 = vpack.c.bf16 %v4839, %v4835
        %v5008 = vpack.c.bf16 %v4844, %v4840
        %v5009 = vpack.c.bf16 %v4845, %v4841
        %v5010 = vpack.c.bf16 %v4846, %v4842
        %v5011 = vpack.c.bf16 %v4847, %v4843
        %v5012 = vpack.c.bf16 %v4852, %v4848
        %v5013 = vpack.c.bf16 %v4853, %v4849
        %v5014 = vpack.c.bf16 %v4854, %v4850
        %v5015 = vpack.c.bf16 %v4855, %v4851
        %v5016 = vpack.c.bf16 %v4860, %v4856
        %v5017 = vpack.c.bf16 %v4861, %v4857
        %v5018 = vpack.c.bf16 %v4862, %v4858
        %v5019 = vpack.c.bf16 %v4863, %v4859
        %v5020 = vpack.c.bf16 %v4868, %v4864
        %v5021 = vpack.c.bf16 %v4869, %v4865
        %v5022 = vpack.c.bf16 %v4870, %v4866
        %v5023 = vpack.c.bf16 %v4871, %v4867
        %v5024 = vpack.c.bf16 %v4876, %v4872
        %v5025 = vpack.c.bf16 %v4877, %v4873
        %v5026 = vpack.c.bf16 %v4878, %v4874
        %v5027 = vpack.c.bf16 %v4879, %v4875
        %v5028 = vpack.c.bf16 %v4884, %v4880
        %v5029 = vpack.c.bf16 %v4885, %v4881
        %v5030 = vpack.c.bf16 %v4886, %v4882
        %v5031 = vpack.c.bf16 %v4887, %v4883
        %v5032 = vpack.c.bf16 %v4892, %v4888
        %v5033 = vpack.c.bf16 %v4893, %v4889
        %v5034 = vpack.c.bf16 %v4894, %v4890
        %v5035 = vpack.c.bf16 %v4895, %v4891
        %v5036 = vpack.c.bf16 %v4900, %v4896
        %v5037 = vpack.c.bf16 %v4901, %v4897
        %v5038 = vpack.c.bf16 %v4902, %v4898
        %v5039 = vpack.c.bf16 %v4903, %v4899
        %v5040 = vpack.c.bf16 %v4908, %v4904
        %v5041 = vpack.c.bf16 %v4909, %v4905
        %v5042 = vpack.c.bf16 %v4910, %v4906
        %v5043 = vpack.c.bf16 %v4911, %v4907
        %v5044 = vpack.c.bf16 %v4916, %v4912
        %v5045 = vpack.c.bf16 %v4917, %v4913
        %v5046 = vpack.c.bf16 %v4918, %v4914
        %v5047 = vpack.c.bf16 %v4919, %v4915
        %v5048 = vld [vmem:[#allocation4] sm:$0xf]
        %v5049 = vld [vmem:[#allocation4 + $0x4] sm:$0xf]
        %v5050 = vld [vmem:[#allocation4 + $0x8] sm:$0xf]
        %v5051 = vld [vmem:[#allocation4 + $0xc] sm:$0xf]
        %v5052 = vld [vmem:[#allocation4 + $0x10] sm:$0xf]
        %v5053 = vld [vmem:[#allocation4 + $0x14] sm:$0xf]
        %v5054 = vld [vmem:[#allocation4 + $0x18] sm:$0xf]
        %v5055 = vld [vmem:[#allocation4 + $0x1c] sm:$0xf]
        %v5056 = vld [vmem:[#allocation4 + $0x20] sm:$0xf]
        %v5057 = vld [vmem:[#allocation4 + $0x24] sm:$0xf]
        %v5058 = vld [vmem:[#allocation4 + $0x28] sm:$0xf]
        %v5059 = vld [vmem:[#allocation4 + $0x2c] sm:$0xf]
        %v5060 = vld [vmem:[#allocation4 + $0x30] sm:$0xf]
        %v5061 = vld [vmem:[#allocation4 + $0x34] sm:$0xf]
        %v5062 = vld [vmem:[#allocation4 + $0x38] sm:$0xf]
        %v5063 = vld [vmem:[#allocation4 + $0x3c] sm:$0xf]
        %v5064 = vld [vmem:[#allocation4 + $0x40] sm:$0xf]
        %v5065 = vld [vmem:[#allocation4 + $0x44] sm:$0xf]
        %v5066 = vld [vmem:[#allocation4 + $0x48] sm:$0xf]
        %v5067 = vld [vmem:[#allocation4 + $0x4c] sm:$0xf]
        %v5068 = vld [vmem:[#allocation4 + $0x50] sm:$0xf]
        %v5069 = vld [vmem:[#allocation4 + $0x54] sm:$0xf]
        %v5070 = vld [vmem:[#allocation4 + $0x58] sm:$0xf]
        %v5071 = vld [vmem:[#allocation4 + $0x5c] sm:$0xf]
        %v5072 = vld [vmem:[#allocation4 + $0x60] sm:$0xf]
        %v5073 = vld [vmem:[#allocation4 + $0x64] sm:$0xf]
        %v5074 = vld [vmem:[#allocation4 + $0x68] sm:$0xf]
        %v5075 = vld [vmem:[#allocation4 + $0x6c] sm:$0xf]
        %v5076 = vld [vmem:[#allocation4 + $0x70] sm:$0xf]
        %v5077 = vld [vmem:[#allocation4 + $0x74] sm:$0xf]
        %v5078 = vld [vmem:[#allocation4 + $0x78] sm:$0xf]
        %v5079 = vld [vmem:[#allocation4 + $0x7c] sm:$0xf]
        %v5080 = vld [vmem:[#allocation4 + $0x80] sm:$0xf]
        %v5081 = vld [vmem:[#allocation4 + $0x84] sm:$0xf]
        %v5082 = vld [vmem:[#allocation4 + $0x88] sm:$0xf]
        %v5083 = vld [vmem:[#allocation4 + $0x8c] sm:$0xf]
        %v5084 = vld [vmem:[#allocation4 + $0x90] sm:$0xf]
        %v5085 = vld [vmem:[#allocation4 + $0x94] sm:$0xf]
        %v5086 = vld [vmem:[#allocation4 + $0x98] sm:$0xf]
        %v5087 = vld [vmem:[#allocation4 + $0x9c] sm:$0xf]
        %v5088 = vld [vmem:[#allocation4 + $0xa0] sm:$0xf]
        %v5089 = vld [vmem:[#allocation4 + $0xa4] sm:$0xf]
        %v5090 = vld [vmem:[#allocation4 + $0xa8] sm:$0xf]
        %v5091 = vld [vmem:[#allocation4 + $0xac] sm:$0xf]
        %v5092 = vld [vmem:[#allocation4 + $0xb0] sm:$0xf]
        %v5093 = vld [vmem:[#allocation4 + $0xb4] sm:$0xf]
        %v5094 = vld [vmem:[#allocation4 + $0xb8] sm:$0xf]
        %v5095 = vld [vmem:[#allocation4 + $0xbc] sm:$0xf]
        %v5096 = vld [vmem:[#allocation4 + $0xc0] sm:$0xf]
        %v5097 = vld [vmem:[#allocation4 + $0xc4] sm:$0xf]
        %v5098 = vld [vmem:[#allocation4 + $0xc8] sm:$0xf]
        %v5099 = vld [vmem:[#allocation4 + $0xcc] sm:$0xf]
        %v5100 = vld [vmem:[#allocation4 + $0xd0] sm:$0xf]
        %v5101 = vld [vmem:[#allocation4 + $0xd4] sm:$0xf]
        %v5102 = vld [vmem:[#allocation4 + $0xd8] sm:$0xf]
        %v5103 = vld [vmem:[#allocation4 + $0xdc] sm:$0xf]
        %v5104 = vld [vmem:[#allocation4 + $0xe0] sm:$0xf]
        %v5105 = vld [vmem:[#allocation4 + $0xe4] sm:$0xf]
        %v5106 = vld [vmem:[#allocation4 + $0xe8] sm:$0xf]
        %v5107 = vld [vmem:[#allocation4 + $0xec] sm:$0xf]
        %v5108 = vld [vmem:[#allocation4 + $0xf0] sm:$0xf]
        %v5109 = vld [vmem:[#allocation4 + $0xf4] sm:$0xf]
        %v5110 = vld [vmem:[#allocation4 + $0xf8] sm:$0xf]
        %v5111 = vld [vmem:[#allocation4 + $0xfc] sm:$0xf]
        %v5176 = vunpack.c.l.b16 %v5048
        %v5177 = vunpack.c.l.b16 %v5049
        %v5178 = vunpack.c.l.b16 %v5050
        %v5179 = vunpack.c.l.b16 %v5051
        %v5180 = vunpack.c.l.b16 %v5052
        %v5181 = vunpack.c.l.b16 %v5053
        %v5182 = vunpack.c.l.b16 %v5054
        %v5183 = vunpack.c.l.b16 %v5055
        %v5184 = vunpack.c.l.b16 %v5056
        %v5185 = vunpack.c.l.b16 %v5057
        %v5186 = vunpack.c.l.b16 %v5058
        %v5187 = vunpack.c.l.b16 %v5059
        %v5188 = vunpack.c.l.b16 %v5060
        %v5189 = vunpack.c.l.b16 %v5061
        %v5190 = vunpack.c.l.b16 %v5062
        %v5191 = vunpack.c.l.b16 %v5063
        %v5192 = vunpack.c.l.b16 %v5064
        %v5193 = vunpack.c.l.b16 %v5065
        %v5194 = vunpack.c.l.b16 %v5066
        %v5195 = vunpack.c.l.b16 %v5067
        %v5196 = vunpack.c.l.b16 %v5068
        %v5197 = vunpack.c.l.b16 %v5069
        %v5198 = vunpack.c.l.b16 %v5070
        %v5199 = vunpack.c.l.b16 %v5071
        %v5200 = vunpack.c.l.b16 %v5072
        %v5201 = vunpack.c.l.b16 %v5073
        %v5202 = vunpack.c.l.b16 %v5074
        %v5203 = vunpack.c.l.b16 %v5075
        %v5204 = vunpack.c.l.b16 %v5076
        %v5205 = vunpack.c.l.b16 %v5077
        %v5206 = vunpack.c.l.b16 %v5078
        %v5207 = vunpack.c.l.b16 %v5079
        %v5208 = vunpack.c.l.b16 %v5080
        %v5209 = vunpack.c.l.b16 %v5081
        %v5210 = vunpack.c.l.b16 %v5082
        %v5211 = vunpack.c.l.b16 %v5083
        %v5212 = vunpack.c.l.b16 %v5084
        %v5213 = vunpack.c.l.b16 %v5085
        %v5214 = vunpack.c.l.b16 %v5086
        %v5215 = vunpack.c.l.b16 %v5087
        %v5216 = vunpack.c.l.b16 %v5088
        %v5217 = vunpack.c.l.b16 %v5089
        %v5218 = vunpack.c.l.b16 %v5090
        %v5219 = vunpack.c.l.b16 %v5091
        %v5220 = vunpack.c.l.b16 %v5092
        %v5221 = vunpack.c.l.b16 %v5093
        %v5222 = vunpack.c.l.b16 %v5094
        %v5223 = vunpack.c.l.b16 %v5095
        %v5224 = vunpack.c.l.b16 %v5096
        %v5225 = vunpack.c.l.b16 %v5097
        %v5226 = vunpack.c.l.b16 %v5098
        %v5227 = vunpack.c.l.b16 %v5099
        %v5228 = vunpack.c.l.b16 %v5100
        %v5229 = vunpack.c.l.b16 %v5101
        %v5230 = vunpack.c.l.b16 %v5102
        %v5231 = vunpack.c.l.b16 %v5103
        %v5232 = vunpack.c.l.b16 %v5104
        %v5233 = vunpack.c.l.b16 %v5105
        %v5234 = vunpack.c.l.b16 %v5106
        %v5235 = vunpack.c.l.b16 %v5107
        %v5236 = vunpack.c.l.b16 %v5108
        %v5237 = vunpack.c.l.b16 %v5109
        %v5238 = vunpack.c.l.b16 %v5110
        %v5239 = vunpack.c.l.b16 %v5111
        %v5240 = vpack.c.b16 %v5177, %v5176
        %v5241 = vpack.c.b16 %v5179, %v5178
        %v5242 = vpack.c.b16 %v5181, %v5180
        %v5243 = vpack.c.b16 %v5183, %v5182
        %v5244 = vpack.c.b16 %v5185, %v5184
        %v5245 = vpack.c.b16 %v5187, %v5186
        %v5246 = vpack.c.b16 %v5189, %v5188
        %v5247 = vpack.c.b16 %v5191, %v5190
        %v5248 = vpack.c.b16 %v5193, %v5192
        %v5249 = vpack.c.b16 %v5195, %v5194
        %v5250 = vpack.c.b16 %v5197, %v5196
        %v5251 = vpack.c.b16 %v5199, %v5198
        %v5252 = vpack.c.b16 %v5201, %v5200
        %v5253 = vpack.c.b16 %v5203, %v5202
        %v5254 = vpack.c.b16 %v5205, %v5204
        %v5255 = vpack.c.b16 %v5207, %v5206
        %v5256 = vpack.c.b16 %v5209, %v5208
        %v5257 = vpack.c.b16 %v5211, %v5210
        %v5258 = vpack.c.b16 %v5213, %v5212
        %v5259 = vpack.c.b16 %v5215, %v5214
        %v5260 = vpack.c.b16 %v5217, %v5216
        %v5261 = vpack.c.b16 %v5219, %v5218
        %v5262 = vpack.c.b16 %v5221, %v5220
        %v5263 = vpack.c.b16 %v5223, %v5222
        %v5264 = vpack.c.b16 %v5225, %v5224
        %v5265 = vpack.c.b16 %v5227, %v5226
        %v5266 = vpack.c.b16 %v5229, %v5228
        %v5267 = vpack.c.b16 %v5231, %v5230
        %v5268 = vpack.c.b16 %v5233, %v5232
        %v5269 = vpack.c.b16 %v5235, %v5234
        %v5270 = vpack.c.b16 %v5237, %v5236
        %v5271 = vpack.c.b16 %v5239, %v5238
        %5304 = vmatprep.subr.bf16.mxu0 0
        %5305 = vmatpush1.bf16.msra.mxu0 %v5240
        %5306 = vmatprep.subr.bf16.mxu0 0
        %5307 = vmatpush1.bf16.msra.mxu0 %v5241
        %5308 = vmatprep.subr.bf16.mxu0 0
        %5309 = vmatpush1.bf16.msra.mxu0 %v5242
        %5310 = vmatprep.subr.bf16.mxu0 0
        %5311 = vmatpush1.bf16.msra.mxu0 %v5243
        %5312 = vmatprep.subr.bf16.mxu0 0
        %5313 = vmatpush1.bf16.msra.mxu0 %v5244
        %5314 = vmatprep.subr.bf16.mxu0 0
        %5315 = vmatpush1.bf16.msra.mxu0 %v5245
        %5316 = vmatprep.subr.bf16.mxu0 0
        %5317 = vmatpush1.bf16.msra.mxu0 %v5246
        %5318 = vmatprep.subr.bf16.mxu0 0
        %5319 = vmatpush1.bf16.msra.mxu0 %v5247
        %5320 = vmatprep.subr.bf16.mxu0 0
        %5321 = vmatpush1.bf16.msra.mxu0 %v5248
        %5322 = vmatprep.subr.bf16.mxu0 0
        %5323 = vmatpush1.bf16.msra.mxu0 %v5249
        %5324 = vmatprep.subr.bf16.mxu0 0
        %5325 = vmatpush1.bf16.msra.mxu0 %v5250
        %5326 = vmatprep.subr.bf16.mxu0 0
        %5327 = vmatpush1.bf16.msra.mxu0 %v5251
        %5328 = vmatprep.subr.bf16.mxu0 0
        %5329 = vmatpush1.bf16.msra.mxu0 %v5252
        %5330 = vmatprep.subr.bf16.mxu0 0
        %5331 = vmatpush1.bf16.msra.mxu0 %v5253
        %5332 = vmatprep.subr.bf16.mxu0 0
        %5333 = vmatpush1.bf16.msra.mxu0 %v5254
        %5334 = vmatprep.subr.bf16.mxu0 0
        %5335 = vmatpush1.bf16.msra.mxu0 %v5255
        %5336 = vmatprep.mubr.bf16.mxu0 %v4921
        %5337 = vmatmul.mubr.bf16.gmra.mrb[0].mxu0 %v4920
        %v5338 = vpop.f32.mrb[0].mxu0
        %v5339 = vadd.f32 0.0, %v5338
        %v5340 = vpop.f32.mrb[0].mxu0
        %v5341 = vpop.f32.mrb[0].mxu0
        %v5342 = vadd.f32 0.0, %v5341
        %v5343 = vpop.f32.mrb[0].mxu0
        %5344 = vmatprep.mubr.bf16.mxu0 %v4925
        %5345 = vmatmul.mubr.bf16.gmra.mrb[0].mxu0 %v4924
        %v5346 = vpop.f32.mrb[0].mxu0
        %v5347 = vadd.f32 0.0, %v5346
        %v5348 = vpop.f32.mrb[0].mxu0
        %v5349 = vpop.f32.mrb[0].mxu0
        %v5350 = vadd.f32 0.0, %v5349
        %v5351 = vpop.f32.mrb[0].mxu0
        %5352 = vmatprep.mubr.bf16.mxu0 %v4929
        %5353 = vmatmul.mubr.bf16.gmra.mrb[0].mxu0 %v4928
        %v5354 = vpop.f32.mrb[0].mxu0
        %v5355 = vadd.f32 0.0, %v5354
        %v5356 = vpop.f32.mrb[0].mxu0
        %v5357 = vpop.f32.mrb[0].mxu0
        %v5358 = vadd.f32 0.0, %v5357
        %v5359 = vpop.f32.mrb[0].mxu0
        %5360 = vmatprep.mubr.bf16.mxu0 %v4933
        %5361 = vmatmul.mubr.bf16.gmra.mrb[0].mxu0 %v4932
        %v5362 = vpop.f32.mrb[0].mxu0
        %v5363 = vadd.f32 0.0, %v5362
        %v5364 = vpop.f32.mrb[0].mxu0
        %v5365 = vpop.f32.mrb[0].mxu0
        %v5366 = vadd.f32 0.0, %v5365
        %v5367 = vpop.f32.mrb[0].mxu0
        %5368 = vmatprep.mubr.bf16.mxu0 %v4937
        %5369 = vmatmul.mubr.bf16.gmra.mrb[0].mxu0 %v4936
        %v5370 = vpop.f32.mrb[0].mxu0
        %v5371 = vadd.f32 0.0, %v5370
        %v5372 = vpop.f32.mrb[0].mxu0
        %v5373 = vpop.f32.mrb[0].mxu0
        %v5374 = vadd.f32 0.0, %v5373
        %v5375 = vpop.f32.mrb[0].mxu0
        %5376 = vmatprep.mubr.bf16.mxu0 %v4941
        %5377 = vmatmul.mubr.bf16.gmra.mrb[0].mxu0 %v4940
        %v5378 = vpop.f32.mrb[0].mxu0
        %v5379 = vadd.f32 0.0, %v5378
        %v5380 = vpop.f32.mrb[0].mxu0
        %v5381 = vpop.f32.mrb[0].mxu0
        %v5382 = vadd.f32 0.0, %v5381
        %v5383 = vpop.f32.mrb[0].mxu0
        %5384 = vmatprep.mubr.bf16.mxu0 %v4945
        %5385 = vmatmul.mubr.bf16.gmra.mrb[0].mxu0 %v4944
        %v5386 = vpop.f32.mrb[0].mxu0
        %v5387 = vadd.f32 0.0, %v5386
        %v5388 = vpop.f32.mrb[0].mxu0
        %v5389 = vpop.f32.mrb[0].mxu0
        %v5390 = vadd.f32 0.0, %v5389
        %v5391 = vpop.f32.mrb[0].mxu0
        %5392 = vmatprep.mubr.bf16.mxu0 %v4949
        %5393 = vmatmul.mubr.bf16.gmra.mrb[0].mxu0 %v4948
        %v5394 = vpop.f32.mrb[0].mxu0
        %v5395 = vadd.f32 0.0, %v5394
        %v5396 = vpop.f32.mrb[0].mxu0
        %v5397 = vpop.f32.mrb[0].mxu0
        %v5398 = vadd.f32 0.0, %v5397
        %v5399 = vpop.f32.mrb[0].mxu0
        %5400 = vmatprep.mubr.bf16.mxu0 %v4953
        %5401 = vmatmul.mubr.bf16.gmra.mrb[0].mxu0 %v4952
        %v5402 = vpop.f32.mrb[0].mxu0
        %v5403 = vadd.f32 0.0, %v5402
        %v5404 = vpop.f32.mrb[0].mxu0
        %v5405 = vpop.f32.mrb[0].mxu0
        %v5406 = vadd.f32 0.0, %v5405
        %v5407 = vpop.f32.mrb[0].mxu0
        %5408 = vmatprep.mubr.bf16.mxu0 %v4957
        %5409 = vmatmul.mubr.bf16.gmra.mrb[0].mxu0 %v4956
        %v5410 = vpop.f32.mrb[0].mxu0
        %v5411 = vadd.f32 0.0, %v5410
        %v5412 = vpop.f32.mrb[0].mxu0
        %v5413 = vpop.f32.mrb[0].mxu0
        %v5414 = vadd.f32 0.0, %v5413
        %v5415 = vpop.f32.mrb[0].mxu0
        %5416 = vmatprep.mubr.bf16.mxu0 %v4961
        %5417 = vmatmul.mubr.bf16.gmra.mrb[0].mxu0 %v4960
        %v5418 = vpop.f32.mrb[0].mxu0
        %v5419 = vadd.f32 0.0, %v5418
        %v5420 = vpop.f32.mrb[0].mxu0
        %v5421 = vpop.f32.mrb[0].mxu0
        %v5422 = vadd.f32 0.0, %v5421
        %v5423 = vpop.f32.mrb[0].mxu0
        %5424 = vmatprep.mubr.bf16.mxu0 %v4965
        %5425 = vmatmul.mubr.bf16.gmra.mrb[0].mxu0 %v4964
        %v5426 = vpop.f32.mrb[0].mxu0
        %v5427 = vadd.f32 0.0, %v5426
        %v5428 = vpop.f32.mrb[0].mxu0
        %v5429 = vpop.f32.mrb[0].mxu0
        %v5430 = vadd.f32 0.0, %v5429
        %v5431 = vpop.f32.mrb[0].mxu0
        %5432 = vmatprep.mubr.bf16.mxu0 %v4969
        %5433 = vmatmul.mubr.bf16.gmra.mrb[0].mxu0 %v4968
        %v5434 = vpop.f32.mrb[0].mxu0
        %v5435 = vadd.f32 0.0, %v5434
        %v5436 = vpop.f32.mrb[0].mxu0
        %v5437 = vpop.f32.mrb[0].mxu0
        %v5438 = vadd.f32 0.0, %v5437
        %v5439 = vpop.f32.mrb[0].mxu0
        %5440 = vmatprep.mubr.bf16.mxu0 %v4973
        %5441 = vmatmul.mubr.bf16.gmra.mrb[0].mxu0 %v4972
        %v5442 = vpop.f32.mrb[0].mxu0
        %v5443 = vadd.f32 0.0, %v5442
        %v5444 = vpop.f32.mrb[0].mxu0
        %v5445 = vpop.f32.mrb[0].mxu0
        %v5446 = vadd.f32 0.0, %v5445
        %v5447 = vpop.f32.mrb[0].mxu0
        %5448 = vmatprep.mubr.bf16.mxu0 %v4977
        %5449 = vmatmul.mubr.bf16.gmra.mrb[0].mxu0 %v4976
        %v5450 = vpop.f32.mrb[0].mxu0
        %v5451 = vadd.f32 0.0, %v5450
        %v5452 = vpop.f32.mrb[0].mxu0
        %v5453 = vpop.f32.mrb[0].mxu0
        %v5454 = vadd.f32 0.0, %v5453
        %v5455 = vpop.f32.mrb[0].mxu0
        %5456 = vmatprep.mubr.bf16.mxu0 %v4981
        %5457 = vmatmul.mubr.bf16.gmra.mrb[0].mxu0 %v4980
        %v5458 = vpop.f32.mrb[0].mxu0
        %v5459 = vadd.f32 0.0, %v5458
        %v5460 = vpop.f32.mrb[0].mxu0
        %v5461 = vpop.f32.mrb[0].mxu0
        %v5462 = vadd.f32 0.0, %v5461
        %v5463 = vpop.f32.mrb[0].mxu0
        %5464 = vmatprep.mubr.bf16.mxu0 %v4985
        %5465 = vmatmul.mubr.bf16.gmra.mrb[0].mxu0 %v4984
        %v5466 = vpop.f32.mrb[0].mxu0
        %v5467 = vadd.f32 0.0, %v5466
        %v5468 = vpop.f32.mrb[0].mxu0
        %v5469 = vpop.f32.mrb[0].mxu0
        %v5470 = vadd.f32 0.0, %v5469
        %v5471 = vpop.f32.mrb[0].mxu0
        %5472 = vmatprep.mubr.bf16.mxu0 %v4989
        %5473 = vmatmul.mubr.bf16.gmra.mrb[0].mxu0 %v4988
        %v5474 = vpop.f32.mrb[0].mxu0
        %v5475 = vadd.f32 0.0, %v5474
        %v5476 = vpop.f32.mrb[0].mxu0
        %v5477 = vpop.f32.mrb[0].mxu0
        %v5478 = vadd.f32 0.0, %v5477
        %v5479 = vpop.f32.mrb[0].mxu0
        %5480 = vmatprep.mubr.bf16.mxu0 %v4993
        %5481 = vmatmul.mubr.bf16.gmra.mrb[0].mxu0 %v4992
        %v5482 = vpop.f32.mrb[0].mxu0
        %v5483 = vadd.f32 0.0, %v5482
        %v5484 = vpop.f32.mrb[0].mxu0
        %v5485 = vpop.f32.mrb[0].mxu0
        %v5486 = vadd.f32 0.0, %v5485
        %v5487 = vpop.f32.mrb[0].mxu0
        %5488 = vmatprep.mubr.bf16.mxu0 %v4997
        %5489 = vmatmul.mubr.bf16.gmra.mrb[0].mxu0 %v4996
        %v5490 = vpop.f32.mrb[0].mxu0
        %v5491 = vadd.f32 0.0, %v5490
        %v5492 = vpop.f32.mrb[0].mxu0
        %v5493 = vpop.f32.mrb[0].mxu0
        %v5494 = vadd.f32 0.0, %v5493
        %v5495 = vpop.f32.mrb[0].mxu0
        %5496 = vmatprep.mubr.bf16.mxu0 %v5001
        %5497 = vmatmul.mubr.bf16.gmra.mrb[0].mxu0 %v5000
        %v5498 = vpop.f32.mrb[0].mxu0
        %v5499 = vadd.f32 0.0, %v5498
        %v5500 = vpop.f32.mrb[0].mxu0
        %v5501 = vpop.f32.mrb[0].mxu0
        %v5502 = vadd.f32 0.0, %v5501
        %v5503 = vpop.f32.mrb[0].mxu0
        %5504 = vmatprep.mubr.bf16.mxu0 %v5005
        %5505 = vmatmul.mubr.bf16.gmra.mrb[0].mxu0 %v5004
        %v5506 = vpop.f32.mrb[0].mxu0
        %v5507 = vadd.f32 0.0, %v5506
        %v5508 = vpop.f32.mrb[0].mxu0
        %v5509 = vpop.f32.mrb[0].mxu0
        %v5510 = vadd.f32 0.0, %v5509
        %v5511 = vpop.f32.mrb[0].mxu0
        %5512 = vmatprep.mubr.bf16.mxu0 %v5009
        %5513 = vmatmul.mubr.bf16.gmra.mrb[0].mxu0 %v5008
        %v5514 = vpop.f32.mrb[0].mxu0
        %v5515 = vadd.f32 0.0, %v5514
        %v5516 = vpop.f32.mrb[0].mxu0
        %v5517 = vpop.f32.mrb[0].mxu0
        %v5518 = vadd.f32 0.0, %v5517
        %v5519 = vpop.f32.mrb[0].mxu0
        %5520 = vmatprep.mubr.bf16.mxu0 %v5013
        %5521 = vmatmul.mubr.bf16.gmra.mrb[0].mxu0 %v5012
        %v5522 = vpop.f32.mrb[0].mxu0
        %v5523 = vadd.f32 0.0, %v5522
        %v5524 = vpop.f32.mrb[0].mxu0
        %v5525 = vpop.f32.mrb[0].mxu0
        %v5526 = vadd.f32 0.0, %v5525
        %v5527 = vpop.f32.mrb[0].mxu0
        %5528 = vmatprep.mubr.bf16.mxu0 %v5017
        %5529 = vmatmul.mubr.bf16.gmra.mrb[0].mxu0 %v5016
        %v5530 = vpop.f32.mrb[0].mxu0
        %v5531 = vadd.f32 0.0, %v5530
        %v5532 = vpop.f32.mrb[0].mxu0
        %v5533 = vpop.f32.mrb[0].mxu0
        %v5534 = vadd.f32 0.0, %v5533
        %v5535 = vpop.f32.mrb[0].mxu0
        %5536 = vmatprep.mubr.bf16.mxu0 %v5021
        %5537 = vmatmul.mubr.bf16.gmra.mrb[0].mxu0 %v5020
        %v5538 = vpop.f32.mrb[0].mxu0
        %v5539 = vadd.f32 0.0, %v5538
        %v5540 = vpop.f32.mrb[0].mxu0
        %v5541 = vpop.f32.mrb[0].mxu0
        %v5542 = vadd.f32 0.0, %v5541
        %v5543 = vpop.f32.mrb[0].mxu0
        %5544 = vmatprep.mubr.bf16.mxu0 %v5025
        %5545 = vmatmul.mubr.bf16.gmra.mrb[0].mxu0 %v5024
        %v5546 = vpop.f32.mrb[0].mxu0
        %v5547 = vadd.f32 0.0, %v5546
        %v5548 = vpop.f32.mrb[0].mxu0
        %v5549 = vpop.f32.mrb[0].mxu0
        %v5550 = vadd.f32 0.0, %v5549
        %v5551 = vpop.f32.mrb[0].mxu0
        %5552 = vmatprep.mubr.bf16.mxu0 %v5029
        %5553 = vmatmul.mubr.bf16.gmra.mrb[0].mxu0 %v5028
        %v5554 = vpop.f32.mrb[0].mxu0
        %v5555 = vadd.f32 0.0, %v5554
        %v5556 = vpop.f32.mrb[0].mxu0
        %v5557 = vpop.f32.mrb[0].mxu0
        %v5558 = vadd.f32 0.0, %v5557
        %v5559 = vpop.f32.mrb[0].mxu0
        %5560 = vmatprep.mubr.bf16.mxu0 %v5033
        %5561 = vmatmul.mubr.bf16.gmra.mrb[0].mxu0 %v5032
        %v5562 = vpop.f32.mrb[0].mxu0
        %v5563 = vadd.f32 0.0, %v5562
        %v5564 = vpop.f32.mrb[0].mxu0
        %v5565 = vpop.f32.mrb[0].mxu0
        %v5566 = vadd.f32 0.0, %v5565
        %v5567 = vpop.f32.mrb[0].mxu0
        %5568 = vmatprep.mubr.bf16.mxu0 %v5037
        %5569 = vmatmul.mubr.bf16.gmra.mrb[0].mxu0 %v5036
        %v5570 = vpop.f32.mrb[0].mxu0
        %v5571 = vadd.f32 0.0, %v5570
        %v5572 = vpop.f32.mrb[0].mxu0
        %v5573 = vpop.f32.mrb[0].mxu0
        %v5574 = vadd.f32 0.0, %v5573
        %v5575 = vpop.f32.mrb[0].mxu0
        %5576 = vmatprep.mubr.bf16.mxu0 %v5041
        %5577 = vmatmul.mubr.bf16.gmra.mrb[0].mxu0 %v5040
        %v5578 = vpop.f32.mrb[0].mxu0
        %v5579 = vadd.f32 0.0, %v5578
        %v5580 = vpop.f32.mrb[0].mxu0
        %v5581 = vpop.f32.mrb[0].mxu0
        %v5582 = vadd.f32 0.0, %v5581
        %v5583 = vpop.f32.mrb[0].mxu0
        %5584 = vmatprep.mubr.bf16.mxu0 %v5045
        %5585 = vmatmul.mubr.bf16.gmra.mrb[0].mxu0 %v5044
        %v5586 = vpop.f32.mrb[0].mxu0
        %v5587 = vadd.f32 0.0, %v5586
        %v5588 = vpop.f32.mrb[0].mxu0
        %v5589 = vpop.f32.mrb[0].mxu0
        %v5590 = vadd.f32 0.0, %v5589
        %v5591 = vpop.f32.mrb[0].mxu0
        %5592 = vdwg.mxu0
        %5593 = vmatprep.subr.bf16.mxu0 0
        %5594 = vmatpush1.bf16.msra.mxu0 %v5256
        %5595 = vmatprep.subr.bf16.mxu0 0
        %5596 = vmatpush1.bf16.msra.mxu0 %v5257
        %5597 = vmatprep.subr.bf16.mxu0 0
        %5598 = vmatpush1.bf16.msra.mxu0 %v5258
        %5599 = vmatprep.subr.bf16.mxu0 0
        %5600 = vmatpush1.bf16.msra.mxu0 %v5259
        %5601 = vmatprep.subr.bf16.mxu0 0
        %5602 = vmatpush1.bf16.msra.mxu0 %v5260
        %5603 = vmatprep.subr.bf16.mxu0 0
        %5604 = vmatpush1.bf16.msra.mxu0 %v5261
        %5605 = vmatprep.subr.bf16.mxu0 0
        %5606 = vmatpush1.bf16.msra.mxu0 %v5262
        %5607 = vmatprep.subr.bf16.mxu0 0
        %5608 = vmatpush1.bf16.msra.mxu0 %v5263
        %5609 = vmatprep.subr.bf16.mxu0 0
        %5610 = vmatpush1.bf16.msra.mxu0 %v5264
        %5611 = vmatprep.subr.bf16.mxu0 0
        %5612 = vmatpush1.bf16.msra.mxu0 %v5265
        %5613 = vmatprep.subr.bf16.mxu0 0
        %5614 = vmatpush1.bf16.msra.mxu0 %v5266
        %5615 = vmatprep.subr.bf16.mxu0 0
        %5616 = vmatpush1.bf16.msra.mxu0 %v5267
        %5617 = vmatprep.subr.bf16.mxu0 0
        %5618 = vmatpush1.bf16.msra.mxu0 %v5268
        %5619 = vmatprep.subr.bf16.mxu0 0
        %5620 = vmatpush1.bf16.msra.mxu0 %v5269
        %5621 = vmatprep.subr.bf16.mxu0 0
        %5622 = vmatpush1.bf16.msra.mxu0 %v5270
        %5623 = vmatprep.subr.bf16.mxu0 0
        %5624 = vmatpush1.bf16.msra.mxu0 %v5271
        %5625 = vmatprep.mubr.bf16.mxu0 %v4923
        %5626 = vmatmul.mubr.bf16.gmra.mrb[0].mxu0 %v4922
        %v5627 = vpop.f32.mrb[0].mxu0
        %v5628 = vadd.f32 %v5339, %v5627
        %v5629 = vpop.f32.mrb[0].mxu0
        %v5630 = vpop.f32.mrb[0].mxu0
        %v5631 = vadd.f32 %v5342, %v5630
        %v5632 = vpop.f32.mrb[0].mxu0
        %5633 = vmatprep.mubr.bf16.mxu0 %v4927
        %5634 = vmatmul.mubr.bf16.gmra.mrb[0].mxu0 %v4926
        %v5635 = vpop.f32.mrb[0].mxu0
        %v5636 = vadd.f32 %v5347, %v5635
        %v5637 = vpop.f32.mrb[0].mxu0
        %v5638 = vpop.f32.mrb[0].mxu0
        %v5639 = vadd.f32 %v5350, %v5638
        %v5640 = vpop.f32.mrb[0].mxu0
        %5641 = vmatprep.mubr.bf16.mxu0 %v4931
        %5642 = vmatmul.mubr.bf16.gmra.mrb[0].mxu0 %v4930
        %v5643 = vpop.f32.mrb[0].mxu0
        %v5644 = vadd.f32 %v5355, %v5643
        %v5645 = vpop.f32.mrb[0].mxu0
        %v5646 = vpop.f32.mrb[0].mxu0
        %v5647 = vadd.f32 %v5358, %v5646
        %v5648 = vpop.f32.mrb[0].mxu0
        %5649 = vmatprep.mubr.bf16.mxu0 %v4935
        %5650 = vmatmul.mubr.bf16.gmra.mrb[0].mxu0 %v4934
        %v5651 = vpop.f32.mrb[0].mxu0
        %v5652 = vadd.f32 %v5363, %v5651
        %v5653 = vpop.f32.mrb[0].mxu0
        %v5654 = vpop.f32.mrb[0].mxu0
        %v5655 = vadd.f32 %v5366, %v5654
        %v5656 = vpop.f32.mrb[0].mxu0
        %5657 = vmatprep.mubr.bf16.mxu0 %v4939
        %5658 = vmatmul.mubr.bf16.gmra.mrb[0].mxu0 %v4938
        %v5659 = vpop.f32.mrb[0].mxu0
        %v5660 = vadd.f32 %v5371, %v5659
        %v5661 = vpop.f32.mrb[0].mxu0
        %v5662 = vpop.f32.mrb[0].mxu0
        %v5663 = vadd.f32 %v5374, %v5662
        %v5664 = vpop.f32.mrb[0].mxu0
        %5665 = vmatprep.mubr.bf16.mxu0 %v4943
        %5666 = vmatmul.mubr.bf16.gmra.mrb[0].mxu0 %v4942
        %v5667 = vpop.f32.mrb[0].mxu0
        %v5668 = vadd.f32 %v5379, %v5667
        %v5669 = vpop.f32.mrb[0].mxu0
        %v5670 = vpop.f32.mrb[0].mxu0
        %v5671 = vadd.f32 %v5382, %v5670
        %v5672 = vpop.f32.mrb[0].mxu0
        %5673 = vmatprep.mubr.bf16.mxu0 %v4947
        %5674 = vmatmul.mubr.bf16.gmra.mrb[0].mxu0 %v4946
        %v5675 = vpop.f32.mrb[0].mxu0
        %v5676 = vadd.f32 %v5387, %v5675
        %v5677 = vpop.f32.mrb[0].mxu0
        %v5678 = vpop.f32.mrb[0].mxu0
        %v5679 = vadd.f32 %v5390, %v5678
        %v5680 = vpop.f32.mrb[0].mxu0
        %5681 = vmatprep.mubr.bf16.mxu0 %v4951
        %5682 = vmatmul.mubr.bf16.gmra.mrb[0].mxu0 %v4950
        %v5683 = vpop.f32.mrb[0].mxu0
        %v5684 = vadd.f32 %v5395, %v5683
        %v5685 = vpop.f32.mrb[0].mxu0
        %v5686 = vpop.f32.mrb[0].mxu0
        %v5687 = vadd.f32 %v5398, %v5686
        %v5688 = vpop.f32.mrb[0].mxu0
        %5689 = vmatprep.mubr.bf16.mxu0 %v4955
        %5690 = vmatmul.mubr.bf16.gmra.mrb[0].mxu0 %v4954
        %v5691 = vpop.f32.mrb[0].mxu0
        %v5692 = vadd.f32 %v5403, %v5691
        %v5693 = vpop.f32.mrb[0].mxu0
        %v5694 = vpop.f32.mrb[0].mxu0
        %v5695 = vadd.f32 %v5406, %v5694
        %v5696 = vpop.f32.mrb[0].mxu0
        %5697 = vmatprep.mubr.bf16.mxu0 %v4959
        %5698 = vmatmul.mubr.bf16.gmra.mrb[0].mxu0 %v4958
        %v5699 = vpop.f32.mrb[0].mxu0
        %v5700 = vadd.f32 %v5411, %v5699
        %v5701 = vpop.f32.mrb[0].mxu0
        %v5702 = vpop.f32.mrb[0].mxu0
        %v5703 = vadd.f32 %v5414, %v5702
        %v5704 = vpop.f32.mrb[0].mxu0
        %5705 = vmatprep.mubr.bf16.mxu0 %v4963
        %5706 = vmatmul.mubr.bf16.gmra.mrb[0].mxu0 %v4962
        %v5707 = vpop.f32.mrb[0].mxu0
        %v5708 = vadd.f32 %v5419, %v5707
        %v5709 = vpop.f32.mrb[0].mxu0
        %v5710 = vpop.f32.mrb[0].mxu0
        %v5711 = vadd.f32 %v5422, %v5710
        %v5712 = vpop.f32.mrb[0].mxu0
        %5713 = vmatprep.mubr.bf16.mxu0 %v4967
        %5714 = vmatmul.mubr.bf16.gmra.mrb[0].mxu0 %v4966
        %v5715 = vpop.f32.mrb[0].mxu0
        %v5716 = vadd.f32 %v5427, %v5715
        %v5717 = vpop.f32.mrb[0].mxu0
        %v5718 = vpop.f32.mrb[0].mxu0
        %v5719 = vadd.f32 %v5430, %v5718
        %v5720 = vpop.f32.mrb[0].mxu0
        %5721 = vmatprep.mubr.bf16.mxu0 %v4971
        %5722 = vmatmul.mubr.bf16.gmra.mrb[0].mxu0 %v4970
        %v5723 = vpop.f32.mrb[0].mxu0
        %v5724 = vadd.f32 %v5435, %v5723
        %v5725 = vpop.f32.mrb[0].mxu0
        %v5726 = vpop.f32.mrb[0].mxu0
        %v5727 = vadd.f32 %v5438, %v5726
        %v5728 = vpop.f32.mrb[0].mxu0
        %5729 = vmatprep.mubr.bf16.mxu0 %v4975
        %5730 = vmatmul.mubr.bf16.gmra.mrb[0].mxu0 %v4974
        %v5731 = vpop.f32.mrb[0].mxu0
        %v5732 = vadd.f32 %v5443, %v5731
        %v5733 = vpop.f32.mrb[0].mxu0
        %v5734 = vpop.f32.mrb[0].mxu0
        %v5735 = vadd.f32 %v5446, %v5734
        %v5736 = vpop.f32.mrb[0].mxu0
        %5737 = vmatprep.mubr.bf16.mxu0 %v4979
        %5738 = vmatmul.mubr.bf16.gmra.mrb[0].mxu0 %v4978
        %v5739 = vpop.f32.mrb[0].mxu0
        %v5740 = vadd.f32 %v5451, %v5739
        %v5741 = vpop.f32.mrb[0].mxu0
        %v5742 = vpop.f32.mrb[0].mxu0
        %v5743 = vadd.f32 %v5454, %v5742
        %v5744 = vpop.f32.mrb[0].mxu0
        %5745 = vmatprep.mubr.bf16.mxu0 %v4983
        %5746 = vmatmul.mubr.bf16.gmra.mrb[0].mxu0 %v4982
        %v5747 = vpop.f32.mrb[0].mxu0
        %v5748 = vadd.f32 %v5459, %v5747
        %v5749 = vpop.f32.mrb[0].mxu0
        %v5750 = vpop.f32.mrb[0].mxu0
        %v5751 = vadd.f32 %v5462, %v5750
        %v5752 = vpop.f32.mrb[0].mxu0
        %5753 = vmatprep.mubr.bf16.mxu0 %v4987
        %5754 = vmatmul.mubr.bf16.gmra.mrb[0].mxu0 %v4986
        %v5755 = vpop.f32.mrb[0].mxu0
        %v5756 = vadd.f32 %v5467, %v5755
        %v5757 = vpop.f32.mrb[0].mxu0
        %v5758 = vpop.f32.mrb[0].mxu0
        %v5759 = vadd.f32 %v5470, %v5758
        %v5760 = vpop.f32.mrb[0].mxu0
        %5761 = vmatprep.mubr.bf16.mxu0 %v4991
        %5762 = vmatmul.mubr.bf16.gmra.mrb[0].mxu0 %v4990
        %v5763 = vpop.f32.mrb[0].mxu0
        %v5764 = vadd.f32 %v5475, %v5763
        %v5765 = vpop.f32.mrb[0].mxu0
        %v5766 = vpop.f32.mrb[0].mxu0
        %v5767 = vadd.f32 %v5478, %v5766
        %v5768 = vpop.f32.mrb[0].mxu0
        %5769 = vmatprep.mubr.bf16.mxu0 %v4995
        %5770 = vmatmul.mubr.bf16.gmra.mrb[0].mxu0 %v4994
        %v5771 = vpop.f32.mrb[0].mxu0
        %v5772 = vadd.f32 %v5483, %v5771
        %v5773 = vpop.f32.mrb[0].mxu0
        %v5774 = vpop.f32.mrb[0].mxu0
        %v5775 = vadd.f32 %v5486, %v5774
        %v5776 = vpop.f32.mrb[0].mxu0
        %5777 = vmatprep.mubr.bf16.mxu0 %v4999
        %5778 = vmatmul.mubr.bf16.gmra.mrb[0].mxu0 %v4998
        %v5779 = vpop.f32.mrb[0].mxu0
        %v5780 = vadd.f32 %v5491, %v5779
        %v5781 = vpop.f32.mrb[0].mxu0
        %v5782 = vpop.f32.mrb[0].mxu0
        %v5783 = vadd.f32 %v5494, %v5782
        %v5784 = vpop.f32.mrb[0].mxu0
        %5785 = vmatprep.mubr.bf16.mxu0 %v5003
        %5786 = vmatmul.mubr.bf16.gmra.mrb[0].mxu0 %v5002
        %v5787 = vpop.f32.mrb[0].mxu0
        %v5788 = vadd.f32 %v5499, %v5787
        %v5789 = vpop.f32.mrb[0].mxu0
        %v5790 = vpop.f32.mrb[0].mxu0
        %v5791 = vadd.f32 %v5502, %v5790
        %v5792 = vpop.f32.mrb[0].mxu0
        %5793 = vmatprep.mubr.bf16.mxu0 %v5007
        %5794 = vmatmul.mubr.bf16.gmra.mrb[0].mxu0 %v5006
        %v5795 = vpop.f32.mrb[0].mxu0
        %v5796 = vadd.f32 %v5507, %v5795
        %v5797 = vpop.f32.mrb[0].mxu0
        %v5798 = vpop.f32.mrb[0].mxu0
        %v5799 = vadd.f32 %v5510, %v5798
        %v5800 = vpop.f32.mrb[0].mxu0
        %5801 = vmatprep.mubr.bf16.mxu0 %v5011
        %5802 = vmatmul.mubr.bf16.gmra.mrb[0].mxu0 %v5010
        %v5803 = vpop.f32.mrb[0].mxu0
        %v5804 = vadd.f32 %v5515, %v5803
        %v5805 = vpop.f32.mrb[0].mxu0
        %v5806 = vpop.f32.mrb[0].mxu0
        %v5807 = vadd.f32 %v5518, %v5806
        %v5808 = vpop.f32.mrb[0].mxu0
        %5809 = vmatprep.mubr.bf16.mxu0 %v5015
        %5810 = vmatmul.mubr.bf16.gmra.mrb[0].mxu0 %v5014
        %v5811 = vpop.f32.mrb[0].mxu0
        %v5812 = vadd.f32 %v5523, %v5811
        %v5813 = vpop.f32.mrb[0].mxu0
        %v5814 = vpop.f32.mrb[0].mxu0
        %v5815 = vadd.f32 %v5526, %v5814
        %v5816 = vpop.f32.mrb[0].mxu0
        %5817 = vmatprep.mubr.bf16.mxu0 %v5019
        %5818 = vmatmul.mubr.bf16.gmra.mrb[0].mxu0 %v5018
        %v5819 = vpop.f32.mrb[0].mxu0
        %v5820 = vadd.f32 %v5531, %v5819
        %v5821 = vpop.f32.mrb[0].mxu0
        %v5822 = vpop.f32.mrb[0].mxu0
        %v5823 = vadd.f32 %v5534, %v5822
        %v5824 = vpop.f32.mrb[0].mxu0
        %5825 = vmatprep.mubr.bf16.mxu0 %v5023
        %5826 = vmatmul.mubr.bf16.gmra.mrb[0].mxu0 %v5022
        %v5827 = vpop.f32.mrb[0].mxu0
        %v5828 = vadd.f32 %v5539, %v5827
        %v5829 = vpop.f32.mrb[0].mxu0
        %v5830 = vpop.f32.mrb[0].mxu0
        %v5831 = vadd.f32 %v5542, %v5830
        %v5832 = vpop.f32.mrb[0].mxu0
        %5833 = vmatprep.mubr.bf16.mxu0 %v5027
        %5834 = vmatmul.mubr.bf16.gmra.mrb[0].mxu0 %v5026
        %v5835 = vpop.f32.mrb[0].mxu0
        %v5836 = vadd.f32 %v5547, %v5835
        %v5837 = vpop.f32.mrb[0].mxu0
        %v5838 = vpop.f32.mrb[0].mxu0
        %v5839 = vadd.f32 %v5550, %v5838
        %v5840 = vpop.f32.mrb[0].mxu0
        %5841 = vmatprep.mubr.bf16.mxu0 %v5031
        %5842 = vmatmul.mubr.bf16.gmra.mrb[0].mxu0 %v5030
        %v5843 = vpop.f32.mrb[0].mxu0
        %v5844 = vadd.f32 %v5555, %v5843
        %v5845 = vpop.f32.mrb[0].mxu0
        %v5846 = vpop.f32.mrb[0].mxu0
        %v5847 = vadd.f32 %v5558, %v5846
        %v5848 = vpop.f32.mrb[0].mxu0
        %5849 = vmatprep.mubr.bf16.mxu0 %v5035
        %5850 = vmatmul.mubr.bf16.gmra.mrb[0].mxu0 %v5034
        %v5851 = vpop.f32.mrb[0].mxu0
        %v5852 = vadd.f32 %v5563, %v5851
        %v5853 = vpop.f32.mrb[0].mxu0
        %v5854 = vpop.f32.mrb[0].mxu0
        %v5855 = vadd.f32 %v5566, %v5854
        %v5856 = vpop.f32.mrb[0].mxu0
        %5857 = vmatprep.mubr.bf16.mxu0 %v5039
        %5858 = vmatmul.mubr.bf16.gmra.mrb[0].mxu0 %v5038
        %v5859 = vpop.f32.mrb[0].mxu0
        %v5860 = vadd.f32 %v5571, %v5859
        %v5861 = vpop.f32.mrb[0].mxu0
        %v5862 = vpop.f32.mrb[0].mxu0
        %v5863 = vadd.f32 %v5574, %v5862
        %v5864 = vpop.f32.mrb[0].mxu0
        %5865 = vmatprep.mubr.bf16.mxu0 %v5043
        %5866 = vmatmul.mubr.bf16.gmra.mrb[0].mxu0 %v5042
        %v5867 = vpop.f32.mrb[0].mxu0
        %v5868 = vadd.f32 %v5579, %v5867
        %v5869 = vpop.f32.mrb[0].mxu0
        %v5870 = vpop.f32.mrb[0].mxu0
        %v5871 = vadd.f32 %v5582, %v5870
        %v5872 = vpop.f32.mrb[0].mxu0
        %5873 = vmatprep.mubr.bf16.mxu0 %v5047
        %5874 = vmatmul.mubr.bf16.gmra.mrb[0].mxu0 %v5046
        %v5875 = vpop.f32.mrb[0].mxu0
        %v5876 = vadd.f32 %v5587, %v5875
        %v5877 = vpop.f32.mrb[0].mxu0
        %v5878 = vpop.f32.mrb[0].mxu0
        %v5879 = vadd.f32 %v5590, %v5878
        %v5880 = vpop.f32.mrb[0].mxu0
        %5881 = vdwg.mxu0
        %v5882 = vmax.f32 %v5628, %v5631
        %v5883 = vmax.f32 %v5882, %v5636
        %v5884 = vmax.f32 %v5883, %v5639
        %v5885 = vmax.f32 %v5884, %v5644
        %v5886 = vmax.f32 %v5885, %v5647
        %v5887 = vmax.f32 %v5886, %v5652
        %v5888 = vmax.f32 %v5887, %v5655
        %v5889 = vrot.slane %v5888, 4
        %v5890 = vmax.f32 %v5888, %v5889
        %v5891 = vrot.slane %v5890, 2
        %v5892 = vmax.f32 %v5890, %v5891
        %v5893 = vrot.slane %v5892, 1
        %v5894 = vmax.f32 %v5892, %v5893
        %v5895 = vmax.f32 %v5660, %v5663
        %v5896 = vmax.f32 %v5895, %v5668
        %v5897 = vmax.f32 %v5896, %v5671
        %v5898 = vmax.f32 %v5897, %v5676
        %v5899 = vmax.f32 %v5898, %v5679
        %v5900 = vmax.f32 %v5899, %v5684
        %v5901 = vmax.f32 %v5900, %v5687
        %v5902 = vrot.slane %v5901, 4
        %v5903 = vmax.f32 %v5901, %v5902
        %v5904 = vrot.slane %v5903, 2
        %v5905 = vmax.f32 %v5903, %v5904
        %v5906 = vrot.slane %v5905, 1
        %v5907 = vmax.f32 %v5905, %v5906
        %v5908 = vmax.f32 %v5692, %v5695
        %v5909 = vmax.f32 %v5908, %v5700
        %v5910 = vmax.f32 %v5909, %v5703
        %v5911 = vmax.f32 %v5910, %v5708
        %v5912 = vmax.f32 %v5911, %v5711
        %v5913 = vmax.f32 %v5912, %v5716
        %v5914 = vmax.f32 %v5913, %v5719
        %v5915 = vrot.slane %v5914, 4
        %v5916 = vmax.f32 %v5914, %v5915
        %v5917 = vrot.slane %v5916, 2
        %v5918 = vmax.f32 %v5916, %v5917
        %v5919 = vrot.slane %v5918, 1
        %v5920 = vmax.f32 %v5918, %v5919
        %v5921 = vmax.f32 %v5724, %v5727
        %v5922 = vmax.f32 %v5921, %v5732
        %v5923 = vmax.f32 %v5922, %v5735
        %v5924 = vmax.f32 %v5923, %v5740
        %v5925 = vmax.f32 %v5924, %v5743
        %v5926 = vmax.f32 %v5925, %v5748
        %v5927 = vmax.f32 %v5926, %v5751
        %v5928 = vrot.slane %v5927, 4
        %v5929 = vmax.f32 %v5927, %v5928
        %v5930 = vrot.slane %v5929, 2
        %v5931 = vmax.f32 %v5929, %v5930
        %v5932 = vrot.slane %v5931, 1
        %v5933 = vmax.f32 %v5931, %v5932
        %v5934 = vmax.f32 %v5756, %v5759
        %v5935 = vmax.f32 %v5934, %v5764
        %v5936 = vmax.f32 %v5935, %v5767
        %v5937 = vmax.f32 %v5936, %v5772
        %v5938 = vmax.f32 %v5937, %v5775
        %v5939 = vmax.f32 %v5938, %v5780
        %v5940 = vmax.f32 %v5939, %v5783
        %v5941 = vrot.slane %v5940, 4
        %v5942 = vmax.f32 %v5940, %v5941
        %v5943 = vrot.slane %v5942, 2
        %v5944 = vmax.f32 %v5942, %v5943
        %v5945 = vrot.slane %v5944, 1
        %v5946 = vmax.f32 %v5944, %v5945
        %v5947 = vmax.f32 %v5788, %v5791
        %v5948 = vmax.f32 %v5947, %v5796
        %v5949 = vmax.f32 %v5948, %v5799
        %v5950 = vmax.f32 %v5949, %v5804
        %v5951 = vmax.f32 %v5950, %v5807
        %v5952 = vmax.f32 %v5951, %v5812
        %v5953 = vmax.f32 %v5952, %v5815
        %v5954 = vrot.slane %v5953, 4
        %v5955 = vmax.f32 %v5953, %v5954
        %v5956 = vrot.slane %v5955, 2
        %v5957 = vmax.f32 %v5955, %v5956
        %v5958 = vrot.slane %v5957, 1
        %v5959 = vmax.f32 %v5957, %v5958
        %v5960 = vmax.f32 %v5820, %v5823
        %v5961 = vmax.f32 %v5960, %v5828
        %v5962 = vmax.f32 %v5961, %v5831
        %v5963 = vmax.f32 %v5962, %v5836
        %v5964 = vmax.f32 %v5963, %v5839
        %v5965 = vmax.f32 %v5964, %v5844
        %v5966 = vmax.f32 %v5965, %v5847
        %v5967 = vrot.slane %v5966, 4
        %v5968 = vmax.f32 %v5966, %v5967
        %v5969 = vrot.slane %v5968, 2
        %v5970 = vmax.f32 %v5968, %v5969
        %v5971 = vrot.slane %v5970, 1
        %v5972 = vmax.f32 %v5970, %v5971
        %v5973 = vmax.f32 %v5852, %v5855
        %v5974 = vmax.f32 %v5973, %v5860
        %v5975 = vmax.f32 %v5974, %v5863
        %v5976 = vmax.f32 %v5975, %v5868
        %v5977 = vmax.f32 %v5976, %v5871
        %v5978 = vmax.f32 %v5977, %v5876
        %v5979 = vmax.f32 %v5978, %v5879
        %v5980 = vrot.slane %v5979, 4
        %v5981 = vmax.f32 %v5979, %v5980
        %v5982 = vrot.slane %v5981, 2
        %v5983 = vmax.f32 %v5981, %v5982
        %v5984 = vrot.slane %v5983, 1
        %v5985 = vmax.f32 %v5983, %v5984
        %v5986 = vld [vmem:[%s9] sm:$0x1]
        %v5988 = vlaneseq
        %v5989 = vshrl.u32 %v5988, 7
        %v5990 = vsub.s32 0, %v5989
        %v5991 = vrot.slane %v5986, %v5990
        %v5993 = vadd.f32 %v5894, %v5991
        %v5994 = vadd.f32 %v5907, %v5991
        %v5995 = vadd.f32 %v5920, %v5991
        %v5996 = vadd.f32 %v5933, %v5991
        %v5997 = vadd.f32 %v5946, %v5991
        %v5998 = vadd.f32 %v5959, %v5991
        %v5999 = vadd.f32 %v5972, %v5991
        %v6000 = vadd.f32 %v5985, %v5991
        %v6009 = vrot.slane %v5994, 7
        %v6010 = vsel %vm2595, %v6009, %v5993
        %v6011 = vrot.slane %v5995, 6
        %v6012 = vsel %vm2597, %v6011, %v6010
        %v6013 = vrot.slane %v5996, 5
        %v6014 = vsel %vm2599, %v6013, %v6012
        %v6015 = vrot.slane %v5997, 4
        %v6016 = vsel %vm2601, %v6015, %v6014
        %v6017 = vrot.slane %v5998, 3
        %v6018 = vsel %vm2603, %v6017, %v6016
        %v6019 = vrot.slane %v5999, 2
        %v6020 = vsel %vm2605, %v6019, %v6018
        %v6021 = vrot.slane %v6000, 1
        %v6022 = vsel %vm2607, %v6021, %v6020
        %6024 = vst [vmem:[%s392] sm:$0xff] %v6022
        %p6025 = scmp.lt.s32.totalorder %s23, 1
        %s6026 = scalar_select %p6025, %s23, 1
        %s6027 = smul.addr %s6026, 8
        %s6028 = scalar_lea.vmem %s10, %s6027
        // Predicated region
        $region69: #{_lambda_.2} parent=59 // pred_check
          %p6029 = pneg %p256
        $region70: #{_lambda_.2} parent=59 // pred_check_branch
          %6031 = sbr.rel (%p6029) target = $region72
        $region71: #{_lambda_.2} parent=59 // pred_region
          _
        $region72: #{_lambda_.2} parent=59 // pred_fallthru
          _
      $region60: #{_lambda_.2} parent=5 // pred_fallthru
        _
      %p6032 = scmp.le.s32.totalorder 2, %s18
      // Predicated region
      $region73: #{_lambda_.2} parent=5 // pred_check
        %p6033 = pneg %p6032
      $region74: #{_lambda_.2} parent=5 // pred_check_branch
        %6035 = sbr.rel (%p6033) target = $region76
      $region75: #{_lambda_.2} parent=5 // pred_region
        %s6036 = ssub.s32 %s18, 2
        // Predicated region
        $region77: #{_lambda_.2} parent=75 // pred_check
          %p6037 = pneg %p262
        $region78: #{_lambda_.2} parent=75 // pred_check_branch
          %6039 = sbr.rel (%p6037) target = $region80
        $region79: #{_lambda_.2} parent=75 // pred_region
          %p6040 = scmp.lt.s32.totalorder %s24, 1
          %s6041 = scalar_select %p6040, %s24, 1
          %s6042 = smul.addr %s6041, 8
          %s6043 = scalar_lea.vmem %s10, %s6042
        $region80: #{_lambda_.2} parent=75 // pred_fallthru
          _
      $region76: #{_lambda_.2} parent=5 // pred_fallthru
        _
    $region6: #{_lambda_.2} parent=1 // loop_footer
      %s22 = sadd.s32 1, %s18
    $region7: #{_lambda_.2} parent=1 // loop_footer_branch
      %17 = sbr.rel target = $region3
    $region8: #{_lambda_.2} parent=1 // loop_exit
      _
    %6044 = vsyncpa [#allocation3], 1
    %s6045 = scalar_lea.sflag [#allocation3], 1
    %6046 = vsyncpa %s6045, 1
    %6047 = vsyncpa [#allocation5], 1

</llo_original>
